<compile_context>
chip_gen: v5e
topology: v5e:2x2
jax: 0.10.0
libtpu: 0.0.40
codegen_flags: <defaults>
</compile_context>

<pallas_src>
import functools

import jax
import jax.numpy as jnp
from jax.experimental import pallas as pl
from jax.experimental.pallas import tpu as pltpu

LANE = 128          # output channels zero-padded to a multiple of this
BN_EPS = 1e-5
LRELU_SLOPE = 0.2


def _round_up(x, m):
    return ((x + m - 1) // m) * m


def _compiler_params(semantics):
    # 32 MiB leaves headroom on v7x (64 MiB physical VMEM); per-step footprints
    # here are < 2 MiB anyway.
    return pltpu.CompilerParams(
        dimension_semantics=semantics,
        vmem_limit_bytes=32 * 1024 * 1024,
    )


def _pick_m_tile(m, target=4096):
    """Largest power-of-two divisor of m that is <= min(target, m // 2).

    Capping at m // 2 keeps the grid length >= 2 so v7x's two TensorCores both
    get work even at small batch; tiles stay >= 8 rows so per-step overhead is
    negligible.
    """
    cap = min(target, max(m // 2, 8))
    for cand in (4096, 2048, 1024, 512, 256, 128, 64, 32, 16, 8):
        if cand <= cap and m % cand == 0:
            return cand
    return m


# ---------------------------------------------------------------------------
# JAX glue: stride-phase / kw-unrolled conv input layout (~1.25x activation).
# z[n, phase, row, :] with row = oh' * OW + ow, oh' in [0, OH_PH), and the last
# dim ordered (kw, cin).  For kernel row offset i the rows needed are the
# contiguous block [ (i//s)*OW, (i//s)*OW + OH*OW ) of phase i % s.
# ---------------------------------------------------------------------------
def _prep_conv_input(x, k, s, p):
    n, h, w, c = x.shape
    oh = (h + 2 * p - k) // s + 1
    ow = (w + 2 * p - k) // s + 1
    hp_needed = s * (oh - 1) + k
    wp_needed = s * (ow - 1) + k
    oh_ph = (hp_needed + s - 1) // s          # rows per phase
    hp = oh_ph * s
    xp = jnp.pad(x, ((0, 0), (p, hp - h - p), (p, wp_needed - w - p), (0, 0)))
    # kw-direction unroll (stride s): (N, HP, OW, k, C) -> (N, HP, OW, k*C)
    cols = [xp[:, :, j: j + s * (ow - 1) + 1: s, :] for j in range(k)]
    z = jnp.stack(cols, axis=3).reshape(n, hp, ow, k * c)
    # kh-direction phase split: (N, OH_PH, s, OW, kC) -> (N, s, OH_PH*OW, kC)
    z = z.reshape(n, oh_ph, s, ow, k * c).transpose(0, 2, 1, 3, 4)
    z = z.reshape(n, s, oh_ph * ow, k * c)
    k5 = k * c
    k5p = _round_up(k5, 8)                    # clean sublane tiling for the RHS
    if k5p != k5:
        z = jnp.pad(z, ((0, 0), (0, 0), (0, 0), (0, k5p - k5)))
    return z.astype(jnp.bfloat16), oh, ow


# ---------------------------------------------------------------------------
# Kernels
# ---------------------------------------------------------------------------
def _conv_kernel(z_ref, w_ref, b_ref, *out_refs, kh, stride, oh, ow,
                 emit_stats, apply_lrelu):
    """Fused conv (kh shifted matmuls, f32 acc) + bias [+ LeakyReLU | stats]."""
    rows = oh * ow
    acc = None
    for i in range(kh):                       # static unroll (kh == 5)
        ph, di = i % stride, i // stride
        lhs = z_ref[0, ph, di * ow: di * ow + rows, :]        # (rows, K5p) bf16
        part = jnp.dot(lhs, w_ref[i], preferred_element_type=jnp.float32)
        acc = part if acc is None else acc + part
    acc = acc + b_ref[...]                                    # (rows, Cp) f32
    if apply_lrelu:
        acc = jnp.where(acc > 0, acc, LRELU_SLOPE * acc)
    o_ref = out_refs[0]
    o_ref[0] = acc.astype(o_ref.dtype)                        # bf16 writeback
    if emit_stats:
        s_ref, q_ref = out_refs[1], out_refs[2]
        s_ref[0] = jnp.sum(acc, axis=0, keepdims=True)        # per-sample partials
        q_ref[0] = jnp.sum(acc * acc, axis=0, keepdims=True)


def _bn_lrelu_kernel(y_ref, sc_ref, sh_ref, o_ref):
    """Training-mode BatchNorm (precomputed scale/shift) + LeakyReLU."""
    y = y_ref[...].astype(jnp.float32)
    out = y * sc_ref[...] + sh_ref[...]
    out = jnp.where(out > 0, out, LRELU_SLOPE * out)
    o_ref[...] = out.astype(o_ref.dtype)


def _bn_lrelu_final_kernel(y_ref, sc_ref, sh_ref, w5_ref, b5_ref, o_ref):
    """Layer-4 BN + LeakyReLU fused with the final 4x4 conv (Cout=1) + Sigmoid."""
    y = y_ref[0].astype(jnp.float32)                          # (16, Cp)
    a = y * sc_ref[...] + sh_ref[...]
    a = jnp.where(a > 0, a, LRELU_SLOPE * a)
    row = jnp.sum(a * w5_ref[...], axis=0, keepdims=True)     # (1, Cp)
    s = jnp.sum(row, axis=1, keepdims=True) + b5_ref[0]       # (1, 1)
    sig = 1.0 / (1.0 + jnp.exp(-s))                           # exact sigmoid
    o_ref[...] = (sig + jnp.zeros(o_ref.shape, jnp.float32)).astype(o_ref.dtype)


# ---------------------------------------------------------------------------
# pallas_call wrappers
# ---------------------------------------------------------------------------
def _conv_layer_call(z, w, b, *, oh, ow, emit_stats, apply_lrelu):
    n, s, r, k5p = z.shape
    kh, _, cp = w.shape
    rows = oh * ow

    kernel = functools.partial(_conv_kernel, kh=kh, stride=s, oh=oh, ow=ow,
                               emit_stats=emit_stats, apply_lrelu=apply_lrelu)

    z_spec = pl.BlockSpec((1, s, r, k5p), lambda i: (i, 0, 0, 0))
    w_spec = pl.BlockSpec((kh, k5p, cp), lambda i: (0, 0, 0))
    b_spec = pl.BlockSpec((1, cp), lambda i: (0, 0))
    o_spec = pl.BlockSpec((1, rows, cp), lambda i: (i, 0, 0))
    stat_spec = pl.BlockSpec((1, 1, cp), lambda i: (i, 0, 0))

    out_shape = [jax.ShapeDtypeStruct((n, rows, cp), jnp.bfloat16)]
    out_specs = [o_spec]
    if emit_stats:
        out_shape += [jax.ShapeDtypeStruct((n, 1, cp), jnp.float32)] * 2
        out_specs += [stat_spec, stat_spec]

    flops = 2 * n * rows * (kh * k5p) * cp
    bytes_accessed = (z.size * z.dtype.itemsize + w.size * w.dtype.itemsize
                      + n * rows * cp * 2)

    return pl.pallas_call(
        kernel,
        out_shape=tuple(out_shape),
        grid=(n,),
        in_specs=[z_spec, w_spec, b_spec],
        out_specs=tuple(out_specs),
        compiler_params=_compiler_params(("parallel",)),
        cost_estimate=pl.CostEstimate(flops=flops, transcendentals=0,
                                      bytes_accessed=bytes_accessed),
    )(z, w, b)


def _bn_lrelu_call(preact, scale, shift):
    m, cp = preact.shape
    tm = _pick_m_tile(m)
    return pl.pallas_call(
        _bn_lrelu_kernel,
        out_shape=jax.ShapeDtypeStruct((m, cp), jnp.bfloat16),
        grid=(m // tm,),
        in_specs=[pl.BlockSpec((tm, cp), lambda i: (i, 0)),
                  pl.BlockSpec((1, cp), lambda i: (0, 0)),
                  pl.BlockSpec((1, cp), lambda i: (0, 0))],
        out_specs=pl.BlockSpec((tm, cp), lambda i: (i, 0)),
        compiler_params=_compiler_params(("parallel",)),
        cost_estimate=pl.CostEstimate(flops=4 * m * cp, transcendentals=0,
                                      bytes_accessed=4 * m * cp),
    )(preact, scale, shift)


def _bn_lrelu_final_call(preact, scale, shift, w5, b5):
    n, rows, cp = preact.shape
    out = pl.pallas_call(
        _bn_lrelu_final_kernel,
        out_shape=jax.ShapeDtypeStruct((n, 1, cp), jnp.float32),
        grid=(n,),
        in_specs=[pl.BlockSpec((1, rows, cp), lambda i: (i, 0, 0)),
                  pl.BlockSpec((1, cp), lambda i: (0, 0)),
                  pl.BlockSpec((1, cp), lambda i: (0, 0)),
                  pl.BlockSpec((rows, cp), lambda i: (0, 0)),
                  pl.BlockSpec(memory_space=pltpu.MemorySpace.SMEM)],
        out_specs=pl.BlockSpec((1, 1, cp), lambda i: (i, 0, 0)),
        compiler_params=_compiler_params(("parallel",)),
        cost_estimate=pl.CostEstimate(flops=6 * n * rows * cp,
                                      transcendentals=n,
                                      bytes_accessed=2 * n * rows * cp + 4 * n),
    )(preact, scale, shift, w5, b5)
    return out[:, 0, 0]                                       # (N,)


def _bn_scale_shift(part_sum, part_sq, count, gamma, beta):
    """Reduce per-sample partials (tiny N x 128) and form BN scale/shift."""
    total = jnp.sum(part_sum, axis=0)                         # (1, Cp)
    total_sq = jnp.sum(part_sq, axis=0)
    mean = total / count
    # One-pass E[x^2]-E[x]^2 variance, clamped; fine at these magnitudes.
    var = jnp.maximum(total_sq / count - mean * mean, 0.0)
    scale = gamma * jax.lax.rsqrt(var + BN_EPS)
    shift = beta - mean * scale
    return scale, shift


# ---------------------------------------------------------------------------
# Parameters (deterministic, mirrors weights_init: conv ~ N(0, 0.02),
# BN gamma ~ N(1, 0.02), BN beta = 0).  Conv weights stored as
# (kh, kw*cin [padded to 8], cout [padded to 128]) bf16.
# ---------------------------------------------------------------------------
def init_discriminator_params(key, in_dim=3, dim=16):
    cfg = [
        (in_dim,  dim,     5, 2, 2, False),
        (dim,     dim * 2, 5, 2, 2, True),
        (dim * 2, dim * 4, 5, 2, 2, True),
        (dim * 4, dim * 8, 5, 2, 2, True),
    ]
    params = []
    for (cin, cout, k, s, p, use_bn) in cfg:
        key, kw_, kb_, kg_ = jax.random.split(key, 4)
        k5 = k * cin
        k5p = _round_up(k5, 8)
        cp = _round_up(cout, LANE)

        w = 0.02 * jax.random.normal(kw_, (k, k, cin, cout), jnp.float32)
        w = w.reshape(k, k5, cout)
        w = jnp.pad(w, ((0, 0), (0, k5p - k5), (0, cp - cout)))

        b = 0.02 * jax.random.normal(kb_, (1, cout), jnp.float32)
        b = jnp.pad(b, ((0, 0), (0, cp - cout)))

        gamma = beta = None
        if use_bn:
            gamma = 1.0 + 0.02 * jax.random.normal(kg_, (1, cout), jnp.float32)
            gamma = jnp.pad(gamma, ((0, 0), (0, cp - cout)), constant_values=1.0)
            beta = jnp.zeros((1, cp), jnp.float32)

        params.append(dict(w=w.astype(jnp.bfloat16), b=b, gamma=gamma, beta=beta,
                           cout=cout, cp=cp, k=k, s=s, p=p, use_bn=use_bn))

    # Final Conv2d(dim*8, 1, 4) + Sigmoid (fused into layer 4's pass-2 kernel).
    key, kw_, kb_ = jax.random.split(key, 3)
    cin5 = dim * 8
    cp4 = _round_up(cin5, LANE)
    w5 = 0.02 * jax.random.normal(kw_, (4, 4, cin5, 1), jnp.float32)
    w5 = jnp.pad(w5.reshape(16, cin5), ((0, 0), (0, cp4 - cin5)))
    b5 = 0.02 * jax.random.normal(kb_, (1,), jnp.float32)
    params.append(dict(w=w5, b=b5))
    return params


# ---------------------------------------------------------------------------
# Forward pass: (N, 3, 64, 64) -> (N,)
# ---------------------------------------------------------------------------
def discriminator_forward(x_nchw, params):
    p1, p2, p3, p4, p5 = params
    x = jnp.transpose(x_nchw, (0, 2, 3, 1)).astype(jnp.bfloat16)   # -> NHWC bf16
    n = x.shape[0]

    # Layer 1: conv + LeakyReLU (no BN).
    z, oh, ow = _prep_conv_input(x, p1["k"], p1["s"], p1["p"])
    (y,) = _conv_layer_call(z, p1["w"], p1["b"], oh=oh, ow=ow,
                            emit_stats=False, apply_lrelu=True)
    x = y[:, :, :p1["cout"]].reshape(n, oh, ow, p1["cout"])

    # Layers 2-3: conv (+ per-sample BN partials) -> BN normalize + LeakyReLU.
    for lp in (p2, p3):
        z, oh, ow = _prep_conv_input(x, lp["k"], lp["s"], lp["p"])
        preact, psum, psq = _conv_layer_call(z, lp["w"], lp["b"], oh=oh, ow=ow,
                                             emit_stats=True, apply_lrelu=False)
        count = float(n * oh * ow)
        scale, shift = _bn_scale_shift(psum, psq, count, lp["gamma"], lp["beta"])
        y = _bn_lrelu_call(preact.reshape(n * oh * ow, lp["cp"]), scale, shift)
        x = y.reshape(n, oh, ow, lp["cp"])[:, :, :, :lp["cout"]]

    # Layer 4: conv + BN stats, then fused BN + LeakyReLU + final 4x4 conv + Sigmoid.
    z, oh, ow = _prep_conv_input(x, p4["k"], p4["s"], p4["p"])
    preact, psum, psq = _conv_layer_call(z, p4["w"], p4["b"], oh=oh, ow=ow,
                                         emit_stats=True, apply_lrelu=False)
    count = float(n * oh * ow)
    scale, shift = _bn_scale_shift(psum, psq, count, p4["gamma"], p4["beta"])
    return _bn_lrelu_final_call(preact, scale, shift, p5["w"], p5["b"])   # (N,)


if __name__ == "__main__":
    key = jax.random.PRNGKey(0)
    k_params, k_x = jax.random.split(key)

    # Spatial must be 64x64 so the final 4x4 valid conv reduces to 1x1;
    # keep batch and channel width small.
    N, IN_DIM, DIM = 2, 3, 16
    params = init_discriminator_params(k_params, in_dim=IN_DIM, dim=DIM)
    x = jax.random.normal(k_x, (N, IN_DIM, 64, 64), jnp.float32)

    fwd = jax.jit(lambda xx: discriminator_forward(xx, params))
    y = jax.block_until_ready(fwd(x))
    assert y.shape == (N,), y.shape
    assert bool(jnp.all(jnp.isfinite(y)))
    print("KERNEL_OK")
</pallas_src>

<mosaic_0001>
module attributes {stable_mosaic.version = 11 : i64} {
  func.func @_conv_kernel(%arg0: i32, %arg1: memref<1x2x1088x16xbf16, #tpu.memory_space<vmem>>, %arg2: memref<5x16x128xbf16, #tpu.memory_space<vmem>>, %arg3: memref<1x128xf32, #tpu.memory_space<vmem>>, %arg4: memref<1x1024x128xbf16, #tpu.memory_space<vmem>>) attributes {dimension_semantics = [#tpu.dimension_semantics<parallel>], iteration_bounds = array<i64: 2>, scalar_prefetch = 0 : i64, scratch_operands = 0 : i64, tpu.core_type = #tpu.core_type<tc>, window_params = [{transform_indices = @transform_0, window_bounds = array<i64: 1, 2, 1088, 16>}, {pipeline_mode = #tpu.pipeline_mode<synchronous>, transform_indices = @transform_1, window_bounds = array<i64: 5, 16, 128>}, {pipeline_mode = #tpu.pipeline_mode<synchronous>, transform_indices = @transform_2, window_bounds = array<i64: 1, 128>}, {transform_indices = @transform_3, window_bounds = array<i64: 1, 1024, 128>}]} {
    %c0 = arith.constant 0 : index
    %c0_0 = arith.constant 0 : index
    %c0_1 = arith.constant 0 : index
    %c0_2 = arith.constant 0 : index
    %0 = vector.load %arg1[%c0, %c0_0, %c0_1, %c0_2] : memref<1x2x1088x16xbf16, #tpu.memory_space<vmem>>, vector<1x1x1024x16xbf16>
    %1 = vector.shape_cast %0 : vector<1x1x1024x16xbf16> to vector<1024x16xbf16>
    %c0_3 = arith.constant 0 : index
    %c0_4 = arith.constant 0 : index
    %c0_5 = arith.constant 0 : index
    %2 = vector.load %arg2[%c0_3, %c0_4, %c0_5] : memref<5x16x128xbf16, #tpu.memory_space<vmem>>, vector<1x16x128xbf16>
    %3 = vector.shape_cast %2 : vector<1x16x128xbf16> to vector<16x128xbf16>
    %cst = arith.constant dense<0.000000e+00> : vector<1024x128xf32>
    %4 = tpu.matmul %1, %3, %cst {dimension_numbers = #tpu.dot_dimension_numbers<[1], [0], [0], [1], [0, 0, 1, 1], [], []>} : vector<1024x16xbf16>, vector<16x128xbf16>, vector<1024x128xf32> -> vector<1024x128xf32>
    %c0_6 = arith.constant 0 : index
    %c1 = arith.constant 1 : index
    %c0_7 = arith.constant 0 : index
    %c0_8 = arith.constant 0 : index
    %5 = vector.load %arg1[%c0_6, %c1, %c0_7, %c0_8] : memref<1x2x1088x16xbf16, #tpu.memory_space<vmem>>, vector<1x1x1024x16xbf16>
    %6 = vector.shape_cast %5 : vector<1x1x1024x16xbf16> to vector<1024x16xbf16>
    %c1_9 = arith.constant 1 : index
    %c0_10 = arith.constant 0 : index
    %c0_11 = arith.constant 0 : index
    %7 = vector.load %arg2[%c1_9, %c0_10, %c0_11] : memref<5x16x128xbf16, #tpu.memory_space<vmem>>, vector<1x16x128xbf16>
    %8 = vector.shape_cast %7 : vector<1x16x128xbf16> to vector<16x128xbf16>
    %cst_12 = arith.constant dense<0.000000e+00> : vector<1024x128xf32>
    %9 = tpu.matmul %6, %8, %cst_12 {dimension_numbers = #tpu.dot_dimension_numbers<[1], [0], [0], [1], [0, 0, 1, 1], [], []>} : vector<1024x16xbf16>, vector<16x128xbf16>, vector<1024x128xf32> -> vector<1024x128xf32>
    %10 = arith.addf %4, %9 : vector<1024x128xf32>
    %c0_13 = arith.constant 0 : index
    %c0_14 = arith.constant 0 : index
    %c32 = arith.constant 32 : index
    %c0_15 = arith.constant 0 : index
    %11 = vector.load %arg1[%c0_13, %c0_14, %c32, %c0_15] : memref<1x2x1088x16xbf16, #tpu.memory_space<vmem>>, vector<1x1x1024x16xbf16>
    %12 = vector.shape_cast %11 : vector<1x1x1024x16xbf16> to vector<1024x16xbf16>
    %c2 = arith.constant 2 : index
    %c0_16 = arith.constant 0 : index
    %c0_17 = arith.constant 0 : index
    %13 = vector.load %arg2[%c2, %c0_16, %c0_17] : memref<5x16x128xbf16, #tpu.memory_space<vmem>>, vector<1x16x128xbf16>
    %14 = vector.shape_cast %13 : vector<1x16x128xbf16> to vector<16x128xbf16>
    %cst_18 = arith.constant dense<0.000000e+00> : vector<1024x128xf32>
    %15 = tpu.matmul %12, %14, %cst_18 {dimension_numbers = #tpu.dot_dimension_numbers<[1], [0], [0], [1], [0, 0, 1, 1], [], []>} : vector<1024x16xbf16>, vector<16x128xbf16>, vector<1024x128xf32> -> vector<1024x128xf32>
    %16 = arith.addf %10, %15 : vector<1024x128xf32>
    %c0_19 = arith.constant 0 : index
    %c1_20 = arith.constant 1 : index
    %c32_21 = arith.constant 32 : index
    %c0_22 = arith.constant 0 : index
    %17 = vector.load %arg1[%c0_19, %c1_20, %c32_21, %c0_22] : memref<1x2x1088x16xbf16, #tpu.memory_space<vmem>>, vector<1x1x1024x16xbf16>
    %18 = vector.shape_cast %17 : vector<1x1x1024x16xbf16> to vector<1024x16xbf16>
    %c3 = arith.constant 3 : index
    %c0_23 = arith.constant 0 : index
    %c0_24 = arith.constant 0 : index
    %19 = vector.load %arg2[%c3, %c0_23, %c0_24] : memref<5x16x128xbf16, #tpu.memory_space<vmem>>, vector<1x16x128xbf16>
    %20 = vector.shape_cast %19 : vector<1x16x128xbf16> to vector<16x128xbf16>
    %cst_25 = arith.constant dense<0.000000e+00> : vector<1024x128xf32>
    %21 = tpu.matmul %18, %20, %cst_25 {dimension_numbers = #tpu.dot_dimension_numbers<[1], [0], [0], [1], [0, 0, 1, 1], [], []>} : vector<1024x16xbf16>, vector<16x128xbf16>, vector<1024x128xf32> -> vector<1024x128xf32>
    %22 = arith.addf %16, %21 : vector<1024x128xf32>
    %c0_26 = arith.constant 0 : index
    %c0_27 = arith.constant 0 : index
    %c64 = arith.constant 64 : index
    %c0_28 = arith.constant 0 : index
    %23 = vector.load %arg1[%c0_26, %c0_27, %c64, %c0_28] : memref<1x2x1088x16xbf16, #tpu.memory_space<vmem>>, vector<1x1x1024x16xbf16>
    %24 = vector.shape_cast %23 : vector<1x1x1024x16xbf16> to vector<1024x16xbf16>
    %c4 = arith.constant 4 : index
    %c0_29 = arith.constant 0 : index
    %c0_30 = arith.constant 0 : index
    %25 = vector.load %arg2[%c4, %c0_29, %c0_30] : memref<5x16x128xbf16, #tpu.memory_space<vmem>>, vector<1x16x128xbf16>
    %26 = vector.shape_cast %25 : vector<1x16x128xbf16> to vector<16x128xbf16>
    %cst_31 = arith.constant dense<0.000000e+00> : vector<1024x128xf32>
    %27 = tpu.matmul %24, %26, %cst_31 {dimension_numbers = #tpu.dot_dimension_numbers<[1], [0], [0], [1], [0, 0, 1, 1], [], []>} : vector<1024x16xbf16>, vector<16x128xbf16>, vector<1024x128xf32> -> vector<1024x128xf32>
    %28 = arith.addf %22, %27 : vector<1024x128xf32>
    %c0_32 = arith.constant 0 : index
    %c0_33 = arith.constant 0 : index
    %29 = vector.load %arg3[%c0_32, %c0_33] : memref<1x128xf32, #tpu.memory_space<vmem>>, vector<1x128xf32>
    %30 = vector.broadcast %29 : vector<1x128xf32> to vector<1024x128xf32>
    %31 = arith.addf %28, %30 : vector<1024x128xf32>
    %cst_34 = arith.constant 0.000000e+00 : f32
    %32 = vector.broadcast %cst_34 : f32 to vector<1024x128xf32>
    %33 = arith.cmpf ogt, %31, %32 : vector<1024x128xf32>
    %cst_35 = arith.constant 2.000000e-01 : f32
    %34 = vector.broadcast %cst_35 : f32 to vector<1024x128xf32>
    %35 = arith.mulf %34, %31 : vector<1024x128xf32>
    %36 = arith.select %33, %31, %35 : vector<1024x128xi1>, vector<1024x128xf32>
    %37 = arith.truncf %36 : vector<1024x128xf32> to vector<1024x128xbf16>
    %c0_36 = arith.constant 0 : index
    %c0_37 = arith.constant 0 : index
    %c0_38 = arith.constant 0 : index
    %38 = vector.load %arg4[%c0_36, %c0_37, %c0_38] : memref<1x1024x128xbf16, #tpu.memory_space<vmem>>, vector<1x1024x128xbf16>
    %39 = vector.shape_cast %38 : vector<1x1024x128xbf16> to vector<1024x128xbf16>
    %40 = vector.shape_cast %37 : vector<1024x128xbf16> to vector<1x1024x128xbf16>
    tpu.vector_store %arg4[%c0_36, %c0_37, %c0_38], %40 {strides = array<i32>} : memref<1x1024x128xbf16, #tpu.memory_space<vmem>>, vector<1x1024x128xbf16>,
    return
  }
  func.func @transform_0(%arg0: i32) -> (i32, i32, i32, i32) {
    %c0_i32 = arith.constant 0 : i32
    %c0_i32_0 = arith.constant 0 : i32
    %c0_i32_1 = arith.constant 0 : i32
    %c0_i32_2 = arith.constant 0 : i32
    return %arg0, %c0_i32, %c0_i32_0, %c0_i32_1 : i32, i32, i32, i32
  }
  func.func @transform_1(%arg0: i32) -> (i32, i32, i32) {
    %c0_i32 = arith.constant 0 : i32
    %c0_i32_0 = arith.constant 0 : i32
    %c0_i32_1 = arith.constant 0 : i32
    %c0_i32_2 = arith.constant 0 : i32
    return %c0_i32, %c0_i32_0, %c0_i32_1 : i32, i32, i32
  }
  func.func @transform_2(%arg0: i32) -> (i32, i32) {
    %c0_i32 = arith.constant 0 : i32
    %c0_i32_0 = arith.constant 0 : i32
    %c0_i32_1 = arith.constant 0 : i32
    return %c0_i32, %c0_i32_0 : i32, i32
  }
  func.func @transform_3(%arg0: i32) -> (i32, i32, i32) {
    %c0_i32 = arith.constant 0 : i32
    %c0_i32_0 = arith.constant 0 : i32
    %c0_i32_1 = arith.constant 0 : i32
    return %arg0, %c0_i32, %c0_i32_0 : i32, i32, i32
  }
}

module attributes {stable_mosaic.version = 11 : i64} {
  func.func @_conv_kernel(%arg0: i32, %arg1: memref<1x2x288x80xbf16, #tpu.memory_space<vmem>>, %arg2: memref<5x80x128xbf16, #tpu.memory_space<vmem>>, %arg3: memref<1x128xf32, #tpu.memory_space<vmem>>, %arg4: memref<1x256x128xbf16, #tpu.memory_space<vmem>>, %arg5: memref<1x1x128xf32, #tpu.memory_space<vmem>>, %arg6: memref<1x1x128xf32, #tpu.memory_space<vmem>>) attributes {dimension_semantics = [#tpu.dimension_semantics<parallel>], iteration_bounds = array<i64: 2>, scalar_prefetch = 0 : i64, scratch_operands = 0 : i64, tpu.core_type = #tpu.core_type<tc>, window_params = [{transform_indices = @transform_0, window_bounds = array<i64: 1, 2, 288, 80>}, {pipeline_mode = #tpu.pipeline_mode<synchronous>, transform_indices = @transform_1, window_bounds = array<i64: 5, 80, 128>}, {pipeline_mode = #tpu.pipeline_mode<synchronous>, transform_indices = @transform_2, window_bounds = array<i64: 1, 128>}, {transform_indices = @transform_3, window_bounds = array<i64: 1, 256, 128>}, {transform_indices = @transform_4, window_bounds = array<i64: 1, 1, 128>}, {transform_indices = @transform_5, window_bounds = array<i64: 1, 1, 128>}]} {
    %c0 = arith.constant 0 : index
    %c0_0 = arith.constant 0 : index
    %c0_1 = arith.constant 0 : index
    %c0_2 = arith.constant 0 : index
    %0 = vector.load %arg1[%c0, %c0_0, %c0_1, %c0_2] : memref<1x2x288x80xbf16, #tpu.memory_space<vmem>>, vector<1x1x256x80xbf16>
    %1 = vector.shape_cast %0 : vector<1x1x256x80xbf16> to vector<256x80xbf16>
    %c0_3 = arith.constant 0 : index
    %c0_4 = arith.constant 0 : index
    %c0_5 = arith.constant 0 : index
    %2 = vector.load %arg2[%c0_3, %c0_4, %c0_5] : memref<5x80x128xbf16, #tpu.memory_space<vmem>>, vector<1x80x128xbf16>
    %3 = vector.shape_cast %2 : vector<1x80x128xbf16> to vector<80x128xbf16>
    %cst = arith.constant dense<0.000000e+00> : vector<256x128xf32>
    %4 = tpu.matmul %1, %3, %cst {dimension_numbers = #tpu.dot_dimension_numbers<[1], [0], [0], [1], [0, 0, 1, 1], [], []>} : vector<256x80xbf16>, vector<80x128xbf16>, vector<256x128xf32> -> vector<256x128xf32>
    %c0_6 = arith.constant 0 : index
    %c1 = arith.constant 1 : index
    %c0_7 = arith.constant 0 : index
    %c0_8 = arith.constant 0 : index
    %5 = vector.load %arg1[%c0_6, %c1, %c0_7, %c0_8] : memref<1x2x288x80xbf16, #tpu.memory_space<vmem>>, vector<1x1x256x80xbf16>
    %6 = vector.shape_cast %5 : vector<1x1x256x80xbf16> to vector<256x80xbf16>
    %c1_9 = arith.constant 1 : index
    %c0_10 = arith.constant 0 : index
    %c0_11 = arith.constant 0 : index
    %7 = vector.load %arg2[%c1_9, %c0_10, %c0_11] : memref<5x80x128xbf16, #tpu.memory_space<vmem>>, vector<1x80x128xbf16>
    %8 = vector.shape_cast %7 : vector<1x80x128xbf16> to vector<80x128xbf16>
    %cst_12 = arith.constant dense<0.000000e+00> : vector<256x128xf32>
    %9 = tpu.matmul %6, %8, %cst_12 {dimension_numbers = #tpu.dot_dimension_numbers<[1], [0], [0], [1], [0, 0, 1, 1], [], []>} : vector<256x80xbf16>, vector<80x128xbf16>, vector<256x128xf32> -> vector<256x128xf32>
    %10 = arith.addf %4, %9 : vector<256x128xf32>
    %c0_13 = arith.constant 0 : index
    %c0_14 = arith.constant 0 : index
    %c16 = arith.constant 16 : index
    %c0_15 = arith.constant 0 : index
    %11 = vector.load %arg1[%c0_13, %c0_14, %c16, %c0_15] : memref<1x2x288x80xbf16, #tpu.memory_space<vmem>>, vector<1x1x256x80xbf16>
    %12 = vector.shape_cast %11 : vector<1x1x256x80xbf16> to vector<256x80xbf16>
    %c2 = arith.constant 2 : index
    %c0_16 = arith.constant 0 : index
    %c0_17 = arith.constant 0 : index
    %13 = vector.load %arg2[%c2, %c0_16, %c0_17] : memref<5x80x128xbf16, #tpu.memory_space<vmem>>, vector<1x80x128xbf16>
    %14 = vector.shape_cast %13 : vector<1x80x128xbf16> to vector<80x128xbf16>
    %cst_18 = arith.constant dense<0.000000e+00> : vector<256x128xf32>
    %15 = tpu.matmul %12, %14, %cst_18 {dimension_numbers = #tpu.dot_dimension_numbers<[1], [0], [0], [1], [0, 0, 1, 1], [], []>} : vector<256x80xbf16>, vector<80x128xbf16>, vector<256x128xf32> -> vector<256x128xf32>
    %16 = arith.addf %10, %15 : vector<256x128xf32>
    %c0_19 = arith.constant 0 : index
    %c1_20 = arith.constant 1 : index
    %c16_21 = arith.constant 16 : index
    %c0_22 = arith.constant 0 : index
    %17 = vector.load %arg1[%c0_19, %c1_20, %c16_21, %c0_22] : memref<1x2x288x80xbf16, #tpu.memory_space<vmem>>, vector<1x1x256x80xbf16>
    %18 = vector.shape_cast %17 : vector<1x1x256x80xbf16> to vector<256x80xbf16>
    %c3 = arith.constant 3 : index
    %c0_23 = arith.constant 0 : index
    %c0_24 = arith.constant 0 : index
    %19 = vector.load %arg2[%c3, %c0_23, %c0_24] : memref<5x80x128xbf16, #tpu.memory_space<vmem>>, vector<1x80x128xbf16>
    %20 = vector.shape_cast %19 : vector<1x80x128xbf16> to vector<80x128xbf16>
    %cst_25 = arith.constant dense<0.000000e+00> : vector<256x128xf32>
    %21 = tpu.matmul %18, %20, %cst_25 {dimension_numbers = #tpu.dot_dimension_numbers<[1], [0], [0], [1], [0, 0, 1, 1], [], []>} : vector<256x80xbf16>, vector<80x128xbf16>, vector<256x128xf32> -> vector<256x128xf32>
    %22 = arith.addf %16, %21 : vector<256x128xf32>
    %c0_26 = arith.constant 0 : index
    %c0_27 = arith.constant 0 : index
    %c32 = arith.constant 32 : index
    %c0_28 = arith.constant 0 : index
    %23 = vector.load %arg1[%c0_26, %c0_27, %c32, %c0_28] : memref<1x2x288x80xbf16, #tpu.memory_space<vmem>>, vector<1x1x256x80xbf16>
    %24 = vector.shape_cast %23 : vector<1x1x256x80xbf16> to vector<256x80xbf16>
    %c4 = arith.constant 4 : index
    %c0_29 = arith.constant 0 : index
    %c0_30 = arith.constant 0 : index
    %25 = vector.load %arg2[%c4, %c0_29, %c0_30] : memref<5x80x128xbf16, #tpu.memory_space<vmem>>, vector<1x80x128xbf16>
    %26 = vector.shape_cast %25 : vector<1x80x128xbf16> to vector<80x128xbf16>
    %cst_31 = arith.constant dense<0.000000e+00> : vector<256x128xf32>
    %27 = tpu.matmul %24, %26, %cst_31 {dimension_numbers = #tpu.dot_dimension_numbers<[1], [0], [0], [1], [0, 0, 1, 1], [], []>} : vector<256x80xbf16>, vector<80x128xbf16>, vector<256x128xf32> -> vector<256x128xf32>
    %28 = arith.addf %22, %27 : vector<256x128xf32>
    %c0_32 = arith.constant 0 : index
    %c0_33 = arith.constant 0 : index
    %29 = vector.load %arg3[%c0_32, %c0_33] : memref<1x128xf32, #tpu.memory_space<vmem>>, vector<1x128xf32>
    %30 = vector.broadcast %29 : vector<1x128xf32> to vector<256x128xf32>
    %31 = arith.addf %28, %30 : vector<256x128xf32>
    %32 = arith.truncf %31 : vector<256x128xf32> to vector<256x128xbf16>
    %c0_34 = arith.constant 0 : index
    %c0_35 = arith.constant 0 : index
    %c0_36 = arith.constant 0 : index
    %33 = vector.load %arg4[%c0_34, %c0_35, %c0_36] : memref<1x256x128xbf16, #tpu.memory_space<vmem>>, vector<1x256x128xbf16>
    %34 = vector.shape_cast %33 : vector<1x256x128xbf16> to vector<256x128xbf16>
    %35 = vector.shape_cast %32 : vector<256x128xbf16> to vector<1x256x128xbf16>
    tpu.vector_store %arg4[%c0_34, %c0_35, %c0_36], %35 {strides = array<i32>} : memref<1x256x128xbf16, #tpu.memory_space<vmem>>, vector<1x256x128xbf16>,
    %cst_37 = arith.constant dense<0.000000e+00> : vector<128xf32>
    %36 = vector.multi_reduction <add>, %31, %cst_37 [0] : vector<256x128xf32> to vector<128xf32>
    %37 = vector.shape_cast %36 : vector<128xf32> to vector<1x128xf32>
    %c0_38 = arith.constant 0 : index
    %c0_39 = arith.constant 0 : index
    %c0_40 = arith.constant 0 : index
    %38 = vector.load %arg5[%c0_38, %c0_39, %c0_40] : memref<1x1x128xf32, #tpu.memory_space<vmem>>, vector<1x1x128xf32>
    %39 = vector.shape_cast %38 : vector<1x1x128xf32> to vector<1x128xf32>
    %40 = vector.shape_cast %37 : vector<1x128xf32> to vector<1x1x128xf32>
    tpu.vector_store %arg5[%c0_38, %c0_39, %c0_40], %40 {strides = array<i32>} : memref<1x1x128xf32, #tpu.memory_space<vmem>>, vector<1x1x128xf32>,
    %41 = arith.mulf %31, %31 : vector<256x128xf32>
    %cst_41 = arith.constant dense<0.000000e+00> : vector<128xf32>
    %42 = vector.multi_reduction <add>, %41, %cst_41 [0] : vector<256x128xf32> to vector<128xf32>
    %43 = vector.shape_cast %42 : vector<128xf32> to vector<1x128xf32>
    %c0_42 = arith.constant 0 : index
    %c0_43 = arith.constant 0 : index
    %c0_44 = arith.constant 0 : index
    %44 = vector.load %arg6[%c0_42, %c0_43, %c0_44] : memref<1x1x128xf32, #tpu.memory_space<vmem>>, vector<1x1x128xf32>
    %45 = vector.shape_cast %44 : vector<1x1x128xf32> to vector<1x128xf32>
    %46 = vector.shape_cast %43 : vector<1x128xf32> to vector<1x1x128xf32>
    tpu.vector_store %arg6[%c0_42, %c0_43, %c0_44], %46 {strides = array<i32>} : memref<1x1x128xf32, #tpu.memory_space<vmem>>, vector<1x1x128xf32>,
    return
  }
  func.func @transform_0(%arg0: i32) -> (i32, i32, i32, i32) {
    %c0_i32 = arith.constant 0 : i32
    %c0_i32_0 = arith.constant 0 : i32
    %c0_i32_1 = arith.constant 0 : i32
    %c0_i32_2 = arith.constant 0 : i32
    return %arg0, %c0_i32, %c0_i32_0, %c0_i32_1 : i32, i32, i32, i32
  }
  func.func @transform_1(%arg0: i32) -> (i32, i32, i32) {
    %c0_i32 = arith.constant 0 : i32
    %c0_i32_0 = arith.constant 0 : i32
    %c0_i32_1 = arith.constant 0 : i32
    %c0_i32_2 = arith.constant 0 : i32
    return %c0_i32, %c0_i32_0, %c0_i32_1 : i32, i32, i32
  }
  func.func @transform_2(%arg0: i32) -> (i32, i32) {
    %c0_i32 = arith.constant 0 : i32
    %c0_i32_0 = arith.constant 0 : i32
    %c0_i32_1 = arith.constant 0 : i32
    return %c0_i32, %c0_i32_0 : i32, i32
  }
  func.func @transform_3(%arg0: i32) -> (i32, i32, i32) {
    %c0_i32 = arith.constant 0 : i32
    %c0_i32_0 = arith.constant 0 : i32
    %c0_i32_1 = arith.constant 0 : i32
    return %arg0, %c0_i32, %c0_i32_0 : i32, i32, i32
  }
  func.func @transform_4(%arg0: i32) -> (i32, i32, i32) {
    %c0_i32 = arith.constant 0 : i32
    %c0_i32_0 = arith.constant 0 : i32
    %c0_i32_1 = arith.constant 0 : i32
    return %arg0, %c0_i32, %c0_i32_0 : i32, i32, i32
  }
  func.func @transform_5(%arg0: i32) -> (i32, i32, i32) {
    %c0_i32 = arith.constant 0 : i32
    %c0_i32_0 = arith.constant 0 : i32
    %c0_i32_1 = arith.constant 0 : i32
    return %arg0, %c0_i32, %c0_i32_0 : i32, i32, i32
  }
}

module attributes {stable_mosaic.version = 11 : i64} {
  func.func @_bn_lrelu_kernel(%arg0: i32, %arg1: memref<256x128xbf16, #tpu.memory_space<vmem>>, %arg2: memref<1x128xf32, #tpu.memory_space<vmem>>, %arg3: memref<1x128xf32, #tpu.memory_space<vmem>>, %arg4: memref<256x128xbf16, #tpu.memory_space<vmem>>) attributes {dimension_semantics = [#tpu.dimension_semantics<parallel>], iteration_bounds = array<i64: 2>, scalar_prefetch = 0 : i64, scratch_operands = 0 : i64, tpu.core_type = #tpu.core_type<tc>, window_params = [{transform_indices = @transform_0, window_bounds = array<i64: 256, 128>}, {pipeline_mode = #tpu.pipeline_mode<synchronous>, transform_indices = @transform_1, window_bounds = array<i64: 1, 128>}, {pipeline_mode = #tpu.pipeline_mode<synchronous>, transform_indices = @transform_2, window_bounds = array<i64: 1, 128>}, {transform_indices = @transform_3, window_bounds = array<i64: 256, 128>}]} {
    %c0 = arith.constant 0 : index
    %c0_0 = arith.constant 0 : index
    %0 = vector.load %arg1[%c0, %c0_0] : memref<256x128xbf16, #tpu.memory_space<vmem>>, vector<256x128xbf16>
    %1 = arith.extf %0 : vector<256x128xbf16> to vector<256x128xf32>
    %c0_1 = arith.constant 0 : index
    %c0_2 = arith.constant 0 : index
    %2 = vector.load %arg2[%c0_1, %c0_2] : memref<1x128xf32, #tpu.memory_space<vmem>>, vector<1x128xf32>
    %3 = vector.broadcast %2 : vector<1x128xf32> to vector<256x128xf32>
    %4 = arith.mulf %1, %3 : vector<256x128xf32>
    %c0_3 = arith.constant 0 : index
    %c0_4 = arith.constant 0 : index
    %5 = vector.load %arg3[%c0_3, %c0_4] : memref<1x128xf32, #tpu.memory_space<vmem>>, vector<1x128xf32>
    %6 = vector.broadcast %5 : vector<1x128xf32> to vector<256x128xf32>
    %7 = arith.addf %4, %6 : vector<256x128xf32>
    %cst = arith.constant 0.000000e+00 : f32
    %8 = vector.broadcast %cst : f32 to vector<256x128xf32>
    %9 = arith.cmpf ogt, %7, %8 : vector<256x128xf32>
    %cst_5 = arith.constant 2.000000e-01 : f32
    %10 = vector.broadcast %cst_5 : f32 to vector<256x128xf32>
    %11 = arith.mulf %10, %7 : vector<256x128xf32>
    %12 = arith.select %9, %7, %11 : vector<256x128xi1>, vector<256x128xf32>
    %13 = arith.truncf %12 : vector<256x128xf32> to vector<256x128xbf16>
    %c0_6 = arith.constant 0 : index
    %c0_7 = arith.constant 0 : index
    %14 = vector.load %arg4[%c0_6, %c0_7] : memref<256x128xbf16, #tpu.memory_space<vmem>>, vector<256x128xbf16>
    tpu.vector_store %arg4[%c0_6, %c0_7], %13 {strides = array<i32>} : memref<256x128xbf16, #tpu.memory_space<vmem>>, vector<256x128xbf16>,
    return
  }
  func.func @transform_0(%arg0: i32) -> (i32, i32) {
    %c0_i32 = arith.constant 0 : i32
    %c0_i32_0 = arith.constant 0 : i32
    return %arg0, %c0_i32 : i32, i32
  }
  func.func @transform_1(%arg0: i32) -> (i32, i32) {
    %c0_i32 = arith.constant 0 : i32
    %c0_i32_0 = arith.constant 0 : i32
    %c0_i32_1 = arith.constant 0 : i32
    return %c0_i32, %c0_i32_0 : i32, i32
  }
  func.func @transform_2(%arg0: i32) -> (i32, i32) {
    %c0_i32 = arith.constant 0 : i32
    %c0_i32_0 = arith.constant 0 : i32
    %c0_i32_1 = arith.constant 0 : i32
    return %c0_i32, %c0_i32_0 : i32, i32
  }
  func.func @transform_3(%arg0: i32) -> (i32, i32) {
    %c0_i32 = arith.constant 0 : i32
    %c0_i32_0 = arith.constant 0 : i32
    return %arg0, %c0_i32 : i32, i32
  }
}

module attributes {stable_mosaic.version = 11 : i64} {
  func.func @_conv_kernel(%arg0: i32, %arg1: memref<1x2x80x160xbf16, #tpu.memory_space<vmem>>, %arg2: memref<5x160x128xbf16, #tpu.memory_space<vmem>>, %arg3: memref<1x128xf32, #tpu.memory_space<vmem>>, %arg4: memref<1x64x128xbf16, #tpu.memory_space<vmem>>, %arg5: memref<1x1x128xf32, #tpu.memory_space<vmem>>, %arg6: memref<1x1x128xf32, #tpu.memory_space<vmem>>) attributes {dimension_semantics = [#tpu.dimension_semantics<parallel>], iteration_bounds = array<i64: 2>, scalar_prefetch = 0 : i64, scratch_operands = 0 : i64, tpu.core_type = #tpu.core_type<tc>, window_params = [{transform_indices = @transform_0, window_bounds = array<i64: 1, 2, 80, 160>}, {pipeline_mode = #tpu.pipeline_mode<synchronous>, transform_indices = @transform_1, window_bounds = array<i64: 5, 160, 128>}, {pipeline_mode = #tpu.pipeline_mode<synchronous>, transform_indices = @transform_2, window_bounds = array<i64: 1, 128>}, {transform_indices = @transform_3, window_bounds = array<i64: 1, 64, 128>}, {transform_indices = @transform_4, window_bounds = array<i64: 1, 1, 128>}, {transform_indices = @transform_5, window_bounds = array<i64: 1, 1, 128>}]} {
    %c0 = arith.constant 0 : index
    %c0_0 = arith.constant 0 : index
    %c0_1 = arith.constant 0 : index
    %c0_2 = arith.constant 0 : index
    %0 = vector.load %arg1[%c0, %c0_0, %c0_1, %c0_2] : memref<1x2x80x160xbf16, #tpu.memory_space<vmem>>, vector<1x1x64x160xbf16>
    %1 = vector.shape_cast %0 : vector<1x1x64x160xbf16> to vector<64x160xbf16>
    %c0_3 = arith.constant 0 : index
    %c0_4 = arith.constant 0 : index
    %c0_5 = arith.constant 0 : index
    %2 = vector.load %arg2[%c0_3, %c0_4, %c0_5] : memref<5x160x128xbf16, #tpu.memory_space<vmem>>, vector<1x160x128xbf16>
    %3 = vector.shape_cast %2 : vector<1x160x128xbf16> to vector<160x128xbf16>
    %cst = arith.constant dense<0.000000e+00> : vector<64x128xf32>
    %4 = tpu.matmul %1, %3, %cst {dimension_numbers = #tpu.dot_dimension_numbers<[1], [0], [0], [1], [0, 0, 1, 1], [], []>} : vector<64x160xbf16>, vector<160x128xbf16>, vector<64x128xf32> -> vector<64x128xf32>
    %c0_6 = arith.constant 0 : index
    %c1 = arith.constant 1 : index
    %c0_7 = arith.constant 0 : index
    %c0_8 = arith.constant 0 : index
    %5 = vector.load %arg1[%c0_6, %c1, %c0_7, %c0_8] : memref<1x2x80x160xbf16, #tpu.memory_space<vmem>>, vector<1x1x64x160xbf16>
    %6 = vector.shape_cast %5 : vector<1x1x64x160xbf16> to vector<64x160xbf16>
    %c1_9 = arith.constant 1 : index
    %c0_10 = arith.constant 0 : index
    %c0_11 = arith.constant 0 : index
    %7 = vector.load %arg2[%c1_9, %c0_10, %c0_11] : memref<5x160x128xbf16, #tpu.memory_space<vmem>>, vector<1x160x128xbf16>
    %8 = vector.shape_cast %7 : vector<1x160x128xbf16> to vector<160x128xbf16>
    %cst_12 = arith.constant dense<0.000000e+00> : vector<64x128xf32>
    %9 = tpu.matmul %6, %8, %cst_12 {dimension_numbers = #tpu.dot_dimension_numbers<[1], [0], [0], [1], [0, 0, 1, 1], [], []>} : vector<64x160xbf16>, vector<160x128xbf16>, vector<64x128xf32> -> vector<64x128xf32>
    %10 = arith.addf %4, %9 : vector<64x128xf32>
    %c0_13 = arith.constant 0 : index
    %c0_14 = arith.constant 0 : index
    %c8 = arith.constant 8 : index
    %c0_15 = arith.constant 0 : index
    %11 = vector.load %arg1[%c0_13, %c0_14, %c8, %c0_15] : memref<1x2x80x160xbf16, #tpu.memory_space<vmem>>, vector<1x1x64x160xbf16>
    %12 = vector.shape_cast %11 : vector<1x1x64x160xbf16> to vector<64x160xbf16>
    %c2 = arith.constant 2 : index
    %c0_16 = arith.constant 0 : index
    %c0_17 = arith.constant 0 : index
    %13 = vector.load %arg2[%c2, %c0_16, %c0_17] : memref<5x160x128xbf16, #tpu.memory_space<vmem>>, vector<1x160x128xbf16>
    %14 = vector.shape_cast %13 : vector<1x160x128xbf16> to vector<160x128xbf16>
    %cst_18 = arith.constant dense<0.000000e+00> : vector<64x128xf32>
    %15 = tpu.matmul %12, %14, %cst_18 {dimension_numbers = #tpu.dot_dimension_numbers<[1], [0], [0], [1], [0, 0, 1, 1], [], []>} : vector<64x160xbf16>, vector<160x128xbf16>, vector<64x128xf32> -> vector<64x128xf32>
    %16 = arith.addf %10, %15 : vector<64x128xf32>
    %c0_19 = arith.constant 0 : index
    %c1_20 = arith.constant 1 : index
    %c8_21 = arith.constant 8 : index
    %c0_22 = arith.constant 0 : index
    %17 = vector.load %arg1[%c0_19, %c1_20, %c8_21, %c0_22] : memref<1x2x80x160xbf16, #tpu.memory_space<vmem>>, vector<1x1x64x160xbf16>
    %18 = vector.shape_cast %17 : vector<1x1x64x160xbf16> to vector<64x160xbf16>
    %c3 = arith.constant 3 : index
    %c0_23 = arith.constant 0 : index
    %c0_24 = arith.constant 0 : index
    %19 = vector.load %arg2[%c3, %c0_23, %c0_24] : memref<5x160x128xbf16, #tpu.memory_space<vmem>>, vector<1x160x128xbf16>
    %20 = vector.shape_cast %19 : vector<1x160x128xbf16> to vector<160x128xbf16>
    %cst_25 = arith.constant dense<0.000000e+00> : vector<64x128xf32>
    %21 = tpu.matmul %18, %20, %cst_25 {dimension_numbers = #tpu.dot_dimension_numbers<[1], [0], [0], [1], [0, 0, 1, 1], [], []>} : vector<64x160xbf16>, vector<160x128xbf16>, vector<64x128xf32> -> vector<64x128xf32>
    %22 = arith.addf %16, %21 : vector<64x128xf32>
    %c0_26 = arith.constant 0 : index
    %c0_27 = arith.constant 0 : index
    %c16 = arith.constant 16 : index
    %c0_28 = arith.constant 0 : index
    %23 = vector.load %arg1[%c0_26, %c0_27, %c16, %c0_28] : memref<1x2x80x160xbf16, #tpu.memory_space<vmem>>, vector<1x1x64x160xbf16>
    %24 = vector.shape_cast %23 : vector<1x1x64x160xbf16> to vector<64x160xbf16>
    %c4 = arith.constant 4 : index
    %c0_29 = arith.constant 0 : index
    %c0_30 = arith.constant 0 : index
    %25 = vector.load %arg2[%c4, %c0_29, %c0_30] : memref<5x160x128xbf16, #tpu.memory_space<vmem>>, vector<1x160x128xbf16>
    %26 = vector.shape_cast %25 : vector<1x160x128xbf16> to vector<160x128xbf16>
    %cst_31 = arith.constant dense<0.000000e+00> : vector<64x128xf32>
    %27 = tpu.matmul %24, %26, %cst_31 {dimension_numbers = #tpu.dot_dimension_numbers<[1], [0], [0], [1], [0, 0, 1, 1], [], []>} : vector<64x160xbf16>, vector<160x128xbf16>, vector<64x128xf32> -> vector<64x128xf32>
    %28 = arith.addf %22, %27 : vector<64x128xf32>
    %c0_32 = arith.constant 0 : index
    %c0_33 = arith.constant 0 : index
    %29 = vector.load %arg3[%c0_32, %c0_33] : memref<1x128xf32, #tpu.memory_space<vmem>>, vector<1x128xf32>
    %30 = vector.broadcast %29 : vector<1x128xf32> to vector<64x128xf32>
    %31 = arith.addf %28, %30 : vector<64x128xf32>
    %32 = arith.truncf %31 : vector<64x128xf32> to vector<64x128xbf16>
    %c0_34 = arith.constant 0 : index
    %c0_35 = arith.constant 0 : index
    %c0_36 = arith.constant 0 : index
    %33 = vector.load %arg4[%c0_34, %c0_35, %c0_36] : memref<1x64x128xbf16, #tpu.memory_space<vmem>>, vector<1x64x128xbf16>
    %34 = vector.shape_cast %33 : vector<1x64x128xbf16> to vector<64x128xbf16>
    %35 = vector.shape_cast %32 : vector<64x128xbf16> to vector<1x64x128xbf16>
    tpu.vector_store %arg4[%c0_34, %c0_35, %c0_36], %35 {strides = array<i32>} : memref<1x64x128xbf16, #tpu.memory_space<vmem>>, vector<1x64x128xbf16>,
    %cst_37 = arith.constant dense<0.000000e+00> : vector<128xf32>
    %36 = vector.multi_reduction <add>, %31, %cst_37 [0] : vector<64x128xf32> to vector<128xf32>
    %37 = vector.shape_cast %36 : vector<128xf32> to vector<1x128xf32>
    %c0_38 = arith.constant 0 : index
    %c0_39 = arith.constant 0 : index
    %c0_40 = arith.constant 0 : index
    %38 = vector.load %arg5[%c0_38, %c0_39, %c0_40] : memref<1x1x128xf32, #tpu.memory_space<vmem>>, vector<1x1x128xf32>
    %39 = vector.shape_cast %38 : vector<1x1x128xf32> to vector<1x128xf32>
    %40 = vector.shape_cast %37 : vector<1x128xf32> to vector<1x1x128xf32>
    tpu.vector_store %arg5[%c0_38, %c0_39, %c0_40], %40 {strides = array<i32>} : memref<1x1x128xf32, #tpu.memory_space<vmem>>, vector<1x1x128xf32>,
    %41 = arith.mulf %31, %31 : vector<64x128xf32>
    %cst_41 = arith.constant dense<0.000000e+00> : vector<128xf32>
    %42 = vector.multi_reduction <add>, %41, %cst_41 [0] : vector<64x128xf32> to vector<128xf32>
    %43 = vector.shape_cast %42 : vector<128xf32> to vector<1x128xf32>
    %c0_42 = arith.constant 0 : index
    %c0_43 = arith.constant 0 : index
    %c0_44 = arith.constant 0 : index
    %44 = vector.load %arg6[%c0_42, %c0_43, %c0_44] : memref<1x1x128xf32, #tpu.memory_space<vmem>>, vector<1x1x128xf32>
    %45 = vector.shape_cast %44 : vector<1x1x128xf32> to vector<1x128xf32>
    %46 = vector.shape_cast %43 : vector<1x128xf32> to vector<1x1x128xf32>
    tpu.vector_store %arg6[%c0_42, %c0_43, %c0_44], %46 {strides = array<i32>} : memref<1x1x128xf32, #tpu.memory_space<vmem>>, vector<1x1x128xf32>,
    return
  }
  func.func @transform_0(%arg0: i32) -> (i32, i32, i32, i32) {
    %c0_i32 = arith.constant 0 : i32
    %c0_i32_0 = arith.constant 0 : i32
    %c0_i32_1 = arith.constant 0 : i32
    %c0_i32_2 = arith.constant 0 : i32
    return %arg0, %c0_i32, %c0_i32_0, %c0_i32_1 : i32, i32, i32, i32
  }
  func.func @transform_1(%arg0: i32) -> (i32, i32, i32) {
    %c0_i32 = arith.constant 0 : i32
    %c0_i32_0 = arith.constant 0 : i32
    %c0_i32_1 = arith.constant 0 : i32
    %c0_i32_2 = arith.constant 0 : i32
    return %c0_i32, %c0_i32_0, %c0_i32_1 : i32, i32, i32
  }
  func.func @transform_2(%arg0: i32) -> (i32, i32) {
    %c0_i32 = arith.constant 0 : i32
    %c0_i32_0 = arith.constant 0 : i32
    %c0_i32_1 = arith.constant 0 : i32
    return %c0_i32, %c0_i32_0 : i32, i32
  }
  func.func @transform_3(%arg0: i32) -> (i32, i32, i32) {
    %c0_i32 = arith.constant 0 : i32
    %c0_i32_0 = arith.constant 0 : i32
    %c0_i32_1 = arith.constant 0 : i32
    return %arg0, %c0_i32, %c0_i32_0 : i32, i32, i32
  }
  func.func @transform_4(%arg0: i32) -> (i32, i32, i32) {
    %c0_i32 = arith.constant 0 : i32
    %c0_i32_0 = arith.constant 0 : i32
    %c0_i32_1 = arith.constant 0 : i32
    return %arg0, %c0_i32, %c0_i32_0 : i32, i32, i32
  }
  func.func @transform_5(%arg0: i32) -> (i32, i32, i32) {
    %c0_i32 = arith.constant 0 : i32
    %c0_i32_0 = arith.constant 0 : i32
    %c0_i32_1 = arith.constant 0 : i32
    return %arg0, %c0_i32, %c0_i32_0 : i32, i32, i32
  }
}

module attributes {stable_mosaic.version = 11 : i64} {
  func.func @_bn_lrelu_kernel(%arg0: i32, %arg1: memref<64x128xbf16, #tpu.memory_space<vmem>>, %arg2: memref<1x128xf32, #tpu.memory_space<vmem>>, %arg3: memref<1x128xf32, #tpu.memory_space<vmem>>, %arg4: memref<64x128xbf16, #tpu.memory_space<vmem>>) attributes {dimension_semantics = [#tpu.dimension_semantics<parallel>], iteration_bounds = array<i64: 2>, scalar_prefetch = 0 : i64, scratch_operands = 0 : i64, tpu.core_type = #tpu.core_type<tc>, window_params = [{transform_indices = @transform_0, window_bounds = array<i64: 64, 128>}, {pipeline_mode = #tpu.pipeline_mode<synchronous>, transform_indices = @transform_1, window_bounds = array<i64: 1, 128>}, {pipeline_mode = #tpu.pipeline_mode<synchronous>, transform_indices = @transform_2, window_bounds = array<i64: 1, 128>}, {transform_indices = @transform_3, window_bounds = array<i64: 64, 128>}]} {
    %c0 = arith.constant 0 : index
    %c0_0 = arith.constant 0 : index
    %0 = vector.load %arg1[%c0, %c0_0] : memref<64x128xbf16, #tpu.memory_space<vmem>>, vector<64x128xbf16>
    %1 = arith.extf %0 : vector<64x128xbf16> to vector<64x128xf32>
    %c0_1 = arith.constant 0 : index
    %c0_2 = arith.constant 0 : index
    %2 = vector.load %arg2[%c0_1, %c0_2] : memref<1x128xf32, #tpu.memory_space<vmem>>, vector<1x128xf32>
    %3 = vector.broadcast %2 : vector<1x128xf32> to vector<64x128xf32>
    %4 = arith.mulf %1, %3 : vector<64x128xf32>
    %c0_3 = arith.constant 0 : index
    %c0_4 = arith.constant 0 : index
    %5 = vector.load %arg3[%c0_3, %c0_4] : memref<1x128xf32, #tpu.memory_space<vmem>>, vector<1x128xf32>
    %6 = vector.broadcast %5 : vector<1x128xf32> to vector<64x128xf32>
    %7 = arith.addf %4, %6 : vector<64x128xf32>
    %cst = arith.constant 0.000000e+00 : f32
    %8 = vector.broadcast %cst : f32 to vector<64x128xf32>
    %9 = arith.cmpf ogt, %7, %8 : vector<64x128xf32>
    %cst_5 = arith.constant 2.000000e-01 : f32
    %10 = vector.broadcast %cst_5 : f32 to vector<64x128xf32>
    %11 = arith.mulf %10, %7 : vector<64x128xf32>
    %12 = arith.select %9, %7, %11 : vector<64x128xi1>, vector<64x128xf32>
    %13 = arith.truncf %12 : vector<64x128xf32> to vector<64x128xbf16>
    %c0_6 = arith.constant 0 : index
    %c0_7 = arith.constant 0 : index
    %14 = vector.load %arg4[%c0_6, %c0_7] : memref<64x128xbf16, #tpu.memory_space<vmem>>, vector<64x128xbf16>
    tpu.vector_store %arg4[%c0_6, %c0_7], %13 {strides = array<i32>} : memref<64x128xbf16, #tpu.memory_space<vmem>>, vector<64x128xbf16>,
    return
  }
  func.func @transform_0(%arg0: i32) -> (i32, i32) {
    %c0_i32 = arith.constant 0 : i32
    %c0_i32_0 = arith.constant 0 : i32
    return %arg0, %c0_i32 : i32, i32
  }
  func.func @transform_1(%arg0: i32) -> (i32, i32) {
    %c0_i32 = arith.constant 0 : i32
    %c0_i32_0 = arith.constant 0 : i32
    %c0_i32_1 = arith.constant 0 : i32
    return %c0_i32, %c0_i32_0 : i32, i32
  }
  func.func @transform_2(%arg0: i32) -> (i32, i32) {
    %c0_i32 = arith.constant 0 : i32
    %c0_i32_0 = arith.constant 0 : i32
    %c0_i32_1 = arith.constant 0 : i32
    return %c0_i32, %c0_i32_0 : i32, i32
  }
  func.func @transform_3(%arg0: i32) -> (i32, i32) {
    %c0_i32 = arith.constant 0 : i32
    %c0_i32_0 = arith.constant 0 : i32
    return %arg0, %c0_i32 : i32, i32
  }
}

module attributes {stable_mosaic.version = 11 : i64} {
  func.func @_conv_kernel(%arg0: i32, %arg1: memref<1x2x24x320xbf16, #tpu.memory_space<vmem>>, %arg2: memref<5x320x128xbf16, #tpu.memory_space<vmem>>, %arg3: memref<1x128xf32, #tpu.memory_space<vmem>>, %arg4: memref<1x16x128xbf16, #tpu.memory_space<vmem>>, %arg5: memref<1x1x128xf32, #tpu.memory_space<vmem>>, %arg6: memref<1x1x128xf32, #tpu.memory_space<vmem>>) attributes {dimension_semantics = [#tpu.dimension_semantics<parallel>], iteration_bounds = array<i64: 2>, scalar_prefetch = 0 : i64, scratch_operands = 0 : i64, tpu.core_type = #tpu.core_type<tc>, window_params = [{transform_indices = @transform_0, window_bounds = array<i64: 1, 2, 24, 320>}, {pipeline_mode = #tpu.pipeline_mode<synchronous>, transform_indices = @transform_1, window_bounds = array<i64: 5, 320, 128>}, {pipeline_mode = #tpu.pipeline_mode<synchronous>, transform_indices = @transform_2, window_bounds = array<i64: 1, 128>}, {transform_indices = @transform_3, window_bounds = array<i64: 1, 16, 128>}, {transform_indices = @transform_4, window_bounds = array<i64: 1, 1, 128>}, {transform_indices = @transform_5, window_bounds = array<i64: 1, 1, 128>}]} {
    %c0 = arith.constant 0 : index
    %c0_0 = arith.constant 0 : index
    %c0_1 = arith.constant 0 : index
    %c0_2 = arith.constant 0 : index
    %0 = vector.load %arg1[%c0, %c0_0, %c0_1, %c0_2] : memref<1x2x24x320xbf16, #tpu.memory_space<vmem>>, vector<1x1x16x320xbf16>
    %1 = vector.shape_cast %0 : vector<1x1x16x320xbf16> to vector<16x320xbf16>
    %c0_3 = arith.constant 0 : index
    %c0_4 = arith.constant 0 : index
    %c0_5 = arith.constant 0 : index
    %2 = vector.load %arg2[%c0_3, %c0_4, %c0_5] : memref<5x320x128xbf16, #tpu.memory_space<vmem>>, vector<1x320x128xbf16>
    %3 = vector.shape_cast %2 : vector<1x320x128xbf16> to vector<320x128xbf16>
    %cst = arith.constant dense<0.000000e+00> : vector<16x128xf32>
    %4 = tpu.matmul %1, %3, %cst {dimension_numbers = #tpu.dot_dimension_numbers<[1], [0], [0], [1], [0, 0, 1, 1], [], []>} : vector<16x320xbf16>, vector<320x128xbf16>, vector<16x128xf32> -> vector<16x128xf32>
    %c0_6 = arith.constant 0 : index
    %c1 = arith.constant 1 : index
    %c0_7 = arith.constant 0 : index
    %c0_8 = arith.constant 0 : index
    %5 = vector.load %arg1[%c0_6, %c1, %c0_7, %c0_8] : memref<1x2x24x320xbf16, #tpu.memory_space<vmem>>, vector<1x1x16x320xbf16>
    %6 = vector.shape_cast %5 : vector<1x1x16x320xbf16> to vector<16x320xbf16>
    %c1_9 = arith.constant 1 : index
    %c0_10 = arith.constant 0 : index
    %c0_11 = arith.constant 0 : index
    %7 = vector.load %arg2[%c1_9, %c0_10, %c0_11] : memref<5x320x128xbf16, #tpu.memory_space<vmem>>, vector<1x320x128xbf16>
    %8 = vector.shape_cast %7 : vector<1x320x128xbf16> to vector<320x128xbf16>
    %cst_12 = arith.constant dense<0.000000e+00> : vector<16x128xf32>
    %9 = tpu.matmul %6, %8, %cst_12 {dimension_numbers = #tpu.dot_dimension_numbers<[1], [0], [0], [1], [0, 0, 1, 1], [], []>} : vector<16x320xbf16>, vector<320x128xbf16>, vector<16x128xf32> -> vector<16x128xf32>
    %10 = arith.addf %4, %9 : vector<16x128xf32>
    %c0_13 = arith.constant 0 : index
    %c0_14 = arith.constant 0 : index
    %c4 = arith.constant 4 : index
    %c0_15 = arith.constant 0 : index
    %11 = vector.load %arg1[%c0_13, %c0_14, %c4, %c0_15] : memref<1x2x24x320xbf16, #tpu.memory_space<vmem>>, vector<1x1x16x320xbf16>
    %12 = vector.shape_cast %11 : vector<1x1x16x320xbf16> to vector<16x320xbf16>
    %c2 = arith.constant 2 : index
    %c0_16 = arith.constant 0 : index
    %c0_17 = arith.constant 0 : index
    %13 = vector.load %arg2[%c2, %c0_16, %c0_17] : memref<5x320x128xbf16, #tpu.memory_space<vmem>>, vector<1x320x128xbf16>
    %14 = vector.shape_cast %13 : vector<1x320x128xbf16> to vector<320x128xbf16>
    %cst_18 = arith.constant dense<0.000000e+00> : vector<16x128xf32>
    %15 = tpu.matmul %12, %14, %cst_18 {dimension_numbers = #tpu.dot_dimension_numbers<[1], [0], [0], [1], [0, 0, 1, 1], [], []>} : vector<16x320xbf16>, vector<320x128xbf16>, vector<16x128xf32> -> vector<16x128xf32>
    %16 = arith.addf %10, %15 : vector<16x128xf32>
    %c0_19 = arith.constant 0 : index
    %c1_20 = arith.constant 1 : index
    %c4_21 = arith.constant 4 : index
    %c0_22 = arith.constant 0 : index
    %17 = vector.load %arg1[%c0_19, %c1_20, %c4_21, %c0_22] : memref<1x2x24x320xbf16, #tpu.memory_space<vmem>>, vector<1x1x16x320xbf16>
    %18 = vector.shape_cast %17 : vector<1x1x16x320xbf16> to vector<16x320xbf16>
    %c3 = arith.constant 3 : index
    %c0_23 = arith.constant 0 : index
    %c0_24 = arith.constant 0 : index
    %19 = vector.load %arg2[%c3, %c0_23, %c0_24] : memref<5x320x128xbf16, #tpu.memory_space<vmem>>, vector<1x320x128xbf16>
    %20 = vector.shape_cast %19 : vector<1x320x128xbf16> to vector<320x128xbf16>
    %cst_25 = arith.constant dense<0.000000e+00> : vector<16x128xf32>
    %21 = tpu.matmul %18, %20, %cst_25 {dimension_numbers = #tpu.dot_dimension_numbers<[1], [0], [0], [1], [0, 0, 1, 1], [], []>} : vector<16x320xbf16>, vector<320x128xbf16>, vector<16x128xf32> -> vector<16x128xf32>
    %22 = arith.addf %16, %21 : vector<16x128xf32>
    %c0_26 = arith.constant 0 : index
    %c0_27 = arith.constant 0 : index
    %c8 = arith.constant 8 : index
    %c0_28 = arith.constant 0 : index
    %23 = vector.load %arg1[%c0_26, %c0_27, %c8, %c0_28] : memref<1x2x24x320xbf16, #tpu.memory_space<vmem>>, vector<1x1x16x320xbf16>
    %24 = vector.shape_cast %23 : vector<1x1x16x320xbf16> to vector<16x320xbf16>
    %c4_29 = arith.constant 4 : index
    %c0_30 = arith.constant 0 : index
    %c0_31 = arith.constant 0 : index
    %25 = vector.load %arg2[%c4_29, %c0_30, %c0_31] : memref<5x320x128xbf16, #tpu.memory_space<vmem>>, vector<1x320x128xbf16>
    %26 = vector.shape_cast %25 : vector<1x320x128xbf16> to vector<320x128xbf16>
    %cst_32 = arith.constant dense<0.000000e+00> : vector<16x128xf32>
    %27 = tpu.matmul %24, %26, %cst_32 {dimension_numbers = #tpu.dot_dimension_numbers<[1], [0], [0], [1], [0, 0, 1, 1], [], []>} : vector<16x320xbf16>, vector<320x128xbf16>, vector<16x128xf32> -> vector<16x128xf32>
    %28 = arith.addf %22, %27 : vector<16x128xf32>
    %c0_33 = arith.constant 0 : index
    %c0_34 = arith.constant 0 : index
    %29 = vector.load %arg3[%c0_33, %c0_34] : memref<1x128xf32, #tpu.memory_space<vmem>>, vector<1x128xf32>
    %30 = vector.broadcast %29 : vector<1x128xf32> to vector<16x128xf32>
    %31 = arith.addf %28, %30 : vector<16x128xf32>
    %32 = arith.truncf %31 : vector<16x128xf32> to vector<16x128xbf16>
    %c0_35 = arith.constant 0 : index
    %c0_36 = arith.constant 0 : index
    %c0_37 = arith.constant 0 : index
    %33 = vector.load %arg4[%c0_35, %c0_36, %c0_37] : memref<1x16x128xbf16, #tpu.memory_space<vmem>>, vector<1x16x128xbf16>
    %34 = vector.shape_cast %33 : vector<1x16x128xbf16> to vector<16x128xbf16>
    %35 = vector.shape_cast %32 : vector<16x128xbf16> to vector<1x16x128xbf16>
    tpu.vector_store %arg4[%c0_35, %c0_36, %c0_37], %35 {strides = array<i32>} : memref<1x16x128xbf16, #tpu.memory_space<vmem>>, vector<1x16x128xbf16>,
    %cst_38 = arith.constant dense<0.000000e+00> : vector<128xf32>
    %36 = vector.multi_reduction <add>, %31, %cst_38 [0] : vector<16x128xf32> to vector<128xf32>
    %37 = vector.shape_cast %36 : vector<128xf32> to vector<1x128xf32>
    %c0_39 = arith.constant 0 : index
    %c0_40 = arith.constant 0 : index
    %c0_41 = arith.constant 0 : index
    %38 = vector.load %arg5[%c0_39, %c0_40, %c0_41] : memref<1x1x128xf32, #tpu.memory_space<vmem>>, vector<1x1x128xf32>
    %39 = vector.shape_cast %38 : vector<1x1x128xf32> to vector<1x128xf32>
    %40 = vector.shape_cast %37 : vector<1x128xf32> to vector<1x1x128xf32>
    tpu.vector_store %arg5[%c0_39, %c0_40, %c0_41], %40 {strides = array<i32>} : memref<1x1x128xf32, #tpu.memory_space<vmem>>, vector<1x1x128xf32>,
    %41 = arith.mulf %31, %31 : vector<16x128xf32>
    %cst_42 = arith.constant dense<0.000000e+00> : vector<128xf32>
    %42 = vector.multi_reduction <add>, %41, %cst_42 [0] : vector<16x128xf32> to vector<128xf32>
    %43 = vector.shape_cast %42 : vector<128xf32> to vector<1x128xf32>
    %c0_43 = arith.constant 0 : index
    %c0_44 = arith.constant 0 : index
    %c0_45 = arith.constant 0 : index
    %44 = vector.load %arg6[%c0_43, %c0_44, %c0_45] : memref<1x1x128xf32, #tpu.memory_space<vmem>>, vector<1x1x128xf32>
    %45 = vector.shape_cast %44 : vector<1x1x128xf32> to vector<1x128xf32>
    %46 = vector.shape_cast %43 : vector<1x128xf32> to vector<1x1x128xf32>
    tpu.vector_store %arg6[%c0_43, %c0_44, %c0_45], %46 {strides = array<i32>} : memref<1x1x128xf32, #tpu.memory_space<vmem>>, vector<1x1x128xf32>,
    return
  }
  func.func @transform_0(%arg0: i32) -> (i32, i32, i32, i32) {
    %c0_i32 = arith.constant 0 : i32
    %c0_i32_0 = arith.constant 0 : i32
    %c0_i32_1 = arith.constant 0 : i32
    %c0_i32_2 = arith.constant 0 : i32
    return %arg0, %c0_i32, %c0_i32_0, %c0_i32_1 : i32, i32, i32, i32
  }
  func.func @transform_1(%arg0: i32) -> (i32, i32, i32) {
    %c0_i32 = arith.constant 0 : i32
    %c0_i32_0 = arith.constant 0 : i32
    %c0_i32_1 = arith.constant 0 : i32
    %c0_i32_2 = arith.constant 0 : i32
    return %c0_i32, %c0_i32_0, %c0_i32_1 : i32, i32, i32
  }
  func.func @transform_2(%arg0: i32) -> (i32, i32) {
    %c0_i32 = arith.constant 0 : i32
    %c0_i32_0 = arith.constant 0 : i32
    %c0_i32_1 = arith.constant 0 : i32
    return %c0_i32, %c0_i32_0 : i32, i32
  }
  func.func @transform_3(%arg0: i32) -> (i32, i32, i32) {
    %c0_i32 = arith.constant 0 : i32
    %c0_i32_0 = arith.constant 0 : i32
    %c0_i32_1 = arith.constant 0 : i32
    return %arg0, %c0_i32, %c0_i32_0 : i32, i32, i32
  }
  func.func @transform_4(%arg0: i32) -> (i32, i32, i32) {
    %c0_i32 = arith.constant 0 : i32
    %c0_i32_0 = arith.constant 0 : i32
    %c0_i32_1 = arith.constant 0 : i32
    return %arg0, %c0_i32, %c0_i32_0 : i32, i32, i32
  }
  func.func @transform_5(%arg0: i32) -> (i32, i32, i32) {
    %c0_i32 = arith.constant 0 : i32
    %c0_i32_0 = arith.constant 0 : i32
    %c0_i32_1 = arith.constant 0 : i32
    return %arg0, %c0_i32, %c0_i32_0 : i32, i32, i32
  }
}

module attributes {stable_mosaic.version = 11 : i64} {
  func.func @_bn_lrelu_final_kernel(%arg0: i32, %arg1: memref<1x16x128xbf16, #tpu.memory_space<vmem>>, %arg2: memref<1x128xf32, #tpu.memory_space<vmem>>, %arg3: memref<1x128xf32, #tpu.memory_space<vmem>>, %arg4: memref<16x128xf32, #tpu.memory_space<vmem>>, %arg5: memref<1xf32, #tpu.memory_space<smem>>, %arg6: memref<1x1x128xf32, #tpu.memory_space<vmem>>) attributes {dimension_semantics = [#tpu.dimension_semantics<parallel>], iteration_bounds = array<i64: 2>, scalar_prefetch = 0 : i64, scratch_operands = 0 : i64, tpu.core_type = #tpu.core_type<tc>, window_params = [{transform_indices = @transform_0, window_bounds = array<i64: 1, 16, 128>}, {pipeline_mode = #tpu.pipeline_mode<synchronous>, transform_indices = @transform_1, window_bounds = array<i64: 1, 128>}, {pipeline_mode = #tpu.pipeline_mode<synchronous>, transform_indices = @transform_2, window_bounds = array<i64: 1, 128>}, {pipeline_mode = #tpu.pipeline_mode<synchronous>, transform_indices = @transform_3, window_bounds = array<i64: 16, 128>}, {transform_indices = @transform_4, window_bounds = array<i64: 1>}, {transform_indices = @transform_5, window_bounds = array<i64: 1, 1, 128>}]} {
    %c0 = arith.constant 0 : index
    %c0_0 = arith.constant 0 : index
    %c0_1 = arith.constant 0 : index
    %0 = vector.load %arg1[%c0, %c0_0, %c0_1] : memref<1x16x128xbf16, #tpu.memory_space<vmem>>, vector<1x16x128xbf16>
    %1 = vector.shape_cast %0 : vector<1x16x128xbf16> to vector<16x128xbf16>
    %2 = arith.extf %1 : vector<16x128xbf16> to vector<16x128xf32>
    %c0_2 = arith.constant 0 : index
    %c0_3 = arith.constant 0 : index
    %3 = vector.load %arg2[%c0_2, %c0_3] : memref<1x128xf32, #tpu.memory_space<vmem>>, vector<1x128xf32>
    %4 = vector.broadcast %3 : vector<1x128xf32> to vector<16x128xf32>
    %5 = arith.mulf %2, %4 : vector<16x128xf32>
    %c0_4 = arith.constant 0 : index
    %c0_5 = arith.constant 0 : index
    %6 = vector.load %arg3[%c0_4, %c0_5] : memref<1x128xf32, #tpu.memory_space<vmem>>, vector<1x128xf32>
    %7 = vector.broadcast %6 : vector<1x128xf32> to vector<16x128xf32>
    %8 = arith.addf %5, %7 : vector<16x128xf32>
    %cst = arith.constant 0.000000e+00 : f32
    %9 = vector.broadcast %cst : f32 to vector<16x128xf32>
    %10 = arith.cmpf ogt, %8, %9 : vector<16x128xf32>
    %cst_6 = arith.constant 2.000000e-01 : f32
    %11 = vector.broadcast %cst_6 : f32 to vector<16x128xf32>
    %12 = arith.mulf %11, %8 : vector<16x128xf32>
    %13 = arith.select %10, %8, %12 : vector<16x128xi1>, vector<16x128xf32>
    %c0_7 = arith.constant 0 : index
    %c0_8 = arith.constant 0 : index
    %14 = vector.load %arg4[%c0_7, %c0_8] : memref<16x128xf32, #tpu.memory_space<vmem>>, vector<16x128xf32>
    %15 = arith.mulf %13, %14 : vector<16x128xf32>
    %cst_9 = arith.constant dense<0.000000e+00> : vector<128xf32>
    %16 = vector.multi_reduction <add>, %15, %cst_9 [0] : vector<16x128xf32> to vector<128xf32>
    %17 = vector.shape_cast %16 : vector<128xf32> to vector<1x128xf32>
    %cst_10 = arith.constant dense<0.000000e+00> : vector<1xf32>
    %18 = vector.multi_reduction <add>, %17, %cst_10 [1] : vector<1x128xf32> to vector<1xf32>
    %19 = vector.shape_cast %18 : vector<1xf32> to vector<1x1xf32>
    %c0_11 = arith.constant 0 : index
    %20 = memref.load %arg5[%c0_11] : memref<1xf32, #tpu.memory_space<smem>>
    %21 = vector.broadcast %20 : f32 to vector<1x1xf32>
    %22 = arith.addf %19, %21 : vector<1x1xf32>
    %cst_12 = arith.constant 0.000000e+00 : f32
    %23 = vector.broadcast %cst_12 : f32 to vector<1x1xf32>
    %24 = arith.subf %23, %22 : vector<1x1xf32>
    %25 = math.exp %24 : vector<1x1xf32>
    %cst_13 = arith.constant 1.000000e+00 : f32
    %26 = vector.broadcast %cst_13 : f32 to vector<1x1xf32>
    %27 = arith.addf %26, %25 : vector<1x1xf32>
    %cst_14 = arith.constant 1.000000e+00 : f32
    %28 = vector.broadcast %cst_14 : f32 to vector<1x1xf32>
    %29 = arith.divf %28, %27 : vector<1x1xf32>
    %cst_15 = arith.constant 0.000000e+00 : f32
    %30 = vector.broadcast %cst_15 : f32 to vector<1x1x128xf32>
    %31 = vector.shape_cast %29 : vector<1x1xf32> to vector<1x1x1xf32>
    %32 = vector.broadcast %31 : vector<1x1x1xf32> to vector<1x1x128xf32>
    %33 = arith.addf %32, %30 : vector<1x1x128xf32>
    %c0_16 = arith.constant 0 : index
    %c0_17 = arith.constant 0 : index
    %c0_18 = arith.constant 0 : index
    %34 = vector.load %arg6[%c0_16, %c0_17, %c0_18] : memref<1x1x128xf32, #tpu.memory_space<vmem>>, vector<1x1x128xf32>
    tpu.vector_store %arg6[%c0_16, %c0_17, %c0_18], %33 {strides = array<i32>} : memref<1x1x128xf32, #tpu.memory_space<vmem>>, vector<1x1x128xf32>,
    return
  }
  func.func @transform_0(%arg0: i32) -> (i32, i32, i32) {
    %c0_i32 = arith.constant 0 : i32
    %c0_i32_0 = arith.constant 0 : i32
    %c0_i32_1 = arith.constant 0 : i32
    return %arg0, %c0_i32, %c0_i32_0 : i32, i32, i32
  }
  func.func @transform_1(%arg0: i32) -> (i32, i32) {
    %c0_i32 = arith.constant 0 : i32
    %c0_i32_0 = arith.constant 0 : i32
    %c0_i32_1 = arith.constant 0 : i32
    return %c0_i32, %c0_i32_0 : i32, i32
  }
  func.func @transform_2(%arg0: i32) -> (i32, i32) {
    %c0_i32 = arith.constant 0 : i32
    %c0_i32_0 = arith.constant 0 : i32
    %c0_i32_1 = arith.constant 0 : i32
    return %c0_i32, %c0_i32_0 : i32, i32
  }
  func.func @transform_3(%arg0: i32) -> (i32, i32) {
    %c0_i32 = arith.constant 0 : i32
    %c0_i32_0 = arith.constant 0 : i32
    %c0_i32_1 = arith.constant 0 : i32
    return %c0_i32, %c0_i32_0 : i32, i32
  }
  func.func @transform_4(%arg0: i32) -> i32 {
    %c0_i32 = arith.constant 0 : i32
    %c0_i32_0 = arith.constant 0 : i32
    return %c0_i32 : i32
  }
  func.func @transform_5(%arg0: i32) -> (i32, i32, i32) {
    %c0_i32 = arith.constant 0 : i32
    %c0_i32_0 = arith.constant 0 : i32
    %c0_i32_1 = arith.constant 0 : i32
    return %arg0, %c0_i32, %c0_i32_0 : i32, i32, i32
  }
}

</mosaic_0001>

<llo_original>
// kernel: _lambda_.7
$region0: #{_lambda_.7}
  #allocation0 [shape = 'u32[]', space=smem, size = 0x4, offset = 0x4, fixed_abs, tag = 'smem constant byte address 0x4 - core index']
  #allocation1 [shape = 'u32[72,128]{1,0:T(1,128)}', space=vmem, size = 0x9000, scoped, tag = 'internal scratch']
  %s0 = inlined_call_operand.vmem [shape: bf16[2,2,1088,16], index: 0, kind: input, shape index: {}]
  %s1 = inlined_call_operand.vmem [shape: bf16[5,16,128], index: 1, kind: input, shape index: {}]
  %s2 = inlined_call_operand.vmem [shape: f32[1,128], index: 2, kind: input, shape index: {}]
  %s3 = inlined_call_operand.vmem [shape: bf16[2,1024,128], index: 3, kind: output, shape index: {}]
  %s4 = sld [smem:[#allocation0]]
  $region45: #{_lambda_.7} parent=0
    _
  %s6 = ssub.s32 1, %s4
  %s7 = scalar_select 0, %s6, %s4
  loop: start=0, step=1, limit=4
  $region2: #{_lambda_.7} parent=0 // loop_pre_header
    _
  $region3: #{_lambda_.7} parent=0 // loop_header
    %s9 = sphi 0, %s13
    %p10 = scmp.ge.s32.totalorder %s9, 4
    %s19 = sphi 0, %s21
    %s22 = sphi 0, %s19
    %s23 = sphi 0, %s22
    %s39 = sphi 0, %s23
    %s43 = sphi 0, %s43
    %s45 = sphi 0, %s43
    %s46 = sphi 0, %s45
    %s60 = sphi 0, %s46
    %s64 = sphi 0, %s64
    %s66 = sphi 0, %s64
    %s67 = sphi 0, %s66
    %s81 = sphi 0, %s67
    %s87 = sphi 0, %s89
    %s90 = sphi 0, %s87
    %s91 = sphi 0, %s90
    %s107 = sphi 0, %s91
  $region4: #{_lambda_.7} parent=0 // loop_header_branch
    %12 = sbr.rel (%p10) target = $region8
  $region5: #{_lambda_.7} parent=0 // loop_body
    %s14 = ssub.s32 %s9, 1
    %s15 = ssub.s32 %s9, 2
    %s16 = sadd.s32 %s9, 1
    %s17 = ssub.s32 %s9, %s16
    %p18 = scmp.eq.s32.totalorder %s17, 0
    %s20 = sadd.s32 %s19, 1
    %s21 = scalar_select %p18, %s19, %s20
    %p24 = pneg %p18
    %p25 = scmp.eq.s32.totalorder %s9, 1
    %p26 = por %p24, %p25
    %p27 = scmp.ne.s32.totalorder %s19, %s22
    %p28 = scmp.eq.s32.totalorder %s9, 0
    %p29 = por %p27, %p28
    %p30 = scmp.ne.s32.totalorder %s19, %s22
    %p31 = scmp.eq.s32.totalorder %s14, 1
    %p32 = por %p30, %p31
    %p33 = scmp.ne.s32.totalorder %s22, %s23
    %p34 = scmp.eq.s32.totalorder %s14, 0
    %p35 = por %p33, %p34
    %p36 = scmp.ne.s32.totalorder %s22, %s23
    %p37 = scmp.eq.s32.totalorder %s15, 1
    %p38 = por %p36, %p37
    %p40 = scmp.ne.s32.totalorder %s23, %s39
    %p41 = scmp.eq.s32.totalorder %s15, 0
    %p42 = por %p40, %p41
    %s44 = sadd.s32 %s43, 1
    %p47 = scmp.eq.s32.totalorder %s9, 1
    %p48 = scmp.ne.s32.totalorder %s43, %s45
    %p49 = scmp.eq.s32.totalorder %s9, 0
    %p50 = por %p48, %p49
    %p51 = scmp.ne.s32.totalorder %s43, %s45
    %p52 = scmp.eq.s32.totalorder %s14, 1
    %p53 = por %p51, %p52
    %p54 = scmp.ne.s32.totalorder %s45, %s46
    %p55 = scmp.eq.s32.totalorder %s14, 0
    %p56 = por %p54, %p55
    %p57 = scmp.ne.s32.totalorder %s45, %s46
    %p58 = scmp.eq.s32.totalorder %s15, 1
    %p59 = por %p57, %p58
    %p61 = scmp.ne.s32.totalorder %s46, %s60
    %p62 = scmp.eq.s32.totalorder %s15, 0
    %p63 = por %p61, %p62
    %s65 = sadd.s32 %s64, 1
    %p68 = scmp.eq.s32.totalorder %s9, 1
    %p69 = scmp.ne.s32.totalorder %s64, %s66
    %p70 = scmp.eq.s32.totalorder %s9, 0
    %p71 = por %p69, %p70
    %p72 = scmp.ne.s32.totalorder %s64, %s66
    %p73 = scmp.eq.s32.totalorder %s14, 1
    %p74 = por %p72, %p73
    %p75 = scmp.ne.s32.totalorder %s66, %s67
    %p76 = scmp.eq.s32.totalorder %s14, 0
    %p77 = por %p75, %p76
    %p78 = scmp.ne.s32.totalorder %s66, %s67
    %p79 = scmp.eq.s32.totalorder %s15, 1
    %p80 = por %p78, %p79
    %p82 = scmp.ne.s32.totalorder %s67, %s81
    %p83 = scmp.eq.s32.totalorder %s15, 0
    %p84 = por %p82, %p83
    %s85 = ssub.s32 %s9, %s16
    %p86 = scmp.eq.s32.totalorder %s85, 0
    %s88 = sadd.s32 %s87, 1
    %s89 = scalar_select %p86, %s87, %s88
    %p92 = pneg %p86
    %p93 = scmp.eq.s32.totalorder %s9, 1
    %p94 = por %p92, %p93
    %p95 = scmp.ne.s32.totalorder %s87, %s90
    %p96 = scmp.eq.s32.totalorder %s9, 0
    %p97 = por %p95, %p96
    %p98 = scmp.ne.s32.totalorder %s87, %s90
    %p99 = scmp.eq.s32.totalorder %s14, 1
    %p100 = por %p98, %p99
    %p101 = scmp.ne.s32.totalorder %s90, %s91
    %p102 = scmp.eq.s32.totalorder %s14, 0
    %p103 = por %p101, %p102
    %p104 = scmp.ne.s32.totalorder %s90, %s91
    %p105 = scmp.eq.s32.totalorder %s15, 1
    %p106 = por %p104, %p105
    %p108 = scmp.ne.s32.totalorder %s91, %s107
    %p109 = scmp.eq.s32.totalorder %s15, 0
    %p110 = por %p108, %p109
    %p111 = scmp.le.s32.totalorder 1, %s9
    %p112 = scmp.lt.s32.totalorder %s9, 3
    %p113 = pnand %p111, %p112
    %p114 = pneg %p113
    // Predicated region
    $region9: #{_lambda_.7} parent=5 // pred_check
      _
    $region10: #{_lambda_.7} parent=5 // pred_check_branch
      %116 = sbr.rel (%p113) target = $region12
    $region11: #{_lambda_.7} parent=5 // pred_region
      %s117 = ssub.s32 %s9, 1
      // Predicated region
      $region13: #{_lambda_.7} parent=11 // pred_check
        %p118 = pneg %p56
      $region14: #{_lambda_.7} parent=11 // pred_check_branch
        %120 = sbr.rel (%p118) target = $region16
      $region15: #{_lambda_.7} parent=11 // pred_region
        _
      $region16: #{_lambda_.7} parent=11 // pred_fallthru
        _
      // Predicated region
      $region17: #{_lambda_.7} parent=11 // pred_check
        %p121 = pneg %p77
      $region18: #{_lambda_.7} parent=11 // pred_check_branch
        %123 = sbr.rel (%p121) target = $region20
      $region19: #{_lambda_.7} parent=11 // pred_region
        _
      $region20: #{_lambda_.7} parent=11 // pred_fallthru
        _
    $region12: #{_lambda_.7} parent=5 // pred_fallthru
      _
    %p124 = scmp.lt.s32.totalorder %s9, 2
    // Predicated region
    $region21: #{_lambda_.7} parent=5 // pred_check
      %p125 = pneg %p124
    $region22: #{_lambda_.7} parent=5 // pred_check_branch
      %127 = sbr.rel (%p125) target = $region24
    $region23: #{_lambda_.7} parent=5 // pred_region
      // Predicated region
      $region25: #{_lambda_.7} parent=23 // pred_check
        %p128 = pneg %p29
      $region26: #{_lambda_.7} parent=23 // pred_check_branch
        %130 = sbr.rel (%p128) target = $region28
      $region27: #{_lambda_.7} parent=23 // pred_region
        %p131 = scmp.lt.s32.totalorder %s9, 1
        %s132 = scalar_select %p131, %s9, 1
        %s133 = smul.addr %s132, 272
        %s134 = smul.addr %s133, 4
        %s135 = scalar_lea.vmem %s0, %s134
      $region28: #{_lambda_.7} parent=23 // pred_fallthru
        _
    $region24: #{_lambda_.7} parent=5 // pred_fallthru
      _
    %p136 = scmp.le.s32.totalorder 1, %s9
    %p137 = scmp.lt.s32.totalorder %s9, 3
    %p138 = pnand %p136, %p137
    %p139 = pneg %p138
    // Predicated region
    $region29: #{_lambda_.7} parent=5 // pred_check
      _
    $region30: #{_lambda_.7} parent=5 // pred_check_branch
      %141 = sbr.rel (%p138) target = $region32
    $region31: #{_lambda_.7} parent=5 // pred_region
      %s142 = ssub.s32 %s9, 1
      %p143 = scmp.lt.s32.totalorder %s14, 1
      %s144 = scalar_select %p143, %s14, 1
      %s145 = smul.addr %s144, 272
      %s146 = smul.addr %s145, 4
      %s147 = scalar_lea.vmem %s0, %s146
      %p148 = pneg %p35
      %p149 = pneg %p32
      %p150 = pneg %p56
      %p151 = pneg %p53
      %p152 = pneg %p77
      %p153 = pneg %p74
      %p154 = pneg %p103
      %p155 = pneg %p100
      %p156 = scmp.lt.s32.totalorder %s14, 1
      %s157 = scalar_select %p156, %s14, 1
      %s158 = smul.addr %s157, 128
      %s159 = smul.addr %s158, 4
      %s160 = scalar_lea.vmem %s3, %s159
      %p161 = scmp.lt.s32.totalorder %s14, 1
      %s162 = scalar_select %p161, %s14, 1
      %s163 = smul.addr %s162, 272
      %s164 = smul.addr %s163, 4
      %s165 = scalar_lea.vmem %s0, %s164
      %p166 = scmp.lt.s32.totalorder %s14, 1
      %s167 = scalar_select %p166, %s14, 1
      %s168 = smul.addr %s167, 128
      %s169 = smul.addr %s168, 4
      %s170 = scalar_lea.vmem %s3, %s169
      %v172 = vld [vmem:[%s165] sm:$0xf]
      %v173 = vld [vmem:[%s165 + $0x4] sm:$0xf]
      %v174 = vld [vmem:[%s165 + $0x8] sm:$0xf]
      %v175 = vld [vmem:[%s165 + $0xc] sm:$0xf]
      %v176 = vld [vmem:[%s165 + $0x10] sm:$0xf]
      %v177 = vld [vmem:[%s165 + $0x14] sm:$0xf]
      %v178 = vld [vmem:[%s165 + $0x18] sm:$0xf]
      %v179 = vld [vmem:[%s165 + $0x1c] sm:$0xf]
      %v180 = vld [vmem:[%s165 + $0x20] sm:$0xf]
      %v181 = vld [vmem:[%s165 + $0x24] sm:$0xf]
      %v182 = vld [vmem:[%s165 + $0x28] sm:$0xf]
      %v183 = vld [vmem:[%s165 + $0x2c] sm:$0xf]
      %v184 = vld [vmem:[%s165 + $0x30] sm:$0xf]
      %v185 = vld [vmem:[%s165 + $0x34] sm:$0xf]
      %v186 = vld [vmem:[%s165 + $0x38] sm:$0xf]
      %v187 = vld [vmem:[%s165 + $0x3c] sm:$0xf]
      %v188 = vld [vmem:[%s165 + $0x40] sm:$0xf]
      %v189 = vld [vmem:[%s165 + $0x44] sm:$0xf]
      %v190 = vld [vmem:[%s165 + $0x48] sm:$0xf]
      %v191 = vld [vmem:[%s165 + $0x4c] sm:$0xf]
      %v192 = vld [vmem:[%s165 + $0x50] sm:$0xf]
      %v193 = vld [vmem:[%s165 + $0x54] sm:$0xf]
      %v194 = vld [vmem:[%s165 + $0x58] sm:$0xf]
      %v195 = vld [vmem:[%s165 + $0x5c] sm:$0xf]
      %v196 = vld [vmem:[%s165 + $0x60] sm:$0xf]
      %v197 = vld [vmem:[%s165 + $0x64] sm:$0xf]
      %v198 = vld [vmem:[%s165 + $0x68] sm:$0xf]
      %v199 = vld [vmem:[%s165 + $0x6c] sm:$0xf]
      %v200 = vld [vmem:[%s165 + $0x70] sm:$0xf]
      %v201 = vld [vmem:[%s165 + $0x74] sm:$0xf]
      %v202 = vld [vmem:[%s165 + $0x78] sm:$0xf]
      %v203 = vld [vmem:[%s165 + $0x7c] sm:$0xf]
      %v204 = vld [vmem:[%s165 + $0x80] sm:$0xf]
      %v205 = vld [vmem:[%s165 + $0x84] sm:$0xf]
      %v206 = vld [vmem:[%s165 + $0x88] sm:$0xf]
      %v207 = vld [vmem:[%s165 + $0x8c] sm:$0xf]
      %v208 = vld [vmem:[%s165 + $0x90] sm:$0xf]
      %v209 = vld [vmem:[%s165 + $0x94] sm:$0xf]
      %v210 = vld [vmem:[%s165 + $0x98] sm:$0xf]
      %v211 = vld [vmem:[%s165 + $0x9c] sm:$0xf]
      %v212 = vld [vmem:[%s165 + $0xa0] sm:$0xf]
      %v213 = vld [vmem:[%s165 + $0xa4] sm:$0xf]
      %v214 = vld [vmem:[%s165 + $0xa8] sm:$0xf]
      %v215 = vld [vmem:[%s165 + $0xac] sm:$0xf]
      %v216 = vld [vmem:[%s165 + $0xb0] sm:$0xf]
      %v217 = vld [vmem:[%s165 + $0xb4] sm:$0xf]
      %v218 = vld [vmem:[%s165 + $0xb8] sm:$0xf]
      %v219 = vld [vmem:[%s165 + $0xbc] sm:$0xf]
      %v220 = vld [vmem:[%s165 + $0xc0] sm:$0xf]
      %v221 = vld [vmem:[%s165 + $0xc4] sm:$0xf]
      %v222 = vld [vmem:[%s165 + $0xc8] sm:$0xf]
      %v223 = vld [vmem:[%s165 + $0xcc] sm:$0xf]
      %v224 = vld [vmem:[%s165 + $0xd0] sm:$0xf]
      %v225 = vld [vmem:[%s165 + $0xd4] sm:$0xf]
      %v226 = vld [vmem:[%s165 + $0xd8] sm:$0xf]
      %v227 = vld [vmem:[%s165 + $0xdc] sm:$0xf]
      %v228 = vld [vmem:[%s165 + $0xe0] sm:$0xf]
      %v229 = vld [vmem:[%s165 + $0xe4] sm:$0xf]
      %v230 = vld [vmem:[%s165 + $0xe8] sm:$0xf]
      %v231 = vld [vmem:[%s165 + $0xec] sm:$0xf]
      %v232 = vld [vmem:[%s165 + $0xf0] sm:$0xf]
      %v233 = vld [vmem:[%s165 + $0xf4] sm:$0xf]
      %v234 = vld [vmem:[%s165 + $0xf8] sm:$0xf]
      %v235 = vld [vmem:[%s165 + $0xfc] sm:$0xf]
      %v236 = vld [vmem:[%s165 + $0x100] sm:$0xf]
      %v237 = vld [vmem:[%s165 + $0x104] sm:$0xf]
      %v238 = vld [vmem:[%s165 + $0x108] sm:$0xf]
      %v239 = vld [vmem:[%s165 + $0x10c] sm:$0xf]
      %v240 = vld [vmem:[%s165 + $0x110] sm:$0xf]
      %v241 = vld [vmem:[%s165 + $0x114] sm:$0xf]
      %v242 = vld [vmem:[%s165 + $0x118] sm:$0xf]
      %v243 = vld [vmem:[%s165 + $0x11c] sm:$0xf]
      %v244 = vld [vmem:[%s165 + $0x120] sm:$0xf]
      %v245 = vld [vmem:[%s165 + $0x124] sm:$0xf]
      %v246 = vld [vmem:[%s165 + $0x128] sm:$0xf]
      %v247 = vld [vmem:[%s165 + $0x12c] sm:$0xf]
      %v248 = vld [vmem:[%s165 + $0x130] sm:$0xf]
      %v249 = vld [vmem:[%s165 + $0x134] sm:$0xf]
      %v250 = vld [vmem:[%s165 + $0x138] sm:$0xf]
      %v251 = vld [vmem:[%s165 + $0x13c] sm:$0xf]
      %v252 = vld [vmem:[%s165 + $0x140] sm:$0xf]
      %v253 = vld [vmem:[%s165 + $0x144] sm:$0xf]
      %v254 = vld [vmem:[%s165 + $0x148] sm:$0xf]
      %v255 = vld [vmem:[%s165 + $0x14c] sm:$0xf]
      %v256 = vld [vmem:[%s165 + $0x150] sm:$0xf]
      %v257 = vld [vmem:[%s165 + $0x154] sm:$0xf]
      %v258 = vld [vmem:[%s165 + $0x158] sm:$0xf]
      %v259 = vld [vmem:[%s165 + $0x15c] sm:$0xf]
      %v260 = vld [vmem:[%s165 + $0x160] sm:$0xf]
      %v261 = vld [vmem:[%s165 + $0x164] sm:$0xf]
      %v262 = vld [vmem:[%s165 + $0x168] sm:$0xf]
      %v263 = vld [vmem:[%s165 + $0x16c] sm:$0xf]
      %v264 = vld [vmem:[%s165 + $0x170] sm:$0xf]
      %v265 = vld [vmem:[%s165 + $0x174] sm:$0xf]
      %v266 = vld [vmem:[%s165 + $0x178] sm:$0xf]
      %v267 = vld [vmem:[%s165 + $0x17c] sm:$0xf]
      %v268 = vld [vmem:[%s165 + $0x180] sm:$0xf]
      %v269 = vld [vmem:[%s165 + $0x184] sm:$0xf]
      %v270 = vld [vmem:[%s165 + $0x188] sm:$0xf]
      %v271 = vld [vmem:[%s165 + $0x18c] sm:$0xf]
      %v272 = vld [vmem:[%s165 + $0x190] sm:$0xf]
      %v273 = vld [vmem:[%s165 + $0x194] sm:$0xf]
      %v274 = vld [vmem:[%s165 + $0x198] sm:$0xf]
      %v275 = vld [vmem:[%s165 + $0x19c] sm:$0xf]
      %v276 = vld [vmem:[%s165 + $0x1a0] sm:$0xf]
      %v277 = vld [vmem:[%s165 + $0x1a4] sm:$0xf]
      %v278 = vld [vmem:[%s165 + $0x1a8] sm:$0xf]
      %v279 = vld [vmem:[%s165 + $0x1ac] sm:$0xf]
      %v280 = vld [vmem:[%s165 + $0x1b0] sm:$0xf]
      %v281 = vld [vmem:[%s165 + $0x1b4] sm:$0xf]
      %v282 = vld [vmem:[%s165 + $0x1b8] sm:$0xf]
      %v283 = vld [vmem:[%s165 + $0x1bc] sm:$0xf]
      %v284 = vld [vmem:[%s165 + $0x1c0] sm:$0xf]
      %v285 = vld [vmem:[%s165 + $0x1c4] sm:$0xf]
      %v286 = vld [vmem:[%s165 + $0x1c8] sm:$0xf]
      %v287 = vld [vmem:[%s165 + $0x1cc] sm:$0xf]
      %v288 = vld [vmem:[%s165 + $0x1d0] sm:$0xf]
      %v289 = vld [vmem:[%s165 + $0x1d4] sm:$0xf]
      %v290 = vld [vmem:[%s165 + $0x1d8] sm:$0xf]
      %v291 = vld [vmem:[%s165 + $0x1dc] sm:$0xf]
      %v292 = vld [vmem:[%s165 + $0x1e0] sm:$0xf]
      %v293 = vld [vmem:[%s165 + $0x1e4] sm:$0xf]
      %v294 = vld [vmem:[%s165 + $0x1e8] sm:$0xf]
      %v295 = vld [vmem:[%s165 + $0x1ec] sm:$0xf]
      %v296 = vld [vmem:[%s165 + $0x1f0] sm:$0xf]
      %v297 = vld [vmem:[%s165 + $0x1f4] sm:$0xf]
      %v298 = vld [vmem:[%s165 + $0x1f8] sm:$0xf]
      %v299 = vld [vmem:[%s165 + $0x1fc] sm:$0xf]
      %v300 = vld [vmem:[%s1] sm:$0xf]
      %v301 = vld [vmem:[%s1 + $0x4] sm:$0xf]
      %s302 = scalar_lea.vmem %s165, 544
      %v303 = vld [vmem:[%s302] sm:$0xf]
      %v304 = vld [vmem:[%s302 + $0x4] sm:$0xf]
      %v305 = vld [vmem:[%s302 + $0x8] sm:$0xf]
      %v306 = vld [vmem:[%s302 + $0xc] sm:$0xf]
      %v307 = vld [vmem:[%s302 + $0x10] sm:$0xf]
      %v308 = vld [vmem:[%s302 + $0x14] sm:$0xf]
      %v309 = vld [vmem:[%s302 + $0x18] sm:$0xf]
      %v310 = vld [vmem:[%s302 + $0x1c] sm:$0xf]
      %v311 = vld [vmem:[%s302 + $0x20] sm:$0xf]
      %v312 = vld [vmem:[%s302 + $0x24] sm:$0xf]
      %v313 = vld [vmem:[%s302 + $0x28] sm:$0xf]
      %v314 = vld [vmem:[%s302 + $0x2c] sm:$0xf]
      %v315 = vld [vmem:[%s302 + $0x30] sm:$0xf]
      %v316 = vld [vmem:[%s302 + $0x34] sm:$0xf]
      %v317 = vld [vmem:[%s302 + $0x38] sm:$0xf]
      %v318 = vld [vmem:[%s302 + $0x3c] sm:$0xf]
      %v319 = vld [vmem:[%s302 + $0x40] sm:$0xf]
      %v320 = vld [vmem:[%s302 + $0x44] sm:$0xf]
      %v321 = vld [vmem:[%s302 + $0x48] sm:$0xf]
      %v322 = vld [vmem:[%s302 + $0x4c] sm:$0xf]
      %v323 = vld [vmem:[%s302 + $0x50] sm:$0xf]
      %v324 = vld [vmem:[%s302 + $0x54] sm:$0xf]
      %v325 = vld [vmem:[%s302 + $0x58] sm:$0xf]
      %v326 = vld [vmem:[%s302 + $0x5c] sm:$0xf]
      %v327 = vld [vmem:[%s302 + $0x60] sm:$0xf]
      %v328 = vld [vmem:[%s302 + $0x64] sm:$0xf]
      %v329 = vld [vmem:[%s302 + $0x68] sm:$0xf]
      %v330 = vld [vmem:[%s302 + $0x6c] sm:$0xf]
      %v331 = vld [vmem:[%s302 + $0x70] sm:$0xf]
      %v332 = vld [vmem:[%s302 + $0x74] sm:$0xf]
      %v333 = vld [vmem:[%s302 + $0x78] sm:$0xf]
      %v334 = vld [vmem:[%s302 + $0x7c] sm:$0xf]
      %v335 = vld [vmem:[%s302 + $0x80] sm:$0xf]
      %v336 = vld [vmem:[%s302 + $0x84] sm:$0xf]
      %v337 = vld [vmem:[%s302 + $0x88] sm:$0xf]
      %v338 = vld [vmem:[%s302 + $0x8c] sm:$0xf]
      %v339 = vld [vmem:[%s302 + $0x90] sm:$0xf]
      %v340 = vld [vmem:[%s302 + $0x94] sm:$0xf]
      %v341 = vld [vmem:[%s302 + $0x98] sm:$0xf]
      %v342 = vld [vmem:[%s302 + $0x9c] sm:$0xf]
      %v343 = vld [vmem:[%s302 + $0xa0] sm:$0xf]
      %v344 = vld [vmem:[%s302 + $0xa4] sm:$0xf]
      %v345 = vld [vmem:[%s302 + $0xa8] sm:$0xf]
      %v346 = vld [vmem:[%s302 + $0xac] sm:$0xf]
      %v347 = vld [vmem:[%s302 + $0xb0] sm:$0xf]
      %v348 = vld [vmem:[%s302 + $0xb4] sm:$0xf]
      %v349 = vld [vmem:[%s302 + $0xb8] sm:$0xf]
      %v350 = vld [vmem:[%s302 + $0xbc] sm:$0xf]
      %v351 = vld [vmem:[%s302 + $0xc0] sm:$0xf]
      %v352 = vld [vmem:[%s302 + $0xc4] sm:$0xf]
      %v353 = vld [vmem:[%s302 + $0xc8] sm:$0xf]
      %v354 = vld [vmem:[%s302 + $0xcc] sm:$0xf]
      %v355 = vld [vmem:[%s302 + $0xd0] sm:$0xf]
      %v356 = vld [vmem:[%s302 + $0xd4] sm:$0xf]
      %v357 = vld [vmem:[%s302 + $0xd8] sm:$0xf]
      %v358 = vld [vmem:[%s302 + $0xdc] sm:$0xf]
      %v359 = vld [vmem:[%s302 + $0xe0] sm:$0xf]
      %v360 = vld [vmem:[%s302 + $0xe4] sm:$0xf]
      %v361 = vld [vmem:[%s302 + $0xe8] sm:$0xf]
      %v362 = vld [vmem:[%s302 + $0xec] sm:$0xf]
      %v363 = vld [vmem:[%s302 + $0xf0] sm:$0xf]
      %v364 = vld [vmem:[%s302 + $0xf4] sm:$0xf]
      %v365 = vld [vmem:[%s302 + $0xf8] sm:$0xf]
      %v366 = vld [vmem:[%s302 + $0xfc] sm:$0xf]
      %v367 = vld [vmem:[%s302 + $0x100] sm:$0xf]
      %v368 = vld [vmem:[%s302 + $0x104] sm:$0xf]
      %v369 = vld [vmem:[%s302 + $0x108] sm:$0xf]
      %v370 = vld [vmem:[%s302 + $0x10c] sm:$0xf]
      %v371 = vld [vmem:[%s302 + $0x110] sm:$0xf]
      %v372 = vld [vmem:[%s302 + $0x114] sm:$0xf]
      %v373 = vld [vmem:[%s302 + $0x118] sm:$0xf]
      %v374 = vld [vmem:[%s302 + $0x11c] sm:$0xf]
      %v375 = vld [vmem:[%s302 + $0x120] sm:$0xf]
      %v376 = vld [vmem:[%s302 + $0x124] sm:$0xf]
      %v377 = vld [vmem:[%s302 + $0x128] sm:$0xf]
      %v378 = vld [vmem:[%s302 + $0x12c] sm:$0xf]
      %v379 = vld [vmem:[%s302 + $0x130] sm:$0xf]
      %v380 = vld [vmem:[%s302 + $0x134] sm:$0xf]
      %v381 = vld [vmem:[%s302 + $0x138] sm:$0xf]
      %v382 = vld [vmem:[%s302 + $0x13c] sm:$0xf]
      %v383 = vld [vmem:[%s302 + $0x140] sm:$0xf]
      %v384 = vld [vmem:[%s302 + $0x144] sm:$0xf]
      %v385 = vld [vmem:[%s302 + $0x148] sm:$0xf]
      %v386 = vld [vmem:[%s302 + $0x14c] sm:$0xf]
      %v387 = vld [vmem:[%s302 + $0x150] sm:$0xf]
      %v388 = vld [vmem:[%s302 + $0x154] sm:$0xf]
      %v389 = vld [vmem:[%s302 + $0x158] sm:$0xf]
      %v390 = vld [vmem:[%s302 + $0x15c] sm:$0xf]
      %v391 = vld [vmem:[%s302 + $0x160] sm:$0xf]
      %v392 = vld [vmem:[%s302 + $0x164] sm:$0xf]
      %v393 = vld [vmem:[%s302 + $0x168] sm:$0xf]
      %v394 = vld [vmem:[%s302 + $0x16c] sm:$0xf]
      %v395 = vld [vmem:[%s302 + $0x170] sm:$0xf]
      %v396 = vld [vmem:[%s302 + $0x174] sm:$0xf]
      %v397 = vld [vmem:[%s302 + $0x178] sm:$0xf]
      %v398 = vld [vmem:[%s302 + $0x17c] sm:$0xf]
      %v399 = vld [vmem:[%s302 + $0x180] sm:$0xf]
      %v400 = vld [vmem:[%s302 + $0x184] sm:$0xf]
      %v401 = vld [vmem:[%s302 + $0x188] sm:$0xf]
      %v402 = vld [vmem:[%s302 + $0x18c] sm:$0xf]
      %v403 = vld [vmem:[%s302 + $0x190] sm:$0xf]
      %v404 = vld [vmem:[%s302 + $0x194] sm:$0xf]
      %v405 = vld [vmem:[%s302 + $0x198] sm:$0xf]
      %v406 = vld [vmem:[%s302 + $0x19c] sm:$0xf]
      %v407 = vld [vmem:[%s302 + $0x1a0] sm:$0xf]
      %v408 = vld [vmem:[%s302 + $0x1a4] sm:$0xf]
      %v409 = vld [vmem:[%s302 + $0x1a8] sm:$0xf]
      %v410 = vld [vmem:[%s302 + $0x1ac] sm:$0xf]
      %v411 = vld [vmem:[%s302 + $0x1b0] sm:$0xf]
      %v412 = vld [vmem:[%s302 + $0x1b4] sm:$0xf]
      %v413 = vld [vmem:[%s302 + $0x1b8] sm:$0xf]
      %v414 = vld [vmem:[%s302 + $0x1bc] sm:$0xf]
      %v415 = vld [vmem:[%s302 + $0x1c0] sm:$0xf]
      %v416 = vld [vmem:[%s302 + $0x1c4] sm:$0xf]
      %v417 = vld [vmem:[%s302 + $0x1c8] sm:$0xf]
      %v418 = vld [vmem:[%s302 + $0x1cc] sm:$0xf]
      %v419 = vld [vmem:[%s302 + $0x1d0] sm:$0xf]
      %v420 = vld [vmem:[%s302 + $0x1d4] sm:$0xf]
      %v421 = vld [vmem:[%s302 + $0x1d8] sm:$0xf]
      %v422 = vld [vmem:[%s302 + $0x1dc] sm:$0xf]
      %v423 = vld [vmem:[%s302 + $0x1e0] sm:$0xf]
      %v424 = vld [vmem:[%s302 + $0x1e4] sm:$0xf]
      %v425 = vld [vmem:[%s302 + $0x1e8] sm:$0xf]
      %v426 = vld [vmem:[%s302 + $0x1ec] sm:$0xf]
      %v427 = vld [vmem:[%s302 + $0x1f0] sm:$0xf]
      %v428 = vld [vmem:[%s302 + $0x1f4] sm:$0xf]
      %v429 = vld [vmem:[%s302 + $0x1f8] sm:$0xf]
      %v430 = vld [vmem:[%s302 + $0x1fc] sm:$0xf]
      %s431 = scalar_lea.vmem %s1, 8
      %v432 = vld [vmem:[%s431] sm:$0xf]
      %v433 = vld [vmem:[%s431 + $0x4] sm:$0xf]
      %v562 = vunpack.c.l.b16 %v303
      %v563 = vunpack.c.l.b16 %v304
      %v564 = vunpack.c.l.b16 %v305
      %v565 = vunpack.c.l.b16 %v306
      %v566 = vunpack.c.l.b16 %v307
      %v567 = vunpack.c.l.b16 %v308
      %v568 = vunpack.c.l.b16 %v309
      %v569 = vunpack.c.l.b16 %v310
      %v570 = vunpack.c.l.b16 %v311
      %v571 = vunpack.c.l.b16 %v312
      %v572 = vunpack.c.l.b16 %v313
      %v573 = vunpack.c.l.b16 %v314
      %v574 = vunpack.c.l.b16 %v315
      %v575 = vunpack.c.l.b16 %v316
      %v576 = vunpack.c.l.b16 %v317
      %v577 = vunpack.c.l.b16 %v318
      %v578 = vunpack.c.l.b16 %v319
      %v579 = vunpack.c.l.b16 %v320
      %v580 = vunpack.c.l.b16 %v321
      %v581 = vunpack.c.l.b16 %v322
      %v582 = vunpack.c.l.b16 %v323
      %v583 = vunpack.c.l.b16 %v324
      %v584 = vunpack.c.l.b16 %v325
      %v585 = vunpack.c.l.b16 %v326
      %v586 = vunpack.c.l.b16 %v327
      %v587 = vunpack.c.l.b16 %v328
      %v588 = vunpack.c.l.b16 %v329
      %v589 = vunpack.c.l.b16 %v330
      %v590 = vunpack.c.l.b16 %v331
      %v591 = vunpack.c.l.b16 %v332
      %v592 = vunpack.c.l.b16 %v333
      %v593 = vunpack.c.l.b16 %v334
      %v594 = vunpack.c.l.b16 %v335
      %v595 = vunpack.c.l.b16 %v336
      %v596 = vunpack.c.l.b16 %v337
      %v597 = vunpack.c.l.b16 %v338
      %v598 = vunpack.c.l.b16 %v339
      %v599 = vunpack.c.l.b16 %v340
      %v600 = vunpack.c.l.b16 %v341
      %v601 = vunpack.c.l.b16 %v342
      %v602 = vunpack.c.l.b16 %v343
      %v603 = vunpack.c.l.b16 %v344
      %v604 = vunpack.c.l.b16 %v345
      %v605 = vunpack.c.l.b16 %v346
      %v606 = vunpack.c.l.b16 %v347
      %v607 = vunpack.c.l.b16 %v348
      %v608 = vunpack.c.l.b16 %v349
      %v609 = vunpack.c.l.b16 %v350
      %v610 = vunpack.c.l.b16 %v351
      %v611 = vunpack.c.l.b16 %v352
      %v612 = vunpack.c.l.b16 %v353
      %v613 = vunpack.c.l.b16 %v354
      %v614 = vunpack.c.l.b16 %v355
      %v615 = vunpack.c.l.b16 %v356
      %v616 = vunpack.c.l.b16 %v357
      %v617 = vunpack.c.l.b16 %v358
      %v618 = vunpack.c.l.b16 %v359
      %v619 = vunpack.c.l.b16 %v360
      %v620 = vunpack.c.l.b16 %v361
      %v621 = vunpack.c.l.b16 %v362
      %v622 = vunpack.c.l.b16 %v363
      %v623 = vunpack.c.l.b16 %v364
      %v624 = vunpack.c.l.b16 %v365
      %v625 = vunpack.c.l.b16 %v366
      %v626 = vunpack.c.l.b16 %v367
      %v627 = vunpack.c.l.b16 %v368
      %v628 = vunpack.c.l.b16 %v369
      %v629 = vunpack.c.l.b16 %v370
      %v630 = vunpack.c.l.b16 %v371
      %v631 = vunpack.c.l.b16 %v372
      %v632 = vunpack.c.l.b16 %v373
      %v633 = vunpack.c.l.b16 %v374
      %v634 = vunpack.c.l.b16 %v375
      %v635 = vunpack.c.l.b16 %v376
      %v636 = vunpack.c.l.b16 %v377
      %v637 = vunpack.c.l.b16 %v378
      %v638 = vunpack.c.l.b16 %v379
      %v639 = vunpack.c.l.b16 %v380
      %v640 = vunpack.c.l.b16 %v381
      %v641 = vunpack.c.l.b16 %v382
      %v642 = vunpack.c.l.b16 %v383
      %v643 = vunpack.c.l.b16 %v384
      %v644 = vunpack.c.l.b16 %v385
      %v645 = vunpack.c.l.b16 %v386
      %v646 = vunpack.c.l.b16 %v387
      %v647 = vunpack.c.l.b16 %v388
      %v648 = vunpack.c.l.b16 %v389
      %v649 = vunpack.c.l.b16 %v390
      %v650 = vunpack.c.l.b16 %v391
      %v651 = vunpack.c.l.b16 %v392
      %v652 = vunpack.c.l.b16 %v393
      %v653 = vunpack.c.l.b16 %v394
      %v654 = vunpack.c.l.b16 %v395
      %v655 = vunpack.c.l.b16 %v396
      %v656 = vunpack.c.l.b16 %v397
      %v657 = vunpack.c.l.b16 %v398
      %v658 = vunpack.c.l.b16 %v399
      %v659 = vunpack.c.l.b16 %v400
      %v660 = vunpack.c.l.b16 %v401
      %v661 = vunpack.c.l.b16 %v402
      %v662 = vunpack.c.l.b16 %v403
      %v663 = vunpack.c.l.b16 %v404
      %v664 = vunpack.c.l.b16 %v405
      %v665 = vunpack.c.l.b16 %v406
      %v666 = vunpack.c.l.b16 %v407
      %v667 = vunpack.c.l.b16 %v408
      %v668 = vunpack.c.l.b16 %v409
      %v669 = vunpack.c.l.b16 %v410
      %v670 = vunpack.c.l.b16 %v411
      %v671 = vunpack.c.l.b16 %v412
      %v672 = vunpack.c.l.b16 %v413
      %v673 = vunpack.c.l.b16 %v414
      %v674 = vunpack.c.l.b16 %v415
      %v675 = vunpack.c.l.b16 %v416
      %v676 = vunpack.c.l.b16 %v417
      %v677 = vunpack.c.l.b16 %v418
      %v678 = vunpack.c.l.b16 %v419
      %v679 = vunpack.c.l.b16 %v420
      %v680 = vunpack.c.l.b16 %v421
      %v681 = vunpack.c.l.b16 %v422
      %v682 = vunpack.c.l.b16 %v423
      %v683 = vunpack.c.l.b16 %v424
      %v684 = vunpack.c.l.b16 %v425
      %v685 = vunpack.c.l.b16 %v426
      %v686 = vunpack.c.l.b16 %v427
      %v687 = vunpack.c.l.b16 %v428
      %v688 = vunpack.c.l.b16 %v429
      %v689 = vunpack.c.l.b16 %v430
      %v690 = vpack.c.b16 %v563, %v562
      %v691 = vpack.c.b16 %v565, %v564
      %v692 = vpack.c.b16 %v567, %v566
      %v693 = vpack.c.b16 %v569, %v568
      %v694 = vpack.c.b16 %v571, %v570
      %v695 = vpack.c.b16 %v573, %v572
      %v696 = vpack.c.b16 %v575, %v574
      %v697 = vpack.c.b16 %v577, %v576
      %v698 = vpack.c.b16 %v579, %v578
      %v699 = vpack.c.b16 %v581, %v580
      %v700 = vpack.c.b16 %v583, %v582
      %v701 = vpack.c.b16 %v585, %v584
      %v702 = vpack.c.b16 %v587, %v586
      %v703 = vpack.c.b16 %v589, %v588
      %v704 = vpack.c.b16 %v591, %v590
      %v705 = vpack.c.b16 %v593, %v592
      %v706 = vpack.c.b16 %v595, %v594
      %v707 = vpack.c.b16 %v597, %v596
      %v708 = vpack.c.b16 %v599, %v598
      %v709 = vpack.c.b16 %v601, %v600
      %v710 = vpack.c.b16 %v603, %v602
      %v711 = vpack.c.b16 %v605, %v604
      %v712 = vpack.c.b16 %v607, %v606
      %v713 = vpack.c.b16 %v609, %v608
      %v714 = vpack.c.b16 %v611, %v610
      %v715 = vpack.c.b16 %v613, %v612
      %v716 = vpack.c.b16 %v615, %v614
      %v717 = vpack.c.b16 %v617, %v616
      %v718 = vpack.c.b16 %v619, %v618
      %v719 = vpack.c.b16 %v621, %v620
      %v720 = vpack.c.b16 %v623, %v622
      %v721 = vpack.c.b16 %v625, %v624
      %v722 = vpack.c.b16 %v627, %v626
      %v723 = vpack.c.b16 %v629, %v628
      %v724 = vpack.c.b16 %v631, %v630
      %v725 = vpack.c.b16 %v633, %v632
      %v726 = vpack.c.b16 %v635, %v634
      %v727 = vpack.c.b16 %v637, %v636
      %v728 = vpack.c.b16 %v639, %v638
      %v729 = vpack.c.b16 %v641, %v640
      %v730 = vpack.c.b16 %v643, %v642
      %v731 = vpack.c.b16 %v645, %v644
      %v732 = vpack.c.b16 %v647, %v646
      %v733 = vpack.c.b16 %v649, %v648
      %v734 = vpack.c.b16 %v651, %v650
      %v735 = vpack.c.b16 %v653, %v652
      %v736 = vpack.c.b16 %v655, %v654
      %v737 = vpack.c.b16 %v657, %v656
      %v738 = vpack.c.b16 %v659, %v658
      %v739 = vpack.c.b16 %v661, %v660
      %v740 = vpack.c.b16 %v663, %v662
      %v741 = vpack.c.b16 %v665, %v664
      %v742 = vpack.c.b16 %v667, %v666
      %v743 = vpack.c.b16 %v669, %v668
      %v744 = vpack.c.b16 %v671, %v670
      %v745 = vpack.c.b16 %v673, %v672
      %v746 = vpack.c.b16 %v675, %v674
      %v747 = vpack.c.b16 %v677, %v676
      %v748 = vpack.c.b16 %v679, %v678
      %v749 = vpack.c.b16 %v681, %v680
      %v750 = vpack.c.b16 %v683, %v682
      %v751 = vpack.c.b16 %v685, %v684
      %v752 = vpack.c.b16 %v687, %v686
      %v753 = vpack.c.b16 %v689, %v688
      %v756 = vunpack.c.l.b16 %v432
      %v757 = vunpack.c.l.b16 %v433
      %v758 = vpack.c.b16 %v757, %v756
      %vm760 = vcmask 130048
      %v762 = vsel %vm760, %v690, 0
      %v765 = vsel %vm760, %v691, 0
      %v768 = vsel %vm760, %v692, 0
      %v771 = vsel %vm760, %v693, 0
      %v774 = vsel %vm760, %v694, 0
      %v777 = vsel %vm760, %v695, 0
      %v780 = vsel %vm760, %v696, 0
      %v783 = vsel %vm760, %v697, 0
      %v786 = vsel %vm760, %v698, 0
      %v789 = vsel %vm760, %v699, 0
      %v792 = vsel %vm760, %v700, 0
      %v795 = vsel %vm760, %v701, 0
      %v798 = vsel %vm760, %v702, 0
      %v801 = vsel %vm760, %v703, 0
      %v804 = vsel %vm760, %v704, 0
      %v807 = vsel %vm760, %v705, 0
      %v810 = vsel %vm760, %v706, 0
      %v813 = vsel %vm760, %v707, 0
      %v816 = vsel %vm760, %v708, 0
      %v819 = vsel %vm760, %v709, 0
      %v822 = vsel %vm760, %v710, 0
      %v825 = vsel %vm760, %v711, 0
      %v828 = vsel %vm760, %v712, 0
      %v831 = vsel %vm760, %v713, 0
      %v834 = vsel %vm760, %v714, 0
      %v837 = vsel %vm760, %v715, 0
      %v840 = vsel %vm760, %v716, 0
      %v843 = vsel %vm760, %v717, 0
      %v846 = vsel %vm760, %v718, 0
      %v849 = vsel %vm760, %v719, 0
      %v852 = vsel %vm760, %v720, 0
      %v855 = vsel %vm760, %v721, 0
      %v858 = vsel %vm760, %v722, 0
      %v861 = vsel %vm760, %v723, 0
      %v864 = vsel %vm760, %v724, 0
      %v867 = vsel %vm760, %v725, 0
      %v870 = vsel %vm760, %v726, 0
      %v873 = vsel %vm760, %v727, 0
      %v876 = vsel %vm760, %v728, 0
      %v879 = vsel %vm760, %v729, 0
      %v882 = vsel %vm760, %v730, 0
      %v885 = vsel %vm760, %v731, 0
      %v888 = vsel %vm760, %v732, 0
      %v891 = vsel %vm760, %v733, 0
      %v894 = vsel %vm760, %v734, 0
      %v897 = vsel %vm760, %v735, 0
      %v900 = vsel %vm760, %v736, 0
      %v903 = vsel %vm760, %v737, 0
      %v906 = vsel %vm760, %v738, 0
      %v909 = vsel %vm760, %v739, 0
      %v912 = vsel %vm760, %v740, 0
      %v915 = vsel %vm760, %v741, 0
      %v918 = vsel %vm760, %v742, 0
      %v921 = vsel %vm760, %v743, 0
      %v924 = vsel %vm760, %v744, 0
      %v927 = vsel %vm760, %v745, 0
      %v930 = vsel %vm760, %v746, 0
      %v933 = vsel %vm760, %v747, 0
      %v936 = vsel %vm760, %v748, 0
      %v939 = vsel %vm760, %v749, 0
      %v942 = vsel %vm760, %v750, 0
      %v945 = vsel %vm760, %v751, 0
      %v948 = vsel %vm760, %v752, 0
      %v951 = vsel %vm760, %v753, 0
      %953 = vmatpush.bf16.msra.mxu0 0
      %954 = vmatpush.bf16.msra.mxu0 0
      %955 = vmatpush.bf16.msra.mxu0 0
      %956 = vmatpush.bf16.msra.mxu0 0
      %957 = vmatpush.bf16.msra.mxu0 0
      %958 = vmatpush.bf16.msra.mxu0 0
      %959 = vmatpush.bf16.msra.mxu0 0
      %960 = vmatpush.bf16.msra.mxu0 %v758
      %961 = vmatmul.bf16.gmra.mxu0 %v762
      %v962 = vpop.f32.mrf.mxu0
      %v963 = vadd.f32 0.0, %v962
      %v964 = vpop.f32.mrf.mxu0
      %v965 = vadd.f32 0.0, %v964
      %966 = vmatmul.bf16.gmra.mxu0 %v765
      %v967 = vpop.f32.mrf.mxu0
      %v968 = vadd.f32 0.0, %v967
      %v969 = vpop.f32.mrf.mxu0
      %v970 = vadd.f32 0.0, %v969
      %971 = vmatmul.bf16.gmra.mxu0 %v768
      %v972 = vpop.f32.mrf.mxu0
      %v973 = vadd.f32 0.0, %v972
      %v974 = vpop.f32.mrf.mxu0
      %v975 = vadd.f32 0.0, %v974
      %976 = vmatmul.bf16.gmra.mxu0 %v771
      %v977 = vpop.f32.mrf.mxu0
      %v978 = vadd.f32 0.0, %v977
      %v979 = vpop.f32.mrf.mxu0
      %v980 = vadd.f32 0.0, %v979
      %981 = vmatmul.bf16.gmra.mxu0 %v774
      %v982 = vpop.f32.mrf.mxu0
      %v983 = vadd.f32 0.0, %v982
      %v984 = vpop.f32.mrf.mxu0
      %v985 = vadd.f32 0.0, %v984
      %986 = vmatmul.bf16.gmra.mxu0 %v777
      %v987 = vpop.f32.mrf.mxu0
      %v988 = vadd.f32 0.0, %v987
      %v989 = vpop.f32.mrf.mxu0
      %v990 = vadd.f32 0.0, %v989
      %991 = vmatmul.bf16.gmra.mxu0 %v780
      %v992 = vpop.f32.mrf.mxu0
      %v993 = vadd.f32 0.0, %v992
      %v994 = vpop.f32.mrf.mxu0
      %v995 = vadd.f32 0.0, %v994
      %996 = vmatmul.bf16.gmra.mxu0 %v783
      %v997 = vpop.f32.mrf.mxu0
      %v998 = vadd.f32 0.0, %v997
      %v999 = vpop.f32.mrf.mxu0
      %v1000 = vadd.f32 0.0, %v999
      %1001 = vmatmul.bf16.gmra.mxu0 %v786
      %v1002 = vpop.f32.mrf.mxu0
      %v1003 = vadd.f32 0.0, %v1002
      %v1004 = vpop.f32.mrf.mxu0
      %v1005 = vadd.f32 0.0, %v1004
      %1006 = vmatmul.bf16.gmra.mxu0 %v789
      %v1007 = vpop.f32.mrf.mxu0
      %v1008 = vadd.f32 0.0, %v1007
      %v1009 = vpop.f32.mrf.mxu0
      %v1010 = vadd.f32 0.0, %v1009
      %1011 = vmatmul.bf16.gmra.mxu0 %v792
      %v1012 = vpop.f32.mrf.mxu0
      %v1013 = vadd.f32 0.0, %v1012
      %v1014 = vpop.f32.mrf.mxu0
      %v1015 = vadd.f32 0.0, %v1014
      %1016 = vmatmul.bf16.gmra.mxu0 %v795
      %v1017 = vpop.f32.mrf.mxu0
      %v1018 = vadd.f32 0.0, %v1017
      %v1019 = vpop.f32.mrf.mxu0
      %v1020 = vadd.f32 0.0, %v1019
      %1021 = vmatmul.bf16.gmra.mxu0 %v798
      %v1022 = vpop.f32.mrf.mxu0
      %v1023 = vadd.f32 0.0, %v1022
      %v1024 = vpop.f32.mrf.mxu0
      %v1025 = vadd.f32 0.0, %v1024
      %1026 = vmatmul.bf16.gmra.mxu0 %v801
      %v1027 = vpop.f32.mrf.mxu0
      %v1028 = vadd.f32 0.0, %v1027
      %v1029 = vpop.f32.mrf.mxu0
      %v1030 = vadd.f32 0.0, %v1029
      %1031 = vmatmul.bf16.gmra.mxu0 %v804
      %v1032 = vpop.f32.mrf.mxu0
      %v1033 = vadd.f32 0.0, %v1032
      %v1034 = vpop.f32.mrf.mxu0
      %v1035 = vadd.f32 0.0, %v1034
      %1036 = vmatmul.bf16.gmra.mxu0 %v807
      %v1037 = vpop.f32.mrf.mxu0
      %v1038 = vadd.f32 0.0, %v1037
      %v1039 = vpop.f32.mrf.mxu0
      %v1040 = vadd.f32 0.0, %v1039
      %1041 = vmatmul.bf16.gmra.mxu0 %v810
      %v1042 = vpop.f32.mrf.mxu0
      %v1043 = vadd.f32 0.0, %v1042
      %v1044 = vpop.f32.mrf.mxu0
      %v1045 = vadd.f32 0.0, %v1044
      %1046 = vmatmul.bf16.gmra.mxu0 %v813
      %v1047 = vpop.f32.mrf.mxu0
      %v1048 = vadd.f32 0.0, %v1047
      %v1049 = vpop.f32.mrf.mxu0
      %v1050 = vadd.f32 0.0, %v1049
      %1051 = vmatmul.bf16.gmra.mxu0 %v816
      %v1052 = vpop.f32.mrf.mxu0
      %v1053 = vadd.f32 0.0, %v1052
      %v1054 = vpop.f32.mrf.mxu0
      %v1055 = vadd.f32 0.0, %v1054
      %1056 = vmatmul.bf16.gmra.mxu0 %v819
      %v1057 = vpop.f32.mrf.mxu0
      %v1058 = vadd.f32 0.0, %v1057
      %v1059 = vpop.f32.mrf.mxu0
      %v1060 = vadd.f32 0.0, %v1059
      %1061 = vmatmul.bf16.gmra.mxu0 %v822
      %v1062 = vpop.f32.mrf.mxu0
      %v1063 = vadd.f32 0.0, %v1062
      %v1064 = vpop.f32.mrf.mxu0
      %v1065 = vadd.f32 0.0, %v1064
      %1066 = vmatmul.bf16.gmra.mxu0 %v825
      %v1067 = vpop.f32.mrf.mxu0
      %v1068 = vadd.f32 0.0, %v1067
      %v1069 = vpop.f32.mrf.mxu0
      %v1070 = vadd.f32 0.0, %v1069
      %1071 = vmatmul.bf16.gmra.mxu0 %v828
      %v1072 = vpop.f32.mrf.mxu0
      %v1073 = vadd.f32 0.0, %v1072
      %v1074 = vpop.f32.mrf.mxu0
      %v1075 = vadd.f32 0.0, %v1074
      %1076 = vmatmul.bf16.gmra.mxu0 %v831
      %v1077 = vpop.f32.mrf.mxu0
      %v1078 = vadd.f32 0.0, %v1077
      %v1079 = vpop.f32.mrf.mxu0
      %v1080 = vadd.f32 0.0, %v1079
      %1081 = vmatmul.bf16.gmra.mxu0 %v834
      %v1082 = vpop.f32.mrf.mxu0
      %v1083 = vadd.f32 0.0, %v1082
      %v1084 = vpop.f32.mrf.mxu0
      %v1085 = vadd.f32 0.0, %v1084
      %1086 = vmatmul.bf16.gmra.mxu0 %v837
      %v1087 = vpop.f32.mrf.mxu0
      %v1088 = vadd.f32 0.0, %v1087
      %v1089 = vpop.f32.mrf.mxu0
      %v1090 = vadd.f32 0.0, %v1089
      %1091 = vmatmul.bf16.gmra.mxu0 %v840
      %v1092 = vpop.f32.mrf.mxu0
      %v1093 = vadd.f32 0.0, %v1092
      %v1094 = vpop.f32.mrf.mxu0
      %v1095 = vadd.f32 0.0, %v1094
      %1096 = vmatmul.bf16.gmra.mxu0 %v843
      %v1097 = vpop.f32.mrf.mxu0
      %v1098 = vadd.f32 0.0, %v1097
      %v1099 = vpop.f32.mrf.mxu0
      %v1100 = vadd.f32 0.0, %v1099
      %1101 = vmatmul.bf16.gmra.mxu0 %v846
      %v1102 = vpop.f32.mrf.mxu0
      %v1103 = vadd.f32 0.0, %v1102
      %v1104 = vpop.f32.mrf.mxu0
      %v1105 = vadd.f32 0.0, %v1104
      %1106 = vmatmul.bf16.gmra.mxu0 %v849
      %v1107 = vpop.f32.mrf.mxu0
      %v1108 = vadd.f32 0.0, %v1107
      %v1109 = vpop.f32.mrf.mxu0
      %v1110 = vadd.f32 0.0, %v1109
      %1111 = vmatmul.bf16.gmra.mxu0 %v852
      %v1112 = vpop.f32.mrf.mxu0
      %v1113 = vadd.f32 0.0, %v1112
      %v1114 = vpop.f32.mrf.mxu0
      %v1115 = vadd.f32 0.0, %v1114
      %1116 = vmatmul.bf16.gmra.mxu0 %v855
      %v1117 = vpop.f32.mrf.mxu0
      %v1118 = vadd.f32 0.0, %v1117
      %v1119 = vpop.f32.mrf.mxu0
      %v1120 = vadd.f32 0.0, %v1119
      %1121 = vmatmul.bf16.gmra.mxu0 %v858
      %v1122 = vpop.f32.mrf.mxu0
      %v1123 = vadd.f32 0.0, %v1122
      %v1124 = vpop.f32.mrf.mxu0
      %v1125 = vadd.f32 0.0, %v1124
      %1126 = vmatmul.bf16.gmra.mxu0 %v861
      %v1127 = vpop.f32.mrf.mxu0
      %v1128 = vadd.f32 0.0, %v1127
      %v1129 = vpop.f32.mrf.mxu0
      %v1130 = vadd.f32 0.0, %v1129
      %1131 = vmatmul.bf16.gmra.mxu0 %v864
      %v1132 = vpop.f32.mrf.mxu0
      %v1133 = vadd.f32 0.0, %v1132
      %v1134 = vpop.f32.mrf.mxu0
      %v1135 = vadd.f32 0.0, %v1134
      %1136 = vmatmul.bf16.gmra.mxu0 %v867
      %v1137 = vpop.f32.mrf.mxu0
      %v1138 = vadd.f32 0.0, %v1137
      %v1139 = vpop.f32.mrf.mxu0
      %v1140 = vadd.f32 0.0, %v1139
      %1141 = vmatmul.bf16.gmra.mxu0 %v870
      %v1142 = vpop.f32.mrf.mxu0
      %v1143 = vadd.f32 0.0, %v1142
      %v1144 = vpop.f32.mrf.mxu0
      %v1145 = vadd.f32 0.0, %v1144
      %1146 = vmatmul.bf16.gmra.mxu0 %v873
      %v1147 = vpop.f32.mrf.mxu0
      %v1148 = vadd.f32 0.0, %v1147
      %v1149 = vpop.f32.mrf.mxu0
      %v1150 = vadd.f32 0.0, %v1149
      %1151 = vmatmul.bf16.gmra.mxu0 %v876
      %v1152 = vpop.f32.mrf.mxu0
      %v1153 = vadd.f32 0.0, %v1152
      %v1154 = vpop.f32.mrf.mxu0
      %v1155 = vadd.f32 0.0, %v1154
      %1156 = vmatmul.bf16.gmra.mxu0 %v879
      %v1157 = vpop.f32.mrf.mxu0
      %v1158 = vadd.f32 0.0, %v1157
      %v1159 = vpop.f32.mrf.mxu0
      %v1160 = vadd.f32 0.0, %v1159
      %1161 = vmatmul.bf16.gmra.mxu0 %v882
      %v1162 = vpop.f32.mrf.mxu0
      %v1163 = vadd.f32 0.0, %v1162
      %v1164 = vpop.f32.mrf.mxu0
      %v1165 = vadd.f32 0.0, %v1164
      %1166 = vmatmul.bf16.gmra.mxu0 %v885
      %v1167 = vpop.f32.mrf.mxu0
      %v1168 = vadd.f32 0.0, %v1167
      %v1169 = vpop.f32.mrf.mxu0
      %v1170 = vadd.f32 0.0, %v1169
      %1171 = vmatmul.bf16.gmra.mxu0 %v888
      %v1172 = vpop.f32.mrf.mxu0
      %v1173 = vadd.f32 0.0, %v1172
      %v1174 = vpop.f32.mrf.mxu0
      %v1175 = vadd.f32 0.0, %v1174
      %1176 = vmatmul.bf16.gmra.mxu0 %v891
      %v1177 = vpop.f32.mrf.mxu0
      %v1178 = vadd.f32 0.0, %v1177
      %v1179 = vpop.f32.mrf.mxu0
      %v1180 = vadd.f32 0.0, %v1179
      %1181 = vmatmul.bf16.gmra.mxu0 %v894
      %v1182 = vpop.f32.mrf.mxu0
      %v1183 = vadd.f32 0.0, %v1182
      %v1184 = vpop.f32.mrf.mxu0
      %v1185 = vadd.f32 0.0, %v1184
      %1186 = vmatmul.bf16.gmra.mxu0 %v897
      %v1187 = vpop.f32.mrf.mxu0
      %v1188 = vadd.f32 0.0, %v1187
      %v1189 = vpop.f32.mrf.mxu0
      %v1190 = vadd.f32 0.0, %v1189
      %1191 = vmatmul.bf16.gmra.mxu0 %v900
      %v1192 = vpop.f32.mrf.mxu0
      %v1193 = vadd.f32 0.0, %v1192
      %v1194 = vpop.f32.mrf.mxu0
      %v1195 = vadd.f32 0.0, %v1194
      %1196 = vmatmul.bf16.gmra.mxu0 %v903
      %v1197 = vpop.f32.mrf.mxu0
      %v1198 = vadd.f32 0.0, %v1197
      %v1199 = vpop.f32.mrf.mxu0
      %v1200 = vadd.f32 0.0, %v1199
      %1201 = vmatmul.bf16.gmra.mxu0 %v906
      %v1202 = vpop.f32.mrf.mxu0
      %v1203 = vadd.f32 0.0, %v1202
      %v1204 = vpop.f32.mrf.mxu0
      %v1205 = vadd.f32 0.0, %v1204
      %1206 = vmatmul.bf16.gmra.mxu0 %v909
      %v1207 = vpop.f32.mrf.mxu0
      %v1208 = vadd.f32 0.0, %v1207
      %v1209 = vpop.f32.mrf.mxu0
      %v1210 = vadd.f32 0.0, %v1209
      %1211 = vmatmul.bf16.gmra.mxu0 %v912
      %v1212 = vpop.f32.mrf.mxu0
      %v1213 = vadd.f32 0.0, %v1212
      %v1214 = vpop.f32.mrf.mxu0
      %v1215 = vadd.f32 0.0, %v1214
      %1216 = vmatmul.bf16.gmra.mxu0 %v915
      %v1217 = vpop.f32.mrf.mxu0
      %v1218 = vadd.f32 0.0, %v1217
      %v1219 = vpop.f32.mrf.mxu0
      %v1220 = vadd.f32 0.0, %v1219
      %1221 = vmatmul.bf16.gmra.mxu0 %v918
      %v1222 = vpop.f32.mrf.mxu0
      %v1223 = vadd.f32 0.0, %v1222
      %v1224 = vpop.f32.mrf.mxu0
      %v1225 = vadd.f32 0.0, %v1224
      %1226 = vmatmul.bf16.gmra.mxu0 %v921
      %v1227 = vpop.f32.mrf.mxu0
      %v1228 = vadd.f32 0.0, %v1227
      %v1229 = vpop.f32.mrf.mxu0
      %v1230 = vadd.f32 0.0, %v1229
      %1231 = vmatmul.bf16.gmra.mxu0 %v924
      %v1232 = vpop.f32.mrf.mxu0
      %v1233 = vadd.f32 0.0, %v1232
      %v1234 = vpop.f32.mrf.mxu0
      %v1235 = vadd.f32 0.0, %v1234
      %1236 = vmatmul.bf16.gmra.mxu0 %v927
      %v1237 = vpop.f32.mrf.mxu0
      %v1238 = vadd.f32 0.0, %v1237
      %v1239 = vpop.f32.mrf.mxu0
      %v1240 = vadd.f32 0.0, %v1239
      %1241 = vmatmul.bf16.gmra.mxu0 %v930
      %v1242 = vpop.f32.mrf.mxu0
      %v1243 = vadd.f32 0.0, %v1242
      %v1244 = vpop.f32.mrf.mxu0
      %v1245 = vadd.f32 0.0, %v1244
      %1246 = vmatmul.bf16.gmra.mxu0 %v933
      %v1247 = vpop.f32.mrf.mxu0
      %v1248 = vadd.f32 0.0, %v1247
      %v1249 = vpop.f32.mrf.mxu0
      %v1250 = vadd.f32 0.0, %v1249
      %1251 = vmatmul.bf16.gmra.mxu0 %v936
      %v1252 = vpop.f32.mrf.mxu0
      %v1253 = vadd.f32 0.0, %v1252
      %v1254 = vpop.f32.mrf.mxu0
      %v1255 = vadd.f32 0.0, %v1254
      %1256 = vmatmul.bf16.gmra.mxu0 %v939
      %v1257 = vpop.f32.mrf.mxu0
      %v1258 = vadd.f32 0.0, %v1257
      %v1259 = vpop.f32.mrf.mxu0
      %v1260 = vadd.f32 0.0, %v1259
      %1261 = vmatmul.bf16.gmra.mxu0 %v942
      %v1262 = vpop.f32.mrf.mxu0
      %v1263 = vadd.f32 0.0, %v1262
      %v1264 = vpop.f32.mrf.mxu0
      %v1265 = vadd.f32 0.0, %v1264
      %1266 = vmatmul.bf16.gmra.mxu0 %v945
      %v1267 = vpop.f32.mrf.mxu0
      %v1268 = vadd.f32 0.0, %v1267
      %v1269 = vpop.f32.mrf.mxu0
      %v1270 = vadd.f32 0.0, %v1269
      %1271 = vmatmul.bf16.gmra.mxu0 %v948
      %v1272 = vpop.f32.mrf.mxu0
      %v1273 = vadd.f32 0.0, %v1272
      %v1274 = vpop.f32.mrf.mxu0
      %v1275 = vadd.f32 0.0, %v1274
      %1276 = vmatmul.bf16.gmra.mxu0 %v951
      %v1277 = vpop.f32.mrf.mxu0
      %v1278 = vadd.f32 0.0, %v1277
      %v1279 = vpop.f32.mrf.mxu0
      %v1280 = vadd.f32 0.0, %v1279
      %1281 = vdwg.mxu0
      %v1410 = vunpack.c.l.b16 %v172
      %v1411 = vunpack.c.l.b16 %v173
      %v1412 = vunpack.c.l.b16 %v174
      %v1413 = vunpack.c.l.b16 %v175
      %v1414 = vunpack.c.l.b16 %v176
      %v1415 = vunpack.c.l.b16 %v177
      %v1416 = vunpack.c.l.b16 %v178
      %v1417 = vunpack.c.l.b16 %v179
      %v1418 = vunpack.c.l.b16 %v180
      %v1419 = vunpack.c.l.b16 %v181
      %v1420 = vunpack.c.l.b16 %v182
      %v1421 = vunpack.c.l.b16 %v183
      %v1422 = vunpack.c.l.b16 %v184
      %v1423 = vunpack.c.l.b16 %v185
      %v1424 = vunpack.c.l.b16 %v186
      %v1425 = vunpack.c.l.b16 %v187
      %v1426 = vunpack.c.l.b16 %v188
      %v1427 = vunpack.c.l.b16 %v189
      %v1428 = vunpack.c.l.b16 %v190
      %v1429 = vunpack.c.l.b16 %v191
      %v1430 = vunpack.c.l.b16 %v192
      %v1431 = vunpack.c.l.b16 %v193
      %v1432 = vunpack.c.l.b16 %v194
      %v1433 = vunpack.c.l.b16 %v195
      %v1434 = vunpack.c.l.b16 %v196
      %v1435 = vunpack.c.l.b16 %v197
      %v1436 = vunpack.c.l.b16 %v198
      %v1437 = vunpack.c.l.b16 %v199
      %v1438 = vunpack.c.l.b16 %v200
      %v1439 = vunpack.c.l.b16 %v201
      %v1440 = vunpack.c.l.b16 %v202
      %v1441 = vunpack.c.l.b16 %v203
      %v1442 = vunpack.c.l.b16 %v204
      %v1443 = vunpack.c.l.b16 %v205
      %v1444 = vunpack.c.l.b16 %v206
      %v1445 = vunpack.c.l.b16 %v207
      %v1446 = vunpack.c.l.b16 %v208
      %v1447 = vunpack.c.l.b16 %v209
      %v1448 = vunpack.c.l.b16 %v210
      %v1449 = vunpack.c.l.b16 %v211
      %v1450 = vunpack.c.l.b16 %v212
      %v1451 = vunpack.c.l.b16 %v213
      %v1452 = vunpack.c.l.b16 %v214
      %v1453 = vunpack.c.l.b16 %v215
      %v1454 = vunpack.c.l.b16 %v216
      %v1455 = vunpack.c.l.b16 %v217
      %v1456 = vunpack.c.l.b16 %v218
      %v1457 = vunpack.c.l.b16 %v219
      %v1458 = vunpack.c.l.b16 %v220
      %v1459 = vunpack.c.l.b16 %v221
      %v1460 = vunpack.c.l.b16 %v222
      %v1461 = vunpack.c.l.b16 %v223
      %v1462 = vunpack.c.l.b16 %v224
      %v1463 = vunpack.c.l.b16 %v225
      %v1464 = vunpack.c.l.b16 %v226
      %v1465 = vunpack.c.l.b16 %v227
      %v1466 = vunpack.c.l.b16 %v228
      %v1467 = vunpack.c.l.b16 %v229
      %v1468 = vunpack.c.l.b16 %v230
      %v1469 = vunpack.c.l.b16 %v231
      %v1470 = vunpack.c.l.b16 %v232
      %v1471 = vunpack.c.l.b16 %v233
      %v1472 = vunpack.c.l.b16 %v234
      %v1473 = vunpack.c.l.b16 %v235
      %v1474 = vunpack.c.l.b16 %v236
      %v1475 = vunpack.c.l.b16 %v237
      %v1476 = vunpack.c.l.b16 %v238
      %v1477 = vunpack.c.l.b16 %v239
      %v1478 = vunpack.c.l.b16 %v240
      %v1479 = vunpack.c.l.b16 %v241
      %v1480 = vunpack.c.l.b16 %v242
      %v1481 = vunpack.c.l.b16 %v243
      %v1482 = vunpack.c.l.b16 %v244
      %v1483 = vunpack.c.l.b16 %v245
      %v1484 = vunpack.c.l.b16 %v246
      %v1485 = vunpack.c.l.b16 %v247
      %v1486 = vunpack.c.l.b16 %v248
      %v1487 = vunpack.c.l.b16 %v249
      %v1488 = vunpack.c.l.b16 %v250
      %v1489 = vunpack.c.l.b16 %v251
      %v1490 = vunpack.c.l.b16 %v252
      %v1491 = vunpack.c.l.b16 %v253
      %v1492 = vunpack.c.l.b16 %v254
      %v1493 = vunpack.c.l.b16 %v255
      %v1494 = vunpack.c.l.b16 %v256
      %v1495 = vunpack.c.l.b16 %v257
      %v1496 = vunpack.c.l.b16 %v258
      %v1497 = vunpack.c.l.b16 %v259
      %v1498 = vunpack.c.l.b16 %v260
      %v1499 = vunpack.c.l.b16 %v261
      %v1500 = vunpack.c.l.b16 %v262
      %v1501 = vunpack.c.l.b16 %v263
      %v1502 = vunpack.c.l.b16 %v264
      %v1503 = vunpack.c.l.b16 %v265
      %v1504 = vunpack.c.l.b16 %v266
      %v1505 = vunpack.c.l.b16 %v267
      %v1506 = vunpack.c.l.b16 %v268
      %v1507 = vunpack.c.l.b16 %v269
      %v1508 = vunpack.c.l.b16 %v270
      %v1509 = vunpack.c.l.b16 %v271
      %v1510 = vunpack.c.l.b16 %v272
      %v1511 = vunpack.c.l.b16 %v273
      %v1512 = vunpack.c.l.b16 %v274
      %v1513 = vunpack.c.l.b16 %v275
      %v1514 = vunpack.c.l.b16 %v276
      %v1515 = vunpack.c.l.b16 %v277
      %v1516 = vunpack.c.l.b16 %v278
      %v1517 = vunpack.c.l.b16 %v279
      %v1518 = vunpack.c.l.b16 %v280
      %v1519 = vunpack.c.l.b16 %v281
      %v1520 = vunpack.c.l.b16 %v282
      %v1521 = vunpack.c.l.b16 %v283
      %v1522 = vunpack.c.l.b16 %v284
      %v1523 = vunpack.c.l.b16 %v285
      %v1524 = vunpack.c.l.b16 %v286
      %v1525 = vunpack.c.l.b16 %v287
      %v1526 = vunpack.c.l.b16 %v288
      %v1527 = vunpack.c.l.b16 %v289
      %v1528 = vunpack.c.l.b16 %v290
      %v1529 = vunpack.c.l.b16 %v291
      %v1530 = vunpack.c.l.b16 %v292
      %v1531 = vunpack.c.l.b16 %v293
      %v1532 = vunpack.c.l.b16 %v294
      %v1533 = vunpack.c.l.b16 %v295
      %v1534 = vunpack.c.l.b16 %v296
      %v1535 = vunpack.c.l.b16 %v297
      %v1536 = vunpack.c.l.b16 %v298
      %v1537 = vunpack.c.l.b16 %v299
      %v1538 = vpack.c.b16 %v1411, %v1410
      %v1539 = vpack.c.b16 %v1413, %v1412
      %v1540 = vpack.c.b16 %v1415, %v1414
      %v1541 = vpack.c.b16 %v1417, %v1416
      %v1542 = vpack.c.b16 %v1419, %v1418
      %v1543 = vpack.c.b16 %v1421, %v1420
      %v1544 = vpack.c.b16 %v1423, %v1422
      %v1545 = vpack.c.b16 %v1425, %v1424
      %v1546 = vpack.c.b16 %v1427, %v1426
      %v1547 = vpack.c.b16 %v1429, %v1428
      %v1548 = vpack.c.b16 %v1431, %v1430
      %v1549 = vpack.c.b16 %v1433, %v1432
      %v1550 = vpack.c.b16 %v1435, %v1434
      %v1551 = vpack.c.b16 %v1437, %v1436
      %v1552 = vpack.c.b16 %v1439, %v1438
      %v1553 = vpack.c.b16 %v1441, %v1440
      %v1554 = vpack.c.b16 %v1443, %v1442
      %v1555 = vpack.c.b16 %v1445, %v1444
      %v1556 = vpack.c.b16 %v1447, %v1446
      %v1557 = vpack.c.b16 %v1449, %v1448
      %v1558 = vpack.c.b16 %v1451, %v1450
      %v1559 = vpack.c.b16 %v1453, %v1452
      %v1560 = vpack.c.b16 %v1455, %v1454
      %v1561 = vpack.c.b16 %v1457, %v1456
      %v1562 = vpack.c.b16 %v1459, %v1458
      %v1563 = vpack.c.b16 %v1461, %v1460
      %v1564 = vpack.c.b16 %v1463, %v1462
      %v1565 = vpack.c.b16 %v1465, %v1464
      %v1566 = vpack.c.b16 %v1467, %v1466
      %v1567 = vpack.c.b16 %v1469, %v1468
      %v1568 = vpack.c.b16 %v1471, %v1470
      %v1569 = vpack.c.b16 %v1473, %v1472
      %v1570 = vpack.c.b16 %v1475, %v1474
      %v1571 = vpack.c.b16 %v1477, %v1476
      %v1572 = vpack.c.b16 %v1479, %v1478
      %v1573 = vpack.c.b16 %v1481, %v1480
      %v1574 = vpack.c.b16 %v1483, %v1482
      %v1575 = vpack.c.b16 %v1485, %v1484
      %v1576 = vpack.c.b16 %v1487, %v1486
      %v1577 = vpack.c.b16 %v1489, %v1488
      %v1578 = vpack.c.b16 %v1491, %v1490
      %v1579 = vpack.c.b16 %v1493, %v1492
      %v1580 = vpack.c.b16 %v1495, %v1494
      %v1581 = vpack.c.b16 %v1497, %v1496
      %v1582 = vpack.c.b16 %v1499, %v1498
      %v1583 = vpack.c.b16 %v1501, %v1500
      %v1584 = vpack.c.b16 %v1503, %v1502
      %v1585 = vpack.c.b16 %v1505, %v1504
      %v1586 = vpack.c.b16 %v1507, %v1506
      %v1587 = vpack.c.b16 %v1509, %v1508
      %v1588 = vpack.c.b16 %v1511, %v1510
      %v1589 = vpack.c.b16 %v1513, %v1512
      %v1590 = vpack.c.b16 %v1515, %v1514
      %v1591 = vpack.c.b16 %v1517, %v1516
      %v1592 = vpack.c.b16 %v1519, %v1518
      %v1593 = vpack.c.b16 %v1521, %v1520
      %v1594 = vpack.c.b16 %v1523, %v1522
      %v1595 = vpack.c.b16 %v1525, %v1524
      %v1596 = vpack.c.b16 %v1527, %v1526
      %v1597 = vpack.c.b16 %v1529, %v1528
      %v1598 = vpack.c.b16 %v1531, %v1530
      %v1599 = vpack.c.b16 %v1533, %v1532
      %v1600 = vpack.c.b16 %v1535, %v1534
      %v1601 = vpack.c.b16 %v1537, %v1536
      %v1604 = vunpack.c.l.b16 %v300
      %v1605 = vunpack.c.l.b16 %v301
      %v1606 = vpack.c.b16 %v1605, %v1604
      %v1609 = vsel %vm760, %v1538, 0
      %v1612 = vsel %vm760, %v1539, 0
      %v1615 = vsel %vm760, %v1540, 0
      %v1618 = vsel %vm760, %v1541, 0
      %v1621 = vsel %vm760, %v1542, 0
      %v1624 = vsel %vm760, %v1543, 0
      %v1627 = vsel %vm760, %v1544, 0
      %v1630 = vsel %vm760, %v1545, 0
      %v1633 = vsel %vm760, %v1546, 0
      %v1636 = vsel %vm760, %v1547, 0
      %v1639 = vsel %vm760, %v1548, 0
      %v1642 = vsel %vm760, %v1549, 0
      %v1645 = vsel %vm760, %v1550, 0
      %v1648 = vsel %vm760, %v1551, 0
      %v1651 = vsel %vm760, %v1552, 0
      %v1654 = vsel %vm760, %v1553, 0
      %v1657 = vsel %vm760, %v1554, 0
      %v1660 = vsel %vm760, %v1555, 0
      %v1663 = vsel %vm760, %v1556, 0
      %v1666 = vsel %vm760, %v1557, 0
      %v1669 = vsel %vm760, %v1558, 0
      %v1672 = vsel %vm760, %v1559, 0
      %v1675 = vsel %vm760, %v1560, 0
      %v1678 = vsel %vm760, %v1561, 0
      %v1681 = vsel %vm760, %v1562, 0
      %v1684 = vsel %vm760, %v1563, 0
      %v1687 = vsel %vm760, %v1564, 0
      %v1690 = vsel %vm760, %v1565, 0
      %v1693 = vsel %vm760, %v1566, 0
      %v1696 = vsel %vm760, %v1567, 0
      %v1699 = vsel %vm760, %v1568, 0
      %v1702 = vsel %vm760, %v1569, 0
      %v1705 = vsel %vm760, %v1570, 0
      %v1708 = vsel %vm760, %v1571, 0
      %v1711 = vsel %vm760, %v1572, 0
      %v1714 = vsel %vm760, %v1573, 0
      %v1717 = vsel %vm760, %v1574, 0
      %v1720 = vsel %vm760, %v1575, 0
      %v1723 = vsel %vm760, %v1576, 0
      %v1726 = vsel %vm760, %v1577, 0
      %v1729 = vsel %vm760, %v1578, 0
      %v1732 = vsel %vm760, %v1579, 0
      %v1735 = vsel %vm760, %v1580, 0
      %v1738 = vsel %vm760, %v1581, 0
      %v1741 = vsel %vm760, %v1582, 0
      %v1744 = vsel %vm760, %v1583, 0
      %v1747 = vsel %vm760, %v1584, 0
      %v1750 = vsel %vm760, %v1585, 0
      %v1753 = vsel %vm760, %v1586, 0
      %v1756 = vsel %vm760, %v1587, 0
      %v1759 = vsel %vm760, %v1588, 0
      %v1762 = vsel %vm760, %v1589, 0
      %v1765 = vsel %vm760, %v1590, 0
      %v1768 = vsel %vm760, %v1591, 0
      %v1771 = vsel %vm760, %v1592, 0
      %v1774 = vsel %vm760, %v1593, 0
      %v1777 = vsel %vm760, %v1594, 0
      %v1780 = vsel %vm760, %v1595, 0
      %v1783 = vsel %vm760, %v1596, 0
      %v1786 = vsel %vm760, %v1597, 0
      %v1789 = vsel %vm760, %v1598, 0
      %v1792 = vsel %vm760, %v1599, 0
      %v1795 = vsel %vm760, %v1600, 0
      %v1798 = vsel %vm760, %v1601, 0
      %1800 = vmatpush.bf16.msra.mxu0 0
      %1801 = vmatpush.bf16.msra.mxu0 0
      %1802 = vmatpush.bf16.msra.mxu0 0
      %1803 = vmatpush.bf16.msra.mxu0 0
      %1804 = vmatpush.bf16.msra.mxu0 0
      %1805 = vmatpush.bf16.msra.mxu0 0
      %1806 = vmatpush.bf16.msra.mxu0 0
      %1807 = vmatpush.bf16.msra.mxu0 %v1606
      %1808 = vmatmul.bf16.gmra.mxu0 %v1609
      %v1809 = vpop.f32.mrf.mxu0
      %v1810 = vadd.f32 %v963, %v1809
      %v1811 = vpop.f32.mrf.mxu0
      %v1812 = vadd.f32 %v965, %v1811
      %1813 = vmatmul.bf16.gmra.mxu0 %v1612
      %v1814 = vpop.f32.mrf.mxu0
      %v1815 = vadd.f32 %v968, %v1814
      %v1816 = vpop.f32.mrf.mxu0
      %v1817 = vadd.f32 %v970, %v1816
      %1818 = vmatmul.bf16.gmra.mxu0 %v1615
      %v1819 = vpop.f32.mrf.mxu0
      %v1820 = vadd.f32 %v973, %v1819
      %v1821 = vpop.f32.mrf.mxu0
      %v1822 = vadd.f32 %v975, %v1821
      %1823 = vmatmul.bf16.gmra.mxu0 %v1618
      %v1824 = vpop.f32.mrf.mxu0
      %v1825 = vadd.f32 %v978, %v1824
      %v1826 = vpop.f32.mrf.mxu0
      %v1827 = vadd.f32 %v980, %v1826
      %1828 = vmatmul.bf16.gmra.mxu0 %v1621
      %v1829 = vpop.f32.mrf.mxu0
      %v1830 = vadd.f32 %v983, %v1829
      %v1831 = vpop.f32.mrf.mxu0
      %v1832 = vadd.f32 %v985, %v1831
      %1833 = vmatmul.bf16.gmra.mxu0 %v1624
      %v1834 = vpop.f32.mrf.mxu0
      %v1835 = vadd.f32 %v988, %v1834
      %v1836 = vpop.f32.mrf.mxu0
      %v1837 = vadd.f32 %v990, %v1836
      %1838 = vmatmul.bf16.gmra.mxu0 %v1627
      %v1839 = vpop.f32.mrf.mxu0
      %v1840 = vadd.f32 %v993, %v1839
      %v1841 = vpop.f32.mrf.mxu0
      %v1842 = vadd.f32 %v995, %v1841
      %1843 = vmatmul.bf16.gmra.mxu0 %v1630
      %v1844 = vpop.f32.mrf.mxu0
      %v1845 = vadd.f32 %v998, %v1844
      %v1846 = vpop.f32.mrf.mxu0
      %v1847 = vadd.f32 %v1000, %v1846
      %1848 = vmatmul.bf16.gmra.mxu0 %v1633
      %v1849 = vpop.f32.mrf.mxu0
      %v1850 = vadd.f32 %v1003, %v1849
      %v1851 = vpop.f32.mrf.mxu0
      %v1852 = vadd.f32 %v1005, %v1851
      %1853 = vmatmul.bf16.gmra.mxu0 %v1636
      %v1854 = vpop.f32.mrf.mxu0
      %v1855 = vadd.f32 %v1008, %v1854
      %v1856 = vpop.f32.mrf.mxu0
      %v1857 = vadd.f32 %v1010, %v1856
      %1858 = vmatmul.bf16.gmra.mxu0 %v1639
      %v1859 = vpop.f32.mrf.mxu0
      %v1860 = vadd.f32 %v1013, %v1859
      %v1861 = vpop.f32.mrf.mxu0
      %v1862 = vadd.f32 %v1015, %v1861
      %1863 = vmatmul.bf16.gmra.mxu0 %v1642
      %v1864 = vpop.f32.mrf.mxu0
      %v1865 = vadd.f32 %v1018, %v1864
      %v1866 = vpop.f32.mrf.mxu0
      %v1867 = vadd.f32 %v1020, %v1866
      %1868 = vmatmul.bf16.gmra.mxu0 %v1645
      %v1869 = vpop.f32.mrf.mxu0
      %v1870 = vadd.f32 %v1023, %v1869
      %v1871 = vpop.f32.mrf.mxu0
      %v1872 = vadd.f32 %v1025, %v1871
      %1873 = vmatmul.bf16.gmra.mxu0 %v1648
      %v1874 = vpop.f32.mrf.mxu0
      %v1875 = vadd.f32 %v1028, %v1874
      %v1876 = vpop.f32.mrf.mxu0
      %v1877 = vadd.f32 %v1030, %v1876
      %1878 = vmatmul.bf16.gmra.mxu0 %v1651
      %v1879 = vpop.f32.mrf.mxu0
      %v1880 = vadd.f32 %v1033, %v1879
      %v1881 = vpop.f32.mrf.mxu0
      %v1882 = vadd.f32 %v1035, %v1881
      %1883 = vmatmul.bf16.gmra.mxu0 %v1654
      %v1884 = vpop.f32.mrf.mxu0
      %v1885 = vadd.f32 %v1038, %v1884
      %v1886 = vpop.f32.mrf.mxu0
      %v1887 = vadd.f32 %v1040, %v1886
      %1888 = vmatmul.bf16.gmra.mxu0 %v1657
      %v1889 = vpop.f32.mrf.mxu0
      %v1890 = vadd.f32 %v1043, %v1889
      %v1891 = vpop.f32.mrf.mxu0
      %v1892 = vadd.f32 %v1045, %v1891
      %1893 = vmatmul.bf16.gmra.mxu0 %v1660
      %v1894 = vpop.f32.mrf.mxu0
      %v1895 = vadd.f32 %v1048, %v1894
      %v1896 = vpop.f32.mrf.mxu0
      %v1897 = vadd.f32 %v1050, %v1896
      %1898 = vmatmul.bf16.gmra.mxu0 %v1663
      %v1899 = vpop.f32.mrf.mxu0
      %v1900 = vadd.f32 %v1053, %v1899
      %v1901 = vpop.f32.mrf.mxu0
      %v1902 = vadd.f32 %v1055, %v1901
      %1903 = vmatmul.bf16.gmra.mxu0 %v1666
      %v1904 = vpop.f32.mrf.mxu0
      %v1905 = vadd.f32 %v1058, %v1904
      %v1906 = vpop.f32.mrf.mxu0
      %v1907 = vadd.f32 %v1060, %v1906
      %1908 = vmatmul.bf16.gmra.mxu0 %v1669
      %v1909 = vpop.f32.mrf.mxu0
      %v1910 = vadd.f32 %v1063, %v1909
      %v1911 = vpop.f32.mrf.mxu0
      %v1912 = vadd.f32 %v1065, %v1911
      %1913 = vmatmul.bf16.gmra.mxu0 %v1672
      %v1914 = vpop.f32.mrf.mxu0
      %v1915 = vadd.f32 %v1068, %v1914
      %v1916 = vpop.f32.mrf.mxu0
      %v1917 = vadd.f32 %v1070, %v1916
      %1918 = vmatmul.bf16.gmra.mxu0 %v1675
      %v1919 = vpop.f32.mrf.mxu0
      %v1920 = vadd.f32 %v1073, %v1919
      %v1921 = vpop.f32.mrf.mxu0
      %v1922 = vadd.f32 %v1075, %v1921
      %1923 = vmatmul.bf16.gmra.mxu0 %v1678
      %v1924 = vpop.f32.mrf.mxu0
      %v1925 = vadd.f32 %v1078, %v1924
      %v1926 = vpop.f32.mrf.mxu0
      %v1927 = vadd.f32 %v1080, %v1926
      %1928 = vmatmul.bf16.gmra.mxu0 %v1681
      %v1929 = vpop.f32.mrf.mxu0
      %v1930 = vadd.f32 %v1083, %v1929
      %v1931 = vpop.f32.mrf.mxu0
      %v1932 = vadd.f32 %v1085, %v1931
      %1933 = vmatmul.bf16.gmra.mxu0 %v1684
      %v1934 = vpop.f32.mrf.mxu0
      %v1935 = vadd.f32 %v1088, %v1934
      %v1936 = vpop.f32.mrf.mxu0
      %v1937 = vadd.f32 %v1090, %v1936
      %1938 = vmatmul.bf16.gmra.mxu0 %v1687
      %v1939 = vpop.f32.mrf.mxu0
      %v1940 = vadd.f32 %v1093, %v1939
      %v1941 = vpop.f32.mrf.mxu0
      %v1942 = vadd.f32 %v1095, %v1941
      %1943 = vmatmul.bf16.gmra.mxu0 %v1690
      %v1944 = vpop.f32.mrf.mxu0
      %v1945 = vadd.f32 %v1098, %v1944
      %v1946 = vpop.f32.mrf.mxu0
      %v1947 = vadd.f32 %v1100, %v1946
      %1948 = vmatmul.bf16.gmra.mxu0 %v1693
      %v1949 = vpop.f32.mrf.mxu0
      %v1950 = vadd.f32 %v1103, %v1949
      %v1951 = vpop.f32.mrf.mxu0
      %v1952 = vadd.f32 %v1105, %v1951
      %1953 = vmatmul.bf16.gmra.mxu0 %v1696
      %v1954 = vpop.f32.mrf.mxu0
      %v1955 = vadd.f32 %v1108, %v1954
      %v1956 = vpop.f32.mrf.mxu0
      %v1957 = vadd.f32 %v1110, %v1956
      %1958 = vmatmul.bf16.gmra.mxu0 %v1699
      %v1959 = vpop.f32.mrf.mxu0
      %v1960 = vadd.f32 %v1113, %v1959
      %v1961 = vpop.f32.mrf.mxu0
      %v1962 = vadd.f32 %v1115, %v1961
      %1963 = vmatmul.bf16.gmra.mxu0 %v1702
      %v1964 = vpop.f32.mrf.mxu0
      %v1965 = vadd.f32 %v1118, %v1964
      %v1966 = vpop.f32.mrf.mxu0
      %v1967 = vadd.f32 %v1120, %v1966
      %1968 = vmatmul.bf16.gmra.mxu0 %v1705
      %v1969 = vpop.f32.mrf.mxu0
      %v1970 = vadd.f32 %v1123, %v1969
      %v1971 = vpop.f32.mrf.mxu0
      %v1972 = vadd.f32 %v1125, %v1971
      %1973 = vmatmul.bf16.gmra.mxu0 %v1708
      %v1974 = vpop.f32.mrf.mxu0
      %v1975 = vadd.f32 %v1128, %v1974
      %v1976 = vpop.f32.mrf.mxu0
      %v1977 = vadd.f32 %v1130, %v1976
      %1978 = vmatmul.bf16.gmra.mxu0 %v1711
      %v1979 = vpop.f32.mrf.mxu0
      %v1980 = vadd.f32 %v1133, %v1979
      %v1981 = vpop.f32.mrf.mxu0
      %v1982 = vadd.f32 %v1135, %v1981
      %1983 = vmatmul.bf16.gmra.mxu0 %v1714
      %v1984 = vpop.f32.mrf.mxu0
      %v1985 = vadd.f32 %v1138, %v1984
      %v1986 = vpop.f32.mrf.mxu0
      %v1987 = vadd.f32 %v1140, %v1986
      %1988 = vmatmul.bf16.gmra.mxu0 %v1717
      %v1989 = vpop.f32.mrf.mxu0
      %v1990 = vadd.f32 %v1143, %v1989
      %v1991 = vpop.f32.mrf.mxu0
      %v1992 = vadd.f32 %v1145, %v1991
      %1993 = vmatmul.bf16.gmra.mxu0 %v1720
      %v1994 = vpop.f32.mrf.mxu0
      %v1995 = vadd.f32 %v1148, %v1994
      %v1996 = vpop.f32.mrf.mxu0
      %v1997 = vadd.f32 %v1150, %v1996
      %1998 = vmatmul.bf16.gmra.mxu0 %v1723
      %v1999 = vpop.f32.mrf.mxu0
      %v2000 = vadd.f32 %v1153, %v1999
      %v2001 = vpop.f32.mrf.mxu0
      %v2002 = vadd.f32 %v1155, %v2001
      %2003 = vmatmul.bf16.gmra.mxu0 %v1726
      %v2004 = vpop.f32.mrf.mxu0
      %v2005 = vadd.f32 %v1158, %v2004
      %v2006 = vpop.f32.mrf.mxu0
      %v2007 = vadd.f32 %v1160, %v2006
      %2008 = vmatmul.bf16.gmra.mxu0 %v1729
      %v2009 = vpop.f32.mrf.mxu0
      %v2010 = vadd.f32 %v1163, %v2009
      %v2011 = vpop.f32.mrf.mxu0
      %v2012 = vadd.f32 %v1165, %v2011
      %2013 = vmatmul.bf16.gmra.mxu0 %v1732
      %v2014 = vpop.f32.mrf.mxu0
      %v2015 = vadd.f32 %v1168, %v2014
      %v2016 = vpop.f32.mrf.mxu0
      %v2017 = vadd.f32 %v1170, %v2016
      %2018 = vmatmul.bf16.gmra.mxu0 %v1735
      %v2019 = vpop.f32.mrf.mxu0
      %v2020 = vadd.f32 %v1173, %v2019
      %v2021 = vpop.f32.mrf.mxu0
      %v2022 = vadd.f32 %v1175, %v2021
      %2023 = vmatmul.bf16.gmra.mxu0 %v1738
      %v2024 = vpop.f32.mrf.mxu0
      %v2025 = vadd.f32 %v1178, %v2024
      %v2026 = vpop.f32.mrf.mxu0
      %v2027 = vadd.f32 %v1180, %v2026
      %2028 = vmatmul.bf16.gmra.mxu0 %v1741
      %v2029 = vpop.f32.mrf.mxu0
      %v2030 = vadd.f32 %v1183, %v2029
      %v2031 = vpop.f32.mrf.mxu0
      %v2032 = vadd.f32 %v1185, %v2031
      %2033 = vmatmul.bf16.gmra.mxu0 %v1744
      %v2034 = vpop.f32.mrf.mxu0
      %v2035 = vadd.f32 %v1188, %v2034
      %v2036 = vpop.f32.mrf.mxu0
      %v2037 = vadd.f32 %v1190, %v2036
      %2038 = vmatmul.bf16.gmra.mxu0 %v1747
      %v2039 = vpop.f32.mrf.mxu0
      %v2040 = vadd.f32 %v1193, %v2039
      %v2041 = vpop.f32.mrf.mxu0
      %v2042 = vadd.f32 %v1195, %v2041
      %2043 = vmatmul.bf16.gmra.mxu0 %v1750
      %v2044 = vpop.f32.mrf.mxu0
      %v2045 = vadd.f32 %v1198, %v2044
      %v2046 = vpop.f32.mrf.mxu0
      %v2047 = vadd.f32 %v1200, %v2046
      %2048 = vmatmul.bf16.gmra.mxu0 %v1753
      %v2049 = vpop.f32.mrf.mxu0
      %v2050 = vadd.f32 %v1203, %v2049
      %v2051 = vpop.f32.mrf.mxu0
      %v2052 = vadd.f32 %v1205, %v2051
      %2053 = vmatmul.bf16.gmra.mxu0 %v1756
      %v2054 = vpop.f32.mrf.mxu0
      %v2055 = vadd.f32 %v1208, %v2054
      %v2056 = vpop.f32.mrf.mxu0
      %v2057 = vadd.f32 %v1210, %v2056
      %2058 = vmatmul.bf16.gmra.mxu0 %v1759
      %v2059 = vpop.f32.mrf.mxu0
      %v2060 = vadd.f32 %v1213, %v2059
      %v2061 = vpop.f32.mrf.mxu0
      %v2062 = vadd.f32 %v1215, %v2061
      %2063 = vmatmul.bf16.gmra.mxu0 %v1762
      %v2064 = vpop.f32.mrf.mxu0
      %v2065 = vadd.f32 %v1218, %v2064
      %v2066 = vpop.f32.mrf.mxu0
      %v2067 = vadd.f32 %v1220, %v2066
      %2068 = vmatmul.bf16.gmra.mxu0 %v1765
      %v2069 = vpop.f32.mrf.mxu0
      %v2070 = vadd.f32 %v1223, %v2069
      %v2071 = vpop.f32.mrf.mxu0
      %v2072 = vadd.f32 %v1225, %v2071
      %2073 = vmatmul.bf16.gmra.mxu0 %v1768
      %v2074 = vpop.f32.mrf.mxu0
      %v2075 = vadd.f32 %v1228, %v2074
      %v2076 = vpop.f32.mrf.mxu0
      %v2077 = vadd.f32 %v1230, %v2076
      %2078 = vmatmul.bf16.gmra.mxu0 %v1771
      %v2079 = vpop.f32.mrf.mxu0
      %v2080 = vadd.f32 %v1233, %v2079
      %v2081 = vpop.f32.mrf.mxu0
      %v2082 = vadd.f32 %v1235, %v2081
      %2083 = vmatmul.bf16.gmra.mxu0 %v1774
      %v2084 = vpop.f32.mrf.mxu0
      %v2085 = vadd.f32 %v1238, %v2084
      %v2086 = vpop.f32.mrf.mxu0
      %v2087 = vadd.f32 %v1240, %v2086
      %2088 = vmatmul.bf16.gmra.mxu0 %v1777
      %v2089 = vpop.f32.mrf.mxu0
      %v2090 = vadd.f32 %v1243, %v2089
      %v2091 = vpop.f32.mrf.mxu0
      %v2092 = vadd.f32 %v1245, %v2091
      %2093 = vmatmul.bf16.gmra.mxu0 %v1780
      %v2094 = vpop.f32.mrf.mxu0
      %v2095 = vadd.f32 %v1248, %v2094
      %v2096 = vpop.f32.mrf.mxu0
      %v2097 = vadd.f32 %v1250, %v2096
      %2098 = vmatmul.bf16.gmra.mxu0 %v1783
      %v2099 = vpop.f32.mrf.mxu0
      %v2100 = vadd.f32 %v1253, %v2099
      %v2101 = vpop.f32.mrf.mxu0
      %v2102 = vadd.f32 %v1255, %v2101
      %2103 = vmatmul.bf16.gmra.mxu0 %v1786
      %v2104 = vpop.f32.mrf.mxu0
      %v2105 = vadd.f32 %v1258, %v2104
      %v2106 = vpop.f32.mrf.mxu0
      %v2107 = vadd.f32 %v1260, %v2106
      %2108 = vmatmul.bf16.gmra.mxu0 %v1789
      %v2109 = vpop.f32.mrf.mxu0
      %v2110 = vadd.f32 %v1263, %v2109
      %v2111 = vpop.f32.mrf.mxu0
      %v2112 = vadd.f32 %v1265, %v2111
      %2113 = vmatmul.bf16.gmra.mxu0 %v1792
      %v2114 = vpop.f32.mrf.mxu0
      %v2115 = vadd.f32 %v1268, %v2114
      %v2116 = vpop.f32.mrf.mxu0
      %v2117 = vadd.f32 %v1270, %v2116
      %2118 = vmatmul.bf16.gmra.mxu0 %v1795
      %v2119 = vpop.f32.mrf.mxu0
      %v2120 = vadd.f32 %v1273, %v2119
      %v2121 = vpop.f32.mrf.mxu0
      %v2122 = vadd.f32 %v1275, %v2121
      %2123 = vmatmul.bf16.gmra.mxu0 %v1798
      %v2124 = vpop.f32.mrf.mxu0
      %v2125 = vadd.f32 %v1278, %v2124
      %v2126 = vpop.f32.mrf.mxu0
      %v2127 = vadd.f32 %v1280, %v2126
      %2128 = vdwg.mxu0
      %v2129 = vld [vmem:[%s165 + $0x10] sm:$0xf]
      %v2130 = vld [vmem:[%s165 + $0x14] sm:$0xf]
      %v2131 = vld [vmem:[%s165 + $0x18] sm:$0xf]
      %v2132 = vld [vmem:[%s165 + $0x1c] sm:$0xf]
      %v2133 = vld [vmem:[%s165 + $0x20] sm:$0xf]
      %v2134 = vld [vmem:[%s165 + $0x24] sm:$0xf]
      %v2135 = vld [vmem:[%s165 + $0x28] sm:$0xf]
      %v2136 = vld [vmem:[%s165 + $0x2c] sm:$0xf]
      %v2137 = vld [vmem:[%s165 + $0x30] sm:$0xf]
      %v2138 = vld [vmem:[%s165 + $0x34] sm:$0xf]
      %v2139 = vld [vmem:[%s165 + $0x38] sm:$0xf]
      %v2140 = vld [vmem:[%s165 + $0x3c] sm:$0xf]
      %v2141 = vld [vmem:[%s165 + $0x40] sm:$0xf]
      %v2142 = vld [vmem:[%s165 + $0x44] sm:$0xf]
      %v2143 = vld [vmem:[%s165 + $0x48] sm:$0xf]
      %v2144 = vld [vmem:[%s165 + $0x4c] sm:$0xf]
      %v2145 = vld [vmem:[%s165 + $0x50] sm:$0xf]
      %v2146 = vld [vmem:[%s165 + $0x54] sm:$0xf]
      %v2147 = vld [vmem:[%s165 + $0x58] sm:$0xf]
      %v2148 = vld [vmem:[%s165 + $0x5c] sm:$0xf]
      %v2149 = vld [vmem:[%s165 + $0x60] sm:$0xf]
      %v2150 = vld [vmem:[%s165 + $0x64] sm:$0xf]
      %v2151 = vld [vmem:[%s165 + $0x68] sm:$0xf]
      %v2152 = vld [vmem:[%s165 + $0x6c] sm:$0xf]
      %v2153 = vld [vmem:[%s165 + $0x70] sm:$0xf]
      %v2154 = vld [vmem:[%s165 + $0x74] sm:$0xf]
      %v2155 = vld [vmem:[%s165 + $0x78] sm:$0xf]
      %v2156 = vld [vmem:[%s165 + $0x7c] sm:$0xf]
      %v2157 = vld [vmem:[%s165 + $0x80] sm:$0xf]
      %v2158 = vld [vmem:[%s165 + $0x84] sm:$0xf]
      %v2159 = vld [vmem:[%s165 + $0x88] sm:$0xf]
      %v2160 = vld [vmem:[%s165 + $0x8c] sm:$0xf]
      %v2161 = vld [vmem:[%s165 + $0x90] sm:$0xf]
      %v2162 = vld [vmem:[%s165 + $0x94] sm:$0xf]
      %v2163 = vld [vmem:[%s165 + $0x98] sm:$0xf]
      %v2164 = vld [vmem:[%s165 + $0x9c] sm:$0xf]
      %v2165 = vld [vmem:[%s165 + $0xa0] sm:$0xf]
      %v2166 = vld [vmem:[%s165 + $0xa4] sm:$0xf]
      %v2167 = vld [vmem:[%s165 + $0xa8] sm:$0xf]
      %v2168 = vld [vmem:[%s165 + $0xac] sm:$0xf]
      %v2169 = vld [vmem:[%s165 + $0xb0] sm:$0xf]
      %v2170 = vld [vmem:[%s165 + $0xb4] sm:$0xf]
      %v2171 = vld [vmem:[%s165 + $0xb8] sm:$0xf]
      %v2172 = vld [vmem:[%s165 + $0xbc] sm:$0xf]
      %v2173 = vld [vmem:[%s165 + $0xc0] sm:$0xf]
      %v2174 = vld [vmem:[%s165 + $0xc4] sm:$0xf]
      %v2175 = vld [vmem:[%s165 + $0xc8] sm:$0xf]
      %v2176 = vld [vmem:[%s165 + $0xcc] sm:$0xf]
      %v2177 = vld [vmem:[%s165 + $0xd0] sm:$0xf]
      %v2178 = vld [vmem:[%s165 + $0xd4] sm:$0xf]
      %v2179 = vld [vmem:[%s165 + $0xd8] sm:$0xf]
      %v2180 = vld [vmem:[%s165 + $0xdc] sm:$0xf]
      %v2181 = vld [vmem:[%s165 + $0xe0] sm:$0xf]
      %v2182 = vld [vmem:[%s165 + $0xe4] sm:$0xf]
      %v2183 = vld [vmem:[%s165 + $0xe8] sm:$0xf]
      %v2184 = vld [vmem:[%s165 + $0xec] sm:$0xf]
      %v2185 = vld [vmem:[%s165 + $0xf0] sm:$0xf]
      %v2186 = vld [vmem:[%s165 + $0xf4] sm:$0xf]
      %v2187 = vld [vmem:[%s165 + $0xf8] sm:$0xf]
      %v2188 = vld [vmem:[%s165 + $0xfc] sm:$0xf]
      %v2189 = vld [vmem:[%s165 + $0x100] sm:$0xf]
      %v2190 = vld [vmem:[%s165 + $0x104] sm:$0xf]
      %v2191 = vld [vmem:[%s165 + $0x108] sm:$0xf]
      %v2192 = vld [vmem:[%s165 + $0x10c] sm:$0xf]
      %v2193 = vld [vmem:[%s165 + $0x110] sm:$0xf]
      %v2194 = vld [vmem:[%s165 + $0x114] sm:$0xf]
      %v2195 = vld [vmem:[%s165 + $0x118] sm:$0xf]
      %v2196 = vld [vmem:[%s165 + $0x11c] sm:$0xf]
      %v2197 = vld [vmem:[%s165 + $0x120] sm:$0xf]
      %v2198 = vld [vmem:[%s165 + $0x124] sm:$0xf]
      %v2199 = vld [vmem:[%s165 + $0x128] sm:$0xf]
      %v2200 = vld [vmem:[%s165 + $0x12c] sm:$0xf]
      %v2201 = vld [vmem:[%s165 + $0x130] sm:$0xf]
      %v2202 = vld [vmem:[%s165 + $0x134] sm:$0xf]
      %v2203 = vld [vmem:[%s165 + $0x138] sm:$0xf]
      %v2204 = vld [vmem:[%s165 + $0x13c] sm:$0xf]
      %v2205 = vld [vmem:[%s165 + $0x140] sm:$0xf]
      %v2206 = vld [vmem:[%s165 + $0x144] sm:$0xf]
      %v2207 = vld [vmem:[%s165 + $0x148] sm:$0xf]
      %v2208 = vld [vmem:[%s165 + $0x14c] sm:$0xf]
      %v2209 = vld [vmem:[%s165 + $0x150] sm:$0xf]
      %v2210 = vld [vmem:[%s165 + $0x154] sm:$0xf]
      %v2211 = vld [vmem:[%s165 + $0x158] sm:$0xf]
      %v2212 = vld [vmem:[%s165 + $0x15c] sm:$0xf]
      %v2213 = vld [vmem:[%s165 + $0x160] sm:$0xf]
      %v2214 = vld [vmem:[%s165 + $0x164] sm:$0xf]
      %v2215 = vld [vmem:[%s165 + $0x168] sm:$0xf]
      %v2216 = vld [vmem:[%s165 + $0x16c] sm:$0xf]
      %v2217 = vld [vmem:[%s165 + $0x170] sm:$0xf]
      %v2218 = vld [vmem:[%s165 + $0x174] sm:$0xf]
      %v2219 = vld [vmem:[%s165 + $0x178] sm:$0xf]
      %v2220 = vld [vmem:[%s165 + $0x17c] sm:$0xf]
      %v2221 = vld [vmem:[%s165 + $0x180] sm:$0xf]
      %v2222 = vld [vmem:[%s165 + $0x184] sm:$0xf]
      %v2223 = vld [vmem:[%s165 + $0x188] sm:$0xf]
      %v2224 = vld [vmem:[%s165 + $0x18c] sm:$0xf]
      %v2225 = vld [vmem:[%s165 + $0x190] sm:$0xf]
      %v2226 = vld [vmem:[%s165 + $0x194] sm:$0xf]
      %v2227 = vld [vmem:[%s165 + $0x198] sm:$0xf]
      %v2228 = vld [vmem:[%s165 + $0x19c] sm:$0xf]
      %v2229 = vld [vmem:[%s165 + $0x1a0] sm:$0xf]
      %v2230 = vld [vmem:[%s165 + $0x1a4] sm:$0xf]
      %v2231 = vld [vmem:[%s165 + $0x1a8] sm:$0xf]
      %v2232 = vld [vmem:[%s165 + $0x1ac] sm:$0xf]
      %v2233 = vld [vmem:[%s165 + $0x1b0] sm:$0xf]
      %v2234 = vld [vmem:[%s165 + $0x1b4] sm:$0xf]
      %v2235 = vld [vmem:[%s165 + $0x1b8] sm:$0xf]
      %v2236 = vld [vmem:[%s165 + $0x1bc] sm:$0xf]
      %v2237 = vld [vmem:[%s165 + $0x1c0] sm:$0xf]
      %v2238 = vld [vmem:[%s165 + $0x1c4] sm:$0xf]
      %v2239 = vld [vmem:[%s165 + $0x1c8] sm:$0xf]
      %v2240 = vld [vmem:[%s165 + $0x1cc] sm:$0xf]
      %v2241 = vld [vmem:[%s165 + $0x1d0] sm:$0xf]
      %v2242 = vld [vmem:[%s165 + $0x1d4] sm:$0xf]
      %v2243 = vld [vmem:[%s165 + $0x1d8] sm:$0xf]
      %v2244 = vld [vmem:[%s165 + $0x1dc] sm:$0xf]
      %v2245 = vld [vmem:[%s165 + $0x1e0] sm:$0xf]
      %v2246 = vld [vmem:[%s165 + $0x1e4] sm:$0xf]
      %v2247 = vld [vmem:[%s165 + $0x1e8] sm:$0xf]
      %v2248 = vld [vmem:[%s165 + $0x1ec] sm:$0xf]
      %v2249 = vld [vmem:[%s165 + $0x1f0] sm:$0xf]
      %v2250 = vld [vmem:[%s165 + $0x1f4] sm:$0xf]
      %v2251 = vld [vmem:[%s165 + $0x1f8] sm:$0xf]
      %v2252 = vld [vmem:[%s165 + $0x1fc] sm:$0xf]
      %v2253 = vld [vmem:[%s165 + $0x200] sm:$0xf]
      %v2254 = vld [vmem:[%s165 + $0x204] sm:$0xf]
      %v2255 = vld [vmem:[%s165 + $0x208] sm:$0xf]
      %v2256 = vld [vmem:[%s165 + $0x20c] sm:$0xf]
      %s2257 = scalar_lea.vmem %s1, 16
      %v2258 = vld [vmem:[%s2257] sm:$0xf]
      %v2259 = vld [vmem:[%s2257 + $0x4] sm:$0xf]
      %v2388 = vunpack.c.l.b16 %v2129
      %v2389 = vunpack.c.l.b16 %v2130
      %v2390 = vunpack.c.l.b16 %v2131
      %v2391 = vunpack.c.l.b16 %v2132
      %v2392 = vunpack.c.l.b16 %v2133
      %v2393 = vunpack.c.l.b16 %v2134
      %v2394 = vunpack.c.l.b16 %v2135
      %v2395 = vunpack.c.l.b16 %v2136
      %v2396 = vunpack.c.l.b16 %v2137
      %v2397 = vunpack.c.l.b16 %v2138
      %v2398 = vunpack.c.l.b16 %v2139
      %v2399 = vunpack.c.l.b16 %v2140
      %v2400 = vunpack.c.l.b16 %v2141
      %v2401 = vunpack.c.l.b16 %v2142
      %v2402 = vunpack.c.l.b16 %v2143
      %v2403 = vunpack.c.l.b16 %v2144
      %v2404 = vunpack.c.l.b16 %v2145
      %v2405 = vunpack.c.l.b16 %v2146
      %v2406 = vunpack.c.l.b16 %v2147
      %v2407 = vunpack.c.l.b16 %v2148
      %v2408 = vunpack.c.l.b16 %v2149
      %v2409 = vunpack.c.l.b16 %v2150
      %v2410 = vunpack.c.l.b16 %v2151
      %v2411 = vunpack.c.l.b16 %v2152
      %v2412 = vunpack.c.l.b16 %v2153
      %v2413 = vunpack.c.l.b16 %v2154
      %v2414 = vunpack.c.l.b16 %v2155
      %v2415 = vunpack.c.l.b16 %v2156
      %v2416 = vunpack.c.l.b16 %v2157
      %v2417 = vunpack.c.l.b16 %v2158
      %v2418 = vunpack.c.l.b16 %v2159
      %v2419 = vunpack.c.l.b16 %v2160
      %v2420 = vunpack.c.l.b16 %v2161
      %v2421 = vunpack.c.l.b16 %v2162
      %v2422 = vunpack.c.l.b16 %v2163
      %v2423 = vunpack.c.l.b16 %v2164
      %v2424 = vunpack.c.l.b16 %v2165
      %v2425 = vunpack.c.l.b16 %v2166
      %v2426 = vunpack.c.l.b16 %v2167
      %v2427 = vunpack.c.l.b16 %v2168
      %v2428 = vunpack.c.l.b16 %v2169
      %v2429 = vunpack.c.l.b16 %v2170
      %v2430 = vunpack.c.l.b16 %v2171
      %v2431 = vunpack.c.l.b16 %v2172
      %v2432 = vunpack.c.l.b16 %v2173
      %v2433 = vunpack.c.l.b16 %v2174
      %v2434 = vunpack.c.l.b16 %v2175
      %v2435 = vunpack.c.l.b16 %v2176
      %v2436 = vunpack.c.l.b16 %v2177
      %v2437 = vunpack.c.l.b16 %v2178
      %v2438 = vunpack.c.l.b16 %v2179
      %v2439 = vunpack.c.l.b16 %v2180
      %v2440 = vunpack.c.l.b16 %v2181
      %v2441 = vunpack.c.l.b16 %v2182
      %v2442 = vunpack.c.l.b16 %v2183
      %v2443 = vunpack.c.l.b16 %v2184
      %v2444 = vunpack.c.l.b16 %v2185
      %v2445 = vunpack.c.l.b16 %v2186
      %v2446 = vunpack.c.l.b16 %v2187
      %v2447 = vunpack.c.l.b16 %v2188
      %v2448 = vunpack.c.l.b16 %v2189
      %v2449 = vunpack.c.l.b16 %v2190
      %v2450 = vunpack.c.l.b16 %v2191
      %v2451 = vunpack.c.l.b16 %v2192
      %v2452 = vunpack.c.l.b16 %v2193
      %v2453 = vunpack.c.l.b16 %v2194
      %v2454 = vunpack.c.l.b16 %v2195
      %v2455 = vunpack.c.l.b16 %v2196
      %v2456 = vunpack.c.l.b16 %v2197
      %v2457 = vunpack.c.l.b16 %v2198
      %v2458 = vunpack.c.l.b16 %v2199
      %v2459 = vunpack.c.l.b16 %v2200
      %v2460 = vunpack.c.l.b16 %v2201
      %v2461 = vunpack.c.l.b16 %v2202
      %v2462 = vunpack.c.l.b16 %v2203
      %v2463 = vunpack.c.l.b16 %v2204
      %v2464 = vunpack.c.l.b16 %v2205
      %v2465 = vunpack.c.l.b16 %v2206
      %v2466 = vunpack.c.l.b16 %v2207
      %v2467 = vunpack.c.l.b16 %v2208
      %v2468 = vunpack.c.l.b16 %v2209
      %v2469 = vunpack.c.l.b16 %v2210
      %v2470 = vunpack.c.l.b16 %v2211
      %v2471 = vunpack.c.l.b16 %v2212
      %v2472 = vunpack.c.l.b16 %v2213
      %v2473 = vunpack.c.l.b16 %v2214
      %v2474 = vunpack.c.l.b16 %v2215
      %v2475 = vunpack.c.l.b16 %v2216
      %v2476 = vunpack.c.l.b16 %v2217
      %v2477 = vunpack.c.l.b16 %v2218
      %v2478 = vunpack.c.l.b16 %v2219
      %v2479 = vunpack.c.l.b16 %v2220
      %v2480 = vunpack.c.l.b16 %v2221
      %v2481 = vunpack.c.l.b16 %v2222
      %v2482 = vunpack.c.l.b16 %v2223
      %v2483 = vunpack.c.l.b16 %v2224
      %v2484 = vunpack.c.l.b16 %v2225
      %v2485 = vunpack.c.l.b16 %v2226
      %v2486 = vunpack.c.l.b16 %v2227
      %v2487 = vunpack.c.l.b16 %v2228
      %v2488 = vunpack.c.l.b16 %v2229
      %v2489 = vunpack.c.l.b16 %v2230
      %v2490 = vunpack.c.l.b16 %v2231
      %v2491 = vunpack.c.l.b16 %v2232
      %v2492 = vunpack.c.l.b16 %v2233
      %v2493 = vunpack.c.l.b16 %v2234
      %v2494 = vunpack.c.l.b16 %v2235
      %v2495 = vunpack.c.l.b16 %v2236
      %v2496 = vunpack.c.l.b16 %v2237
      %v2497 = vunpack.c.l.b16 %v2238
      %v2498 = vunpack.c.l.b16 %v2239
      %v2499 = vunpack.c.l.b16 %v2240
      %v2500 = vunpack.c.l.b16 %v2241
      %v2501 = vunpack.c.l.b16 %v2242
      %v2502 = vunpack.c.l.b16 %v2243
      %v2503 = vunpack.c.l.b16 %v2244
      %v2504 = vunpack.c.l.b16 %v2245
      %v2505 = vunpack.c.l.b16 %v2246
      %v2506 = vunpack.c.l.b16 %v2247
      %v2507 = vunpack.c.l.b16 %v2248
      %v2508 = vunpack.c.l.b16 %v2249
      %v2509 = vunpack.c.l.b16 %v2250
      %v2510 = vunpack.c.l.b16 %v2251
      %v2511 = vunpack.c.l.b16 %v2252
      %v2512 = vunpack.c.l.b16 %v2253
      %v2513 = vunpack.c.l.b16 %v2254
      %v2514 = vunpack.c.l.b16 %v2255
      %v2515 = vunpack.c.l.b16 %v2256
      %v2516 = vpack.c.b16 %v2389, %v2388
      %v2517 = vpack.c.b16 %v2391, %v2390
      %v2518 = vpack.c.b16 %v2393, %v2392
      %v2519 = vpack.c.b16 %v2395, %v2394
      %v2520 = vpack.c.b16 %v2397, %v2396
      %v2521 = vpack.c.b16 %v2399, %v2398
      %v2522 = vpack.c.b16 %v2401, %v2400
      %v2523 = vpack.c.b16 %v2403, %v2402
      %v2524 = vpack.c.b16 %v2405, %v2404
      %v2525 = vpack.c.b16 %v2407, %v2406
      %v2526 = vpack.c.b16 %v2409, %v2408
      %v2527 = vpack.c.b16 %v2411, %v2410
      %v2528 = vpack.c.b16 %v2413, %v2412
      %v2529 = vpack.c.b16 %v2415, %v2414
      %v2530 = vpack.c.b16 %v2417, %v2416
      %v2531 = vpack.c.b16 %v2419, %v2418
      %v2532 = vpack.c.b16 %v2421, %v2420
      %v2533 = vpack.c.b16 %v2423, %v2422
      %v2534 = vpack.c.b16 %v2425, %v2424
      %v2535 = vpack.c.b16 %v2427, %v2426
      %v2536 = vpack.c.b16 %v2429, %v2428
      %v2537 = vpack.c.b16 %v2431, %v2430
      %v2538 = vpack.c.b16 %v2433, %v2432
      %v2539 = vpack.c.b16 %v2435, %v2434
      %v2540 = vpack.c.b16 %v2437, %v2436
      %v2541 = vpack.c.b16 %v2439, %v2438
      %v2542 = vpack.c.b16 %v2441, %v2440
      %v2543 = vpack.c.b16 %v2443, %v2442
      %v2544 = vpack.c.b16 %v2445, %v2444
      %v2545 = vpack.c.b16 %v2447, %v2446
      %v2546 = vpack.c.b16 %v2449, %v2448
      %v2547 = vpack.c.b16 %v2451, %v2450
      %v2548 = vpack.c.b16 %v2453, %v2452
      %v2549 = vpack.c.b16 %v2455, %v2454
      %v2550 = vpack.c.b16 %v2457, %v2456
      %v2551 = vpack.c.b16 %v2459, %v2458
      %v2552 = vpack.c.b16 %v2461, %v2460
      %v2553 = vpack.c.b16 %v2463, %v2462
      %v2554 = vpack.c.b16 %v2465, %v2464
      %v2555 = vpack.c.b16 %v2467, %v2466
      %v2556 = vpack.c.b16 %v2469, %v2468
      %v2557 = vpack.c.b16 %v2471, %v2470
      %v2558 = vpack.c.b16 %v2473, %v2472
      %v2559 = vpack.c.b16 %v2475, %v2474
      %v2560 = vpack.c.b16 %v2477, %v2476
      %v2561 = vpack.c.b16 %v2479, %v2478
      %v2562 = vpack.c.b16 %v2481, %v2480
      %v2563 = vpack.c.b16 %v2483, %v2482
      %v2564 = vpack.c.b16 %v2485, %v2484
      %v2565 = vpack.c.b16 %v2487, %v2486
      %v2566 = vpack.c.b16 %v2489, %v2488
      %v2567 = vpack.c.b16 %v2491, %v2490
      %v2568 = vpack.c.b16 %v2493, %v2492
      %v2569 = vpack.c.b16 %v2495, %v2494
      %v2570 = vpack.c.b16 %v2497, %v2496
      %v2571 = vpack.c.b16 %v2499, %v2498
      %v2572 = vpack.c.b16 %v2501, %v2500
      %v2573 = vpack.c.b16 %v2503, %v2502
      %v2574 = vpack.c.b16 %v2505, %v2504
      %v2575 = vpack.c.b16 %v2507, %v2506
      %v2576 = vpack.c.b16 %v2509, %v2508
      %v2577 = vpack.c.b16 %v2511, %v2510
      %v2578 = vpack.c.b16 %v2513, %v2512
      %v2579 = vpack.c.b16 %v2515, %v2514
      %v2582 = vunpack.c.l.b16 %v2258
      %v2583 = vunpack.c.l.b16 %v2259
      %v2584 = vpack.c.b16 %v2583, %v2582
      %v2587 = vsel %vm760, %v2516, 0
      %v2590 = vsel %vm760, %v2517, 0
      %v2593 = vsel %vm760, %v2518, 0
      %v2596 = vsel %vm760, %v2519, 0
      %v2599 = vsel %vm760, %v2520, 0
      %v2602 = vsel %vm760, %v2521, 0
      %v2605 = vsel %vm760, %v2522, 0
      %v2608 = vsel %vm760, %v2523, 0
      %v2611 = vsel %vm760, %v2524, 0
      %v2614 = vsel %vm760, %v2525, 0
      %v2617 = vsel %vm760, %v2526, 0
      %v2620 = vsel %vm760, %v2527, 0
      %v2623 = vsel %vm760, %v2528, 0
      %v2626 = vsel %vm760, %v2529, 0
      %v2629 = vsel %vm760, %v2530, 0
      %v2632 = vsel %vm760, %v2531, 0
      %v2635 = vsel %vm760, %v2532, 0
      %v2638 = vsel %vm760, %v2533, 0
      %v2641 = vsel %vm760, %v2534, 0
      %v2644 = vsel %vm760, %v2535, 0
      %v2647 = vsel %vm760, %v2536, 0
      %v2650 = vsel %vm760, %v2537, 0
      %v2653 = vsel %vm760, %v2538, 0
      %v2656 = vsel %vm760, %v2539, 0
      %v2659 = vsel %vm760, %v2540, 0
      %v2662 = vsel %vm760, %v2541, 0
      %v2665 = vsel %vm760, %v2542, 0
      %v2668 = vsel %vm760, %v2543, 0
      %v2671 = vsel %vm760, %v2544, 0
      %v2674 = vsel %vm760, %v2545, 0
      %v2677 = vsel %vm760, %v2546, 0
      %v2680 = vsel %vm760, %v2547, 0
      %v2683 = vsel %vm760, %v2548, 0
      %v2686 = vsel %vm760, %v2549, 0
      %v2689 = vsel %vm760, %v2550, 0
      %v2692 = vsel %vm760, %v2551, 0
      %v2695 = vsel %vm760, %v2552, 0
      %v2698 = vsel %vm760, %v2553, 0
      %v2701 = vsel %vm760, %v2554, 0
      %v2704 = vsel %vm760, %v2555, 0
      %v2707 = vsel %vm760, %v2556, 0
      %v2710 = vsel %vm760, %v2557, 0
      %v2713 = vsel %vm760, %v2558, 0
      %v2716 = vsel %vm760, %v2559, 0
      %v2719 = vsel %vm760, %v2560, 0
      %v2722 = vsel %vm760, %v2561, 0
      %v2725 = vsel %vm760, %v2562, 0
      %v2728 = vsel %vm760, %v2563, 0
      %v2731 = vsel %vm760, %v2564, 0
      %v2734 = vsel %vm760, %v2565, 0
      %v2737 = vsel %vm760, %v2566, 0
      %v2740 = vsel %vm760, %v2567, 0
      %v2743 = vsel %vm760, %v2568, 0
      %v2746 = vsel %vm760, %v2569, 0
      %v2749 = vsel %vm760, %v2570, 0
      %v2752 = vsel %vm760, %v2571, 0
      %v2755 = vsel %vm760, %v2572, 0
      %v2758 = vsel %vm760, %v2573, 0
      %v2761 = vsel %vm760, %v2574, 0
      %v2764 = vsel %vm760, %v2575, 0
      %v2767 = vsel %vm760, %v2576, 0
      %v2770 = vsel %vm760, %v2577, 0
      %v2773 = vsel %vm760, %v2578, 0
      %v2776 = vsel %vm760, %v2579, 0
      %2778 = vmatpush.bf16.msra.mxu0 0
      %2779 = vmatpush.bf16.msra.mxu0 0
      %2780 = vmatpush.bf16.msra.mxu0 0
      %2781 = vmatpush.bf16.msra.mxu0 0
      %2782 = vmatpush.bf16.msra.mxu0 0
      %2783 = vmatpush.bf16.msra.mxu0 0
      %2784 = vmatpush.bf16.msra.mxu0 0
      %2785 = vmatpush.bf16.msra.mxu0 %v2584
      %2786 = vmatmul.bf16.gmra.mxu0 %v2587
      %v2787 = vpop.f32.mrf.mxu0
      %v2788 = vadd.f32 0.0, %v2787
      %v2789 = vpop.f32.mrf.mxu0
      %v2790 = vadd.f32 0.0, %v2789
      %2791 = vmatmul.bf16.gmra.mxu0 %v2590
      %v2792 = vpop.f32.mrf.mxu0
      %v2793 = vadd.f32 0.0, %v2792
      %v2794 = vpop.f32.mrf.mxu0
      %v2795 = vadd.f32 0.0, %v2794
      %2796 = vmatmul.bf16.gmra.mxu0 %v2593
      %v2797 = vpop.f32.mrf.mxu0
      %v2798 = vadd.f32 0.0, %v2797
      %v2799 = vpop.f32.mrf.mxu0
      %v2800 = vadd.f32 0.0, %v2799
      %2801 = vmatmul.bf16.gmra.mxu0 %v2596
      %v2802 = vpop.f32.mrf.mxu0
      %v2803 = vadd.f32 0.0, %v2802
      %v2804 = vpop.f32.mrf.mxu0
      %v2805 = vadd.f32 0.0, %v2804
      %2806 = vmatmul.bf16.gmra.mxu0 %v2599
      %v2807 = vpop.f32.mrf.mxu0
      %v2808 = vadd.f32 0.0, %v2807
      %v2809 = vpop.f32.mrf.mxu0
      %v2810 = vadd.f32 0.0, %v2809
      %2811 = vmatmul.bf16.gmra.mxu0 %v2602
      %v2812 = vpop.f32.mrf.mxu0
      %v2813 = vadd.f32 0.0, %v2812
      %v2814 = vpop.f32.mrf.mxu0
      %v2815 = vadd.f32 0.0, %v2814
      %2816 = vmatmul.bf16.gmra.mxu0 %v2605
      %v2817 = vpop.f32.mrf.mxu0
      %v2818 = vadd.f32 0.0, %v2817
      %v2819 = vpop.f32.mrf.mxu0
      %v2820 = vadd.f32 0.0, %v2819
      %2821 = vmatmul.bf16.gmra.mxu0 %v2608
      %v2822 = vpop.f32.mrf.mxu0
      %v2823 = vadd.f32 0.0, %v2822
      %v2824 = vpop.f32.mrf.mxu0
      %v2825 = vadd.f32 0.0, %v2824
      %2826 = vmatmul.bf16.gmra.mxu0 %v2611
      %v2827 = vpop.f32.mrf.mxu0
      %v2828 = vadd.f32 0.0, %v2827
      %v2829 = vpop.f32.mrf.mxu0
      %v2830 = vadd.f32 0.0, %v2829
      %2831 = vmatmul.bf16.gmra.mxu0 %v2614
      %v2832 = vpop.f32.mrf.mxu0
      %v2833 = vadd.f32 0.0, %v2832
      %v2834 = vpop.f32.mrf.mxu0
      %v2835 = vadd.f32 0.0, %v2834
      %2836 = vmatmul.bf16.gmra.mxu0 %v2617
      %v2837 = vpop.f32.mrf.mxu0
      %v2838 = vadd.f32 0.0, %v2837
      %v2839 = vpop.f32.mrf.mxu0
      %v2840 = vadd.f32 0.0, %v2839
      %2841 = vmatmul.bf16.gmra.mxu0 %v2620
      %v2842 = vpop.f32.mrf.mxu0
      %v2843 = vadd.f32 0.0, %v2842
      %v2844 = vpop.f32.mrf.mxu0
      %v2845 = vadd.f32 0.0, %v2844
      %2846 = vmatmul.bf16.gmra.mxu0 %v2623
      %v2847 = vpop.f32.mrf.mxu0
      %v2848 = vadd.f32 0.0, %v2847
      %v2849 = vpop.f32.mrf.mxu0
      %v2850 = vadd.f32 0.0, %v2849
      %2851 = vmatmul.bf16.gmra.mxu0 %v2626
      %v2852 = vpop.f32.mrf.mxu0
      %v2853 = vadd.f32 0.0, %v2852
      %v2854 = vpop.f32.mrf.mxu0
      %v2855 = vadd.f32 0.0, %v2854
      %2856 = vmatmul.bf16.gmra.mxu0 %v2629
      %v2857 = vpop.f32.mrf.mxu0
      %v2858 = vadd.f32 0.0, %v2857
      %v2859 = vpop.f32.mrf.mxu0
      %v2860 = vadd.f32 0.0, %v2859
      %2861 = vmatmul.bf16.gmra.mxu0 %v2632
      %v2862 = vpop.f32.mrf.mxu0
      %v2863 = vadd.f32 0.0, %v2862
      %v2864 = vpop.f32.mrf.mxu0
      %v2865 = vadd.f32 0.0, %v2864
      %2866 = vmatmul.bf16.gmra.mxu0 %v2635
      %v2867 = vpop.f32.mrf.mxu0
      %v2868 = vadd.f32 0.0, %v2867
      %v2869 = vpop.f32.mrf.mxu0
      %v2870 = vadd.f32 0.0, %v2869
      %2871 = vmatmul.bf16.gmra.mxu0 %v2638
      %v2872 = vpop.f32.mrf.mxu0
      %v2873 = vadd.f32 0.0, %v2872
      %v2874 = vpop.f32.mrf.mxu0
      %v2875 = vadd.f32 0.0, %v2874
      %2876 = vmatmul.bf16.gmra.mxu0 %v2641
      %v2877 = vpop.f32.mrf.mxu0
      %v2878 = vadd.f32 0.0, %v2877
      %v2879 = vpop.f32.mrf.mxu0
      %v2880 = vadd.f32 0.0, %v2879
      %2881 = vmatmul.bf16.gmra.mxu0 %v2644
      %v2882 = vpop.f32.mrf.mxu0
      %v2883 = vadd.f32 0.0, %v2882
      %v2884 = vpop.f32.mrf.mxu0
      %v2885 = vadd.f32 0.0, %v2884
      %2886 = vmatmul.bf16.gmra.mxu0 %v2647
      %v2887 = vpop.f32.mrf.mxu0
      %v2888 = vadd.f32 0.0, %v2887
      %v2889 = vpop.f32.mrf.mxu0
      %v2890 = vadd.f32 0.0, %v2889
      %2891 = vmatmul.bf16.gmra.mxu0 %v2650
      %v2892 = vpop.f32.mrf.mxu0
      %v2893 = vadd.f32 0.0, %v2892
      %v2894 = vpop.f32.mrf.mxu0
      %v2895 = vadd.f32 0.0, %v2894
      %2896 = vmatmul.bf16.gmra.mxu0 %v2653
      %v2897 = vpop.f32.mrf.mxu0
      %v2898 = vadd.f32 0.0, %v2897
      %v2899 = vpop.f32.mrf.mxu0
      %v2900 = vadd.f32 0.0, %v2899
      %2901 = vmatmul.bf16.gmra.mxu0 %v2656
      %v2902 = vpop.f32.mrf.mxu0
      %v2903 = vadd.f32 0.0, %v2902
      %v2904 = vpop.f32.mrf.mxu0
      %v2905 = vadd.f32 0.0, %v2904
      %2906 = vmatmul.bf16.gmra.mxu0 %v2659
      %v2907 = vpop.f32.mrf.mxu0
      %v2908 = vadd.f32 0.0, %v2907
      %v2909 = vpop.f32.mrf.mxu0
      %v2910 = vadd.f32 0.0, %v2909
      %2911 = vmatmul.bf16.gmra.mxu0 %v2662
      %v2912 = vpop.f32.mrf.mxu0
      %v2913 = vadd.f32 0.0, %v2912
      %v2914 = vpop.f32.mrf.mxu0
      %v2915 = vadd.f32 0.0, %v2914
      %2916 = vmatmul.bf16.gmra.mxu0 %v2665
      %v2917 = vpop.f32.mrf.mxu0
      %v2918 = vadd.f32 0.0, %v2917
      %v2919 = vpop.f32.mrf.mxu0
      %v2920 = vadd.f32 0.0, %v2919
      %2921 = vmatmul.bf16.gmra.mxu0 %v2668
      %v2922 = vpop.f32.mrf.mxu0
      %v2923 = vadd.f32 0.0, %v2922
      %v2924 = vpop.f32.mrf.mxu0
      %v2925 = vadd.f32 0.0, %v2924
      %2926 = vmatmul.bf16.gmra.mxu0 %v2671
      %v2927 = vpop.f32.mrf.mxu0
      %v2928 = vadd.f32 0.0, %v2927
      %v2929 = vpop.f32.mrf.mxu0
      %v2930 = vadd.f32 0.0, %v2929
      %2931 = vmatmul.bf16.gmra.mxu0 %v2674
      %v2932 = vpop.f32.mrf.mxu0
      %v2933 = vadd.f32 0.0, %v2932
      %v2934 = vpop.f32.mrf.mxu0
      %v2935 = vadd.f32 0.0, %v2934
      %2936 = vmatmul.bf16.gmra.mxu0 %v2677
      %v2937 = vpop.f32.mrf.mxu0
      %v2938 = vadd.f32 0.0, %v2937
      %v2939 = vpop.f32.mrf.mxu0
      %v2940 = vadd.f32 0.0, %v2939
      %2941 = vmatmul.bf16.gmra.mxu0 %v2680
      %v2942 = vpop.f32.mrf.mxu0
      %v2943 = vadd.f32 0.0, %v2942
      %v2944 = vpop.f32.mrf.mxu0
      %v2945 = vadd.f32 0.0, %v2944
      %2946 = vmatmul.bf16.gmra.mxu0 %v2683
      %v2947 = vpop.f32.mrf.mxu0
      %v2948 = vadd.f32 0.0, %v2947
      %v2949 = vpop.f32.mrf.mxu0
      %v2950 = vadd.f32 0.0, %v2949
      %2951 = vmatmul.bf16.gmra.mxu0 %v2686
      %v2952 = vpop.f32.mrf.mxu0
      %v2953 = vadd.f32 0.0, %v2952
      %v2954 = vpop.f32.mrf.mxu0
      %v2955 = vadd.f32 0.0, %v2954
      %2956 = vmatmul.bf16.gmra.mxu0 %v2689
      %v2957 = vpop.f32.mrf.mxu0
      %v2958 = vadd.f32 0.0, %v2957
      %v2959 = vpop.f32.mrf.mxu0
      %v2960 = vadd.f32 0.0, %v2959
      %2961 = vmatmul.bf16.gmra.mxu0 %v2692
      %v2962 = vpop.f32.mrf.mxu0
      %v2963 = vadd.f32 0.0, %v2962
      %v2964 = vpop.f32.mrf.mxu0
      %v2965 = vadd.f32 0.0, %v2964
      %2966 = vmatmul.bf16.gmra.mxu0 %v2695
      %v2967 = vpop.f32.mrf.mxu0
      %v2968 = vadd.f32 0.0, %v2967
      %v2969 = vpop.f32.mrf.mxu0
      %v2970 = vadd.f32 0.0, %v2969
      %2971 = vmatmul.bf16.gmra.mxu0 %v2698
      %v2972 = vpop.f32.mrf.mxu0
      %v2973 = vadd.f32 0.0, %v2972
      %v2974 = vpop.f32.mrf.mxu0
      %v2975 = vadd.f32 0.0, %v2974
      %2976 = vmatmul.bf16.gmra.mxu0 %v2701
      %v2977 = vpop.f32.mrf.mxu0
      %v2978 = vadd.f32 0.0, %v2977
      %v2979 = vpop.f32.mrf.mxu0
      %v2980 = vadd.f32 0.0, %v2979
      %2981 = vmatmul.bf16.gmra.mxu0 %v2704
      %v2982 = vpop.f32.mrf.mxu0
      %v2983 = vadd.f32 0.0, %v2982
      %v2984 = vpop.f32.mrf.mxu0
      %v2985 = vadd.f32 0.0, %v2984
      %2986 = vmatmul.bf16.gmra.mxu0 %v2707
      %v2987 = vpop.f32.mrf.mxu0
      %v2988 = vadd.f32 0.0, %v2987
      %v2989 = vpop.f32.mrf.mxu0
      %v2990 = vadd.f32 0.0, %v2989
      %2991 = vmatmul.bf16.gmra.mxu0 %v2710
      %v2992 = vpop.f32.mrf.mxu0
      %v2993 = vadd.f32 0.0, %v2992
      %v2994 = vpop.f32.mrf.mxu0
      %v2995 = vadd.f32 0.0, %v2994
      %2996 = vmatmul.bf16.gmra.mxu0 %v2713
      %v2997 = vpop.f32.mrf.mxu0
      %v2998 = vadd.f32 0.0, %v2997
      %v2999 = vpop.f32.mrf.mxu0
      %v3000 = vadd.f32 0.0, %v2999
      %3001 = vmatmul.bf16.gmra.mxu0 %v2716
      %v3002 = vpop.f32.mrf.mxu0
      %v3003 = vadd.f32 0.0, %v3002
      %v3004 = vpop.f32.mrf.mxu0
      %v3005 = vadd.f32 0.0, %v3004
      %3006 = vmatmul.bf16.gmra.mxu0 %v2719
      %v3007 = vpop.f32.mrf.mxu0
      %v3008 = vadd.f32 0.0, %v3007
      %v3009 = vpop.f32.mrf.mxu0
      %v3010 = vadd.f32 0.0, %v3009
      %3011 = vmatmul.bf16.gmra.mxu0 %v2722
      %v3012 = vpop.f32.mrf.mxu0
      %v3013 = vadd.f32 0.0, %v3012
      %v3014 = vpop.f32.mrf.mxu0
      %v3015 = vadd.f32 0.0, %v3014
      %3016 = vmatmul.bf16.gmra.mxu0 %v2725
      %v3017 = vpop.f32.mrf.mxu0
      %v3018 = vadd.f32 0.0, %v3017
      %v3019 = vpop.f32.mrf.mxu0
      %v3020 = vadd.f32 0.0, %v3019
      %3021 = vmatmul.bf16.gmra.mxu0 %v2728
      %v3022 = vpop.f32.mrf.mxu0
      %v3023 = vadd.f32 0.0, %v3022
      %v3024 = vpop.f32.mrf.mxu0
      %v3025 = vadd.f32 0.0, %v3024
      %3026 = vmatmul.bf16.gmra.mxu0 %v2731
      %v3027 = vpop.f32.mrf.mxu0
      %v3028 = vadd.f32 0.0, %v3027
      %v3029 = vpop.f32.mrf.mxu0
      %v3030 = vadd.f32 0.0, %v3029
      %3031 = vmatmul.bf16.gmra.mxu0 %v2734
      %v3032 = vpop.f32.mrf.mxu0
      %v3033 = vadd.f32 0.0, %v3032
      %v3034 = vpop.f32.mrf.mxu0
      %v3035 = vadd.f32 0.0, %v3034
      %3036 = vmatmul.bf16.gmra.mxu0 %v2737
      %v3037 = vpop.f32.mrf.mxu0
      %v3038 = vadd.f32 0.0, %v3037
      %v3039 = vpop.f32.mrf.mxu0
      %v3040 = vadd.f32 0.0, %v3039
      %3041 = vmatmul.bf16.gmra.mxu0 %v2740
      %v3042 = vpop.f32.mrf.mxu0
      %v3043 = vadd.f32 0.0, %v3042
      %v3044 = vpop.f32.mrf.mxu0
      %v3045 = vadd.f32 0.0, %v3044
      %3046 = vmatmul.bf16.gmra.mxu0 %v2743
      %v3047 = vpop.f32.mrf.mxu0
      %v3048 = vadd.f32 0.0, %v3047
      %v3049 = vpop.f32.mrf.mxu0
      %v3050 = vadd.f32 0.0, %v3049
      %3051 = vmatmul.bf16.gmra.mxu0 %v2746
      %v3052 = vpop.f32.mrf.mxu0
      %v3053 = vadd.f32 0.0, %v3052
      %v3054 = vpop.f32.mrf.mxu0
      %v3055 = vadd.f32 0.0, %v3054
      %3056 = vmatmul.bf16.gmra.mxu0 %v2749
      %v3057 = vpop.f32.mrf.mxu0
      %v3058 = vadd.f32 0.0, %v3057
      %v3059 = vpop.f32.mrf.mxu0
      %v3060 = vadd.f32 0.0, %v3059
      %3061 = vmatmul.bf16.gmra.mxu0 %v2752
      %v3062 = vpop.f32.mrf.mxu0
      %v3063 = vadd.f32 0.0, %v3062
      %v3064 = vpop.f32.mrf.mxu0
      %v3065 = vadd.f32 0.0, %v3064
      %3066 = vmatmul.bf16.gmra.mxu0 %v2755
      %v3067 = vpop.f32.mrf.mxu0
      %v3068 = vadd.f32 0.0, %v3067
      %v3069 = vpop.f32.mrf.mxu0
      %v3070 = vadd.f32 0.0, %v3069
      %3071 = vmatmul.bf16.gmra.mxu0 %v2758
      %v3072 = vpop.f32.mrf.mxu0
      %v3073 = vadd.f32 0.0, %v3072
      %v3074 = vpop.f32.mrf.mxu0
      %v3075 = vadd.f32 0.0, %v3074
      %3076 = vmatmul.bf16.gmra.mxu0 %v2761
      %v3077 = vpop.f32.mrf.mxu0
      %v3078 = vadd.f32 0.0, %v3077
      %v3079 = vpop.f32.mrf.mxu0
      %v3080 = vadd.f32 0.0, %v3079
      %3081 = vmatmul.bf16.gmra.mxu0 %v2764
      %v3082 = vpop.f32.mrf.mxu0
      %v3083 = vadd.f32 0.0, %v3082
      %v3084 = vpop.f32.mrf.mxu0
      %v3085 = vadd.f32 0.0, %v3084
      %3086 = vmatmul.bf16.gmra.mxu0 %v2767
      %v3087 = vpop.f32.mrf.mxu0
      %v3088 = vadd.f32 0.0, %v3087
      %v3089 = vpop.f32.mrf.mxu0
      %v3090 = vadd.f32 0.0, %v3089
      %3091 = vmatmul.bf16.gmra.mxu0 %v2770
      %v3092 = vpop.f32.mrf.mxu0
      %v3093 = vadd.f32 0.0, %v3092
      %v3094 = vpop.f32.mrf.mxu0
      %v3095 = vadd.f32 0.0, %v3094
      %3096 = vmatmul.bf16.gmra.mxu0 %v2773
      %v3097 = vpop.f32.mrf.mxu0
      %v3098 = vadd.f32 0.0, %v3097
      %v3099 = vpop.f32.mrf.mxu0
      %v3100 = vadd.f32 0.0, %v3099
      %3101 = vmatmul.bf16.gmra.mxu0 %v2776
      %v3102 = vpop.f32.mrf.mxu0
      %v3103 = vadd.f32 0.0, %v3102
      %v3104 = vpop.f32.mrf.mxu0
      %v3105 = vadd.f32 0.0, %v3104
      %3106 = vdwg.mxu0
      %v3107 = vadd.f32 %v1810, %v2788
      %v3108 = vadd.f32 %v1812, %v2790
      %v3109 = vadd.f32 %v1815, %v2793
      %v3110 = vadd.f32 %v1817, %v2795
      %v3111 = vadd.f32 %v1820, %v2798
      %v3112 = vadd.f32 %v1822, %v2800
      %v3113 = vadd.f32 %v1825, %v2803
      %v3114 = vadd.f32 %v1827, %v2805
      %v3115 = vadd.f32 %v1830, %v2808
      %v3116 = vadd.f32 %v1832, %v2810
      %v3117 = vadd.f32 %v1835, %v2813
      %v3118 = vadd.f32 %v1837, %v2815
      %v3119 = vadd.f32 %v1840, %v2818
      %v3120 = vadd.f32 %v1842, %v2820
      %v3121 = vadd.f32 %v1845, %v2823
      %v3122 = vadd.f32 %v1847, %v2825
      %v3123 = vadd.f32 %v1850, %v2828
      %v3124 = vadd.f32 %v1852, %v2830
      %v3125 = vadd.f32 %v1855, %v2833
      %v3126 = vadd.f32 %v1857, %v2835
      %v3127 = vadd.f32 %v1860, %v2838
      %v3128 = vadd.f32 %v1862, %v2840
      %v3129 = vadd.f32 %v1865, %v2843
      %v3130 = vadd.f32 %v1867, %v2845
      %v3131 = vadd.f32 %v1870, %v2848
      %v3132 = vadd.f32 %v1872, %v2850
      %v3133 = vadd.f32 %v1875, %v2853
      %v3134 = vadd.f32 %v1877, %v2855
      %v3135 = vadd.f32 %v1880, %v2858
      %v3136 = vadd.f32 %v1882, %v2860
      %v3137 = vadd.f32 %v1885, %v2863
      %v3138 = vadd.f32 %v1887, %v2865
      %v3139 = vadd.f32 %v1890, %v2868
      %v3140 = vadd.f32 %v1892, %v2870
      %v3141 = vadd.f32 %v1895, %v2873
      %v3142 = vadd.f32 %v1897, %v2875
      %v3143 = vadd.f32 %v1900, %v2878
      %v3144 = vadd.f32 %v1902, %v2880
      %v3145 = vadd.f32 %v1905, %v2883
      %v3146 = vadd.f32 %v1907, %v2885
      %v3147 = vadd.f32 %v1910, %v2888
      %v3148 = vadd.f32 %v1912, %v2890
      %v3149 = vadd.f32 %v1915, %v2893
      %v3150 = vadd.f32 %v1917, %v2895
      %v3151 = vadd.f32 %v1920, %v2898
      %v3152 = vadd.f32 %v1922, %v2900
      %v3153 = vadd.f32 %v1925, %v2903
      %v3154 = vadd.f32 %v1927, %v2905
      %v3155 = vadd.f32 %v1930, %v2908
      %v3156 = vadd.f32 %v1932, %v2910
      %v3157 = vadd.f32 %v1935, %v2913
      %v3158 = vadd.f32 %v1937, %v2915
      %v3159 = vadd.f32 %v1940, %v2918
      %v3160 = vadd.f32 %v1942, %v2920
      %v3161 = vadd.f32 %v1945, %v2923
      %v3162 = vadd.f32 %v1947, %v2925
      %v3163 = vadd.f32 %v1950, %v2928
      %v3164 = vadd.f32 %v1952, %v2930
      %v3165 = vadd.f32 %v1955, %v2933
      %v3166 = vadd.f32 %v1957, %v2935
      %v3167 = vadd.f32 %v1960, %v2938
      %v3168 = vadd.f32 %v1962, %v2940
      %v3169 = vadd.f32 %v1965, %v2943
      %v3170 = vadd.f32 %v1967, %v2945
      %v3171 = vadd.f32 %v1970, %v2948
      %v3172 = vadd.f32 %v1972, %v2950
      %v3173 = vadd.f32 %v1975, %v2953
      %v3174 = vadd.f32 %v1977, %v2955
      %v3175 = vadd.f32 %v1980, %v2958
      %v3176 = vadd.f32 %v1982, %v2960
      %v3177 = vadd.f32 %v1985, %v2963
      %v3178 = vadd.f32 %v1987, %v2965
      %v3179 = vadd.f32 %v1990, %v2968
      %v3180 = vadd.f32 %v1992, %v2970
      %v3181 = vadd.f32 %v1995, %v2973
      %v3182 = vadd.f32 %v1997, %v2975
      %v3183 = vadd.f32 %v2000, %v2978
      %v3184 = vadd.f32 %v2002, %v2980
      %v3185 = vadd.f32 %v2005, %v2983
      %v3186 = vadd.f32 %v2007, %v2985
      %v3187 = vadd.f32 %v2010, %v2988
      %v3188 = vadd.f32 %v2012, %v2990
      %v3189 = vadd.f32 %v2015, %v2993
      %v3190 = vadd.f32 %v2017, %v2995
      %v3191 = vadd.f32 %v2020, %v2998
      %v3192 = vadd.f32 %v2022, %v3000
      %v3193 = vadd.f32 %v2025, %v3003
      %v3194 = vadd.f32 %v2027, %v3005
      %v3195 = vadd.f32 %v2030, %v3008
      %v3196 = vadd.f32 %v2032, %v3010
      %v3197 = vadd.f32 %v2035, %v3013
      %v3198 = vadd.f32 %v2037, %v3015
      %v3199 = vadd.f32 %v2040, %v3018
      %v3200 = vadd.f32 %v2042, %v3020
      %v3201 = vadd.f32 %v2045, %v3023
      %v3202 = vadd.f32 %v2047, %v3025
      %v3203 = vadd.f32 %v2050, %v3028
      %v3204 = vadd.f32 %v2052, %v3030
      %v3205 = vadd.f32 %v2055, %v3033
      %v3206 = vadd.f32 %v2057, %v3035
      %v3207 = vadd.f32 %v2060, %v3038
      %v3208 = vadd.f32 %v2062, %v3040
      %v3209 = vadd.f32 %v2065, %v3043
      %v3210 = vadd.f32 %v2067, %v3045
      %v3211 = vadd.f32 %v2070, %v3048
      %v3212 = vadd.f32 %v2072, %v3050
      %v3213 = vadd.f32 %v2075, %v3053
      %v3214 = vadd.f32 %v2077, %v3055
      %v3215 = vadd.f32 %v2080, %v3058
      %v3216 = vadd.f32 %v2082, %v3060
      %v3217 = vadd.f32 %v2085, %v3063
      %v3218 = vadd.f32 %v2087, %v3065
      %v3219 = vadd.f32 %v2090, %v3068
      %v3220 = vadd.f32 %v2092, %v3070
      %v3221 = vadd.f32 %v2095, %v3073
      %v3222 = vadd.f32 %v2097, %v3075
      %v3223 = vadd.f32 %v2100, %v3078
      %v3224 = vadd.f32 %v2102, %v3080
      %v3225 = vadd.f32 %v2105, %v3083
      %v3226 = vadd.f32 %v2107, %v3085
      %v3227 = vadd.f32 %v2110, %v3088
      %v3228 = vadd.f32 %v2112, %v3090
      %v3229 = vadd.f32 %v2115, %v3093
      %v3230 = vadd.f32 %v2117, %v3095
      %v3231 = vadd.f32 %v2120, %v3098
      %v3232 = vadd.f32 %v2122, %v3100
      %v3233 = vadd.f32 %v2125, %v3103
      %v3234 = vadd.f32 %v2127, %v3105
      %v3235 = vld [vmem:[%s302 + $0x10] sm:$0xf]
      %v3236 = vld [vmem:[%s302 + $0x14] sm:$0xf]
      %v3237 = vld [vmem:[%s302 + $0x18] sm:$0xf]
      %v3238 = vld [vmem:[%s302 + $0x1c] sm:$0xf]
      %v3239 = vld [vmem:[%s302 + $0x20] sm:$0xf]
      %v3240 = vld [vmem:[%s302 + $0x24] sm:$0xf]
      %v3241 = vld [vmem:[%s302 + $0x28] sm:$0xf]
      %v3242 = vld [vmem:[%s302 + $0x2c] sm:$0xf]
      %v3243 = vld [vmem:[%s302 + $0x30] sm:$0xf]
      %v3244 = vld [vmem:[%s302 + $0x34] sm:$0xf]
      %v3245 = vld [vmem:[%s302 + $0x38] sm:$0xf]
      %v3246 = vld [vmem:[%s302 + $0x3c] sm:$0xf]
      %v3247 = vld [vmem:[%s302 + $0x40] sm:$0xf]
      %v3248 = vld [vmem:[%s302 + $0x44] sm:$0xf]
      %v3249 = vld [vmem:[%s302 + $0x48] sm:$0xf]
      %v3250 = vld [vmem:[%s302 + $0x4c] sm:$0xf]
      %v3251 = vld [vmem:[%s302 + $0x50] sm:$0xf]
      %v3252 = vld [vmem:[%s302 + $0x54] sm:$0xf]
      %v3253 = vld [vmem:[%s302 + $0x58] sm:$0xf]
      %v3254 = vld [vmem:[%s302 + $0x5c] sm:$0xf]
      %v3255 = vld [vmem:[%s302 + $0x60] sm:$0xf]
      %v3256 = vld [vmem:[%s302 + $0x64] sm:$0xf]
      %v3257 = vld [vmem:[%s302 + $0x68] sm:$0xf]
      %v3258 = vld [vmem:[%s302 + $0x6c] sm:$0xf]
      %v3259 = vld [vmem:[%s302 + $0x70] sm:$0xf]
      %v3260 = vld [vmem:[%s302 + $0x74] sm:$0xf]
      %v3261 = vld [vmem:[%s302 + $0x78] sm:$0xf]
      %v3262 = vld [vmem:[%s302 + $0x7c] sm:$0xf]
      %v3263 = vld [vmem:[%s302 + $0x80] sm:$0xf]
      %v3264 = vld [vmem:[%s302 + $0x84] sm:$0xf]
      %v3265 = vld [vmem:[%s302 + $0x88] sm:$0xf]
      %v3266 = vld [vmem:[%s302 + $0x8c] sm:$0xf]
      %v3267 = vld [vmem:[%s302 + $0x90] sm:$0xf]
      %v3268 = vld [vmem:[%s302 + $0x94] sm:$0xf]
      %v3269 = vld [vmem:[%s302 + $0x98] sm:$0xf]
      %v3270 = vld [vmem:[%s302 + $0x9c] sm:$0xf]
      %v3271 = vld [vmem:[%s302 + $0xa0] sm:$0xf]
      %v3272 = vld [vmem:[%s302 + $0xa4] sm:$0xf]
      %v3273 = vld [vmem:[%s302 + $0xa8] sm:$0xf]
      %v3274 = vld [vmem:[%s302 + $0xac] sm:$0xf]
      %v3275 = vld [vmem:[%s302 + $0xb0] sm:$0xf]
      %v3276 = vld [vmem:[%s302 + $0xb4] sm:$0xf]
      %v3277 = vld [vmem:[%s302 + $0xb8] sm:$0xf]
      %v3278 = vld [vmem:[%s302 + $0xbc] sm:$0xf]
      %v3279 = vld [vmem:[%s302 + $0xc0] sm:$0xf]
      %v3280 = vld [vmem:[%s302 + $0xc4] sm:$0xf]
      %v3281 = vld [vmem:[%s302 + $0xc8] sm:$0xf]
      %v3282 = vld [vmem:[%s302 + $0xcc] sm:$0xf]
      %v3283 = vld [vmem:[%s302 + $0xd0] sm:$0xf]
      %v3284 = vld [vmem:[%s302 + $0xd4] sm:$0xf]
      %v3285 = vld [vmem:[%s302 + $0xd8] sm:$0xf]
      %v3286 = vld [vmem:[%s302 + $0xdc] sm:$0xf]
      %v3287 = vld [vmem:[%s302 + $0xe0] sm:$0xf]
      %v3288 = vld [vmem:[%s302 + $0xe4] sm:$0xf]
      %v3289 = vld [vmem:[%s302 + $0xe8] sm:$0xf]
      %v3290 = vld [vmem:[%s302 + $0xec] sm:$0xf]
      %v3291 = vld [vmem:[%s302 + $0xf0] sm:$0xf]
      %v3292 = vld [vmem:[%s302 + $0xf4] sm:$0xf]
      %v3293 = vld [vmem:[%s302 + $0xf8] sm:$0xf]
      %v3294 = vld [vmem:[%s302 + $0xfc] sm:$0xf]
      %v3295 = vld [vmem:[%s302 + $0x100] sm:$0xf]
      %v3296 = vld [vmem:[%s302 + $0x104] sm:$0xf]
      %v3297 = vld [vmem:[%s302 + $0x108] sm:$0xf]
      %v3298 = vld [vmem:[%s302 + $0x10c] sm:$0xf]
      %v3299 = vld [vmem:[%s302 + $0x110] sm:$0xf]
      %v3300 = vld [vmem:[%s302 + $0x114] sm:$0xf]
      %v3301 = vld [vmem:[%s302 + $0x118] sm:$0xf]
      %v3302 = vld [vmem:[%s302 + $0x11c] sm:$0xf]
      %v3303 = vld [vmem:[%s302 + $0x120] sm:$0xf]
      %v3304 = vld [vmem:[%s302 + $0x124] sm:$0xf]
      %v3305 = vld [vmem:[%s302 + $0x128] sm:$0xf]
      %v3306 = vld [vmem:[%s302 + $0x12c] sm:$0xf]
      %v3307 = vld [vmem:[%s302 + $0x130] sm:$0xf]
      %v3308 = vld [vmem:[%s302 + $0x134] sm:$0xf]
      %v3309 = vld [vmem:[%s302 + $0x138] sm:$0xf]
      %v3310 = vld [vmem:[%s302 + $0x13c] sm:$0xf]
      %v3311 = vld [vmem:[%s302 + $0x140] sm:$0xf]
      %v3312 = vld [vmem:[%s302 + $0x144] sm:$0xf]
      %v3313 = vld [vmem:[%s302 + $0x148] sm:$0xf]
      %v3314 = vld [vmem:[%s302 + $0x14c] sm:$0xf]
      %v3315 = vld [vmem:[%s302 + $0x150] sm:$0xf]
      %v3316 = vld [vmem:[%s302 + $0x154] sm:$0xf]
      %v3317 = vld [vmem:[%s302 + $0x158] sm:$0xf]
      %v3318 = vld [vmem:[%s302 + $0x15c] sm:$0xf]
      %v3319 = vld [vmem:[%s302 + $0x160] sm:$0xf]
      %v3320 = vld [vmem:[%s302 + $0x164] sm:$0xf]
      %v3321 = vld [vmem:[%s302 + $0x168] sm:$0xf]
      %v3322 = vld [vmem:[%s302 + $0x16c] sm:$0xf]
      %v3323 = vld [vmem:[%s302 + $0x170] sm:$0xf]
      %v3324 = vld [vmem:[%s302 + $0x174] sm:$0xf]
      %v3325 = vld [vmem:[%s302 + $0x178] sm:$0xf]
      %v3326 = vld [vmem:[%s302 + $0x17c] sm:$0xf]
      %v3327 = vld [vmem:[%s302 + $0x180] sm:$0xf]
      %v3328 = vld [vmem:[%s302 + $0x184] sm:$0xf]
      %v3329 = vld [vmem:[%s302 + $0x188] sm:$0xf]
      %v3330 = vld [vmem:[%s302 + $0x18c] sm:$0xf]
      %v3331 = vld [vmem:[%s302 + $0x190] sm:$0xf]
      %v3332 = vld [vmem:[%s302 + $0x194] sm:$0xf]
      %v3333 = vld [vmem:[%s302 + $0x198] sm:$0xf]
      %v3334 = vld [vmem:[%s302 + $0x19c] sm:$0xf]
      %v3335 = vld [vmem:[%s302 + $0x1a0] sm:$0xf]
      %v3336 = vld [vmem:[%s302 + $0x1a4] sm:$0xf]
      %v3337 = vld [vmem:[%s302 + $0x1a8] sm:$0xf]
      %v3338 = vld [vmem:[%s302 + $0x1ac] sm:$0xf]
      %v3339 = vld [vmem:[%s302 + $0x1b0] sm:$0xf]
      %v3340 = vld [vmem:[%s302 + $0x1b4] sm:$0xf]
      %v3341 = vld [vmem:[%s302 + $0x1b8] sm:$0xf]
      %v3342 = vld [vmem:[%s302 + $0x1bc] sm:$0xf]
      %v3343 = vld [vmem:[%s302 + $0x1c0] sm:$0xf]
      %v3344 = vld [vmem:[%s302 + $0x1c4] sm:$0xf]
      %v3345 = vld [vmem:[%s302 + $0x1c8] sm:$0xf]
      %v3346 = vld [vmem:[%s302 + $0x1cc] sm:$0xf]
      %v3347 = vld [vmem:[%s302 + $0x1d0] sm:$0xf]
      %v3348 = vld [vmem:[%s302 + $0x1d4] sm:$0xf]
      %v3349 = vld [vmem:[%s302 + $0x1d8] sm:$0xf]
      %v3350 = vld [vmem:[%s302 + $0x1dc] sm:$0xf]
      %v3351 = vld [vmem:[%s302 + $0x1e0] sm:$0xf]
      %v3352 = vld [vmem:[%s302 + $0x1e4] sm:$0xf]
      %v3353 = vld [vmem:[%s302 + $0x1e8] sm:$0xf]
      %v3354 = vld [vmem:[%s302 + $0x1ec] sm:$0xf]
      %v3355 = vld [vmem:[%s302 + $0x1f0] sm:$0xf]
      %v3356 = vld [vmem:[%s302 + $0x1f4] sm:$0xf]
      %v3357 = vld [vmem:[%s302 + $0x1f8] sm:$0xf]
      %v3358 = vld [vmem:[%s302 + $0x1fc] sm:$0xf]
      %v3359 = vld [vmem:[%s302 + $0x200] sm:$0xf]
      %v3360 = vld [vmem:[%s302 + $0x204] sm:$0xf]
      %v3361 = vld [vmem:[%s302 + $0x208] sm:$0xf]
      %v3362 = vld [vmem:[%s302 + $0x20c] sm:$0xf]
      %s3363 = scalar_lea.vmem %s1, 24
      %v3364 = vld [vmem:[%s3363] sm:$0xf]
      %v3365 = vld [vmem:[%s3363 + $0x4] sm:$0xf]
      %v3494 = vunpack.c.l.b16 %v3235
      %v3495 = vunpack.c.l.b16 %v3236
      %v3496 = vunpack.c.l.b16 %v3237
      %v3497 = vunpack.c.l.b16 %v3238
      %v3498 = vunpack.c.l.b16 %v3239
      %v3499 = vunpack.c.l.b16 %v3240
      %v3500 = vunpack.c.l.b16 %v3241
      %v3501 = vunpack.c.l.b16 %v3242
      %v3502 = vunpack.c.l.b16 %v3243
      %v3503 = vunpack.c.l.b16 %v3244
      %v3504 = vunpack.c.l.b16 %v3245
      %v3505 = vunpack.c.l.b16 %v3246
      %v3506 = vunpack.c.l.b16 %v3247
      %v3507 = vunpack.c.l.b16 %v3248
      %v3508 = vunpack.c.l.b16 %v3249
      %v3509 = vunpack.c.l.b16 %v3250
      %v3510 = vunpack.c.l.b16 %v3251
      %v3511 = vunpack.c.l.b16 %v3252
      %v3512 = vunpack.c.l.b16 %v3253
      %v3513 = vunpack.c.l.b16 %v3254
      %v3514 = vunpack.c.l.b16 %v3255
      %v3515 = vunpack.c.l.b16 %v3256
      %v3516 = vunpack.c.l.b16 %v3257
      %v3517 = vunpack.c.l.b16 %v3258
      %v3518 = vunpack.c.l.b16 %v3259
      %v3519 = vunpack.c.l.b16 %v3260
      %v3520 = vunpack.c.l.b16 %v3261
      %v3521 = vunpack.c.l.b16 %v3262
      %v3522 = vunpack.c.l.b16 %v3263
      %v3523 = vunpack.c.l.b16 %v3264
      %v3524 = vunpack.c.l.b16 %v3265
      %v3525 = vunpack.c.l.b16 %v3266
      %v3526 = vunpack.c.l.b16 %v3267
      %v3527 = vunpack.c.l.b16 %v3268
      %v3528 = vunpack.c.l.b16 %v3269
      %v3529 = vunpack.c.l.b16 %v3270
      %v3530 = vunpack.c.l.b16 %v3271
      %v3531 = vunpack.c.l.b16 %v3272
      %v3532 = vunpack.c.l.b16 %v3273
      %v3533 = vunpack.c.l.b16 %v3274
      %v3534 = vunpack.c.l.b16 %v3275
      %v3535 = vunpack.c.l.b16 %v3276
      %v3536 = vunpack.c.l.b16 %v3277
      %v3537 = vunpack.c.l.b16 %v3278
      %v3538 = vunpack.c.l.b16 %v3279
      %v3539 = vunpack.c.l.b16 %v3280
      %v3540 = vunpack.c.l.b16 %v3281
      %v3541 = vunpack.c.l.b16 %v3282
      %v3542 = vunpack.c.l.b16 %v3283
      %v3543 = vunpack.c.l.b16 %v3284
      %v3544 = vunpack.c.l.b16 %v3285
      %v3545 = vunpack.c.l.b16 %v3286
      %v3546 = vunpack.c.l.b16 %v3287
      %v3547 = vunpack.c.l.b16 %v3288
      %v3548 = vunpack.c.l.b16 %v3289
      %v3549 = vunpack.c.l.b16 %v3290
      %v3550 = vunpack.c.l.b16 %v3291
      %v3551 = vunpack.c.l.b16 %v3292
      %v3552 = vunpack.c.l.b16 %v3293
      %v3553 = vunpack.c.l.b16 %v3294
      %v3554 = vunpack.c.l.b16 %v3295
      %v3555 = vunpack.c.l.b16 %v3296
      %v3556 = vunpack.c.l.b16 %v3297
      %v3557 = vunpack.c.l.b16 %v3298
      %v3558 = vunpack.c.l.b16 %v3299
      %v3559 = vunpack.c.l.b16 %v3300
      %v3560 = vunpack.c.l.b16 %v3301
      %v3561 = vunpack.c.l.b16 %v3302
      %v3562 = vunpack.c.l.b16 %v3303
      %v3563 = vunpack.c.l.b16 %v3304
      %v3564 = vunpack.c.l.b16 %v3305
      %v3565 = vunpack.c.l.b16 %v3306
      %v3566 = vunpack.c.l.b16 %v3307
      %v3567 = vunpack.c.l.b16 %v3308
      %v3568 = vunpack.c.l.b16 %v3309
      %v3569 = vunpack.c.l.b16 %v3310
      %v3570 = vunpack.c.l.b16 %v3311
      %v3571 = vunpack.c.l.b16 %v3312
      %v3572 = vunpack.c.l.b16 %v3313
      %v3573 = vunpack.c.l.b16 %v3314
      %v3574 = vunpack.c.l.b16 %v3315
      %v3575 = vunpack.c.l.b16 %v3316
      %v3576 = vunpack.c.l.b16 %v3317
      %v3577 = vunpack.c.l.b16 %v3318
      %v3578 = vunpack.c.l.b16 %v3319
      %v3579 = vunpack.c.l.b16 %v3320
      %v3580 = vunpack.c.l.b16 %v3321
      %v3581 = vunpack.c.l.b16 %v3322
      %v3582 = vunpack.c.l.b16 %v3323
      %v3583 = vunpack.c.l.b16 %v3324
      %v3584 = vunpack.c.l.b16 %v3325
      %v3585 = vunpack.c.l.b16 %v3326
      %v3586 = vunpack.c.l.b16 %v3327
      %v3587 = vunpack.c.l.b16 %v3328
      %v3588 = vunpack.c.l.b16 %v3329
      %v3589 = vunpack.c.l.b16 %v3330
      %v3590 = vunpack.c.l.b16 %v3331
      %v3591 = vunpack.c.l.b16 %v3332
      %v3592 = vunpack.c.l.b16 %v3333
      %v3593 = vunpack.c.l.b16 %v3334
      %v3594 = vunpack.c.l.b16 %v3335
      %v3595 = vunpack.c.l.b16 %v3336
      %v3596 = vunpack.c.l.b16 %v3337
      %v3597 = vunpack.c.l.b16 %v3338
      %v3598 = vunpack.c.l.b16 %v3339
      %v3599 = vunpack.c.l.b16 %v3340
      %v3600 = vunpack.c.l.b16 %v3341
      %v3601 = vunpack.c.l.b16 %v3342
      %v3602 = vunpack.c.l.b16 %v3343
      %v3603 = vunpack.c.l.b16 %v3344
      %v3604 = vunpack.c.l.b16 %v3345
      %v3605 = vunpack.c.l.b16 %v3346
      %v3606 = vunpack.c.l.b16 %v3347
      %v3607 = vunpack.c.l.b16 %v3348
      %v3608 = vunpack.c.l.b16 %v3349
      %v3609 = vunpack.c.l.b16 %v3350
      %v3610 = vunpack.c.l.b16 %v3351
      %v3611 = vunpack.c.l.b16 %v3352
      %v3612 = vunpack.c.l.b16 %v3353
      %v3613 = vunpack.c.l.b16 %v3354
      %v3614 = vunpack.c.l.b16 %v3355
      %v3615 = vunpack.c.l.b16 %v3356
      %v3616 = vunpack.c.l.b16 %v3357
      %v3617 = vunpack.c.l.b16 %v3358
      %v3618 = vunpack.c.l.b16 %v3359
      %v3619 = vunpack.c.l.b16 %v3360
      %v3620 = vunpack.c.l.b16 %v3361
      %v3621 = vunpack.c.l.b16 %v3362
      %v3622 = vpack.c.b16 %v3495, %v3494
      %v3623 = vpack.c.b16 %v3497, %v3496
      %v3624 = vpack.c.b16 %v3499, %v3498
      %v3625 = vpack.c.b16 %v3501, %v3500
      %v3626 = vpack.c.b16 %v3503, %v3502
      %v3627 = vpack.c.b16 %v3505, %v3504
      %v3628 = vpack.c.b16 %v3507, %v3506
      %v3629 = vpack.c.b16 %v3509, %v3508
      %v3630 = vpack.c.b16 %v3511, %v3510
      %v3631 = vpack.c.b16 %v3513, %v3512
      %v3632 = vpack.c.b16 %v3515, %v3514
      %v3633 = vpack.c.b16 %v3517, %v3516
      %v3634 = vpack.c.b16 %v3519, %v3518
      %v3635 = vpack.c.b16 %v3521, %v3520
      %v3636 = vpack.c.b16 %v3523, %v3522
      %v3637 = vpack.c.b16 %v3525, %v3524
      %v3638 = vpack.c.b16 %v3527, %v3526
      %v3639 = vpack.c.b16 %v3529, %v3528
      %v3640 = vpack.c.b16 %v3531, %v3530
      %v3641 = vpack.c.b16 %v3533, %v3532
      %v3642 = vpack.c.b16 %v3535, %v3534
      %v3643 = vpack.c.b16 %v3537, %v3536
      %v3644 = vpack.c.b16 %v3539, %v3538
      %v3645 = vpack.c.b16 %v3541, %v3540
      %v3646 = vpack.c.b16 %v3543, %v3542
      %v3647 = vpack.c.b16 %v3545, %v3544
      %v3648 = vpack.c.b16 %v3547, %v3546
      %v3649 = vpack.c.b16 %v3549, %v3548
      %v3650 = vpack.c.b16 %v3551, %v3550
      %v3651 = vpack.c.b16 %v3553, %v3552
      %v3652 = vpack.c.b16 %v3555, %v3554
      %v3653 = vpack.c.b16 %v3557, %v3556
      %v3654 = vpack.c.b16 %v3559, %v3558
      %v3655 = vpack.c.b16 %v3561, %v3560
      %v3656 = vpack.c.b16 %v3563, %v3562
      %v3657 = vpack.c.b16 %v3565, %v3564
      %v3658 = vpack.c.b16 %v3567, %v3566
      %v3659 = vpack.c.b16 %v3569, %v3568
      %v3660 = vpack.c.b16 %v3571, %v3570
      %v3661 = vpack.c.b16 %v3573, %v3572
      %v3662 = vpack.c.b16 %v3575, %v3574
      %v3663 = vpack.c.b16 %v3577, %v3576
      %v3664 = vpack.c.b16 %v3579, %v3578
      %v3665 = vpack.c.b16 %v3581, %v3580
      %v3666 = vpack.c.b16 %v3583, %v3582
      %v3667 = vpack.c.b16 %v3585, %v3584
      %v3668 = vpack.c.b16 %v3587, %v3586
      %v3669 = vpack.c.b16 %v3589, %v3588
      %v3670 = vpack.c.b16 %v3591, %v3590
      %v3671 = vpack.c.b16 %v3593, %v3592
      %v3672 = vpack.c.b16 %v3595, %v3594
      %v3673 = vpack.c.b16 %v3597, %v3596
      %v3674 = vpack.c.b16 %v3599, %v3598
      %v3675 = vpack.c.b16 %v3601, %v3600
      %v3676 = vpack.c.b16 %v3603, %v3602
      %v3677 = vpack.c.b16 %v3605, %v3604
      %v3678 = vpack.c.b16 %v3607, %v3606
      %v3679 = vpack.c.b16 %v3609, %v3608
      %v3680 = vpack.c.b16 %v3611, %v3610
      %v3681 = vpack.c.b16 %v3613, %v3612
      %v3682 = vpack.c.b16 %v3615, %v3614
      %v3683 = vpack.c.b16 %v3617, %v3616
      %v3684 = vpack.c.b16 %v3619, %v3618
      %v3685 = vpack.c.b16 %v3621, %v3620
      %v3688 = vunpack.c.l.b16 %v3364
      %v3689 = vunpack.c.l.b16 %v3365
      %v3690 = vpack.c.b16 %v3689, %v3688
      %v3693 = vsel %vm760, %v3622, 0
      %v3696 = vsel %vm760, %v3623, 0
      %v3699 = vsel %vm760, %v3624, 0
      %v3702 = vsel %vm760, %v3625, 0
      %v3705 = vsel %vm760, %v3626, 0
      %v3708 = vsel %vm760, %v3627, 0
      %v3711 = vsel %vm760, %v3628, 0
      %v3714 = vsel %vm760, %v3629, 0
      %v3717 = vsel %vm760, %v3630, 0
      %v3720 = vsel %vm760, %v3631, 0
      %v3723 = vsel %vm760, %v3632, 0
      %v3726 = vsel %vm760, %v3633, 0
      %v3729 = vsel %vm760, %v3634, 0
      %v3732 = vsel %vm760, %v3635, 0
      %v3735 = vsel %vm760, %v3636, 0
      %v3738 = vsel %vm760, %v3637, 0
      %v3741 = vsel %vm760, %v3638, 0
      %v3744 = vsel %vm760, %v3639, 0
      %v3747 = vsel %vm760, %v3640, 0
      %v3750 = vsel %vm760, %v3641, 0
      %v3753 = vsel %vm760, %v3642, 0
      %v3756 = vsel %vm760, %v3643, 0
      %v3759 = vsel %vm760, %v3644, 0
      %v3762 = vsel %vm760, %v3645, 0
      %v3765 = vsel %vm760, %v3646, 0
      %v3768 = vsel %vm760, %v3647, 0
      %v3771 = vsel %vm760, %v3648, 0
      %v3774 = vsel %vm760, %v3649, 0
      %v3777 = vsel %vm760, %v3650, 0
      %v3780 = vsel %vm760, %v3651, 0
      %v3783 = vsel %vm760, %v3652, 0
      %v3786 = vsel %vm760, %v3653, 0
      %v3789 = vsel %vm760, %v3654, 0
      %v3792 = vsel %vm760, %v3655, 0
      %v3795 = vsel %vm760, %v3656, 0
      %v3798 = vsel %vm760, %v3657, 0
      %v3801 = vsel %vm760, %v3658, 0
      %v3804 = vsel %vm760, %v3659, 0
      %v3807 = vsel %vm760, %v3660, 0
      %v3810 = vsel %vm760, %v3661, 0
      %v3813 = vsel %vm760, %v3662, 0
      %v3816 = vsel %vm760, %v3663, 0
      %v3819 = vsel %vm760, %v3664, 0
      %v3822 = vsel %vm760, %v3665, 0
      %v3825 = vsel %vm760, %v3666, 0
      %v3828 = vsel %vm760, %v3667, 0
      %v3831 = vsel %vm760, %v3668, 0
      %v3834 = vsel %vm760, %v3669, 0
      %v3837 = vsel %vm760, %v3670, 0
      %v3840 = vsel %vm760, %v3671, 0
      %v3843 = vsel %vm760, %v3672, 0
      %v3846 = vsel %vm760, %v3673, 0
      %v3849 = vsel %vm760, %v3674, 0
      %v3852 = vsel %vm760, %v3675, 0
      %v3855 = vsel %vm760, %v3676, 0
      %v3858 = vsel %vm760, %v3677, 0
      %v3861 = vsel %vm760, %v3678, 0
      %v3864 = vsel %vm760, %v3679, 0
      %v3867 = vsel %vm760, %v3680, 0
      %v3870 = vsel %vm760, %v3681, 0
      %v3873 = vsel %vm760, %v3682, 0
      %v3876 = vsel %vm760, %v3683, 0
      %v3879 = vsel %vm760, %v3684, 0
      %v3882 = vsel %vm760, %v3685, 0
      %3884 = vmatpush.bf16.msra.mxu0 0
      %3885 = vmatpush.bf16.msra.mxu0 0
      %3886 = vmatpush.bf16.msra.mxu0 0
      %3887 = vmatpush.bf16.msra.mxu0 0
      %3888 = vmatpush.bf16.msra.mxu0 0
      %3889 = vmatpush.bf16.msra.mxu0 0
      %3890 = vmatpush.bf16.msra.mxu0 0
      %3891 = vmatpush.bf16.msra.mxu0 %v3690
      %3892 = vmatmul.bf16.gmra.mxu0 %v3693
      %v3893 = vpop.f32.mrf.mxu0
      %v3894 = vadd.f32 0.0, %v3893
      %v3895 = vpop.f32.mrf.mxu0
      %v3896 = vadd.f32 0.0, %v3895
      %3897 = vmatmul.bf16.gmra.mxu0 %v3696
      %v3898 = vpop.f32.mrf.mxu0
      %v3899 = vadd.f32 0.0, %v3898
      %v3900 = vpop.f32.mrf.mxu0
      %v3901 = vadd.f32 0.0, %v3900
      %3902 = vmatmul.bf16.gmra.mxu0 %v3699
      %v3903 = vpop.f32.mrf.mxu0
      %v3904 = vadd.f32 0.0, %v3903
      %v3905 = vpop.f32.mrf.mxu0
      %v3906 = vadd.f32 0.0, %v3905
      %3907 = vmatmul.bf16.gmra.mxu0 %v3702
      %v3908 = vpop.f32.mrf.mxu0
      %v3909 = vadd.f32 0.0, %v3908
      %v3910 = vpop.f32.mrf.mxu0
      %v3911 = vadd.f32 0.0, %v3910
      %3912 = vmatmul.bf16.gmra.mxu0 %v3705
      %v3913 = vpop.f32.mrf.mxu0
      %v3914 = vadd.f32 0.0, %v3913
      %v3915 = vpop.f32.mrf.mxu0
      %v3916 = vadd.f32 0.0, %v3915
      %3917 = vmatmul.bf16.gmra.mxu0 %v3708
      %v3918 = vpop.f32.mrf.mxu0
      %v3919 = vadd.f32 0.0, %v3918
      %v3920 = vpop.f32.mrf.mxu0
      %v3921 = vadd.f32 0.0, %v3920
      %3922 = vmatmul.bf16.gmra.mxu0 %v3711
      %v3923 = vpop.f32.mrf.mxu0
      %v3924 = vadd.f32 0.0, %v3923
      %v3925 = vpop.f32.mrf.mxu0
      %v3926 = vadd.f32 0.0, %v3925
      %3927 = vmatmul.bf16.gmra.mxu0 %v3714
      %v3928 = vpop.f32.mrf.mxu0
      %v3929 = vadd.f32 0.0, %v3928
      %v3930 = vpop.f32.mrf.mxu0
      %v3931 = vadd.f32 0.0, %v3930
      %3932 = vmatmul.bf16.gmra.mxu0 %v3717
      %v3933 = vpop.f32.mrf.mxu0
      %v3934 = vadd.f32 0.0, %v3933
      %v3935 = vpop.f32.mrf.mxu0
      %v3936 = vadd.f32 0.0, %v3935
      %3937 = vmatmul.bf16.gmra.mxu0 %v3720
      %v3938 = vpop.f32.mrf.mxu0
      %v3939 = vadd.f32 0.0, %v3938
      %v3940 = vpop.f32.mrf.mxu0
      %v3941 = vadd.f32 0.0, %v3940
      %3942 = vmatmul.bf16.gmra.mxu0 %v3723
      %v3943 = vpop.f32.mrf.mxu0
      %v3944 = vadd.f32 0.0, %v3943
      %v3945 = vpop.f32.mrf.mxu0
      %v3946 = vadd.f32 0.0, %v3945
      %3947 = vmatmul.bf16.gmra.mxu0 %v3726
      %v3948 = vpop.f32.mrf.mxu0
      %v3949 = vadd.f32 0.0, %v3948
      %v3950 = vpop.f32.mrf.mxu0
      %v3951 = vadd.f32 0.0, %v3950
      %3952 = vmatmul.bf16.gmra.mxu0 %v3729
      %v3953 = vpop.f32.mrf.mxu0
      %v3954 = vadd.f32 0.0, %v3953
      %v3955 = vpop.f32.mrf.mxu0
      %v3956 = vadd.f32 0.0, %v3955
      %3957 = vmatmul.bf16.gmra.mxu0 %v3732
      %v3958 = vpop.f32.mrf.mxu0
      %v3959 = vadd.f32 0.0, %v3958
      %v3960 = vpop.f32.mrf.mxu0
      %v3961 = vadd.f32 0.0, %v3960
      %3962 = vmatmul.bf16.gmra.mxu0 %v3735
      %v3963 = vpop.f32.mrf.mxu0
      %v3964 = vadd.f32 0.0, %v3963
      %v3965 = vpop.f32.mrf.mxu0
      %v3966 = vadd.f32 0.0, %v3965
      %3967 = vmatmul.bf16.gmra.mxu0 %v3738
      %v3968 = vpop.f32.mrf.mxu0
      %v3969 = vadd.f32 0.0, %v3968
      %v3970 = vpop.f32.mrf.mxu0
      %v3971 = vadd.f32 0.0, %v3970
      %3972 = vmatmul.bf16.gmra.mxu0 %v3741
      %v3973 = vpop.f32.mrf.mxu0
      %v3974 = vadd.f32 0.0, %v3973
      %v3975 = vpop.f32.mrf.mxu0
      %v3976 = vadd.f32 0.0, %v3975
      %3977 = vmatmul.bf16.gmra.mxu0 %v3744
      %v3978 = vpop.f32.mrf.mxu0
      %v3979 = vadd.f32 0.0, %v3978
      %v3980 = vpop.f32.mrf.mxu0
      %v3981 = vadd.f32 0.0, %v3980
      %3982 = vmatmul.bf16.gmra.mxu0 %v3747
      %v3983 = vpop.f32.mrf.mxu0
      %v3984 = vadd.f32 0.0, %v3983
      %v3985 = vpop.f32.mrf.mxu0
      %v3986 = vadd.f32 0.0, %v3985
      %3987 = vmatmul.bf16.gmra.mxu0 %v3750
      %v3988 = vpop.f32.mrf.mxu0
      %v3989 = vadd.f32 0.0, %v3988
      %v3990 = vpop.f32.mrf.mxu0
      %v3991 = vadd.f32 0.0, %v3990
      %3992 = vmatmul.bf16.gmra.mxu0 %v3753
      %v3993 = vpop.f32.mrf.mxu0
      %v3994 = vadd.f32 0.0, %v3993
      %v3995 = vpop.f32.mrf.mxu0
      %v3996 = vadd.f32 0.0, %v3995
      %3997 = vmatmul.bf16.gmra.mxu0 %v3756
      %v3998 = vpop.f32.mrf.mxu0
      %v3999 = vadd.f32 0.0, %v3998
      %v4000 = vpop.f32.mrf.mxu0
      %v4001 = vadd.f32 0.0, %v4000
      %4002 = vmatmul.bf16.gmra.mxu0 %v3759
      %v4003 = vpop.f32.mrf.mxu0
      %v4004 = vadd.f32 0.0, %v4003
      %v4005 = vpop.f32.mrf.mxu0
      %v4006 = vadd.f32 0.0, %v4005
      %4007 = vmatmul.bf16.gmra.mxu0 %v3762
      %v4008 = vpop.f32.mrf.mxu0
      %v4009 = vadd.f32 0.0, %v4008
      %v4010 = vpop.f32.mrf.mxu0
      %v4011 = vadd.f32 0.0, %v4010
      %4012 = vmatmul.bf16.gmra.mxu0 %v3765
      %v4013 = vpop.f32.mrf.mxu0
      %v4014 = vadd.f32 0.0, %v4013
      %v4015 = vpop.f32.mrf.mxu0
      %v4016 = vadd.f32 0.0, %v4015
      %4017 = vmatmul.bf16.gmra.mxu0 %v3768
      %v4018 = vpop.f32.mrf.mxu0
      %v4019 = vadd.f32 0.0, %v4018
      %v4020 = vpop.f32.mrf.mxu0
      %v4021 = vadd.f32 0.0, %v4020
      %4022 = vmatmul.bf16.gmra.mxu0 %v3771
      %v4023 = vpop.f32.mrf.mxu0
      %v4024 = vadd.f32 0.0, %v4023
      %v4025 = vpop.f32.mrf.mxu0
      %v4026 = vadd.f32 0.0, %v4025
      %4027 = vmatmul.bf16.gmra.mxu0 %v3774
      %v4028 = vpop.f32.mrf.mxu0
      %v4029 = vadd.f32 0.0, %v4028
      %v4030 = vpop.f32.mrf.mxu0
      %v4031 = vadd.f32 0.0, %v4030
      %4032 = vmatmul.bf16.gmra.mxu0 %v3777
      %v4033 = vpop.f32.mrf.mxu0
      %v4034 = vadd.f32 0.0, %v4033
      %v4035 = vpop.f32.mrf.mxu0
      %v4036 = vadd.f32 0.0, %v4035
      %4037 = vmatmul.bf16.gmra.mxu0 %v3780
      %v4038 = vpop.f32.mrf.mxu0
      %v4039 = vadd.f32 0.0, %v4038
      %v4040 = vpop.f32.mrf.mxu0
      %v4041 = vadd.f32 0.0, %v4040
      %4042 = vmatmul.bf16.gmra.mxu0 %v3783
      %v4043 = vpop.f32.mrf.mxu0
      %v4044 = vadd.f32 0.0, %v4043
      %v4045 = vpop.f32.mrf.mxu0
      %v4046 = vadd.f32 0.0, %v4045
      %4047 = vmatmul.bf16.gmra.mxu0 %v3786
      %v4048 = vpop.f32.mrf.mxu0
      %v4049 = vadd.f32 0.0, %v4048
      %v4050 = vpop.f32.mrf.mxu0
      %v4051 = vadd.f32 0.0, %v4050
      %4052 = vmatmul.bf16.gmra.mxu0 %v3789
      %v4053 = vpop.f32.mrf.mxu0
      %v4054 = vadd.f32 0.0, %v4053
      %v4055 = vpop.f32.mrf.mxu0
      %v4056 = vadd.f32 0.0, %v4055
      %4057 = vmatmul.bf16.gmra.mxu0 %v3792
      %v4058 = vpop.f32.mrf.mxu0
      %v4059 = vadd.f32 0.0, %v4058
      %v4060 = vpop.f32.mrf.mxu0
      %v4061 = vadd.f32 0.0, %v4060
      %4062 = vmatmul.bf16.gmra.mxu0 %v3795
      %v4063 = vpop.f32.mrf.mxu0
      %v4064 = vadd.f32 0.0, %v4063
      %v4065 = vpop.f32.mrf.mxu0
      %v4066 = vadd.f32 0.0, %v4065
      %4067 = vmatmul.bf16.gmra.mxu0 %v3798
      %v4068 = vpop.f32.mrf.mxu0
      %v4069 = vadd.f32 0.0, %v4068
      %v4070 = vpop.f32.mrf.mxu0
      %v4071 = vadd.f32 0.0, %v4070
      %4072 = vmatmul.bf16.gmra.mxu0 %v3801
      %v4073 = vpop.f32.mrf.mxu0
      %v4074 = vadd.f32 0.0, %v4073
      %v4075 = vpop.f32.mrf.mxu0
      %v4076 = vadd.f32 0.0, %v4075
      %4077 = vmatmul.bf16.gmra.mxu0 %v3804
      %v4078 = vpop.f32.mrf.mxu0
      %v4079 = vadd.f32 0.0, %v4078
      %v4080 = vpop.f32.mrf.mxu0
      %v4081 = vadd.f32 0.0, %v4080
      %4082 = vmatmul.bf16.gmra.mxu0 %v3807
      %v4083 = vpop.f32.mrf.mxu0
      %v4084 = vadd.f32 0.0, %v4083
      %v4085 = vpop.f32.mrf.mxu0
      %v4086 = vadd.f32 0.0, %v4085
      %4087 = vmatmul.bf16.gmra.mxu0 %v3810
      %v4088 = vpop.f32.mrf.mxu0
      %v4089 = vadd.f32 0.0, %v4088
      %v4090 = vpop.f32.mrf.mxu0
      %v4091 = vadd.f32 0.0, %v4090
      %4092 = vmatmul.bf16.gmra.mxu0 %v3813
      %v4093 = vpop.f32.mrf.mxu0
      %v4094 = vadd.f32 0.0, %v4093
      %v4095 = vpop.f32.mrf.mxu0
      %v4096 = vadd.f32 0.0, %v4095
      %4097 = vmatmul.bf16.gmra.mxu0 %v3816
      %v4098 = vpop.f32.mrf.mxu0
      %v4099 = vadd.f32 0.0, %v4098
      %v4100 = vpop.f32.mrf.mxu0
      %v4101 = vadd.f32 0.0, %v4100
      %4102 = vmatmul.bf16.gmra.mxu0 %v3819
      %v4103 = vpop.f32.mrf.mxu0
      %v4104 = vadd.f32 0.0, %v4103
      %v4105 = vpop.f32.mrf.mxu0
      %v4106 = vadd.f32 0.0, %v4105
      %4107 = vmatmul.bf16.gmra.mxu0 %v3822
      %v4108 = vpop.f32.mrf.mxu0
      %v4109 = vadd.f32 0.0, %v4108
      %v4110 = vpop.f32.mrf.mxu0
      %v4111 = vadd.f32 0.0, %v4110
      %4112 = vmatmul.bf16.gmra.mxu0 %v3825
      %v4113 = vpop.f32.mrf.mxu0
      %v4114 = vadd.f32 0.0, %v4113
      %v4115 = vpop.f32.mrf.mxu0
      %v4116 = vadd.f32 0.0, %v4115
      %4117 = vmatmul.bf16.gmra.mxu0 %v3828
      %v4118 = vpop.f32.mrf.mxu0
      %v4119 = vadd.f32 0.0, %v4118
      %v4120 = vpop.f32.mrf.mxu0
      %v4121 = vadd.f32 0.0, %v4120
      %4122 = vmatmul.bf16.gmra.mxu0 %v3831
      %v4123 = vpop.f32.mrf.mxu0
      %v4124 = vadd.f32 0.0, %v4123
      %v4125 = vpop.f32.mrf.mxu0
      %v4126 = vadd.f32 0.0, %v4125
      %4127 = vmatmul.bf16.gmra.mxu0 %v3834
      %v4128 = vpop.f32.mrf.mxu0
      %v4129 = vadd.f32 0.0, %v4128
      %v4130 = vpop.f32.mrf.mxu0
      %v4131 = vadd.f32 0.0, %v4130
      %4132 = vmatmul.bf16.gmra.mxu0 %v3837
      %v4133 = vpop.f32.mrf.mxu0
      %v4134 = vadd.f32 0.0, %v4133
      %v4135 = vpop.f32.mrf.mxu0
      %v4136 = vadd.f32 0.0, %v4135
      %4137 = vmatmul.bf16.gmra.mxu0 %v3840
      %v4138 = vpop.f32.mrf.mxu0
      %v4139 = vadd.f32 0.0, %v4138
      %v4140 = vpop.f32.mrf.mxu0
      %v4141 = vadd.f32 0.0, %v4140
      %4142 = vmatmul.bf16.gmra.mxu0 %v3843
      %v4143 = vpop.f32.mrf.mxu0
      %v4144 = vadd.f32 0.0, %v4143
      %v4145 = vpop.f32.mrf.mxu0
      %v4146 = vadd.f32 0.0, %v4145
      %4147 = vmatmul.bf16.gmra.mxu0 %v3846
      %v4148 = vpop.f32.mrf.mxu0
      %v4149 = vadd.f32 0.0, %v4148
      %v4150 = vpop.f32.mrf.mxu0
      %v4151 = vadd.f32 0.0, %v4150
      %4152 = vmatmul.bf16.gmra.mxu0 %v3849
      %v4153 = vpop.f32.mrf.mxu0
      %v4154 = vadd.f32 0.0, %v4153
      %v4155 = vpop.f32.mrf.mxu0
      %v4156 = vadd.f32 0.0, %v4155
      %4157 = vmatmul.bf16.gmra.mxu0 %v3852
      %v4158 = vpop.f32.mrf.mxu0
      %v4159 = vadd.f32 0.0, %v4158
      %v4160 = vpop.f32.mrf.mxu0
      %v4161 = vadd.f32 0.0, %v4160
      %4162 = vmatmul.bf16.gmra.mxu0 %v3855
      %v4163 = vpop.f32.mrf.mxu0
      %v4164 = vadd.f32 0.0, %v4163
      %v4165 = vpop.f32.mrf.mxu0
      %v4166 = vadd.f32 0.0, %v4165
      %4167 = vmatmul.bf16.gmra.mxu0 %v3858
      %v4168 = vpop.f32.mrf.mxu0
      %v4169 = vadd.f32 0.0, %v4168
      %v4170 = vpop.f32.mrf.mxu0
      %v4171 = vadd.f32 0.0, %v4170
      %4172 = vmatmul.bf16.gmra.mxu0 %v3861
      %v4173 = vpop.f32.mrf.mxu0
      %v4174 = vadd.f32 0.0, %v4173
      %v4175 = vpop.f32.mrf.mxu0
      %v4176 = vadd.f32 0.0, %v4175
      %4177 = vmatmul.bf16.gmra.mxu0 %v3864
      %v4178 = vpop.f32.mrf.mxu0
      %v4179 = vadd.f32 0.0, %v4178
      %v4180 = vpop.f32.mrf.mxu0
      %v4181 = vadd.f32 0.0, %v4180
      %4182 = vmatmul.bf16.gmra.mxu0 %v3867
      %v4183 = vpop.f32.mrf.mxu0
      %v4184 = vadd.f32 0.0, %v4183
      %v4185 = vpop.f32.mrf.mxu0
      %v4186 = vadd.f32 0.0, %v4185
      %4187 = vmatmul.bf16.gmra.mxu0 %v3870
      %v4188 = vpop.f32.mrf.mxu0
      %v4189 = vadd.f32 0.0, %v4188
      %v4190 = vpop.f32.mrf.mxu0
      %v4191 = vadd.f32 0.0, %v4190
      %4192 = vmatmul.bf16.gmra.mxu0 %v3873
      %v4193 = vpop.f32.mrf.mxu0
      %v4194 = vadd.f32 0.0, %v4193
      %v4195 = vpop.f32.mrf.mxu0
      %v4196 = vadd.f32 0.0, %v4195
      %4197 = vmatmul.bf16.gmra.mxu0 %v3876
      %v4198 = vpop.f32.mrf.mxu0
      %v4199 = vadd.f32 0.0, %v4198
      %v4200 = vpop.f32.mrf.mxu0
      %v4201 = vadd.f32 0.0, %v4200
      %4202 = vmatmul.bf16.gmra.mxu0 %v3879
      %v4203 = vpop.f32.mrf.mxu0
      %v4204 = vadd.f32 0.0, %v4203
      %v4205 = vpop.f32.mrf.mxu0
      %v4206 = vadd.f32 0.0, %v4205
      %4207 = vmatmul.bf16.gmra.mxu0 %v3882
      %v4208 = vpop.f32.mrf.mxu0
      %v4209 = vadd.f32 0.0, %v4208
      %v4210 = vpop.f32.mrf.mxu0
      %v4211 = vadd.f32 0.0, %v4210
      %4212 = vdwg.mxu0
      %v4213 = vadd.f32 %v3107, %v3894
      %v4214 = vadd.f32 %v3108, %v3896
      %v4215 = vadd.f32 %v3109, %v3899
      %v4216 = vadd.f32 %v3110, %v3901
      %v4217 = vadd.f32 %v3111, %v3904
      %v4218 = vadd.f32 %v3112, %v3906
      %v4219 = vadd.f32 %v3113, %v3909
      %v4220 = vadd.f32 %v3114, %v3911
      %v4221 = vadd.f32 %v3115, %v3914
      %v4222 = vadd.f32 %v3116, %v3916
      %v4223 = vadd.f32 %v3117, %v3919
      %v4224 = vadd.f32 %v3118, %v3921
      %v4225 = vadd.f32 %v3119, %v3924
      %v4226 = vadd.f32 %v3120, %v3926
      %v4227 = vadd.f32 %v3121, %v3929
      %v4228 = vadd.f32 %v3122, %v3931
      %v4229 = vadd.f32 %v3123, %v3934
      %v4230 = vadd.f32 %v3124, %v3936
      %v4231 = vadd.f32 %v3125, %v3939
      %v4232 = vadd.f32 %v3126, %v3941
      %v4233 = vadd.f32 %v3127, %v3944
      %v4234 = vadd.f32 %v3128, %v3946
      %v4235 = vadd.f32 %v3129, %v3949
      %v4236 = vadd.f32 %v3130, %v3951
      %v4237 = vadd.f32 %v3131, %v3954
      %v4238 = vadd.f32 %v3132, %v3956
      %v4239 = vadd.f32 %v3133, %v3959
      %v4240 = vadd.f32 %v3134, %v3961
      %v4241 = vadd.f32 %v3135, %v3964
      %v4242 = vadd.f32 %v3136, %v3966
      %v4243 = vadd.f32 %v3137, %v3969
      %v4244 = vadd.f32 %v3138, %v3971
      %v4245 = vadd.f32 %v3139, %v3974
      %v4246 = vadd.f32 %v3140, %v3976
      %v4247 = vadd.f32 %v3141, %v3979
      %v4248 = vadd.f32 %v3142, %v3981
      %v4249 = vadd.f32 %v3143, %v3984
      %v4250 = vadd.f32 %v3144, %v3986
      %v4251 = vadd.f32 %v3145, %v3989
      %v4252 = vadd.f32 %v3146, %v3991
      %v4253 = vadd.f32 %v3147, %v3994
      %v4254 = vadd.f32 %v3148, %v3996
      %v4255 = vadd.f32 %v3149, %v3999
      %v4256 = vadd.f32 %v3150, %v4001
      %v4257 = vadd.f32 %v3151, %v4004
      %v4258 = vadd.f32 %v3152, %v4006
      %v4259 = vadd.f32 %v3153, %v4009
      %v4260 = vadd.f32 %v3154, %v4011
      %v4261 = vadd.f32 %v3155, %v4014
      %v4262 = vadd.f32 %v3156, %v4016
      %v4263 = vadd.f32 %v3157, %v4019
      %v4264 = vadd.f32 %v3158, %v4021
      %v4265 = vadd.f32 %v3159, %v4024
      %v4266 = vadd.f32 %v3160, %v4026
      %v4267 = vadd.f32 %v3161, %v4029
      %v4268 = vadd.f32 %v3162, %v4031
      %v4269 = vadd.f32 %v3163, %v4034
      %v4270 = vadd.f32 %v3164, %v4036
      %v4271 = vadd.f32 %v3165, %v4039
      %v4272 = vadd.f32 %v3166, %v4041
      %v4273 = vadd.f32 %v3167, %v4044
      %v4274 = vadd.f32 %v3168, %v4046
      %v4275 = vadd.f32 %v3169, %v4049
      %v4276 = vadd.f32 %v3170, %v4051
      %v4277 = vadd.f32 %v3171, %v4054
      %v4278 = vadd.f32 %v3172, %v4056
      %v4279 = vadd.f32 %v3173, %v4059
      %v4280 = vadd.f32 %v3174, %v4061
      %v4281 = vadd.f32 %v3175, %v4064
      %v4282 = vadd.f32 %v3176, %v4066
      %v4283 = vadd.f32 %v3177, %v4069
      %v4284 = vadd.f32 %v3178, %v4071
      %v4285 = vadd.f32 %v3179, %v4074
      %v4286 = vadd.f32 %v3180, %v4076
      %v4287 = vadd.f32 %v3181, %v4079
      %v4288 = vadd.f32 %v3182, %v4081
      %v4289 = vadd.f32 %v3183, %v4084
      %v4290 = vadd.f32 %v3184, %v4086
      %v4291 = vadd.f32 %v3185, %v4089
      %v4292 = vadd.f32 %v3186, %v4091
      %v4293 = vadd.f32 %v3187, %v4094
      %v4294 = vadd.f32 %v3188, %v4096
      %v4295 = vadd.f32 %v3189, %v4099
      %v4296 = vadd.f32 %v3190, %v4101
      %v4297 = vadd.f32 %v3191, %v4104
      %v4298 = vadd.f32 %v3192, %v4106
      %v4299 = vadd.f32 %v3193, %v4109
      %v4300 = vadd.f32 %v3194, %v4111
      %v4301 = vadd.f32 %v3195, %v4114
      %v4302 = vadd.f32 %v3196, %v4116
      %v4303 = vadd.f32 %v3197, %v4119
      %v4304 = vadd.f32 %v3198, %v4121
      %v4305 = vadd.f32 %v3199, %v4124
      %v4306 = vadd.f32 %v3200, %v4126
      %v4307 = vadd.f32 %v3201, %v4129
      %v4308 = vadd.f32 %v3202, %v4131
      %v4309 = vadd.f32 %v3203, %v4134
      %v4310 = vadd.f32 %v3204, %v4136
      %v4311 = vadd.f32 %v3205, %v4139
      %v4312 = vadd.f32 %v3206, %v4141
      %v4313 = vadd.f32 %v3207, %v4144
      %v4314 = vadd.f32 %v3208, %v4146
      %v4315 = vadd.f32 %v3209, %v4149
      %v4316 = vadd.f32 %v3210, %v4151
      %v4317 = vadd.f32 %v3211, %v4154
      %v4318 = vadd.f32 %v3212, %v4156
      %v4319 = vadd.f32 %v3213, %v4159
      %v4320 = vadd.f32 %v3214, %v4161
      %v4321 = vadd.f32 %v3215, %v4164
      %v4322 = vadd.f32 %v3216, %v4166
      %v4323 = vadd.f32 %v3217, %v4169
      %v4324 = vadd.f32 %v3218, %v4171
      %v4325 = vadd.f32 %v3219, %v4174
      %v4326 = vadd.f32 %v3220, %v4176
      %v4327 = vadd.f32 %v3221, %v4179
      %v4328 = vadd.f32 %v3222, %v4181
      %v4329 = vadd.f32 %v3223, %v4184
      %v4330 = vadd.f32 %v3224, %v4186
      %v4331 = vadd.f32 %v3225, %v4189
      %v4332 = vadd.f32 %v3226, %v4191
      %v4333 = vadd.f32 %v3227, %v4194
      %v4334 = vadd.f32 %v3228, %v4196
      %v4335 = vadd.f32 %v3229, %v4199
      %v4336 = vadd.f32 %v3230, %v4201
      %v4337 = vadd.f32 %v3231, %v4204
      %v4338 = vadd.f32 %v3232, %v4206
      %v4339 = vadd.f32 %v3233, %v4209
      %v4340 = vadd.f32 %v3234, %v4211
      %v4341 = vld [vmem:[%s165 + $0x20] sm:$0xf]
      %v4342 = vld [vmem:[%s165 + $0x24] sm:$0xf]
      %v4343 = vld [vmem:[%s165 + $0x28] sm:$0xf]
      %v4344 = vld [vmem:[%s165 + $0x2c] sm:$0xf]
      %v4345 = vld [vmem:[%s165 + $0x30] sm:$0xf]
      %v4346 = vld [vmem:[%s165 + $0x34] sm:$0xf]
      %v4347 = vld [vmem:[%s165 + $0x38] sm:$0xf]
      %v4348 = vld [vmem:[%s165 + $0x3c] sm:$0xf]
      %v4349 = vld [vmem:[%s165 + $0x40] sm:$0xf]
      %v4350 = vld [vmem:[%s165 + $0x44] sm:$0xf]
      %v4351 = vld [vmem:[%s165 + $0x48] sm:$0xf]
      %v4352 = vld [vmem:[%s165 + $0x4c] sm:$0xf]
      %v4353 = vld [vmem:[%s165 + $0x50] sm:$0xf]
      %v4354 = vld [vmem:[%s165 + $0x54] sm:$0xf]
      %v4355 = vld [vmem:[%s165 + $0x58] sm:$0xf]
      %v4356 = vld [vmem:[%s165 + $0x5c] sm:$0xf]
      %v4357 = vld [vmem:[%s165 + $0x60] sm:$0xf]
      %v4358 = vld [vmem:[%s165 + $0x64] sm:$0xf]
      %v4359 = vld [vmem:[%s165 + $0x68] sm:$0xf]
      %v4360 = vld [vmem:[%s165 + $0x6c] sm:$0xf]
      %v4361 = vld [vmem:[%s165 + $0x70] sm:$0xf]
      %v4362 = vld [vmem:[%s165 + $0x74] sm:$0xf]
      %v4363 = vld [vmem:[%s165 + $0x78] sm:$0xf]
      %v4364 = vld [vmem:[%s165 + $0x7c] sm:$0xf]
      %v4365 = vld [vmem:[%s165 + $0x80] sm:$0xf]
      %v4366 = vld [vmem:[%s165 + $0x84] sm:$0xf]
      %v4367 = vld [vmem:[%s165 + $0x88] sm:$0xf]
      %v4368 = vld [vmem:[%s165 + $0x8c] sm:$0xf]
      %v4369 = vld [vmem:[%s165 + $0x90] sm:$0xf]
      %v4370 = vld [vmem:[%s165 + $0x94] sm:$0xf]
      %v4371 = vld [vmem:[%s165 + $0x98] sm:$0xf]
      %v4372 = vld [vmem:[%s165 + $0x9c] sm:$0xf]
      %v4373 = vld [vmem:[%s165 + $0xa0] sm:$0xf]
      %v4374 = vld [vmem:[%s165 + $0xa4] sm:$0xf]
      %v4375 = vld [vmem:[%s165 + $0xa8] sm:$0xf]
      %v4376 = vld [vmem:[%s165 + $0xac] sm:$0xf]
      %v4377 = vld [vmem:[%s165 + $0xb0] sm:$0xf]
      %v4378 = vld [vmem:[%s165 + $0xb4] sm:$0xf]
      %v4379 = vld [vmem:[%s165 + $0xb8] sm:$0xf]
      %v4380 = vld [vmem:[%s165 + $0xbc] sm:$0xf]
      %v4381 = vld [vmem:[%s165 + $0xc0] sm:$0xf]
      %v4382 = vld [vmem:[%s165 + $0xc4] sm:$0xf]
      %v4383 = vld [vmem:[%s165 + $0xc8] sm:$0xf]
      %v4384 = vld [vmem:[%s165 + $0xcc] sm:$0xf]
      %v4385 = vld [vmem:[%s165 + $0xd0] sm:$0xf]
      %v4386 = vld [vmem:[%s165 + $0xd4] sm:$0xf]
      %v4387 = vld [vmem:[%s165 + $0xd8] sm:$0xf]
      %v4388 = vld [vmem:[%s165 + $0xdc] sm:$0xf]
      %v4389 = vld [vmem:[%s165 + $0xe0] sm:$0xf]
      %v4390 = vld [vmem:[%s165 + $0xe4] sm:$0xf]
      %v4391 = vld [vmem:[%s165 + $0xe8] sm:$0xf]
      %v4392 = vld [vmem:[%s165 + $0xec] sm:$0xf]
      %v4393 = vld [vmem:[%s165 + $0xf0] sm:$0xf]
      %v4394 = vld [vmem:[%s165 + $0xf4] sm:$0xf]
      %v4395 = vld [vmem:[%s165 + $0xf8] sm:$0xf]
      %v4396 = vld [vmem:[%s165 + $0xfc] sm:$0xf]
      %v4397 = vld [vmem:[%s165 + $0x100] sm:$0xf]
      %v4398 = vld [vmem:[%s165 + $0x104] sm:$0xf]
      %v4399 = vld [vmem:[%s165 + $0x108] sm:$0xf]
      %v4400 = vld [vmem:[%s165 + $0x10c] sm:$0xf]
      %v4401 = vld [vmem:[%s165 + $0x110] sm:$0xf]
      %v4402 = vld [vmem:[%s165 + $0x114] sm:$0xf]
      %v4403 = vld [vmem:[%s165 + $0x118] sm:$0xf]
      %v4404 = vld [vmem:[%s165 + $0x11c] sm:$0xf]
      %v4405 = vld [vmem:[%s165 + $0x120] sm:$0xf]
      %v4406 = vld [vmem:[%s165 + $0x124] sm:$0xf]
      %v4407 = vld [vmem:[%s165 + $0x128] sm:$0xf]
      %v4408 = vld [vmem:[%s165 + $0x12c] sm:$0xf]
      %v4409 = vld [vmem:[%s165 + $0x130] sm:$0xf]
      %v4410 = vld [vmem:[%s165 + $0x134] sm:$0xf]
      %v4411 = vld [vmem:[%s165 + $0x138] sm:$0xf]
      %v4412 = vld [vmem:[%s165 + $0x13c] sm:$0xf]
      %v4413 = vld [vmem:[%s165 + $0x140] sm:$0xf]
      %v4414 = vld [vmem:[%s165 + $0x144] sm:$0xf]
      %v4415 = vld [vmem:[%s165 + $0x148] sm:$0xf]
      %v4416 = vld [vmem:[%s165 + $0x14c] sm:$0xf]
      %v4417 = vld [vmem:[%s165 + $0x150] sm:$0xf]
      %v4418 = vld [vmem:[%s165 + $0x154] sm:$0xf]
      %v4419 = vld [vmem:[%s165 + $0x158] sm:$0xf]
      %v4420 = vld [vmem:[%s165 + $0x15c] sm:$0xf]
      %v4421 = vld [vmem:[%s165 + $0x160] sm:$0xf]
      %v4422 = vld [vmem:[%s165 + $0x164] sm:$0xf]
      %v4423 = vld [vmem:[%s165 + $0x168] sm:$0xf]
      %v4424 = vld [vmem:[%s165 + $0x16c] sm:$0xf]
      %v4425 = vld [vmem:[%s165 + $0x170] sm:$0xf]
      %v4426 = vld [vmem:[%s165 + $0x174] sm:$0xf]
      %v4427 = vld [vmem:[%s165 + $0x178] sm:$0xf]
      %v4428 = vld [vmem:[%s165 + $0x17c] sm:$0xf]
      %v4429 = vld [vmem:[%s165 + $0x180] sm:$0xf]
      %v4430 = vld [vmem:[%s165 + $0x184] sm:$0xf]
      %v4431 = vld [vmem:[%s165 + $0x188] sm:$0xf]
      %v4432 = vld [vmem:[%s165 + $0x18c] sm:$0xf]
      %v4433 = vld [vmem:[%s165 + $0x190] sm:$0xf]
      %v4434 = vld [vmem:[%s165 + $0x194] sm:$0xf]
      %v4435 = vld [vmem:[%s165 + $0x198] sm:$0xf]
      %v4436 = vld [vmem:[%s165 + $0x19c] sm:$0xf]
      %v4437 = vld [vmem:[%s165 + $0x1a0] sm:$0xf]
      %v4438 = vld [vmem:[%s165 + $0x1a4] sm:$0xf]
      %v4439 = vld [vmem:[%s165 + $0x1a8] sm:$0xf]
      %v4440 = vld [vmem:[%s165 + $0x1ac] sm:$0xf]
      %v4441 = vld [vmem:[%s165 + $0x1b0] sm:$0xf]
      %v4442 = vld [vmem:[%s165 + $0x1b4] sm:$0xf]
      %v4443 = vld [vmem:[%s165 + $0x1b8] sm:$0xf]
      %v4444 = vld [vmem:[%s165 + $0x1bc] sm:$0xf]
      %v4445 = vld [vmem:[%s165 + $0x1c0] sm:$0xf]
      %v4446 = vld [vmem:[%s165 + $0x1c4] sm:$0xf]
      %v4447 = vld [vmem:[%s165 + $0x1c8] sm:$0xf]
      %v4448 = vld [vmem:[%s165 + $0x1cc] sm:$0xf]
      %v4449 = vld [vmem:[%s165 + $0x1d0] sm:$0xf]
      %v4450 = vld [vmem:[%s165 + $0x1d4] sm:$0xf]
      %v4451 = vld [vmem:[%s165 + $0x1d8] sm:$0xf]
      %v4452 = vld [vmem:[%s165 + $0x1dc] sm:$0xf]
      %v4453 = vld [vmem:[%s165 + $0x1e0] sm:$0xf]
      %v4454 = vld [vmem:[%s165 + $0x1e4] sm:$0xf]
      %v4455 = vld [vmem:[%s165 + $0x1e8] sm:$0xf]
      %v4456 = vld [vmem:[%s165 + $0x1ec] sm:$0xf]
      %v4457 = vld [vmem:[%s165 + $0x1f0] sm:$0xf]
      %v4458 = vld [vmem:[%s165 + $0x1f4] sm:$0xf]
      %v4459 = vld [vmem:[%s165 + $0x1f8] sm:$0xf]
      %v4460 = vld [vmem:[%s165 + $0x1fc] sm:$0xf]
      %v4461 = vld [vmem:[%s165 + $0x200] sm:$0xf]
      %v4462 = vld [vmem:[%s165 + $0x204] sm:$0xf]
      %v4463 = vld [vmem:[%s165 + $0x208] sm:$0xf]
      %v4464 = vld [vmem:[%s165 + $0x20c] sm:$0xf]
      %v4465 = vld [vmem:[%s165 + $0x210] sm:$0xf]
      %v4466 = vld [vmem:[%s165 + $0x214] sm:$0xf]
      %v4467 = vld [vmem:[%s165 + $0x218] sm:$0xf]
      %v4468 = vld [vmem:[%s165 + $0x21c] sm:$0xf]
      %s4469 = scalar_lea.vmem %s1, 32
      %v4470 = vld [vmem:[%s4469] sm:$0xf]
      %v4471 = vld [vmem:[%s4469 + $0x4] sm:$0xf]
      %v4600 = vunpack.c.l.b16 %v4341
      %v4601 = vunpack.c.l.b16 %v4342
      %v4602 = vunpack.c.l.b16 %v4343
      %v4603 = vunpack.c.l.b16 %v4344
      %v4604 = vunpack.c.l.b16 %v4345
      %v4605 = vunpack.c.l.b16 %v4346
      %v4606 = vunpack.c.l.b16 %v4347
      %v4607 = vunpack.c.l.b16 %v4348
      %v4608 = vunpack.c.l.b16 %v4349
      %v4609 = vunpack.c.l.b16 %v4350
      %v4610 = vunpack.c.l.b16 %v4351
      %v4611 = vunpack.c.l.b16 %v4352
      %v4612 = vunpack.c.l.b16 %v4353
      %v4613 = vunpack.c.l.b16 %v4354
      %v4614 = vunpack.c.l.b16 %v4355
      %v4615 = vunpack.c.l.b16 %v4356
      %v4616 = vunpack.c.l.b16 %v4357
      %v4617 = vunpack.c.l.b16 %v4358
      %v4618 = vunpack.c.l.b16 %v4359
      %v4619 = vunpack.c.l.b16 %v4360
      %v4620 = vunpack.c.l.b16 %v4361
      %v4621 = vunpack.c.l.b16 %v4362
      %v4622 = vunpack.c.l.b16 %v4363
      %v4623 = vunpack.c.l.b16 %v4364
      %v4624 = vunpack.c.l.b16 %v4365
      %v4625 = vunpack.c.l.b16 %v4366
      %v4626 = vunpack.c.l.b16 %v4367
      %v4627 = vunpack.c.l.b16 %v4368
      %v4628 = vunpack.c.l.b16 %v4369
      %v4629 = vunpack.c.l.b16 %v4370
      %v4630 = vunpack.c.l.b16 %v4371
      %v4631 = vunpack.c.l.b16 %v4372
      %v4632 = vunpack.c.l.b16 %v4373
      %v4633 = vunpack.c.l.b16 %v4374
      %v4634 = vunpack.c.l.b16 %v4375
      %v4635 = vunpack.c.l.b16 %v4376
      %v4636 = vunpack.c.l.b16 %v4377
      %v4637 = vunpack.c.l.b16 %v4378
      %v4638 = vunpack.c.l.b16 %v4379
      %v4639 = vunpack.c.l.b16 %v4380
      %v4640 = vunpack.c.l.b16 %v4381
      %v4641 = vunpack.c.l.b16 %v4382
      %v4642 = vunpack.c.l.b16 %v4383
      %v4643 = vunpack.c.l.b16 %v4384
      %v4644 = vunpack.c.l.b16 %v4385
      %v4645 = vunpack.c.l.b16 %v4386
      %v4646 = vunpack.c.l.b16 %v4387
      %v4647 = vunpack.c.l.b16 %v4388
      %v4648 = vunpack.c.l.b16 %v4389
      %v4649 = vunpack.c.l.b16 %v4390
      %v4650 = vunpack.c.l.b16 %v4391
      %v4651 = vunpack.c.l.b16 %v4392
      %v4652 = vunpack.c.l.b16 %v4393
      %v4653 = vunpack.c.l.b16 %v4394
      %v4654 = vunpack.c.l.b16 %v4395
      %v4655 = vunpack.c.l.b16 %v4396
      %v4656 = vunpack.c.l.b16 %v4397
      %v4657 = vunpack.c.l.b16 %v4398
      %v4658 = vunpack.c.l.b16 %v4399
      %v4659 = vunpack.c.l.b16 %v4400
      %v4660 = vunpack.c.l.b16 %v4401
      %v4661 = vunpack.c.l.b16 %v4402
      %v4662 = vunpack.c.l.b16 %v4403
      %v4663 = vunpack.c.l.b16 %v4404
      %v4664 = vunpack.c.l.b16 %v4405
      %v4665 = vunpack.c.l.b16 %v4406
      %v4666 = vunpack.c.l.b16 %v4407
      %v4667 = vunpack.c.l.b16 %v4408
      %v4668 = vunpack.c.l.b16 %v4409
      %v4669 = vunpack.c.l.b16 %v4410
      %v4670 = vunpack.c.l.b16 %v4411
      %v4671 = vunpack.c.l.b16 %v4412
      %v4672 = vunpack.c.l.b16 %v4413
      %v4673 = vunpack.c.l.b16 %v4414
      %v4674 = vunpack.c.l.b16 %v4415
      %v4675 = vunpack.c.l.b16 %v4416
      %v4676 = vunpack.c.l.b16 %v4417
      %v4677 = vunpack.c.l.b16 %v4418
      %v4678 = vunpack.c.l.b16 %v4419
      %v4679 = vunpack.c.l.b16 %v4420
      %v4680 = vunpack.c.l.b16 %v4421
      %v4681 = vunpack.c.l.b16 %v4422
      %v4682 = vunpack.c.l.b16 %v4423
      %v4683 = vunpack.c.l.b16 %v4424
      %v4684 = vunpack.c.l.b16 %v4425
      %v4685 = vunpack.c.l.b16 %v4426
      %v4686 = vunpack.c.l.b16 %v4427
      %v4687 = vunpack.c.l.b16 %v4428
      %v4688 = vunpack.c.l.b16 %v4429
      %v4689 = vunpack.c.l.b16 %v4430
      %v4690 = vunpack.c.l.b16 %v4431
      %v4691 = vunpack.c.l.b16 %v4432
      %v4692 = vunpack.c.l.b16 %v4433
      %v4693 = vunpack.c.l.b16 %v4434
      %v4694 = vunpack.c.l.b16 %v4435
      %v4695 = vunpack.c.l.b16 %v4436
      %v4696 = vunpack.c.l.b16 %v4437
      %v4697 = vunpack.c.l.b16 %v4438
      %v4698 = vunpack.c.l.b16 %v4439
      %v4699 = vunpack.c.l.b16 %v4440
      %v4700 = vunpack.c.l.b16 %v4441
      %v4701 = vunpack.c.l.b16 %v4442
      %v4702 = vunpack.c.l.b16 %v4443
      %v4703 = vunpack.c.l.b16 %v4444
      %v4704 = vunpack.c.l.b16 %v4445
      %v4705 = vunpack.c.l.b16 %v4446
      %v4706 = vunpack.c.l.b16 %v4447
      %v4707 = vunpack.c.l.b16 %v4448
      %v4708 = vunpack.c.l.b16 %v4449
      %v4709 = vunpack.c.l.b16 %v4450
      %v4710 = vunpack.c.l.b16 %v4451
      %v4711 = vunpack.c.l.b16 %v4452
      %v4712 = vunpack.c.l.b16 %v4453
      %v4713 = vunpack.c.l.b16 %v4454
      %v4714 = vunpack.c.l.b16 %v4455
      %v4715 = vunpack.c.l.b16 %v4456
      %v4716 = vunpack.c.l.b16 %v4457
      %v4717 = vunpack.c.l.b16 %v4458
      %v4718 = vunpack.c.l.b16 %v4459
      %v4719 = vunpack.c.l.b16 %v4460
      %v4720 = vunpack.c.l.b16 %v4461
      %v4721 = vunpack.c.l.b16 %v4462
      %v4722 = vunpack.c.l.b16 %v4463
      %v4723 = vunpack.c.l.b16 %v4464
      %v4724 = vunpack.c.l.b16 %v4465
      %v4725 = vunpack.c.l.b16 %v4466
      %v4726 = vunpack.c.l.b16 %v4467
      %v4727 = vunpack.c.l.b16 %v4468
      %v4728 = vpack.c.b16 %v4601, %v4600
      %v4729 = vpack.c.b16 %v4603, %v4602
      %v4730 = vpack.c.b16 %v4605, %v4604
      %v4731 = vpack.c.b16 %v4607, %v4606
      %v4732 = vpack.c.b16 %v4609, %v4608
      %v4733 = vpack.c.b16 %v4611, %v4610
      %v4734 = vpack.c.b16 %v4613, %v4612
      %v4735 = vpack.c.b16 %v4615, %v4614
      %v4736 = vpack.c.b16 %v4617, %v4616
      %v4737 = vpack.c.b16 %v4619, %v4618
      %v4738 = vpack.c.b16 %v4621, %v4620
      %v4739 = vpack.c.b16 %v4623, %v4622
      %v4740 = vpack.c.b16 %v4625, %v4624
      %v4741 = vpack.c.b16 %v4627, %v4626
      %v4742 = vpack.c.b16 %v4629, %v4628
      %v4743 = vpack.c.b16 %v4631, %v4630
      %v4744 = vpack.c.b16 %v4633, %v4632
      %v4745 = vpack.c.b16 %v4635, %v4634
      %v4746 = vpack.c.b16 %v4637, %v4636
      %v4747 = vpack.c.b16 %v4639, %v4638
      %v4748 = vpack.c.b16 %v4641, %v4640
      %v4749 = vpack.c.b16 %v4643, %v4642
      %v4750 = vpack.c.b16 %v4645, %v4644
      %v4751 = vpack.c.b16 %v4647, %v4646
      %v4752 = vpack.c.b16 %v4649, %v4648
      %v4753 = vpack.c.b16 %v4651, %v4650
      %v4754 = vpack.c.b16 %v4653, %v4652
      %v4755 = vpack.c.b16 %v4655, %v4654
      %v4756 = vpack.c.b16 %v4657, %v4656
      %v4757 = vpack.c.b16 %v4659, %v4658
      %v4758 = vpack.c.b16 %v4661, %v4660
      %v4759 = vpack.c.b16 %v4663, %v4662
      %v4760 = vpack.c.b16 %v4665, %v4664
      %v4761 = vpack.c.b16 %v4667, %v4666
      %v4762 = vpack.c.b16 %v4669, %v4668
      %v4763 = vpack.c.b16 %v4671, %v4670
      %v4764 = vpack.c.b16 %v4673, %v4672
      %v4765 = vpack.c.b16 %v4675, %v4674
      %v4766 = vpack.c.b16 %v4677, %v4676
      %v4767 = vpack.c.b16 %v4679, %v4678
      %v4768 = vpack.c.b16 %v4681, %v4680
      %v4769 = vpack.c.b16 %v4683, %v4682
      %v4770 = vpack.c.b16 %v4685, %v4684
      %v4771 = vpack.c.b16 %v4687, %v4686
      %v4772 = vpack.c.b16 %v4689, %v4688
      %v4773 = vpack.c.b16 %v4691, %v4690
      %v4774 = vpack.c.b16 %v4693, %v4692
      %v4775 = vpack.c.b16 %v4695, %v4694
      %v4776 = vpack.c.b16 %v4697, %v4696
      %v4777 = vpack.c.b16 %v4699, %v4698
      %v4778 = vpack.c.b16 %v4701, %v4700
      %v4779 = vpack.c.b16 %v4703, %v4702
      %v4780 = vpack.c.b16 %v4705, %v4704
      %v4781 = vpack.c.b16 %v4707, %v4706
      %v4782 = vpack.c.b16 %v4709, %v4708
      %v4783 = vpack.c.b16 %v4711, %v4710
      %v4784 = vpack.c.b16 %v4713, %v4712
      %v4785 = vpack.c.b16 %v4715, %v4714
      %v4786 = vpack.c.b16 %v4717, %v4716
      %v4787 = vpack.c.b16 %v4719, %v4718
      %v4788 = vpack.c.b16 %v4721, %v4720
      %v4789 = vpack.c.b16 %v4723, %v4722
      %v4790 = vpack.c.b16 %v4725, %v4724
      %v4791 = vpack.c.b16 %v4727, %v4726
      %v4794 = vunpack.c.l.b16 %v4470
      %v4795 = vunpack.c.l.b16 %v4471
      %v4796 = vpack.c.b16 %v4795, %v4794
      %v4799 = vsel %vm760, %v4728, 0
      %v4802 = vsel %vm760, %v4729, 0
      %v4805 = vsel %vm760, %v4730, 0
      %v4808 = vsel %vm760, %v4731, 0
      %v4811 = vsel %vm760, %v4732, 0
      %v4814 = vsel %vm760, %v4733, 0
      %v4817 = vsel %vm760, %v4734, 0
      %v4820 = vsel %vm760, %v4735, 0
      %v4823 = vsel %vm760, %v4736, 0
      %v4826 = vsel %vm760, %v4737, 0
      %v4829 = vsel %vm760, %v4738, 0
      %v4832 = vsel %vm760, %v4739, 0
      %v4835 = vsel %vm760, %v4740, 0
      %v4838 = vsel %vm760, %v4741, 0
      %v4841 = vsel %vm760, %v4742, 0
      %v4844 = vsel %vm760, %v4743, 0
      %v4847 = vsel %vm760, %v4744, 0
      %v4850 = vsel %vm760, %v4745, 0
      %v4853 = vsel %vm760, %v4746, 0
      %v4856 = vsel %vm760, %v4747, 0
      %v4859 = vsel %vm760, %v4748, 0
      %v4862 = vsel %vm760, %v4749, 0
      %v4865 = vsel %vm760, %v4750, 0
      %v4868 = vsel %vm760, %v4751, 0
      %v4871 = vsel %vm760, %v4752, 0
      %v4874 = vsel %vm760, %v4753, 0
      %v4877 = vsel %vm760, %v4754, 0
      %v4880 = vsel %vm760, %v4755, 0
      %v4883 = vsel %vm760, %v4756, 0
      %v4886 = vsel %vm760, %v4757, 0
      %v4889 = vsel %vm760, %v4758, 0
      %v4892 = vsel %vm760, %v4759, 0
      %v4895 = vsel %vm760, %v4760, 0
      %v4898 = vsel %vm760, %v4761, 0
      %v4901 = vsel %vm760, %v4762, 0
      %v4904 = vsel %vm760, %v4763, 0
      %v4907 = vsel %vm760, %v4764, 0
      %v4910 = vsel %vm760, %v4765, 0
      %v4913 = vsel %vm760, %v4766, 0
      %v4916 = vsel %vm760, %v4767, 0
      %v4919 = vsel %vm760, %v4768, 0
      %v4922 = vsel %vm760, %v4769, 0
      %v4925 = vsel %vm760, %v4770, 0
      %v4928 = vsel %vm760, %v4771, 0
      %v4931 = vsel %vm760, %v4772, 0
      %v4934 = vsel %vm760, %v4773, 0
      %v4937 = vsel %vm760, %v4774, 0
      %v4940 = vsel %vm760, %v4775, 0
      %v4943 = vsel %vm760, %v4776, 0
      %v4946 = vsel %vm760, %v4777, 0
      %v4949 = vsel %vm760, %v4778, 0
      %v4952 = vsel %vm760, %v4779, 0
      %v4955 = vsel %vm760, %v4780, 0
      %v4958 = vsel %vm760, %v4781, 0
      %v4961 = vsel %vm760, %v4782, 0
      %v4964 = vsel %vm760, %v4783, 0
      %v4967 = vsel %vm760, %v4784, 0
      %v4970 = vsel %vm760, %v4785, 0
      %v4973 = vsel %vm760, %v4786, 0
      %v4976 = vsel %vm760, %v4787, 0
      %v4979 = vsel %vm760, %v4788, 0
      %v4982 = vsel %vm760, %v4789, 0
      %v4985 = vsel %vm760, %v4790, 0
      %v4988 = vsel %vm760, %v4791, 0
      %4990 = vmatpush.bf16.msra.mxu0 0
      %4991 = vmatpush.bf16.msra.mxu0 0
      %4992 = vmatpush.bf16.msra.mxu0 0
      %4993 = vmatpush.bf16.msra.mxu0 0
      %4994 = vmatpush.bf16.msra.mxu0 0
      %4995 = vmatpush.bf16.msra.mxu0 0
      %4996 = vmatpush.bf16.msra.mxu0 0
      %4997 = vmatpush.bf16.msra.mxu0 %v4796
      %4998 = vmatmul.bf16.gmra.mxu0 %v4799
      %v4999 = vpop.f32.mrf.mxu0
      %v5000 = vadd.f32 0.0, %v4999
      %v5001 = vpop.f32.mrf.mxu0
      %v5002 = vadd.f32 0.0, %v5001
      %5003 = vmatmul.bf16.gmra.mxu0 %v4802
      %v5004 = vpop.f32.mrf.mxu0
      %v5005 = vadd.f32 0.0, %v5004
      %v5006 = vpop.f32.mrf.mxu0
      %v5007 = vadd.f32 0.0, %v5006
      %5008 = vmatmul.bf16.gmra.mxu0 %v4805
      %v5009 = vpop.f32.mrf.mxu0
      %v5010 = vadd.f32 0.0, %v5009
      %v5011 = vpop.f32.mrf.mxu0
      %v5012 = vadd.f32 0.0, %v5011
      %5013 = vmatmul.bf16.gmra.mxu0 %v4808
      %v5014 = vpop.f32.mrf.mxu0
      %v5015 = vadd.f32 0.0, %v5014
      %v5016 = vpop.f32.mrf.mxu0
      %v5017 = vadd.f32 0.0, %v5016
      %5018 = vmatmul.bf16.gmra.mxu0 %v4811
      %v5019 = vpop.f32.mrf.mxu0
      %v5020 = vadd.f32 0.0, %v5019
      %v5021 = vpop.f32.mrf.mxu0
      %v5022 = vadd.f32 0.0, %v5021
      %5023 = vmatmul.bf16.gmra.mxu0 %v4814
      %v5024 = vpop.f32.mrf.mxu0
      %v5025 = vadd.f32 0.0, %v5024
      %v5026 = vpop.f32.mrf.mxu0
      %v5027 = vadd.f32 0.0, %v5026
      %5028 = vmatmul.bf16.gmra.mxu0 %v4817
      %v5029 = vpop.f32.mrf.mxu0
      %v5030 = vadd.f32 0.0, %v5029
      %v5031 = vpop.f32.mrf.mxu0
      %v5032 = vadd.f32 0.0, %v5031
      %5033 = vmatmul.bf16.gmra.mxu0 %v4820
      %v5034 = vpop.f32.mrf.mxu0
      %v5035 = vadd.f32 0.0, %v5034
      %v5036 = vpop.f32.mrf.mxu0
      %v5037 = vadd.f32 0.0, %v5036
      %5038 = vmatmul.bf16.gmra.mxu0 %v4823
      %v5039 = vpop.f32.mrf.mxu0
      %v5040 = vadd.f32 0.0, %v5039
      %v5041 = vpop.f32.mrf.mxu0
      %v5042 = vadd.f32 0.0, %v5041
      %5043 = vmatmul.bf16.gmra.mxu0 %v4826
      %v5044 = vpop.f32.mrf.mxu0
      %v5045 = vadd.f32 0.0, %v5044
      %v5046 = vpop.f32.mrf.mxu0
      %v5047 = vadd.f32 0.0, %v5046
      %5048 = vmatmul.bf16.gmra.mxu0 %v4829
      %v5049 = vpop.f32.mrf.mxu0
      %v5050 = vadd.f32 0.0, %v5049
      %v5051 = vpop.f32.mrf.mxu0
      %v5052 = vadd.f32 0.0, %v5051
      %5053 = vmatmul.bf16.gmra.mxu0 %v4832
      %v5054 = vpop.f32.mrf.mxu0
      %v5055 = vadd.f32 0.0, %v5054
      %v5056 = vpop.f32.mrf.mxu0
      %v5057 = vadd.f32 0.0, %v5056
      %5058 = vmatmul.bf16.gmra.mxu0 %v4835
      %v5059 = vpop.f32.mrf.mxu0
      %v5060 = vadd.f32 0.0, %v5059
      %v5061 = vpop.f32.mrf.mxu0
      %v5062 = vadd.f32 0.0, %v5061
      %5063 = vmatmul.bf16.gmra.mxu0 %v4838
      %v5064 = vpop.f32.mrf.mxu0
      %v5065 = vadd.f32 0.0, %v5064
      %v5066 = vpop.f32.mrf.mxu0
      %v5067 = vadd.f32 0.0, %v5066
      %5068 = vmatmul.bf16.gmra.mxu0 %v4841
      %v5069 = vpop.f32.mrf.mxu0
      %v5070 = vadd.f32 0.0, %v5069
      %v5071 = vpop.f32.mrf.mxu0
      %v5072 = vadd.f32 0.0, %v5071
      %5073 = vmatmul.bf16.gmra.mxu0 %v4844
      %v5074 = vpop.f32.mrf.mxu0
      %v5075 = vadd.f32 0.0, %v5074
      %v5076 = vpop.f32.mrf.mxu0
      %v5077 = vadd.f32 0.0, %v5076
      %5078 = vmatmul.bf16.gmra.mxu0 %v4847
      %v5079 = vpop.f32.mrf.mxu0
      %v5080 = vadd.f32 0.0, %v5079
      %v5081 = vpop.f32.mrf.mxu0
      %v5082 = vadd.f32 0.0, %v5081
      %5083 = vmatmul.bf16.gmra.mxu0 %v4850
      %v5084 = vpop.f32.mrf.mxu0
      %v5085 = vadd.f32 0.0, %v5084
      %v5086 = vpop.f32.mrf.mxu0
      %v5087 = vadd.f32 0.0, %v5086
      %5088 = vmatmul.bf16.gmra.mxu0 %v4853
      %v5089 = vpop.f32.mrf.mxu0
      %v5090 = vadd.f32 0.0, %v5089
      %v5091 = vpop.f32.mrf.mxu0
      %v5092 = vadd.f32 0.0, %v5091
      %5093 = vmatmul.bf16.gmra.mxu0 %v4856
      %v5094 = vpop.f32.mrf.mxu0
      %v5095 = vadd.f32 0.0, %v5094
      %v5096 = vpop.f32.mrf.mxu0
      %v5097 = vadd.f32 0.0, %v5096
      %5098 = vmatmul.bf16.gmra.mxu0 %v4859
      %v5099 = vpop.f32.mrf.mxu0
      %v5100 = vadd.f32 0.0, %v5099
      %v5101 = vpop.f32.mrf.mxu0
      %v5102 = vadd.f32 0.0, %v5101
      %5103 = vmatmul.bf16.gmra.mxu0 %v4862
      %v5104 = vpop.f32.mrf.mxu0
      %v5105 = vadd.f32 0.0, %v5104
      %v5106 = vpop.f32.mrf.mxu0
      %v5107 = vadd.f32 0.0, %v5106
      %5108 = vmatmul.bf16.gmra.mxu0 %v4865
      %v5109 = vpop.f32.mrf.mxu0
      %v5110 = vadd.f32 0.0, %v5109
      %v5111 = vpop.f32.mrf.mxu0
      %v5112 = vadd.f32 0.0, %v5111
      %5113 = vmatmul.bf16.gmra.mxu0 %v4868
      %v5114 = vpop.f32.mrf.mxu0
      %v5115 = vadd.f32 0.0, %v5114
      %v5116 = vpop.f32.mrf.mxu0
      %v5117 = vadd.f32 0.0, %v5116
      %5118 = vmatmul.bf16.gmra.mxu0 %v4871
      %v5119 = vpop.f32.mrf.mxu0
      %v5120 = vadd.f32 0.0, %v5119
      %v5121 = vpop.f32.mrf.mxu0
      %v5122 = vadd.f32 0.0, %v5121
      %5123 = vmatmul.bf16.gmra.mxu0 %v4874
      %v5124 = vpop.f32.mrf.mxu0
      %v5125 = vadd.f32 0.0, %v5124
      %v5126 = vpop.f32.mrf.mxu0
      %v5127 = vadd.f32 0.0, %v5126
      %5128 = vmatmul.bf16.gmra.mxu0 %v4877
      %v5129 = vpop.f32.mrf.mxu0
      %v5130 = vadd.f32 0.0, %v5129
      %v5131 = vpop.f32.mrf.mxu0
      %v5132 = vadd.f32 0.0, %v5131
      %5133 = vmatmul.bf16.gmra.mxu0 %v4880
      %v5134 = vpop.f32.mrf.mxu0
      %v5135 = vadd.f32 0.0, %v5134
      %v5136 = vpop.f32.mrf.mxu0
      %v5137 = vadd.f32 0.0, %v5136
      %5138 = vmatmul.bf16.gmra.mxu0 %v4883
      %v5139 = vpop.f32.mrf.mxu0
      %v5140 = vadd.f32 0.0, %v5139
      %v5141 = vpop.f32.mrf.mxu0
      %v5142 = vadd.f32 0.0, %v5141
      %5143 = vmatmul.bf16.gmra.mxu0 %v4886
      %v5144 = vpop.f32.mrf.mxu0
      %v5145 = vadd.f32 0.0, %v5144
      %v5146 = vpop.f32.mrf.mxu0
      %v5147 = vadd.f32 0.0, %v5146
      %5148 = vmatmul.bf16.gmra.mxu0 %v4889
      %v5149 = vpop.f32.mrf.mxu0
      %v5150 = vadd.f32 0.0, %v5149
      %v5151 = vpop.f32.mrf.mxu0
      %v5152 = vadd.f32 0.0, %v5151
      %5153 = vmatmul.bf16.gmra.mxu0 %v4892
      %v5154 = vpop.f32.mrf.mxu0
      %v5155 = vadd.f32 0.0, %v5154
      %v5156 = vpop.f32.mrf.mxu0
      %v5157 = vadd.f32 0.0, %v5156
      %5158 = vmatmul.bf16.gmra.mxu0 %v4895
      %v5159 = vpop.f32.mrf.mxu0
      %v5160 = vadd.f32 0.0, %v5159
      %v5161 = vpop.f32.mrf.mxu0
      %v5162 = vadd.f32 0.0, %v5161
      %5163 = vmatmul.bf16.gmra.mxu0 %v4898
      %v5164 = vpop.f32.mrf.mxu0
      %v5165 = vadd.f32 0.0, %v5164
      %v5166 = vpop.f32.mrf.mxu0
      %v5167 = vadd.f32 0.0, %v5166
      %5168 = vmatmul.bf16.gmra.mxu0 %v4901
      %v5169 = vpop.f32.mrf.mxu0
      %v5170 = vadd.f32 0.0, %v5169
      %v5171 = vpop.f32.mrf.mxu0
      %v5172 = vadd.f32 0.0, %v5171
      %5173 = vmatmul.bf16.gmra.mxu0 %v4904
      %v5174 = vpop.f32.mrf.mxu0
      %v5175 = vadd.f32 0.0, %v5174
      %v5176 = vpop.f32.mrf.mxu0
      %v5177 = vadd.f32 0.0, %v5176
      %5178 = vmatmul.bf16.gmra.mxu0 %v4907
      %v5179 = vpop.f32.mrf.mxu0
      %v5180 = vadd.f32 0.0, %v5179
      %v5181 = vpop.f32.mrf.mxu0
      %v5182 = vadd.f32 0.0, %v5181
      %5183 = vmatmul.bf16.gmra.mxu0 %v4910
      %v5184 = vpop.f32.mrf.mxu0
      %v5185 = vadd.f32 0.0, %v5184
      %v5186 = vpop.f32.mrf.mxu0
      %v5187 = vadd.f32 0.0, %v5186
      %5188 = vmatmul.bf16.gmra.mxu0 %v4913
      %v5189 = vpop.f32.mrf.mxu0
      %v5190 = vadd.f32 0.0, %v5189
      %v5191 = vpop.f32.mrf.mxu0
      %v5192 = vadd.f32 0.0, %v5191
      %5193 = vmatmul.bf16.gmra.mxu0 %v4916
      %v5194 = vpop.f32.mrf.mxu0
      %v5195 = vadd.f32 0.0, %v5194
      %v5196 = vpop.f32.mrf.mxu0
      %v5197 = vadd.f32 0.0, %v5196
      %5198 = vmatmul.bf16.gmra.mxu0 %v4919
      %v5199 = vpop.f32.mrf.mxu0
      %v5200 = vadd.f32 0.0, %v5199
      %v5201 = vpop.f32.mrf.mxu0
      %v5202 = vadd.f32 0.0, %v5201
      %5203 = vmatmul.bf16.gmra.mxu0 %v4922
      %v5204 = vpop.f32.mrf.mxu0
      %v5205 = vadd.f32 0.0, %v5204
      %v5206 = vpop.f32.mrf.mxu0
      %v5207 = vadd.f32 0.0, %v5206
      %5208 = vmatmul.bf16.gmra.mxu0 %v4925
      %v5209 = vpop.f32.mrf.mxu0
      %v5210 = vadd.f32 0.0, %v5209
      %v5211 = vpop.f32.mrf.mxu0
      %v5212 = vadd.f32 0.0, %v5211
      %5213 = vmatmul.bf16.gmra.mxu0 %v4928
      %v5214 = vpop.f32.mrf.mxu0
      %v5215 = vadd.f32 0.0, %v5214
      %v5216 = vpop.f32.mrf.mxu0
      %v5217 = vadd.f32 0.0, %v5216
      %5218 = vmatmul.bf16.gmra.mxu0 %v4931
      %v5219 = vpop.f32.mrf.mxu0
      %v5220 = vadd.f32 0.0, %v5219
      %v5221 = vpop.f32.mrf.mxu0
      %v5222 = vadd.f32 0.0, %v5221
      %5223 = vmatmul.bf16.gmra.mxu0 %v4934
      %v5224 = vpop.f32.mrf.mxu0
      %v5225 = vadd.f32 0.0, %v5224
      %v5226 = vpop.f32.mrf.mxu0
      %v5227 = vadd.f32 0.0, %v5226
      %5228 = vmatmul.bf16.gmra.mxu0 %v4937
      %v5229 = vpop.f32.mrf.mxu0
      %v5230 = vadd.f32 0.0, %v5229
      %v5231 = vpop.f32.mrf.mxu0
      %v5232 = vadd.f32 0.0, %v5231
      %5233 = vmatmul.bf16.gmra.mxu0 %v4940
      %v5234 = vpop.f32.mrf.mxu0
      %v5235 = vadd.f32 0.0, %v5234
      %v5236 = vpop.f32.mrf.mxu0
      %v5237 = vadd.f32 0.0, %v5236
      %5238 = vmatmul.bf16.gmra.mxu0 %v4943
      %v5239 = vpop.f32.mrf.mxu0
      %v5240 = vadd.f32 0.0, %v5239
      %v5241 = vpop.f32.mrf.mxu0
      %v5242 = vadd.f32 0.0, %v5241
      %5243 = vmatmul.bf16.gmra.mxu0 %v4946
      %v5244 = vpop.f32.mrf.mxu0
      %v5245 = vadd.f32 0.0, %v5244
      %v5246 = vpop.f32.mrf.mxu0
      %v5247 = vadd.f32 0.0, %v5246
      %5248 = vmatmul.bf16.gmra.mxu0 %v4949
      %v5249 = vpop.f32.mrf.mxu0
      %v5250 = vadd.f32 0.0, %v5249
      %v5251 = vpop.f32.mrf.mxu0
      %v5252 = vadd.f32 0.0, %v5251
      %5253 = vmatmul.bf16.gmra.mxu0 %v4952
      %v5254 = vpop.f32.mrf.mxu0
      %v5255 = vadd.f32 0.0, %v5254
      %v5256 = vpop.f32.mrf.mxu0
      %v5257 = vadd.f32 0.0, %v5256
      %5258 = vmatmul.bf16.gmra.mxu0 %v4955
      %v5259 = vpop.f32.mrf.mxu0
      %v5260 = vadd.f32 0.0, %v5259
      %v5261 = vpop.f32.mrf.mxu0
      %v5262 = vadd.f32 0.0, %v5261
      %5263 = vmatmul.bf16.gmra.mxu0 %v4958
      %v5264 = vpop.f32.mrf.mxu0
      %v5265 = vadd.f32 0.0, %v5264
      %v5266 = vpop.f32.mrf.mxu0
      %v5267 = vadd.f32 0.0, %v5266
      %5268 = vmatmul.bf16.gmra.mxu0 %v4961
      %v5269 = vpop.f32.mrf.mxu0
      %v5270 = vadd.f32 0.0, %v5269
      %v5271 = vpop.f32.mrf.mxu0
      %v5272 = vadd.f32 0.0, %v5271
      %5273 = vmatmul.bf16.gmra.mxu0 %v4964
      %v5274 = vpop.f32.mrf.mxu0
      %v5275 = vadd.f32 0.0, %v5274
      %v5276 = vpop.f32.mrf.mxu0
      %v5277 = vadd.f32 0.0, %v5276
      %5278 = vmatmul.bf16.gmra.mxu0 %v4967
      %v5279 = vpop.f32.mrf.mxu0
      %v5280 = vadd.f32 0.0, %v5279
      %v5281 = vpop.f32.mrf.mxu0
      %v5282 = vadd.f32 0.0, %v5281
      %5283 = vmatmul.bf16.gmra.mxu0 %v4970
      %v5284 = vpop.f32.mrf.mxu0
      %v5285 = vadd.f32 0.0, %v5284
      %v5286 = vpop.f32.mrf.mxu0
      %v5287 = vadd.f32 0.0, %v5286
      %5288 = vmatmul.bf16.gmra.mxu0 %v4973
      %v5289 = vpop.f32.mrf.mxu0
      %v5290 = vadd.f32 0.0, %v5289
      %v5291 = vpop.f32.mrf.mxu0
      %v5292 = vadd.f32 0.0, %v5291
      %5293 = vmatmul.bf16.gmra.mxu0 %v4976
      %v5294 = vpop.f32.mrf.mxu0
      %v5295 = vadd.f32 0.0, %v5294
      %v5296 = vpop.f32.mrf.mxu0
      %v5297 = vadd.f32 0.0, %v5296
      %5298 = vmatmul.bf16.gmra.mxu0 %v4979
      %v5299 = vpop.f32.mrf.mxu0
      %v5300 = vadd.f32 0.0, %v5299
      %v5301 = vpop.f32.mrf.mxu0
      %v5302 = vadd.f32 0.0, %v5301
      %5303 = vmatmul.bf16.gmra.mxu0 %v4982
      %v5304 = vpop.f32.mrf.mxu0
      %v5305 = vadd.f32 0.0, %v5304
      %v5306 = vpop.f32.mrf.mxu0
      %v5307 = vadd.f32 0.0, %v5306
      %5308 = vmatmul.bf16.gmra.mxu0 %v4985
      %v5309 = vpop.f32.mrf.mxu0
      %v5310 = vadd.f32 0.0, %v5309
      %v5311 = vpop.f32.mrf.mxu0
      %v5312 = vadd.f32 0.0, %v5311
      %5313 = vmatmul.bf16.gmra.mxu0 %v4988
      %v5314 = vpop.f32.mrf.mxu0
      %v5315 = vadd.f32 0.0, %v5314
      %v5316 = vpop.f32.mrf.mxu0
      %v5317 = vadd.f32 0.0, %v5316
      %5318 = vdwg.mxu0
      %v5319 = vadd.f32 %v4213, %v5000
      %v5320 = vadd.f32 %v4214, %v5002
      %v5321 = vadd.f32 %v4215, %v5005
      %v5322 = vadd.f32 %v4216, %v5007
      %v5323 = vadd.f32 %v4217, %v5010
      %v5324 = vadd.f32 %v4218, %v5012
      %v5325 = vadd.f32 %v4219, %v5015
      %v5326 = vadd.f32 %v4220, %v5017
      %v5327 = vadd.f32 %v4221, %v5020
      %v5328 = vadd.f32 %v4222, %v5022
      %v5329 = vadd.f32 %v4223, %v5025
      %v5330 = vadd.f32 %v4224, %v5027
      %v5331 = vadd.f32 %v4225, %v5030
      %v5332 = vadd.f32 %v4226, %v5032
      %v5333 = vadd.f32 %v4227, %v5035
      %v5334 = vadd.f32 %v4228, %v5037
      %v5335 = vadd.f32 %v4229, %v5040
      %v5336 = vadd.f32 %v4230, %v5042
      %v5337 = vadd.f32 %v4231, %v5045
      %v5338 = vadd.f32 %v4232, %v5047
      %v5339 = vadd.f32 %v4233, %v5050
      %v5340 = vadd.f32 %v4234, %v5052
      %v5341 = vadd.f32 %v4235, %v5055
      %v5342 = vadd.f32 %v4236, %v5057
      %v5343 = vadd.f32 %v4237, %v5060
      %v5344 = vadd.f32 %v4238, %v5062
      %v5345 = vadd.f32 %v4239, %v5065
      %v5346 = vadd.f32 %v4240, %v5067
      %v5347 = vadd.f32 %v4241, %v5070
      %v5348 = vadd.f32 %v4242, %v5072
      %v5349 = vadd.f32 %v4243, %v5075
      %v5350 = vadd.f32 %v4244, %v5077
      %v5351 = vadd.f32 %v4245, %v5080
      %v5352 = vadd.f32 %v4246, %v5082
      %v5353 = vadd.f32 %v4247, %v5085
      %v5354 = vadd.f32 %v4248, %v5087
      %v5355 = vadd.f32 %v4249, %v5090
      %v5356 = vadd.f32 %v4250, %v5092
      %v5357 = vadd.f32 %v4251, %v5095
      %v5358 = vadd.f32 %v4252, %v5097
      %v5359 = vadd.f32 %v4253, %v5100
      %v5360 = vadd.f32 %v4254, %v5102
      %v5361 = vadd.f32 %v4255, %v5105
      %v5362 = vadd.f32 %v4256, %v5107
      %v5363 = vadd.f32 %v4257, %v5110
      %v5364 = vadd.f32 %v4258, %v5112
      %v5365 = vadd.f32 %v4259, %v5115
      %v5366 = vadd.f32 %v4260, %v5117
      %v5367 = vadd.f32 %v4261, %v5120
      %v5368 = vadd.f32 %v4262, %v5122
      %v5369 = vadd.f32 %v4263, %v5125
      %v5370 = vadd.f32 %v4264, %v5127
      %v5371 = vadd.f32 %v4265, %v5130
      %v5372 = vadd.f32 %v4266, %v5132
      %v5373 = vadd.f32 %v4267, %v5135
      %v5374 = vadd.f32 %v4268, %v5137
      %v5375 = vadd.f32 %v4269, %v5140
      %v5376 = vadd.f32 %v4270, %v5142
      %v5377 = vadd.f32 %v4271, %v5145
      %v5378 = vadd.f32 %v4272, %v5147
      %v5379 = vadd.f32 %v4273, %v5150
      %v5380 = vadd.f32 %v4274, %v5152
      %v5381 = vadd.f32 %v4275, %v5155
      %v5382 = vadd.f32 %v4276, %v5157
      %v5383 = vadd.f32 %v4277, %v5160
      %v5384 = vadd.f32 %v4278, %v5162
      %v5385 = vadd.f32 %v4279, %v5165
      %v5386 = vadd.f32 %v4280, %v5167
      %v5387 = vadd.f32 %v4281, %v5170
      %v5388 = vadd.f32 %v4282, %v5172
      %v5389 = vadd.f32 %v4283, %v5175
      %v5390 = vadd.f32 %v4284, %v5177
      %v5391 = vadd.f32 %v4285, %v5180
      %v5392 = vadd.f32 %v4286, %v5182
      %v5393 = vadd.f32 %v4287, %v5185
      %v5394 = vadd.f32 %v4288, %v5187
      %v5395 = vadd.f32 %v4289, %v5190
      %v5396 = vadd.f32 %v4290, %v5192
      %v5397 = vadd.f32 %v4291, %v5195
      %v5398 = vadd.f32 %v4292, %v5197
      %v5399 = vadd.f32 %v4293, %v5200
      %v5400 = vadd.f32 %v4294, %v5202
      %v5401 = vadd.f32 %v4295, %v5205
      %v5402 = vadd.f32 %v4296, %v5207
      %v5403 = vadd.f32 %v4297, %v5210
      %v5404 = vadd.f32 %v4298, %v5212
      %v5405 = vadd.f32 %v4299, %v5215
      %v5406 = vadd.f32 %v4300, %v5217
      %v5407 = vadd.f32 %v4301, %v5220
      %v5408 = vadd.f32 %v4302, %v5222
      %v5409 = vadd.f32 %v4303, %v5225
      %v5410 = vadd.f32 %v4304, %v5227
      %v5411 = vadd.f32 %v4305, %v5230
      %v5412 = vadd.f32 %v4306, %v5232
      %v5413 = vadd.f32 %v4307, %v5235
      %v5414 = vadd.f32 %v4308, %v5237
      %v5415 = vadd.f32 %v4309, %v5240
      %v5416 = vadd.f32 %v4310, %v5242
      %v5417 = vadd.f32 %v4311, %v5245
      %v5418 = vadd.f32 %v4312, %v5247
      %v5419 = vadd.f32 %v4313, %v5250
      %v5420 = vadd.f32 %v4314, %v5252
      %v5421 = vadd.f32 %v4315, %v5255
      %v5422 = vadd.f32 %v4316, %v5257
      %v5423 = vadd.f32 %v4317, %v5260
      %v5424 = vadd.f32 %v4318, %v5262
      %v5425 = vadd.f32 %v4319, %v5265
      %v5426 = vadd.f32 %v4320, %v5267
      %v5427 = vadd.f32 %v4321, %v5270
      %v5428 = vadd.f32 %v4322, %v5272
      %v5429 = vadd.f32 %v4323, %v5275
      %v5430 = vadd.f32 %v4324, %v5277
      %v5431 = vadd.f32 %v4325, %v5280
      %v5432 = vadd.f32 %v4326, %v5282
      %v5433 = vadd.f32 %v4327, %v5285
      %v5434 = vadd.f32 %v4328, %v5287
      %v5435 = vadd.f32 %v4329, %v5290
      %v5436 = vadd.f32 %v4330, %v5292
      %v5437 = vadd.f32 %v4331, %v5295
      %v5438 = vadd.f32 %v4332, %v5297
      %v5439 = vadd.f32 %v4333, %v5300
      %v5440 = vadd.f32 %v4334, %v5302
      %v5441 = vadd.f32 %v4335, %v5305
      %v5442 = vadd.f32 %v4336, %v5307
      %v5443 = vadd.f32 %v4337, %v5310
      %v5444 = vadd.f32 %v4338, %v5312
      %v5445 = vadd.f32 %v4339, %v5315
      %v5446 = vadd.f32 %v4340, %v5317
      %v5447 = vld [vmem:[%s2] sm:$0x1]
      %v5449 = vperm.slane %v5447, 0
      %v5451 = vadd.f32 %v5319, %v5449
      %v5452 = vadd.f32 %v5320, %v5449
      %v5453 = vadd.f32 %v5321, %v5449
      %v5454 = vadd.f32 %v5322, %v5449
      %v5455 = vadd.f32 %v5323, %v5449
      %v5456 = vadd.f32 %v5324, %v5449
      %v5457 = vadd.f32 %v5325, %v5449
      %v5458 = vadd.f32 %v5326, %v5449
      %v5459 = vadd.f32 %v5327, %v5449
      %v5460 = vadd.f32 %v5328, %v5449
      %v5461 = vadd.f32 %v5329, %v5449
      %v5462 = vadd.f32 %v5330, %v5449
      %v5463 = vadd.f32 %v5331, %v5449
      %v5464 = vadd.f32 %v5332, %v5449
      %v5465 = vadd.f32 %v5333, %v5449
      %v5466 = vadd.f32 %v5334, %v5449
      %v5467 = vadd.f32 %v5335, %v5449
      %v5468 = vadd.f32 %v5336, %v5449
      %v5469 = vadd.f32 %v5337, %v5449
      %v5470 = vadd.f32 %v5338, %v5449
      %v5471 = vadd.f32 %v5339, %v5449
      %v5472 = vadd.f32 %v5340, %v5449
      %v5473 = vadd.f32 %v5341, %v5449
      %v5474 = vadd.f32 %v5342, %v5449
      %v5475 = vadd.f32 %v5343, %v5449
      %v5476 = vadd.f32 %v5344, %v5449
      %v5477 = vadd.f32 %v5345, %v5449
      %v5478 = vadd.f32 %v5346, %v5449
      %v5479 = vadd.f32 %v5347, %v5449
      %v5480 = vadd.f32 %v5348, %v5449
      %v5481 = vadd.f32 %v5349, %v5449
      %v5482 = vadd.f32 %v5350, %v5449
      %v5483 = vadd.f32 %v5351, %v5449
      %v5484 = vadd.f32 %v5352, %v5449
      %v5485 = vadd.f32 %v5353, %v5449
      %v5486 = vadd.f32 %v5354, %v5449
      %v5487 = vadd.f32 %v5355, %v5449
      %v5488 = vadd.f32 %v5356, %v5449
      %v5489 = vadd.f32 %v5357, %v5449
      %v5490 = vadd.f32 %v5358, %v5449
      %v5491 = vadd.f32 %v5359, %v5449
      %v5492 = vadd.f32 %v5360, %v5449
      %v5493 = vadd.f32 %v5361, %v5449
      %v5494 = vadd.f32 %v5362, %v5449
      %v5495 = vadd.f32 %v5363, %v5449
      %v5496 = vadd.f32 %v5364, %v5449
      %v5497 = vadd.f32 %v5365, %v5449
      %v5498 = vadd.f32 %v5366, %v5449
      %v5499 = vadd.f32 %v5367, %v5449
      %v5500 = vadd.f32 %v5368, %v5449
      %v5501 = vadd.f32 %v5369, %v5449
      %v5502 = vadd.f32 %v5370, %v5449
      %v5503 = vadd.f32 %v5371, %v5449
      %v5504 = vadd.f32 %v5372, %v5449
      %v5505 = vadd.f32 %v5373, %v5449
      %v5506 = vadd.f32 %v5374, %v5449
      %v5507 = vadd.f32 %v5375, %v5449
      %v5508 = vadd.f32 %v5376, %v5449
      %v5509 = vadd.f32 %v5377, %v5449
      %v5510 = vadd.f32 %v5378, %v5449
      %v5511 = vadd.f32 %v5379, %v5449
      %v5512 = vadd.f32 %v5380, %v5449
      %v5513 = vadd.f32 %v5381, %v5449
      %v5514 = vadd.f32 %v5382, %v5449
      %v5515 = vadd.f32 %v5383, %v5449
      %v5516 = vadd.f32 %v5384, %v5449
      %v5517 = vadd.f32 %v5385, %v5449
      %v5518 = vadd.f32 %v5386, %v5449
      %v5519 = vadd.f32 %v5387, %v5449
      %v5520 = vadd.f32 %v5388, %v5449
      %v5521 = vadd.f32 %v5389, %v5449
      %v5522 = vadd.f32 %v5390, %v5449
      %v5523 = vadd.f32 %v5391, %v5449
      %v5524 = vadd.f32 %v5392, %v5449
      %v5525 = vadd.f32 %v5393, %v5449
      %v5526 = vadd.f32 %v5394, %v5449
      %v5527 = vadd.f32 %v5395, %v5449
      %v5528 = vadd.f32 %v5396, %v5449
      %v5529 = vadd.f32 %v5397, %v5449
      %v5530 = vadd.f32 %v5398, %v5449
      %v5531 = vadd.f32 %v5399, %v5449
      %v5532 = vadd.f32 %v5400, %v5449
      %v5533 = vadd.f32 %v5401, %v5449
      %v5534 = vadd.f32 %v5402, %v5449
      %v5535 = vadd.f32 %v5403, %v5449
      %v5536 = vadd.f32 %v5404, %v5449
      %v5537 = vadd.f32 %v5405, %v5449
      %v5538 = vadd.f32 %v5406, %v5449
      %v5539 = vadd.f32 %v5407, %v5449
      %v5540 = vadd.f32 %v5408, %v5449
      %v5541 = vadd.f32 %v5409, %v5449
      %v5542 = vadd.f32 %v5410, %v5449
      %v5543 = vadd.f32 %v5411, %v5449
      %v5544 = vadd.f32 %v5412, %v5449
      %v5545 = vadd.f32 %v5413, %v5449
      %v5546 = vadd.f32 %v5414, %v5449
      %v5547 = vadd.f32 %v5415, %v5449
      %v5548 = vadd.f32 %v5416, %v5449
      %v5549 = vadd.f32 %v5417, %v5449
      %v5550 = vadd.f32 %v5418, %v5449
      %v5551 = vadd.f32 %v5419, %v5449
      %v5552 = vadd.f32 %v5420, %v5449
      %v5553 = vadd.f32 %v5421, %v5449
      %v5554 = vadd.f32 %v5422, %v5449
      %v5555 = vadd.f32 %v5423, %v5449
      %v5556 = vadd.f32 %v5424, %v5449
      %v5557 = vadd.f32 %v5425, %v5449
      %v5558 = vadd.f32 %v5426, %v5449
      %v5559 = vadd.f32 %v5427, %v5449
      %v5560 = vadd.f32 %v5428, %v5449
      %v5561 = vadd.f32 %v5429, %v5449
      %v5562 = vadd.f32 %v5430, %v5449
      %v5563 = vadd.f32 %v5431, %v5449
      %v5564 = vadd.f32 %v5432, %v5449
      %v5565 = vadd.f32 %v5433, %v5449
      %v5566 = vadd.f32 %v5434, %v5449
      %v5567 = vadd.f32 %v5435, %v5449
      %v5568 = vadd.f32 %v5436, %v5449
      %v5569 = vadd.f32 %v5437, %v5449
      %v5570 = vadd.f32 %v5438, %v5449
      %v5571 = vadd.f32 %v5439, %v5449
      %v5572 = vadd.f32 %v5440, %v5449
      %v5573 = vadd.f32 %v5441, %v5449
      %v5574 = vadd.f32 %v5442, %v5449
      %v5575 = vadd.f32 %v5443, %v5449
      %v5576 = vadd.f32 %v5444, %v5449
      %v5577 = vadd.f32 %v5445, %v5449
      %v5578 = vadd.f32 %v5446, %v5449
      %vm5579 = vcmp.gt.f32.partialorder %v5451, 0.0
      %vm5580 = vcmp.gt.f32.partialorder %v5452, 0.0
      %vm5581 = vcmp.gt.f32.partialorder %v5453, 0.0
      %vm5582 = vcmp.gt.f32.partialorder %v5454, 0.0
      %vm5583 = vcmp.gt.f32.partialorder %v5455, 0.0
      %vm5584 = vcmp.gt.f32.partialorder %v5456, 0.0
      %vm5585 = vcmp.gt.f32.partialorder %v5457, 0.0
      %vm5586 = vcmp.gt.f32.partialorder %v5458, 0.0
      %vm5587 = vcmp.gt.f32.partialorder %v5459, 0.0
      %vm5588 = vcmp.gt.f32.partialorder %v5460, 0.0
      %vm5589 = vcmp.gt.f32.partialorder %v5461, 0.0
      %vm5590 = vcmp.gt.f32.partialorder %v5462, 0.0
      %vm5591 = vcmp.gt.f32.partialorder %v5463, 0.0
      %vm5592 = vcmp.gt.f32.partialorder %v5464, 0.0
      %vm5593 = vcmp.gt.f32.partialorder %v5465, 0.0
      %vm5594 = vcmp.gt.f32.partialorder %v5466, 0.0
      %vm5595 = vcmp.gt.f32.partialorder %v5467, 0.0
      %vm5596 = vcmp.gt.f32.partialorder %v5468, 0.0
      %vm5597 = vcmp.gt.f32.partialorder %v5469, 0.0
      %vm5598 = vcmp.gt.f32.partialorder %v5470, 0.0
      %vm5599 = vcmp.gt.f32.partialorder %v5471, 0.0
      %vm5600 = vcmp.gt.f32.partialorder %v5472, 0.0
      %vm5601 = vcmp.gt.f32.partialorder %v5473, 0.0
      %vm5602 = vcmp.gt.f32.partialorder %v5474, 0.0
      %vm5603 = vcmp.gt.f32.partialorder %v5475, 0.0
      %vm5604 = vcmp.gt.f32.partialorder %v5476, 0.0
      %vm5605 = vcmp.gt.f32.partialorder %v5477, 0.0
      %vm5606 = vcmp.gt.f32.partialorder %v5478, 0.0
      %vm5607 = vcmp.gt.f32.partialorder %v5479, 0.0
      %vm5608 = vcmp.gt.f32.partialorder %v5480, 0.0
      %vm5609 = vcmp.gt.f32.partialorder %v5481, 0.0
      %vm5610 = vcmp.gt.f32.partialorder %v5482, 0.0
      %vm5611 = vcmp.gt.f32.partialorder %v5483, 0.0
      %vm5612 = vcmp.gt.f32.partialorder %v5484, 0.0
      %vm5613 = vcmp.gt.f32.partialorder %v5485, 0.0
      %vm5614 = vcmp.gt.f32.partialorder %v5486, 0.0
      %vm5615 = vcmp.gt.f32.partialorder %v5487, 0.0
      %vm5616 = vcmp.gt.f32.partialorder %v5488, 0.0
      %vm5617 = vcmp.gt.f32.partialorder %v5489, 0.0
      %vm5618 = vcmp.gt.f32.partialorder %v5490, 0.0
      %vm5619 = vcmp.gt.f32.partialorder %v5491, 0.0
      %vm5620 = vcmp.gt.f32.partialorder %v5492, 0.0
      %vm5621 = vcmp.gt.f32.partialorder %v5493, 0.0
      %vm5622 = vcmp.gt.f32.partialorder %v5494, 0.0
      %vm5623 = vcmp.gt.f32.partialorder %v5495, 0.0
      %vm5624 = vcmp.gt.f32.partialorder %v5496, 0.0
      %vm5625 = vcmp.gt.f32.partialorder %v5497, 0.0
      %vm5626 = vcmp.gt.f32.partialorder %v5498, 0.0
      %vm5627 = vcmp.gt.f32.partialorder %v5499, 0.0
      %vm5628 = vcmp.gt.f32.partialorder %v5500, 0.0
      %vm5629 = vcmp.gt.f32.partialorder %v5501, 0.0
      %vm5630 = vcmp.gt.f32.partialorder %v5502, 0.0
      %vm5631 = vcmp.gt.f32.partialorder %v5503, 0.0
      %vm5632 = vcmp.gt.f32.partialorder %v5504, 0.0
      %vm5633 = vcmp.gt.f32.partialorder %v5505, 0.0
      %vm5634 = vcmp.gt.f32.partialorder %v5506, 0.0
      %vm5635 = vcmp.gt.f32.partialorder %v5507, 0.0
      %vm5636 = vcmp.gt.f32.partialorder %v5508, 0.0
      %vm5637 = vcmp.gt.f32.partialorder %v5509, 0.0
      %vm5638 = vcmp.gt.f32.partialorder %v5510, 0.0
      %vm5639 = vcmp.gt.f32.partialorder %v5511, 0.0
      %vm5640 = vcmp.gt.f32.partialorder %v5512, 0.0
      %vm5641 = vcmp.gt.f32.partialorder %v5513, 0.0
      %vm5642 = vcmp.gt.f32.partialorder %v5514, 0.0
      %vm5643 = vcmp.gt.f32.partialorder %v5515, 0.0
      %vm5644 = vcmp.gt.f32.partialorder %v5516, 0.0
      %vm5645 = vcmp.gt.f32.partialorder %v5517, 0.0
      %vm5646 = vcmp.gt.f32.partialorder %v5518, 0.0
      %vm5647 = vcmp.gt.f32.partialorder %v5519, 0.0
      %vm5648 = vcmp.gt.f32.partialorder %v5520, 0.0
      %vm5649 = vcmp.gt.f32.partialorder %v5521, 0.0
      %vm5650 = vcmp.gt.f32.partialorder %v5522, 0.0
      %vm5651 = vcmp.gt.f32.partialorder %v5523, 0.0
      %vm5652 = vcmp.gt.f32.partialorder %v5524, 0.0
      %vm5653 = vcmp.gt.f32.partialorder %v5525, 0.0
      %vm5654 = vcmp.gt.f32.partialorder %v5526, 0.0
      %vm5655 = vcmp.gt.f32.partialorder %v5527, 0.0
      %vm5656 = vcmp.gt.f32.partialorder %v5528, 0.0
      %vm5657 = vcmp.gt.f32.partialorder %v5529, 0.0
      %vm5658 = vcmp.gt.f32.partialorder %v5530, 0.0
      %vm5659 = vcmp.gt.f32.partialorder %v5531, 0.0
      %vm5660 = vcmp.gt.f32.partialorder %v5532, 0.0
      %vm5661 = vcmp.gt.f32.partialorder %v5533, 0.0
      %vm5662 = vcmp.gt.f32.partialorder %v5534, 0.0
      %vm5663 = vcmp.gt.f32.partialorder %v5535, 0.0
      %vm5664 = vcmp.gt.f32.partialorder %v5536, 0.0
      %vm5665 = vcmp.gt.f32.partialorder %v5537, 0.0
      %vm5666 = vcmp.gt.f32.partialorder %v5538, 0.0
      %vm5667 = vcmp.gt.f32.partialorder %v5539, 0.0
      %vm5668 = vcmp.gt.f32.partialorder %v5540, 0.0
      %vm5669 = vcmp.gt.f32.partialorder %v5541, 0.0
      %vm5670 = vcmp.gt.f32.partialorder %v5542, 0.0
      %vm5671 = vcmp.gt.f32.partialorder %v5543, 0.0
      %vm5672 = vcmp.gt.f32.partialorder %v5544, 0.0
      %vm5673 = vcmp.gt.f32.partialorder %v5545, 0.0
      %vm5674 = vcmp.gt.f32.partialorder %v5546, 0.0
      %vm5675 = vcmp.gt.f32.partialorder %v5547, 0.0
      %vm5676 = vcmp.gt.f32.partialorder %v5548, 0.0
      %vm5677 = vcmp.gt.f32.partialorder %v5549, 0.0
      %vm5678 = vcmp.gt.f32.partialorder %v5550, 0.0
      %vm5679 = vcmp.gt.f32.partialorder %v5551, 0.0
      %vm5680 = vcmp.gt.f32.partialorder %v5552, 0.0
      %vm5681 = vcmp.gt.f32.partialorder %v5553, 0.0
      %vm5682 = vcmp.gt.f32.partialorder %v5554, 0.0
      %vm5683 = vcmp.gt.f32.partialorder %v5555, 0.0
      %vm5684 = vcmp.gt.f32.partialorder %v5556, 0.0
      %vm5685 = vcmp.gt.f32.partialorder %v5557, 0.0
      %vm5686 = vcmp.gt.f32.partialorder %v5558, 0.0
      %vm5687 = vcmp.gt.f32.partialorder %v5559, 0.0
      %vm5688 = vcmp.gt.f32.partialorder %v5560, 0.0
      %vm5689 = vcmp.gt.f32.partialorder %v5561, 0.0
      %vm5690 = vcmp.gt.f32.partialorder %v5562, 0.0
      %vm5691 = vcmp.gt.f32.partialorder %v5563, 0.0
      %vm5692 = vcmp.gt.f32.partialorder %v5564, 0.0
      %vm5693 = vcmp.gt.f32.partialorder %v5565, 0.0
      %vm5694 = vcmp.gt.f32.partialorder %v5566, 0.0
      %vm5695 = vcmp.gt.f32.partialorder %v5567, 0.0
      %vm5696 = vcmp.gt.f32.partialorder %v5568, 0.0
      %vm5697 = vcmp.gt.f32.partialorder %v5569, 0.0
      %vm5698 = vcmp.gt.f32.partialorder %v5570, 0.0
      %vm5699 = vcmp.gt.f32.partialorder %v5571, 0.0
      %vm5700 = vcmp.gt.f32.partialorder %v5572, 0.0
      %vm5701 = vcmp.gt.f32.partialorder %v5573, 0.0
      %vm5702 = vcmp.gt.f32.partialorder %v5574, 0.0
      %vm5703 = vcmp.gt.f32.partialorder %v5575, 0.0
      %vm5704 = vcmp.gt.f32.partialorder %v5576, 0.0
      %vm5705 = vcmp.gt.f32.partialorder %v5577, 0.0
      %vm5706 = vcmp.gt.f32.partialorder %v5578, 0.0
      %v5707 = vmul.f32 %v5451, 0.2
      %v5708 = vmul.f32 %v5452, 0.2
      %v5709 = vmul.f32 %v5453, 0.2
      %v5710 = vmul.f32 %v5454, 0.2
      %v5711 = vmul.f32 %v5455, 0.2
      %v5712 = vmul.f32 %v5456, 0.2
      %v5713 = vmul.f32 %v5457, 0.2
      %v5714 = vmul.f32 %v5458, 0.2
      %v5715 = vmul.f32 %v5459, 0.2
      %v5716 = vmul.f32 %v5460, 0.2
      %v5717 = vmul.f32 %v5461, 0.2
      %v5718 = vmul.f32 %v5462, 0.2
      %v5719 = vmul.f32 %v5463, 0.2
      %v5720 = vmul.f32 %v5464, 0.2
      %v5721 = vmul.f32 %v5465, 0.2
      %v5722 = vmul.f32 %v5466, 0.2
      %v5723 = vmul.f32 %v5467, 0.2
      %v5724 = vmul.f32 %v5468, 0.2
      %v5725 = vmul.f32 %v5469, 0.2
      %v5726 = vmul.f32 %v5470, 0.2
      %v5727 = vmul.f32 %v5471, 0.2
      %v5728 = vmul.f32 %v5472, 0.2
      %v5729 = vmul.f32 %v5473, 0.2
      %v5730 = vmul.f32 %v5474, 0.2
      %v5731 = vmul.f32 %v5475, 0.2
      %v5732 = vmul.f32 %v5476, 0.2
      %v5733 = vmul.f32 %v5477, 0.2
      %v5734 = vmul.f32 %v5478, 0.2
      %v5735 = vmul.f32 %v5479, 0.2
      %v5736 = vmul.f32 %v5480, 0.2
      %v5737 = vmul.f32 %v5481, 0.2
      %v5738 = vmul.f32 %v5482, 0.2
      %v5739 = vmul.f32 %v5483, 0.2
      %v5740 = vmul.f32 %v5484, 0.2
      %v5741 = vmul.f32 %v5485, 0.2
      %v5742 = vmul.f32 %v5486, 0.2
      %v5743 = vmul.f32 %v5487, 0.2
      %v5744 = vmul.f32 %v5488, 0.2
      %v5745 = vmul.f32 %v5489, 0.2
      %v5746 = vmul.f32 %v5490, 0.2
      %v5747 = vmul.f32 %v5491, 0.2
      %v5748 = vmul.f32 %v5492, 0.2
      %v5749 = vmul.f32 %v5493, 0.2
      %v5750 = vmul.f32 %v5494, 0.2
      %v5751 = vmul.f32 %v5495, 0.2
      %v5752 = vmul.f32 %v5496, 0.2
      %v5753 = vmul.f32 %v5497, 0.2
      %v5754 = vmul.f32 %v5498, 0.2
      %v5755 = vmul.f32 %v5499, 0.2
      %v5756 = vmul.f32 %v5500, 0.2
      %v5757 = vmul.f32 %v5501, 0.2
      %v5758 = vmul.f32 %v5502, 0.2
      %v5759 = vmul.f32 %v5503, 0.2
      %v5760 = vmul.f32 %v5504, 0.2
      %v5761 = vmul.f32 %v5505, 0.2
      %v5762 = vmul.f32 %v5506, 0.2
      %v5763 = vmul.f32 %v5507, 0.2
      %v5764 = vmul.f32 %v5508, 0.2
      %v5765 = vmul.f32 %v5509, 0.2
      %v5766 = vmul.f32 %v5510, 0.2
      %v5767 = vmul.f32 %v5511, 0.2
      %v5768 = vmul.f32 %v5512, 0.2
      %v5769 = vmul.f32 %v5513, 0.2
      %v5770 = vmul.f32 %v5514, 0.2
      %v5771 = vmul.f32 %v5515, 0.2
      %v5772 = vmul.f32 %v5516, 0.2
      %v5773 = vmul.f32 %v5517, 0.2
      %v5774 = vmul.f32 %v5518, 0.2
      %v5775 = vmul.f32 %v5519, 0.2
      %v5776 = vmul.f32 %v5520, 0.2
      %v5777 = vmul.f32 %v5521, 0.2
      %v5778 = vmul.f32 %v5522, 0.2
      %v5779 = vmul.f32 %v5523, 0.2
      %v5780 = vmul.f32 %v5524, 0.2
      %v5781 = vmul.f32 %v5525, 0.2
      %v5782 = vmul.f32 %v5526, 0.2
      %v5783 = vmul.f32 %v5527, 0.2
      %v5784 = vmul.f32 %v5528, 0.2
      %v5785 = vmul.f32 %v5529, 0.2
      %v5786 = vmul.f32 %v5530, 0.2
      %v5787 = vmul.f32 %v5531, 0.2
      %v5788 = vmul.f32 %v5532, 0.2
      %v5789 = vmul.f32 %v5533, 0.2
      %v5790 = vmul.f32 %v5534, 0.2
      %v5791 = vmul.f32 %v5535, 0.2
      %v5792 = vmul.f32 %v5536, 0.2
      %v5793 = vmul.f32 %v5537, 0.2
      %v5794 = vmul.f32 %v5538, 0.2
      %v5795 = vmul.f32 %v5539, 0.2
      %v5796 = vmul.f32 %v5540, 0.2
      %v5797 = vmul.f32 %v5541, 0.2
      %v5798 = vmul.f32 %v5542, 0.2
      %v5799 = vmul.f32 %v5543, 0.2
      %v5800 = vmul.f32 %v5544, 0.2
      %v5801 = vmul.f32 %v5545, 0.2
      %v5802 = vmul.f32 %v5546, 0.2
      %v5803 = vmul.f32 %v5547, 0.2
      %v5804 = vmul.f32 %v5548, 0.2
      %v5805 = vmul.f32 %v5549, 0.2
      %v5806 = vmul.f32 %v5550, 0.2
      %v5807 = vmul.f32 %v5551, 0.2
      %v5808 = vmul.f32 %v5552, 0.2
      %v5809 = vmul.f32 %v5553, 0.2
      %v5810 = vmul.f32 %v5554, 0.2
      %v5811 = vmul.f32 %v5555, 0.2
      %v5812 = vmul.f32 %v5556, 0.2
      %v5813 = vmul.f32 %v5557, 0.2
      %v5814 = vmul.f32 %v5558, 0.2
      %v5815 = vmul.f32 %v5559, 0.2
      %v5816 = vmul.f32 %v5560, 0.2
      %v5817 = vmul.f32 %v5561, 0.2
      %v5818 = vmul.f32 %v5562, 0.2
      %v5819 = vmul.f32 %v5563, 0.2
      %v5820 = vmul.f32 %v5564, 0.2
      %v5821 = vmul.f32 %v5565, 0.2
      %v5822 = vmul.f32 %v5566, 0.2
      %v5823 = vmul.f32 %v5567, 0.2
      %v5824 = vmul.f32 %v5568, 0.2
      %v5825 = vmul.f32 %v5569, 0.2
      %v5826 = vmul.f32 %v5570, 0.2
      %v5827 = vmul.f32 %v5571, 0.2
      %v5828 = vmul.f32 %v5572, 0.2
      %v5829 = vmul.f32 %v5573, 0.2
      %v5830 = vmul.f32 %v5574, 0.2
      %v5831 = vmul.f32 %v5575, 0.2
      %v5832 = vmul.f32 %v5576, 0.2
      %v5833 = vmul.f32 %v5577, 0.2
      %v5834 = vmul.f32 %v5578, 0.2
      %v5835 = vsel %vm5579, %v5451, %v5707
      %v5836 = vsel %vm5580, %v5452, %v5708
      %v5837 = vsel %vm5581, %v5453, %v5709
      %v5838 = vsel %vm5582, %v5454, %v5710
      %v5839 = vsel %vm5583, %v5455, %v5711
      %v5840 = vsel %vm5584, %v5456, %v5712
      %v5841 = vsel %vm5585, %v5457, %v5713
      %v5842 = vsel %vm5586, %v5458, %v5714
      %v5843 = vsel %vm5587, %v5459, %v5715
      %v5844 = vsel %vm5588, %v5460, %v5716
      %v5845 = vsel %vm5589, %v5461, %v5717
      %v5846 = vsel %vm5590, %v5462, %v5718
      %v5847 = vsel %vm5591, %v5463, %v5719
      %v5848 = vsel %vm5592, %v5464, %v5720
      %v5849 = vsel %vm5593, %v5465, %v5721
      %v5850 = vsel %vm5594, %v5466, %v5722
      %v5851 = vsel %vm5595, %v5467, %v5723
      %v5852 = vsel %vm5596, %v5468, %v5724
      %v5853 = vsel %vm5597, %v5469, %v5725
      %v5854 = vsel %vm5598, %v5470, %v5726
      %v5855 = vsel %vm5599, %v5471, %v5727
      %v5856 = vsel %vm5600, %v5472, %v5728
      %v5857 = vsel %vm5601, %v5473, %v5729
      %v5858 = vsel %vm5602, %v5474, %v5730
      %v5859 = vsel %vm5603, %v5475, %v5731
      %v5860 = vsel %vm5604, %v5476, %v5732
      %v5861 = vsel %vm5605, %v5477, %v5733
      %v5862 = vsel %vm5606, %v5478, %v5734
      %v5863 = vsel %vm5607, %v5479, %v5735
      %v5864 = vsel %vm5608, %v5480, %v5736
      %v5865 = vsel %vm5609, %v5481, %v5737
      %v5866 = vsel %vm5610, %v5482, %v5738
      %v5867 = vsel %vm5611, %v5483, %v5739
      %v5868 = vsel %vm5612, %v5484, %v5740
      %v5869 = vsel %vm5613, %v5485, %v5741
      %v5870 = vsel %vm5614, %v5486, %v5742
      %v5871 = vsel %vm5615, %v5487, %v5743
      %v5872 = vsel %vm5616, %v5488, %v5744
      %v5873 = vsel %vm5617, %v5489, %v5745
      %v5874 = vsel %vm5618, %v5490, %v5746
      %v5875 = vsel %vm5619, %v5491, %v5747
      %v5876 = vsel %vm5620, %v5492, %v5748
      %v5877 = vsel %vm5621, %v5493, %v5749
      %v5878 = vsel %vm5622, %v5494, %v5750
      %v5879 = vsel %vm5623, %v5495, %v5751
      %v5880 = vsel %vm5624, %v5496, %v5752
      %v5881 = vsel %vm5625, %v5497, %v5753
      %v5882 = vsel %vm5626, %v5498, %v5754
      %v5883 = vsel %vm5627, %v5499, %v5755
      %v5884 = vsel %vm5628, %v5500, %v5756
      %v5885 = vsel %vm5629, %v5501, %v5757
      %v5886 = vsel %vm5630, %v5502, %v5758
      %v5887 = vsel %vm5631, %v5503, %v5759
      %v5888 = vsel %vm5632, %v5504, %v5760
      %v5889 = vsel %vm5633, %v5505, %v5761
      %v5890 = vsel %vm5634, %v5506, %v5762
      %v5891 = vsel %vm5635, %v5507, %v5763
      %v5892 = vsel %vm5636, %v5508, %v5764
      %v5893 = vsel %vm5637, %v5509, %v5765
      %v5894 = vsel %vm5638, %v5510, %v5766
      %v5895 = vsel %vm5639, %v5511, %v5767
      %v5896 = vsel %vm5640, %v5512, %v5768
      %v5897 = vsel %vm5641, %v5513, %v5769
      %v5898 = vsel %vm5642, %v5514, %v5770
      %v5899 = vsel %vm5643, %v5515, %v5771
      %v5900 = vsel %vm5644, %v5516, %v5772
      %v5901 = vsel %vm5645, %v5517, %v5773
      %v5902 = vsel %vm5646, %v5518, %v5774
      %v5903 = vsel %vm5647, %v5519, %v5775
      %v5904 = vsel %vm5648, %v5520, %v5776
      %v5905 = vsel %vm5649, %v5521, %v5777
      %v5906 = vsel %vm5650, %v5522, %v5778
      %v5907 = vsel %vm5651, %v5523, %v5779
      %v5908 = vsel %vm5652, %v5524, %v5780
      %v5909 = vsel %vm5653, %v5525, %v5781
      %v5910 = vsel %vm5654, %v5526, %v5782
      %v5911 = vsel %vm5655, %v5527, %v5783
      %v5912 = vsel %vm5656, %v5528, %v5784
      %v5913 = vsel %vm5657, %v5529, %v5785
      %v5914 = vsel %vm5658, %v5530, %v5786
      %v5915 = vsel %vm5659, %v5531, %v5787
      %v5916 = vsel %vm5660, %v5532, %v5788
      %v5917 = vsel %vm5661, %v5533, %v5789
      %v5918 = vsel %vm5662, %v5534, %v5790
      %v5919 = vsel %vm5663, %v5535, %v5791
      %v5920 = vsel %vm5664, %v5536, %v5792
      %v5921 = vsel %vm5665, %v5537, %v5793
      %v5922 = vsel %vm5666, %v5538, %v5794
      %v5923 = vsel %vm5667, %v5539, %v5795
      %v5924 = vsel %vm5668, %v5540, %v5796
      %v5925 = vsel %vm5669, %v5541, %v5797
      %v5926 = vsel %vm5670, %v5542, %v5798
      %v5927 = vsel %vm5671, %v5543, %v5799
      %v5928 = vsel %vm5672, %v5544, %v5800
      %v5929 = vsel %vm5673, %v5545, %v5801
      %v5930 = vsel %vm5674, %v5546, %v5802
      %v5931 = vsel %vm5675, %v5547, %v5803
      %v5932 = vsel %vm5676, %v5548, %v5804
      %v5933 = vsel %vm5677, %v5549, %v5805
      %v5934 = vsel %vm5678, %v5550, %v5806
      %v5935 = vsel %vm5679, %v5551, %v5807
      %v5936 = vsel %vm5680, %v5552, %v5808
      %v5937 = vsel %vm5681, %v5553, %v5809
      %v5938 = vsel %vm5682, %v5554, %v5810
      %v5939 = vsel %vm5683, %v5555, %v5811
      %v5940 = vsel %vm5684, %v5556, %v5812
      %v5941 = vsel %vm5685, %v5557, %v5813
      %v5942 = vsel %vm5686, %v5558, %v5814
      %v5943 = vsel %vm5687, %v5559, %v5815
      %v5944 = vsel %vm5688, %v5560, %v5816
      %v5945 = vsel %vm5689, %v5561, %v5817
      %v5946 = vsel %vm5690, %v5562, %v5818
      %v5947 = vsel %vm5691, %v5563, %v5819
      %v5948 = vsel %vm5692, %v5564, %v5820
      %v5949 = vsel %vm5693, %v5565, %v5821
      %v5950 = vsel %vm5694, %v5566, %v5822
      %v5951 = vsel %vm5695, %v5567, %v5823
      %v5952 = vsel %vm5696, %v5568, %v5824
      %v5953 = vsel %vm5697, %v5569, %v5825
      %v5954 = vsel %vm5698, %v5570, %v5826
      %v5955 = vsel %vm5699, %v5571, %v5827
      %v5956 = vsel %vm5700, %v5572, %v5828
      %v5957 = vsel %vm5701, %v5573, %v5829
      %v5958 = vsel %vm5702, %v5574, %v5830
      %v5959 = vsel %vm5703, %v5575, %v5831
      %v5960 = vsel %vm5704, %v5576, %v5832
      %v5961 = vsel %vm5705, %v5577, %v5833
      %v5962 = vsel %vm5706, %v5578, %v5834
      %v5963 = vpack.c.bf16 %v5835, %v5835
      %v5964 = vpack.c.bf16 %v5836, %v5836
      %v5965 = vpack.c.bf16 %v5837, %v5837
      %v5966 = vpack.c.bf16 %v5838, %v5838
      %v5967 = vpack.c.bf16 %v5839, %v5839
      %v5968 = vpack.c.bf16 %v5840, %v5840
      %v5969 = vpack.c.bf16 %v5841, %v5841
      %v5970 = vpack.c.bf16 %v5842, %v5842
      %v5971 = vpack.c.bf16 %v5843, %v5843
      %v5972 = vpack.c.bf16 %v5844, %v5844
      %v5973 = vpack.c.bf16 %v5845, %v5845
      %v5974 = vpack.c.bf16 %v5846, %v5846
      %v5975 = vpack.c.bf16 %v5847, %v5847
      %v5976 = vpack.c.bf16 %v5848, %v5848
      %v5977 = vpack.c.bf16 %v5849, %v5849
      %v5978 = vpack.c.bf16 %v5850, %v5850
      %v5979 = vpack.c.bf16 %v5851, %v5851
      %v5980 = vpack.c.bf16 %v5852, %v5852
      %v5981 = vpack.c.bf16 %v5853, %v5853
      %v5982 = vpack.c.bf16 %v5854, %v5854
      %v5983 = vpack.c.bf16 %v5855, %v5855
      %v5984 = vpack.c.bf16 %v5856, %v5856
      %v5985 = vpack.c.bf16 %v5857, %v5857
      %v5986 = vpack.c.bf16 %v5858, %v5858
      %v5987 = vpack.c.bf16 %v5859, %v5859
      %v5988 = vpack.c.bf16 %v5860, %v5860
      %v5989 = vpack.c.bf16 %v5861, %v5861
      %v5990 = vpack.c.bf16 %v5862, %v5862
      %v5991 = vpack.c.bf16 %v5863, %v5863
      %v5992 = vpack.c.bf16 %v5864, %v5864
      %v5993 = vpack.c.bf16 %v5865, %v5865
      %v5994 = vpack.c.bf16 %v5866, %v5866
      %v5995 = vpack.c.bf16 %v5867, %v5867
      %v5996 = vpack.c.bf16 %v5868, %v5868
      %v5997 = vpack.c.bf16 %v5869, %v5869
      %v5998 = vpack.c.bf16 %v5870, %v5870
      %v5999 = vpack.c.bf16 %v5871, %v5871
      %v6000 = vpack.c.bf16 %v5872, %v5872
      %v6001 = vpack.c.bf16 %v5873, %v5873
      %v6002 = vpack.c.bf16 %v5874, %v5874
      %v6003 = vpack.c.bf16 %v5875, %v5875
      %v6004 = vpack.c.bf16 %v5876, %v5876
      %v6005 = vpack.c.bf16 %v5877, %v5877
      %v6006 = vpack.c.bf16 %v5878, %v5878
      %v6007 = vpack.c.bf16 %v5879, %v5879
      %v6008 = vpack.c.bf16 %v5880, %v5880
      %v6009 = vpack.c.bf16 %v5881, %v5881
      %v6010 = vpack.c.bf16 %v5882, %v5882
      %v6011 = vpack.c.bf16 %v5883, %v5883
      %v6012 = vpack.c.bf16 %v5884, %v5884
      %v6013 = vpack.c.bf16 %v5885, %v5885
      %v6014 = vpack.c.bf16 %v5886, %v5886
      %v6015 = vpack.c.bf16 %v5887, %v5887
      %v6016 = vpack.c.bf16 %v5888, %v5888
      %v6017 = vpack.c.bf16 %v5889, %v5889
      %v6018 = vpack.c.bf16 %v5890, %v5890
      %v6019 = vpack.c.bf16 %v5891, %v5891
      %v6020 = vpack.c.bf16 %v5892, %v5892
      %v6021 = vpack.c.bf16 %v5893, %v5893
      %v6022 = vpack.c.bf16 %v5894, %v5894
      %v6023 = vpack.c.bf16 %v5895, %v5895
      %v6024 = vpack.c.bf16 %v5896, %v5896
      %v6025 = vpack.c.bf16 %v5897, %v5897
      %v6026 = vpack.c.bf16 %v5898, %v5898
      %v6027 = vpack.c.bf16 %v5899, %v5899
      %v6028 = vpack.c.bf16 %v5900, %v5900
      %v6029 = vpack.c.bf16 %v5901, %v5901
      %v6030 = vpack.c.bf16 %v5902, %v5902
      %v6031 = vpack.c.bf16 %v5903, %v5903
      %v6032 = vpack.c.bf16 %v5904, %v5904
      %v6033 = vpack.c.bf16 %v5905, %v5905
      %v6034 = vpack.c.bf16 %v5906, %v5906
      %v6035 = vpack.c.bf16 %v5907, %v5907
      %v6036 = vpack.c.bf16 %v5908, %v5908
      %v6037 = vpack.c.bf16 %v5909, %v5909
      %v6038 = vpack.c.bf16 %v5910, %v5910
      %v6039 = vpack.c.bf16 %v5911, %v5911
      %v6040 = vpack.c.bf16 %v5912, %v5912
      %v6041 = vpack.c.bf16 %v5913, %v5913
      %v6042 = vpack.c.bf16 %v5914, %v5914
      %v6043 = vpack.c.bf16 %v5915, %v5915
      %v6044 = vpack.c.bf16 %v5916, %v5916
      %v6045 = vpack.c.bf16 %v5917, %v5917
      %v6046 = vpack.c.bf16 %v5918, %v5918
      %v6047 = vpack.c.bf16 %v5919, %v5919
      %v6048 = vpack.c.bf16 %v5920, %v5920
      %v6049 = vpack.c.bf16 %v5921, %v5921
      %v6050 = vpack.c.bf16 %v5922, %v5922
      %v6051 = vpack.c.bf16 %v5923, %v5923
      %v6052 = vpack.c.bf16 %v5924, %v5924
      %v6053 = vpack.c.bf16 %v5925, %v5925
      %v6054 = vpack.c.bf16 %v5926, %v5926
      %v6055 = vpack.c.bf16 %v5927, %v5927
      %v6056 = vpack.c.bf16 %v5928, %v5928
      %v6057 = vpack.c.bf16 %v5929, %v5929
      %v6058 = vpack.c.bf16 %v5930, %v5930
      %v6059 = vpack.c.bf16 %v5931, %v5931
      %v6060 = vpack.c.bf16 %v5932, %v5932
      %v6061 = vpack.c.bf16 %v5933, %v5933
      %v6062 = vpack.c.bf16 %v5934, %v5934
      %v6063 = vpack.c.bf16 %v5935, %v5935
      %v6064 = vpack.c.bf16 %v5936, %v5936
      %v6065 = vpack.c.bf16 %v5937, %v5937
      %v6066 = vpack.c.bf16 %v5938, %v5938
      %v6067 = vpack.c.bf16 %v5939, %v5939
      %v6068 = vpack.c.bf16 %v5940, %v5940
      %v6069 = vpack.c.bf16 %v5941, %v5941
      %v6070 = vpack.c.bf16 %v5942, %v5942
      %v6071 = vpack.c.bf16 %v5943, %v5943
      %v6072 = vpack.c.bf16 %v5944, %v5944
      %v6073 = vpack.c.bf16 %v5945, %v5945
      %v6074 = vpack.c.bf16 %v5946, %v5946
      %v6075 = vpack.c.bf16 %v5947, %v5947
      %v6076 = vpack.c.bf16 %v5948, %v5948
      %v6077 = vpack.c.bf16 %v5949, %v5949
      %v6078 = vpack.c.bf16 %v5950, %v5950
      %v6079 = vpack.c.bf16 %v5951, %v5951
      %v6080 = vpack.c.bf16 %v5952, %v5952
      %v6081 = vpack.c.bf16 %v5953, %v5953
      %v6082 = vpack.c.bf16 %v5954, %v5954
      %v6083 = vpack.c.bf16 %v5955, %v5955
      %v6084 = vpack.c.bf16 %v5956, %v5956
      %v6085 = vpack.c.bf16 %v5957, %v5957
      %v6086 = vpack.c.bf16 %v5958, %v5958
      %v6087 = vpack.c.bf16 %v5959, %v5959
      %v6088 = vpack.c.bf16 %v5960, %v5960
      %v6089 = vpack.c.bf16 %v5961, %v5961
      %v6090 = vpack.c.bf16 %v5962, %v5962
      %6091 = vst [vmem:[%s170] sm:$0xf] %v5963
      %6092 = vst [vmem:[%s170 + $0x4] sm:$0xf] %v5964
      %6093 = vst [vmem:[%s170 + $0x8] sm:$0xf] %v5965
      %6094 = vst [vmem:[%s170 + $0xc] sm:$0xf] %v5966
      %6095 = vst [vmem:[%s170 + $0x10] sm:$0xf] %v5967
      %6096 = vst [vmem:[%s170 + $0x14] sm:$0xf] %v5968
      %6097 = vst [vmem:[%s170 + $0x18] sm:$0xf] %v5969
      %6098 = vst [vmem:[%s170 + $0x1c] sm:$0xf] %v5970
      %6099 = vst [vmem:[%s170 + $0x20] sm:$0xf] %v5971
      %6100 = vst [vmem:[%s170 + $0x24] sm:$0xf] %v5972
      %6101 = vst [vmem:[%s170 + $0x28] sm:$0xf] %v5973
      %6102 = vst [vmem:[%s170 + $0x2c] sm:$0xf] %v5974
      %6103 = vst [vmem:[%s170 + $0x30] sm:$0xf] %v5975
      %6104 = vst [vmem:[%s170 + $0x34] sm:$0xf] %v5976
      %6105 = vst [vmem:[%s170 + $0x38] sm:$0xf] %v5977
      %6106 = vst [vmem:[%s170 + $0x3c] sm:$0xf] %v5978
      %6107 = vst [vmem:[%s170 + $0x40] sm:$0xf] %v5979
      %6108 = vst [vmem:[%s170 + $0x44] sm:$0xf] %v5980
      %6109 = vst [vmem:[%s170 + $0x48] sm:$0xf] %v5981
      %6110 = vst [vmem:[%s170 + $0x4c] sm:$0xf] %v5982
      %6111 = vst [vmem:[%s170 + $0x50] sm:$0xf] %v5983
      %6112 = vst [vmem:[%s170 + $0x54] sm:$0xf] %v5984
      %6113 = vst [vmem:[%s170 + $0x58] sm:$0xf] %v5985
      %6114 = vst [vmem:[%s170 + $0x5c] sm:$0xf] %v5986
      %6115 = vst [vmem:[%s170 + $0x60] sm:$0xf] %v5987
      %6116 = vst [vmem:[%s170 + $0x64] sm:$0xf] %v5988
      %6117 = vst [vmem:[%s170 + $0x68] sm:$0xf] %v5989
      %6118 = vst [vmem:[%s170 + $0x6c] sm:$0xf] %v5990
      %6119 = vst [vmem:[%s170 + $0x70] sm:$0xf] %v5991
      %6120 = vst [vmem:[%s170 + $0x74] sm:$0xf] %v5992
      %6121 = vst [vmem:[%s170 + $0x78] sm:$0xf] %v5993
      %6122 = vst [vmem:[%s170 + $0x7c] sm:$0xf] %v5994
      %6123 = vst [vmem:[%s170 + $0x80] sm:$0xf] %v5995
      %6124 = vst [vmem:[%s170 + $0x84] sm:$0xf] %v5996
      %6125 = vst [vmem:[%s170 + $0x88] sm:$0xf] %v5997
      %6126 = vst [vmem:[%s170 + $0x8c] sm:$0xf] %v5998
      %6127 = vst [vmem:[%s170 + $0x90] sm:$0xf] %v5999
      %6128 = vst [vmem:[%s170 + $0x94] sm:$0xf] %v6000
      %6129 = vst [vmem:[%s170 + $0x98] sm:$0xf] %v6001
      %6130 = vst [vmem:[%s170 + $0x9c] sm:$0xf] %v6002
      %6131 = vst [vmem:[%s170 + $0xa0] sm:$0xf] %v6003
      %6132 = vst [vmem:[%s170 + $0xa4] sm:$0xf] %v6004
      %6133 = vst [vmem:[%s170 + $0xa8] sm:$0xf] %v6005
      %6134 = vst [vmem:[%s170 + $0xac] sm:$0xf] %v6006
      %6135 = vst [vmem:[%s170 + $0xb0] sm:$0xf] %v6007
      %6136 = vst [vmem:[%s170 + $0xb4] sm:$0xf] %v6008
      %6137 = vst [vmem:[%s170 + $0xb8] sm:$0xf] %v6009
      %6138 = vst [vmem:[%s170 + $0xbc] sm:$0xf] %v6010
      %6139 = vst [vmem:[%s170 + $0xc0] sm:$0xf] %v6011
      %6140 = vst [vmem:[%s170 + $0xc4] sm:$0xf] %v6012
      %6141 = vst [vmem:[%s170 + $0xc8] sm:$0xf] %v6013
      %6142 = vst [vmem:[%s170 + $0xcc] sm:$0xf] %v6014
      %6143 = vst [vmem:[%s170 + $0xd0] sm:$0xf] %v6015
      %6144 = vst [vmem:[%s170 + $0xd4] sm:$0xf] %v6016
      %6145 = vst [vmem:[%s170 + $0xd8] sm:$0xf] %v6017
      %6146 = vst [vmem:[%s170 + $0xdc] sm:$0xf] %v6018
      %6147 = vst [vmem:[%s170 + $0xe0] sm:$0xf] %v6019
      %6148 = vst [vmem:[%s170 + $0xe4] sm:$0xf] %v6020
      %6149 = vst [vmem:[%s170 + $0xe8] sm:$0xf] %v6021
      %6150 = vst [vmem:[%s170 + $0xec] sm:$0xf] %v6022
      %6151 = vst [vmem:[%s170 + $0xf0] sm:$0xf] %v6023
      %6152 = vst [vmem:[%s170 + $0xf4] sm:$0xf] %v6024
      %6153 = vst [vmem:[%s170 + $0xf8] sm:$0xf] %v6025
      %6154 = vst [vmem:[%s170 + $0xfc] sm:$0xf] %v6026
      %6155 = vst [vmem:[%s170 + $0x100] sm:$0xf] %v6027
      %6156 = vst [vmem:[%s170 + $0x104] sm:$0xf] %v6028
      %6157 = vst [vmem:[%s170 + $0x108] sm:$0xf] %v6029
      %6158 = vst [vmem:[%s170 + $0x10c] sm:$0xf] %v6030
      %6159 = vst [vmem:[%s170 + $0x110] sm:$0xf] %v6031
      %6160 = vst [vmem:[%s170 + $0x114] sm:$0xf] %v6032
      %6161 = vst [vmem:[%s170 + $0x118] sm:$0xf] %v6033
      %6162 = vst [vmem:[%s170 + $0x11c] sm:$0xf] %v6034
      %6163 = vst [vmem:[%s170 + $0x120] sm:$0xf] %v6035
      %6164 = vst [vmem:[%s170 + $0x124] sm:$0xf] %v6036
      %6165 = vst [vmem:[%s170 + $0x128] sm:$0xf] %v6037
      %6166 = vst [vmem:[%s170 + $0x12c] sm:$0xf] %v6038
      %6167 = vst [vmem:[%s170 + $0x130] sm:$0xf] %v6039
      %6168 = vst [vmem:[%s170 + $0x134] sm:$0xf] %v6040
      %6169 = vst [vmem:[%s170 + $0x138] sm:$0xf] %v6041
      %6170 = vst [vmem:[%s170 + $0x13c] sm:$0xf] %v6042
      %6171 = vst [vmem:[%s170 + $0x140] sm:$0xf] %v6043
      %6172 = vst [vmem:[%s170 + $0x144] sm:$0xf] %v6044
      %6173 = vst [vmem:[%s170 + $0x148] sm:$0xf] %v6045
      %6174 = vst [vmem:[%s170 + $0x14c] sm:$0xf] %v6046
      %6175 = vst [vmem:[%s170 + $0x150] sm:$0xf] %v6047
      %6176 = vst [vmem:[%s170 + $0x154] sm:$0xf] %v6048
      %6177 = vst [vmem:[%s170 + $0x158] sm:$0xf] %v6049
      %6178 = vst [vmem:[%s170 + $0x15c] sm:$0xf] %v6050
      %6179 = vst [vmem:[%s170 + $0x160] sm:$0xf] %v6051
      %6180 = vst [vmem:[%s170 + $0x164] sm:$0xf] %v6052
      %6181 = vst [vmem:[%s170 + $0x168] sm:$0xf] %v6053
      %6182 = vst [vmem:[%s170 + $0x16c] sm:$0xf] %v6054
      %6183 = vst [vmem:[%s170 + $0x170] sm:$0xf] %v6055
      %6184 = vst [vmem:[%s170 + $0x174] sm:$0xf] %v6056
      %6185 = vst [vmem:[%s170 + $0x178] sm:$0xf] %v6057
      %6186 = vst [vmem:[%s170 + $0x17c] sm:$0xf] %v6058
      %6187 = vst [vmem:[%s170 + $0x180] sm:$0xf] %v6059
      %6188 = vst [vmem:[%s170 + $0x184] sm:$0xf] %v6060
      %6189 = vst [vmem:[%s170 + $0x188] sm:$0xf] %v6061
      %6190 = vst [vmem:[%s170 + $0x18c] sm:$0xf] %v6062
      %6191 = vst [vmem:[%s170 + $0x190] sm:$0xf] %v6063
      %6192 = vst [vmem:[%s170 + $0x194] sm:$0xf] %v6064
      %6193 = vst [vmem:[%s170 + $0x198] sm:$0xf] %v6065
      %6194 = vst [vmem:[%s170 + $0x19c] sm:$0xf] %v6066
      %6195 = vst [vmem:[%s170 + $0x1a0] sm:$0xf] %v6067
      %6196 = vst [vmem:[%s170 + $0x1a4] sm:$0xf] %v6068
      %6197 = vst [vmem:[%s170 + $0x1a8] sm:$0xf] %v6069
      %6198 = vst [vmem:[%s170 + $0x1ac] sm:$0xf] %v6070
      %6199 = vst [vmem:[%s170 + $0x1b0] sm:$0xf] %v6071
      %6200 = vst [vmem:[%s170 + $0x1b4] sm:$0xf] %v6072
      %6201 = vst [vmem:[%s170 + $0x1b8] sm:$0xf] %v6073
      %6202 = vst [vmem:[%s170 + $0x1bc] sm:$0xf] %v6074
      %6203 = vst [vmem:[%s170 + $0x1c0] sm:$0xf] %v6075
      %6204 = vst [vmem:[%s170 + $0x1c4] sm:$0xf] %v6076
      %6205 = vst [vmem:[%s170 + $0x1c8] sm:$0xf] %v6077
      %6206 = vst [vmem:[%s170 + $0x1cc] sm:$0xf] %v6078
      %6207 = vst [vmem:[%s170 + $0x1d0] sm:$0xf] %v6079
      %6208 = vst [vmem:[%s170 + $0x1d4] sm:$0xf] %v6080
      %6209 = vst [vmem:[%s170 + $0x1d8] sm:$0xf] %v6081
      %6210 = vst [vmem:[%s170 + $0x1dc] sm:$0xf] %v6082
      %6211 = vst [vmem:[%s170 + $0x1e0] sm:$0xf] %v6083
      %6212 = vst [vmem:[%s170 + $0x1e4] sm:$0xf] %v6084
      %6213 = vst [vmem:[%s170 + $0x1e8] sm:$0xf] %v6085
      %6214 = vst [vmem:[%s170 + $0x1ec] sm:$0xf] %v6086
      %6215 = vst [vmem:[%s170 + $0x1f0] sm:$0xf] %v6087
      %6216 = vst [vmem:[%s170 + $0x1f4] sm:$0xf] %v6088
      %6217 = vst [vmem:[%s170 + $0x1f8] sm:$0xf] %v6089
      %6218 = vst [vmem:[%s170 + $0x1fc] sm:$0xf] %v6090
      %p6219 = scmp.lt.s32.totalorder %s14, 1
      %s6220 = scalar_select %p6219, %s14, 1
      %s6221 = smul.addr %s6220, 128
      %s6222 = smul.addr %s6221, 4
      %s6223 = scalar_lea.vmem %s3, %s6222
      // Predicated region
      $region33: #{_lambda_.7} parent=31 // pred_check
        %p6224 = pneg %p100
      $region34: #{_lambda_.7} parent=31 // pred_check_branch
        %6226 = sbr.rel (%p6224) target = $region36
      $region35: #{_lambda_.7} parent=31 // pred_region
        _
      $region36: #{_lambda_.7} parent=31 // pred_fallthru
        _
    $region32: #{_lambda_.7} parent=5 // pred_fallthru
      _
    %p6227 = scmp.le.s32.totalorder 2, %s9
    // Predicated region
    $region37: #{_lambda_.7} parent=5 // pred_check
      %p6228 = pneg %p6227
    $region38: #{_lambda_.7} parent=5 // pred_check_branch
      %6230 = sbr.rel (%p6228) target = $region40
    $region39: #{_lambda_.7} parent=5 // pred_region
      %s6231 = ssub.s32 %s9, 2
      // Predicated region
      $region41: #{_lambda_.7} parent=39 // pred_check
        %p6232 = pneg %p106
      $region42: #{_lambda_.7} parent=39 // pred_check_branch
        %6234 = sbr.rel (%p6232) target = $region44
      $region43: #{_lambda_.7} parent=39 // pred_region
        %p6235 = scmp.lt.s32.totalorder %s15, 1
        %s6236 = scalar_select %p6235, %s15, 1
        %s6237 = smul.addr %s6236, 128
        %s6238 = smul.addr %s6237, 4
        %s6239 = scalar_lea.vmem %s3, %s6238
      $region44: #{_lambda_.7} parent=39 // pred_fallthru
        _
    $region40: #{_lambda_.7} parent=5 // pred_fallthru
      _
  $region6: #{_lambda_.7} parent=0 // loop_footer
    %s13 = sadd.s32 1, %s9
  $region7: #{_lambda_.7} parent=0 // loop_footer_branch
    %8 = sbr.rel target = $region3
  $region8: #{_lambda_.7} parent=0 // loop_exit
    _

// kernel: _lambda_.9
$region0: #{_lambda_.9}
  #allocation0 [shape = 'u32[]', space=smem, size = 0x4, offset = 0x4, fixed_abs, tag = 'smem constant byte address 0x4 - core index']
  #allocation1 [shape = 'u32[72,128]{1,0:T(1,128)}', space=vmem, size = 0x9000, scoped, tag = 'internal scratch']
  %s0 = inlined_call_operand.vmem [shape: bf16[512,128], index: 0, kind: input, shape index: {}]
  %s1 = inlined_call_operand.vmem [shape: f32[1,128], index: 1, kind: input, shape index: {}]
  %s2 = inlined_call_operand.vmem [shape: f32[1,128], index: 2, kind: input, shape index: {}]
  %s3 = inlined_call_operand.vmem [shape: bf16[512,128], index: 3, kind: output, shape index: {}]
  %s4 = sld [smem:[#allocation0]]
  $region45: #{_lambda_.9} parent=0
    _
  %s6 = ssub.s32 1, %s4
  %s7 = scalar_select 0, %s6, %s4
  loop: start=0, step=1, limit=4
  $region2: #{_lambda_.9} parent=0 // loop_pre_header
    _
  $region3: #{_lambda_.9} parent=0 // loop_header
    %s9 = sphi 0, %s13
    %p10 = scmp.ge.s32.totalorder %s9, 4
    %s19 = sphi 0, %s21
    %s22 = sphi 0, %s19
    %s23 = sphi 0, %s22
    %s39 = sphi 0, %s23
    %s43 = sphi 0, %s43
    %s45 = sphi 0, %s43
    %s46 = sphi 0, %s45
    %s60 = sphi 0, %s46
    %s64 = sphi 0, %s64
    %s66 = sphi 0, %s64
    %s67 = sphi 0, %s66
    %s81 = sphi 0, %s67
    %s87 = sphi 0, %s89
    %s90 = sphi 0, %s87
    %s91 = sphi 0, %s90
    %s107 = sphi 0, %s91
  $region4: #{_lambda_.9} parent=0 // loop_header_branch
    %12 = sbr.rel (%p10) target = $region8
  $region5: #{_lambda_.9} parent=0 // loop_body
    %s14 = ssub.s32 %s9, 1
    %s15 = ssub.s32 %s9, 2
    %s16 = sadd.s32 %s9, 1
    %s17 = ssub.s32 %s9, %s16
    %p18 = scmp.eq.s32.totalorder %s17, 0
    %s20 = sadd.s32 %s19, 1
    %s21 = scalar_select %p18, %s19, %s20
    %p24 = pneg %p18
    %p25 = scmp.eq.s32.totalorder %s9, 1
    %p26 = por %p24, %p25
    %p27 = scmp.ne.s32.totalorder %s19, %s22
    %p28 = scmp.eq.s32.totalorder %s9, 0
    %p29 = por %p27, %p28
    %p30 = scmp.ne.s32.totalorder %s19, %s22
    %p31 = scmp.eq.s32.totalorder %s14, 1
    %p32 = por %p30, %p31
    %p33 = scmp.ne.s32.totalorder %s22, %s23
    %p34 = scmp.eq.s32.totalorder %s14, 0
    %p35 = por %p33, %p34
    %p36 = scmp.ne.s32.totalorder %s22, %s23
    %p37 = scmp.eq.s32.totalorder %s15, 1
    %p38 = por %p36, %p37
    %p40 = scmp.ne.s32.totalorder %s23, %s39
    %p41 = scmp.eq.s32.totalorder %s15, 0
    %p42 = por %p40, %p41
    %s44 = sadd.s32 %s43, 1
    %p47 = scmp.eq.s32.totalorder %s9, 1
    %p48 = scmp.ne.s32.totalorder %s43, %s45
    %p49 = scmp.eq.s32.totalorder %s9, 0
    %p50 = por %p48, %p49
    %p51 = scmp.ne.s32.totalorder %s43, %s45
    %p52 = scmp.eq.s32.totalorder %s14, 1
    %p53 = por %p51, %p52
    %p54 = scmp.ne.s32.totalorder %s45, %s46
    %p55 = scmp.eq.s32.totalorder %s14, 0
    %p56 = por %p54, %p55
    %p57 = scmp.ne.s32.totalorder %s45, %s46
    %p58 = scmp.eq.s32.totalorder %s15, 1
    %p59 = por %p57, %p58
    %p61 = scmp.ne.s32.totalorder %s46, %s60
    %p62 = scmp.eq.s32.totalorder %s15, 0
    %p63 = por %p61, %p62
    %s65 = sadd.s32 %s64, 1
    %p68 = scmp.eq.s32.totalorder %s9, 1
    %p69 = scmp.ne.s32.totalorder %s64, %s66
    %p70 = scmp.eq.s32.totalorder %s9, 0
    %p71 = por %p69, %p70
    %p72 = scmp.ne.s32.totalorder %s64, %s66
    %p73 = scmp.eq.s32.totalorder %s14, 1
    %p74 = por %p72, %p73
    %p75 = scmp.ne.s32.totalorder %s66, %s67
    %p76 = scmp.eq.s32.totalorder %s14, 0
    %p77 = por %p75, %p76
    %p78 = scmp.ne.s32.totalorder %s66, %s67
    %p79 = scmp.eq.s32.totalorder %s15, 1
    %p80 = por %p78, %p79
    %p82 = scmp.ne.s32.totalorder %s67, %s81
    %p83 = scmp.eq.s32.totalorder %s15, 0
    %p84 = por %p82, %p83
    %s85 = ssub.s32 %s9, %s16
    %p86 = scmp.eq.s32.totalorder %s85, 0
    %s88 = sadd.s32 %s87, 1
    %s89 = scalar_select %p86, %s87, %s88
    %p92 = pneg %p86
    %p93 = scmp.eq.s32.totalorder %s9, 1
    %p94 = por %p92, %p93
    %p95 = scmp.ne.s32.totalorder %s87, %s90
    %p96 = scmp.eq.s32.totalorder %s9, 0
    %p97 = por %p95, %p96
    %p98 = scmp.ne.s32.totalorder %s87, %s90
    %p99 = scmp.eq.s32.totalorder %s14, 1
    %p100 = por %p98, %p99
    %p101 = scmp.ne.s32.totalorder %s90, %s91
    %p102 = scmp.eq.s32.totalorder %s14, 0
    %p103 = por %p101, %p102
    %p104 = scmp.ne.s32.totalorder %s90, %s91
    %p105 = scmp.eq.s32.totalorder %s15, 1
    %p106 = por %p104, %p105
    %p108 = scmp.ne.s32.totalorder %s91, %s107
    %p109 = scmp.eq.s32.totalorder %s15, 0
    %p110 = por %p108, %p109
    %p111 = scmp.le.s32.totalorder 1, %s9
    %p112 = scmp.lt.s32.totalorder %s9, 3
    %p113 = pnand %p111, %p112
    %p114 = pneg %p113
    // Predicated region
    $region9: #{_lambda_.9} parent=5 // pred_check
      _
    $region10: #{_lambda_.9} parent=5 // pred_check_branch
      %116 = sbr.rel (%p113) target = $region12
    $region11: #{_lambda_.9} parent=5 // pred_region
      %s117 = ssub.s32 %s9, 1
      // Predicated region
      $region13: #{_lambda_.9} parent=11 // pred_check
        %p118 = pneg %p56
      $region14: #{_lambda_.9} parent=11 // pred_check_branch
        %120 = sbr.rel (%p118) target = $region16
      $region15: #{_lambda_.9} parent=11 // pred_region
        _
      $region16: #{_lambda_.9} parent=11 // pred_fallthru
        _
      // Predicated region
      $region17: #{_lambda_.9} parent=11 // pred_check
        %p121 = pneg %p77
      $region18: #{_lambda_.9} parent=11 // pred_check_branch
        %123 = sbr.rel (%p121) target = $region20
      $region19: #{_lambda_.9} parent=11 // pred_region
        _
      $region20: #{_lambda_.9} parent=11 // pred_fallthru
        _
    $region12: #{_lambda_.9} parent=5 // pred_fallthru
      _
    %p124 = scmp.lt.s32.totalorder %s9, 2
    // Predicated region
    $region21: #{_lambda_.9} parent=5 // pred_check
      %p125 = pneg %p124
    $region22: #{_lambda_.9} parent=5 // pred_check_branch
      %127 = sbr.rel (%p125) target = $region24
    $region23: #{_lambda_.9} parent=5 // pred_region
      // Predicated region
      $region25: #{_lambda_.9} parent=23 // pred_check
        %p128 = pneg %p29
      $region26: #{_lambda_.9} parent=23 // pred_check_branch
        %130 = sbr.rel (%p128) target = $region28
      $region27: #{_lambda_.9} parent=23 // pred_region
        %s131 = smul.u32 32, %s9
        %p132 = scmp.lt.s32.totalorder %s131, 63
        %s133 = scalar_select %p132, %s131, 63
        %s134 = smul.addr %s133, 4
        %s135 = scalar_lea.vmem %s0, %s134
        %s136 = smul.u32 32, %s9
      $region28: #{_lambda_.9} parent=23 // pred_fallthru
        _
    $region24: #{_lambda_.9} parent=5 // pred_fallthru
      _
    %p137 = scmp.le.s32.totalorder 1, %s9
    %p138 = scmp.lt.s32.totalorder %s9, 3
    %p139 = pnand %p137, %p138
    %p140 = pneg %p139
    // Predicated region
    $region29: #{_lambda_.9} parent=5 // pred_check
      _
    $region30: #{_lambda_.9} parent=5 // pred_check_branch
      %142 = sbr.rel (%p139) target = $region32
    $region31: #{_lambda_.9} parent=5 // pred_region
      %s143 = ssub.s32 %s9, 1
      %s144 = smul.u32 32, %s14
      %p145 = scmp.lt.s32.totalorder %s144, 63
      %s146 = scalar_select %p145, %s144, 63
      %s147 = smul.addr %s146, 4
      %s148 = scalar_lea.vmem %s0, %s147
      %p149 = pneg %p35
      %p150 = pneg %p32
      %p151 = pneg %p56
      %p152 = pneg %p53
      %p153 = pneg %p77
      %p154 = pneg %p74
      %p155 = pneg %p103
      %p156 = pneg %p100
      %s157 = smul.u32 32, %s14
      %p158 = scmp.lt.s32.totalorder %s157, 63
      %s159 = scalar_select %p158, %s157, 63
      %s160 = smul.addr %s159, 4
      %s161 = scalar_lea.vmem %s3, %s160
      %s162 = smul.u32 32, %s14
      %p163 = scmp.lt.s32.totalorder %s162, 63
      %s164 = scalar_select %p163, %s162, 63
      %s165 = smul.addr %s164, 4
      %s166 = scalar_lea.vmem %s0, %s165
      %s167 = smul.u32 32, %s14
      %s168 = smul.u32 32, %s14
      %p169 = scmp.lt.s32.totalorder %s168, 63
      %s170 = scalar_select %p169, %s168, 63
      %s171 = smul.addr %s170, 4
      %s172 = scalar_lea.vmem %s3, %s171
      %s173 = smul.u32 32, %s14
      %v174 = vld [vmem:[%s166] sm:$0xf]
      %v175 = vld [vmem:[%s166 + $0x4] sm:$0xf]
      %v176 = vld [vmem:[%s166 + $0x8] sm:$0xf]
      %v177 = vld [vmem:[%s166 + $0xc] sm:$0xf]
      %v178 = vld [vmem:[%s166 + $0x10] sm:$0xf]
      %v179 = vld [vmem:[%s166 + $0x14] sm:$0xf]
      %v180 = vld [vmem:[%s166 + $0x18] sm:$0xf]
      %v181 = vld [vmem:[%s166 + $0x1c] sm:$0xf]
      %v182 = vld [vmem:[%s166 + $0x20] sm:$0xf]
      %v183 = vld [vmem:[%s166 + $0x24] sm:$0xf]
      %v184 = vld [vmem:[%s166 + $0x28] sm:$0xf]
      %v185 = vld [vmem:[%s166 + $0x2c] sm:$0xf]
      %v186 = vld [vmem:[%s166 + $0x30] sm:$0xf]
      %v187 = vld [vmem:[%s166 + $0x34] sm:$0xf]
      %v188 = vld [vmem:[%s166 + $0x38] sm:$0xf]
      %v189 = vld [vmem:[%s166 + $0x3c] sm:$0xf]
      %v190 = vld [vmem:[%s166 + $0x40] sm:$0xf]
      %v191 = vld [vmem:[%s166 + $0x44] sm:$0xf]
      %v192 = vld [vmem:[%s166 + $0x48] sm:$0xf]
      %v193 = vld [vmem:[%s166 + $0x4c] sm:$0xf]
      %v194 = vld [vmem:[%s166 + $0x50] sm:$0xf]
      %v195 = vld [vmem:[%s166 + $0x54] sm:$0xf]
      %v196 = vld [vmem:[%s166 + $0x58] sm:$0xf]
      %v197 = vld [vmem:[%s166 + $0x5c] sm:$0xf]
      %v198 = vld [vmem:[%s166 + $0x60] sm:$0xf]
      %v199 = vld [vmem:[%s166 + $0x64] sm:$0xf]
      %v200 = vld [vmem:[%s166 + $0x68] sm:$0xf]
      %v201 = vld [vmem:[%s166 + $0x6c] sm:$0xf]
      %v202 = vld [vmem:[%s166 + $0x70] sm:$0xf]
      %v203 = vld [vmem:[%s166 + $0x74] sm:$0xf]
      %v204 = vld [vmem:[%s166 + $0x78] sm:$0xf]
      %v205 = vld [vmem:[%s166 + $0x7c] sm:$0xf]
      %v206 = vunpack.c.l.bf16 %v174
      %v207 = vunpack.c.l.bf16 %v175
      %v208 = vunpack.c.l.bf16 %v176
      %v209 = vunpack.c.l.bf16 %v177
      %v210 = vunpack.c.l.bf16 %v178
      %v211 = vunpack.c.l.bf16 %v179
      %v212 = vunpack.c.l.bf16 %v180
      %v213 = vunpack.c.l.bf16 %v181
      %v214 = vunpack.c.l.bf16 %v182
      %v215 = vunpack.c.l.bf16 %v183
      %v216 = vunpack.c.l.bf16 %v184
      %v217 = vunpack.c.l.bf16 %v185
      %v218 = vunpack.c.l.bf16 %v186
      %v219 = vunpack.c.l.bf16 %v187
      %v220 = vunpack.c.l.bf16 %v188
      %v221 = vunpack.c.l.bf16 %v189
      %v222 = vunpack.c.l.bf16 %v190
      %v223 = vunpack.c.l.bf16 %v191
      %v224 = vunpack.c.l.bf16 %v192
      %v225 = vunpack.c.l.bf16 %v193
      %v226 = vunpack.c.l.bf16 %v194
      %v227 = vunpack.c.l.bf16 %v195
      %v228 = vunpack.c.l.bf16 %v196
      %v229 = vunpack.c.l.bf16 %v197
      %v230 = vunpack.c.l.bf16 %v198
      %v231 = vunpack.c.l.bf16 %v199
      %v232 = vunpack.c.l.bf16 %v200
      %v233 = vunpack.c.l.bf16 %v201
      %v234 = vunpack.c.l.bf16 %v202
      %v235 = vunpack.c.l.bf16 %v203
      %v236 = vunpack.c.l.bf16 %v204
      %v237 = vunpack.c.l.bf16 %v205
      %v238 = vld [vmem:[%s1] sm:$0x1]
      %v240 = vperm.slane %v238, 0
      %v242 = vmul.f32 %v206, %v240
      %v243 = vmul.f32 %v207, %v240
      %v244 = vmul.f32 %v208, %v240
      %v245 = vmul.f32 %v209, %v240
      %v246 = vmul.f32 %v210, %v240
      %v247 = vmul.f32 %v211, %v240
      %v248 = vmul.f32 %v212, %v240
      %v249 = vmul.f32 %v213, %v240
      %v250 = vmul.f32 %v214, %v240
      %v251 = vmul.f32 %v215, %v240
      %v252 = vmul.f32 %v216, %v240
      %v253 = vmul.f32 %v217, %v240
      %v254 = vmul.f32 %v218, %v240
      %v255 = vmul.f32 %v219, %v240
      %v256 = vmul.f32 %v220, %v240
      %v257 = vmul.f32 %v221, %v240
      %v258 = vmul.f32 %v222, %v240
      %v259 = vmul.f32 %v223, %v240
      %v260 = vmul.f32 %v224, %v240
      %v261 = vmul.f32 %v225, %v240
      %v262 = vmul.f32 %v226, %v240
      %v263 = vmul.f32 %v227, %v240
      %v264 = vmul.f32 %v228, %v240
      %v265 = vmul.f32 %v229, %v240
      %v266 = vmul.f32 %v230, %v240
      %v267 = vmul.f32 %v231, %v240
      %v268 = vmul.f32 %v232, %v240
      %v269 = vmul.f32 %v233, %v240
      %v270 = vmul.f32 %v234, %v240
      %v271 = vmul.f32 %v235, %v240
      %v272 = vmul.f32 %v236, %v240
      %v273 = vmul.f32 %v237, %v240
      %v274 = vld [vmem:[%s2] sm:$0x1]
      %v276 = vperm.slane %v274, 0
      %v278 = vadd.f32 %v242, %v276
      %v279 = vadd.f32 %v243, %v276
      %v280 = vadd.f32 %v244, %v276
      %v281 = vadd.f32 %v245, %v276
      %v282 = vadd.f32 %v246, %v276
      %v283 = vadd.f32 %v247, %v276
      %v284 = vadd.f32 %v248, %v276
      %v285 = vadd.f32 %v249, %v276
      %v286 = vadd.f32 %v250, %v276
      %v287 = vadd.f32 %v251, %v276
      %v288 = vadd.f32 %v252, %v276
      %v289 = vadd.f32 %v253, %v276
      %v290 = vadd.f32 %v254, %v276
      %v291 = vadd.f32 %v255, %v276
      %v292 = vadd.f32 %v256, %v276
      %v293 = vadd.f32 %v257, %v276
      %v294 = vadd.f32 %v258, %v276
      %v295 = vadd.f32 %v259, %v276
      %v296 = vadd.f32 %v260, %v276
      %v297 = vadd.f32 %v261, %v276
      %v298 = vadd.f32 %v262, %v276
      %v299 = vadd.f32 %v263, %v276
      %v300 = vadd.f32 %v264, %v276
      %v301 = vadd.f32 %v265, %v276
      %v302 = vadd.f32 %v266, %v276
      %v303 = vadd.f32 %v267, %v276
      %v304 = vadd.f32 %v268, %v276
      %v305 = vadd.f32 %v269, %v276
      %v306 = vadd.f32 %v270, %v276
      %v307 = vadd.f32 %v271, %v276
      %v308 = vadd.f32 %v272, %v276
      %v309 = vadd.f32 %v273, %v276
      %vm310 = vcmp.gt.f32.partialorder %v278, 0.0
      %vm311 = vcmp.gt.f32.partialorder %v279, 0.0
      %vm312 = vcmp.gt.f32.partialorder %v280, 0.0
      %vm313 = vcmp.gt.f32.partialorder %v281, 0.0
      %vm314 = vcmp.gt.f32.partialorder %v282, 0.0
      %vm315 = vcmp.gt.f32.partialorder %v283, 0.0
      %vm316 = vcmp.gt.f32.partialorder %v284, 0.0
      %vm317 = vcmp.gt.f32.partialorder %v285, 0.0
      %vm318 = vcmp.gt.f32.partialorder %v286, 0.0
      %vm319 = vcmp.gt.f32.partialorder %v287, 0.0
      %vm320 = vcmp.gt.f32.partialorder %v288, 0.0
      %vm321 = vcmp.gt.f32.partialorder %v289, 0.0
      %vm322 = vcmp.gt.f32.partialorder %v290, 0.0
      %vm323 = vcmp.gt.f32.partialorder %v291, 0.0
      %vm324 = vcmp.gt.f32.partialorder %v292, 0.0
      %vm325 = vcmp.gt.f32.partialorder %v293, 0.0
      %vm326 = vcmp.gt.f32.partialorder %v294, 0.0
      %vm327 = vcmp.gt.f32.partialorder %v295, 0.0
      %vm328 = vcmp.gt.f32.partialorder %v296, 0.0
      %vm329 = vcmp.gt.f32.partialorder %v297, 0.0
      %vm330 = vcmp.gt.f32.partialorder %v298, 0.0
      %vm331 = vcmp.gt.f32.partialorder %v299, 0.0
      %vm332 = vcmp.gt.f32.partialorder %v300, 0.0
      %vm333 = vcmp.gt.f32.partialorder %v301, 0.0
      %vm334 = vcmp.gt.f32.partialorder %v302, 0.0
      %vm335 = vcmp.gt.f32.partialorder %v303, 0.0
      %vm336 = vcmp.gt.f32.partialorder %v304, 0.0
      %vm337 = vcmp.gt.f32.partialorder %v305, 0.0
      %vm338 = vcmp.gt.f32.partialorder %v306, 0.0
      %vm339 = vcmp.gt.f32.partialorder %v307, 0.0
      %vm340 = vcmp.gt.f32.partialorder %v308, 0.0
      %vm341 = vcmp.gt.f32.partialorder %v309, 0.0
      %v342 = vmul.f32 %v278, 0.2
      %v343 = vmul.f32 %v279, 0.2
      %v344 = vmul.f32 %v280, 0.2
      %v345 = vmul.f32 %v281, 0.2
      %v346 = vmul.f32 %v282, 0.2
      %v347 = vmul.f32 %v283, 0.2
      %v348 = vmul.f32 %v284, 0.2
      %v349 = vmul.f32 %v285, 0.2
      %v350 = vmul.f32 %v286, 0.2
      %v351 = vmul.f32 %v287, 0.2
      %v352 = vmul.f32 %v288, 0.2
      %v353 = vmul.f32 %v289, 0.2
      %v354 = vmul.f32 %v290, 0.2
      %v355 = vmul.f32 %v291, 0.2
      %v356 = vmul.f32 %v292, 0.2
      %v357 = vmul.f32 %v293, 0.2
      %v358 = vmul.f32 %v294, 0.2
      %v359 = vmul.f32 %v295, 0.2
      %v360 = vmul.f32 %v296, 0.2
      %v361 = vmul.f32 %v297, 0.2
      %v362 = vmul.f32 %v298, 0.2
      %v363 = vmul.f32 %v299, 0.2
      %v364 = vmul.f32 %v300, 0.2
      %v365 = vmul.f32 %v301, 0.2
      %v366 = vmul.f32 %v302, 0.2
      %v367 = vmul.f32 %v303, 0.2
      %v368 = vmul.f32 %v304, 0.2
      %v369 = vmul.f32 %v305, 0.2
      %v370 = vmul.f32 %v306, 0.2
      %v371 = vmul.f32 %v307, 0.2
      %v372 = vmul.f32 %v308, 0.2
      %v373 = vmul.f32 %v309, 0.2
      %v374 = vsel %vm310, %v278, %v342
      %v375 = vsel %vm311, %v279, %v343
      %v376 = vsel %vm312, %v280, %v344
      %v377 = vsel %vm313, %v281, %v345
      %v378 = vsel %vm314, %v282, %v346
      %v379 = vsel %vm315, %v283, %v347
      %v380 = vsel %vm316, %v284, %v348
      %v381 = vsel %vm317, %v285, %v349
      %v382 = vsel %vm318, %v286, %v350
      %v383 = vsel %vm319, %v287, %v351
      %v384 = vsel %vm320, %v288, %v352
      %v385 = vsel %vm321, %v289, %v353
      %v386 = vsel %vm322, %v290, %v354
      %v387 = vsel %vm323, %v291, %v355
      %v388 = vsel %vm324, %v292, %v356
      %v389 = vsel %vm325, %v293, %v357
      %v390 = vsel %vm326, %v294, %v358
      %v391 = vsel %vm327, %v295, %v359
      %v392 = vsel %vm328, %v296, %v360
      %v393 = vsel %vm329, %v297, %v361
      %v394 = vsel %vm330, %v298, %v362
      %v395 = vsel %vm331, %v299, %v363
      %v396 = vsel %vm332, %v300, %v364
      %v397 = vsel %vm333, %v301, %v365
      %v398 = vsel %vm334, %v302, %v366
      %v399 = vsel %vm335, %v303, %v367
      %v400 = vsel %vm336, %v304, %v368
      %v401 = vsel %vm337, %v305, %v369
      %v402 = vsel %vm338, %v306, %v370
      %v403 = vsel %vm339, %v307, %v371
      %v404 = vsel %vm340, %v308, %v372
      %v405 = vsel %vm341, %v309, %v373
      %v406 = vpack.c.bf16 %v374, %v374
      %v407 = vpack.c.bf16 %v375, %v375
      %v408 = vpack.c.bf16 %v376, %v376
      %v409 = vpack.c.bf16 %v377, %v377
      %v410 = vpack.c.bf16 %v378, %v378
      %v411 = vpack.c.bf16 %v379, %v379
      %v412 = vpack.c.bf16 %v380, %v380
      %v413 = vpack.c.bf16 %v381, %v381
      %v414 = vpack.c.bf16 %v382, %v382
      %v415 = vpack.c.bf16 %v383, %v383
      %v416 = vpack.c.bf16 %v384, %v384
      %v417 = vpack.c.bf16 %v385, %v385
      %v418 = vpack.c.bf16 %v386, %v386
      %v419 = vpack.c.bf16 %v387, %v387
      %v420 = vpack.c.bf16 %v388, %v388
      %v421 = vpack.c.bf16 %v389, %v389
      %v422 = vpack.c.bf16 %v390, %v390
      %v423 = vpack.c.bf16 %v391, %v391
      %v424 = vpack.c.bf16 %v392, %v392
      %v425 = vpack.c.bf16 %v393, %v393
      %v426 = vpack.c.bf16 %v394, %v394
      %v427 = vpack.c.bf16 %v395, %v395
      %v428 = vpack.c.bf16 %v396, %v396
      %v429 = vpack.c.bf16 %v397, %v397
      %v430 = vpack.c.bf16 %v398, %v398
      %v431 = vpack.c.bf16 %v399, %v399
      %v432 = vpack.c.bf16 %v400, %v400
      %v433 = vpack.c.bf16 %v401, %v401
      %v434 = vpack.c.bf16 %v402, %v402
      %v435 = vpack.c.bf16 %v403, %v403
      %v436 = vpack.c.bf16 %v404, %v404
      %v437 = vpack.c.bf16 %v405, %v405
      %438 = vst [vmem:[%s172] sm:$0xf] %v406
      %439 = vst [vmem:[%s172 + $0x4] sm:$0xf] %v407
      %440 = vst [vmem:[%s172 + $0x8] sm:$0xf] %v408
      %441 = vst [vmem:[%s172 + $0xc] sm:$0xf] %v409
      %442 = vst [vmem:[%s172 + $0x10] sm:$0xf] %v410
      %443 = vst [vmem:[%s172 + $0x14] sm:$0xf] %v411
      %444 = vst [vmem:[%s172 + $0x18] sm:$0xf] %v412
      %445 = vst [vmem:[%s172 + $0x1c] sm:$0xf] %v413
      %446 = vst [vmem:[%s172 + $0x20] sm:$0xf] %v414
      %447 = vst [vmem:[%s172 + $0x24] sm:$0xf] %v415
      %448 = vst [vmem:[%s172 + $0x28] sm:$0xf] %v416
      %449 = vst [vmem:[%s172 + $0x2c] sm:$0xf] %v417
      %450 = vst [vmem:[%s172 + $0x30] sm:$0xf] %v418
      %451 = vst [vmem:[%s172 + $0x34] sm:$0xf] %v419
      %452 = vst [vmem:[%s172 + $0x38] sm:$0xf] %v420
      %453 = vst [vmem:[%s172 + $0x3c] sm:$0xf] %v421
      %454 = vst [vmem:[%s172 + $0x40] sm:$0xf] %v422
      %455 = vst [vmem:[%s172 + $0x44] sm:$0xf] %v423
      %456 = vst [vmem:[%s172 + $0x48] sm:$0xf] %v424
      %457 = vst [vmem:[%s172 + $0x4c] sm:$0xf] %v425
      %458 = vst [vmem:[%s172 + $0x50] sm:$0xf] %v426
      %459 = vst [vmem:[%s172 + $0x54] sm:$0xf] %v427
      %460 = vst [vmem:[%s172 + $0x58] sm:$0xf] %v428
      %461 = vst [vmem:[%s172 + $0x5c] sm:$0xf] %v429
      %462 = vst [vmem:[%s172 + $0x60] sm:$0xf] %v430
      %463 = vst [vmem:[%s172 + $0x64] sm:$0xf] %v431
      %464 = vst [vmem:[%s172 + $0x68] sm:$0xf] %v432
      %465 = vst [vmem:[%s172 + $0x6c] sm:$0xf] %v433
      %466 = vst [vmem:[%s172 + $0x70] sm:$0xf] %v434
      %467 = vst [vmem:[%s172 + $0x74] sm:$0xf] %v435
      %468 = vst [vmem:[%s172 + $0x78] sm:$0xf] %v436
      %469 = vst [vmem:[%s172 + $0x7c] sm:$0xf] %v437
      %s470 = smul.u32 32, %s14
      %p471 = scmp.lt.s32.totalorder %s470, 63
      %s472 = scalar_select %p471, %s470, 63
      %s473 = smul.addr %s472, 4
      %s474 = scalar_lea.vmem %s3, %s473
      // Predicated region
      $region33: #{_lambda_.9} parent=31 // pred_check
        %p475 = pneg %p100
      $region34: #{_lambda_.9} parent=31 // pred_check_branch
        %477 = sbr.rel (%p475) target = $region36
      $region35: #{_lambda_.9} parent=31 // pred_region
        %s478 = smul.u32 32, %s14
      $region36: #{_lambda_.9} parent=31 // pred_fallthru
        _
    $region32: #{_lambda_.9} parent=5 // pred_fallthru
      _
    %p479 = scmp.le.s32.totalorder 2, %s9
    // Predicated region
    $region37: #{_lambda_.9} parent=5 // pred_check
      %p480 = pneg %p479
    $region38: #{_lambda_.9} parent=5 // pred_check_branch
      %482 = sbr.rel (%p480) target = $region40
    $region39: #{_lambda_.9} parent=5 // pred_region
      %s483 = ssub.s32 %s9, 2
      // Predicated region
      $region41: #{_lambda_.9} parent=39 // pred_check
        %p484 = pneg %p106
      $region42: #{_lambda_.9} parent=39 // pred_check_branch
        %486 = sbr.rel (%p484) target = $region44
      $region43: #{_lambda_.9} parent=39 // pred_region
        %s487 = smul.u32 32, %s15
        %p488 = scmp.lt.s32.totalorder %s487, 63
        %s489 = scalar_select %p488, %s487, 63
        %s490 = smul.addr %s489, 4
        %s491 = scalar_lea.vmem %s3, %s490
      $region44: #{_lambda_.9} parent=39 // pred_fallthru
        _
    $region40: #{_lambda_.9} parent=5 // pred_fallthru
      _
  $region6: #{_lambda_.9} parent=0 // loop_footer
    %s13 = sadd.s32 1, %s9
  $region7: #{_lambda_.9} parent=0 // loop_footer_branch
    %8 = sbr.rel target = $region3
  $region8: #{_lambda_.9} parent=0 // loop_exit
    _

// kernel: _lambda_.8
$region0: #{_lambda_.8}
  #allocation0 [shape = 'u32[]', space=smem, size = 0x4, offset = 0x4, fixed_abs, tag = 'smem constant byte address 0x4 - core index']
  #allocation1 [shape = 'u32[72,128]{1,0:T(1,128)}', space=vmem, size = 0x9000, scoped, tag = 'internal scratch']
  %s0 = inlined_call_operand.vmem [shape: bf16[2,2,288,80], index: 0, kind: input, shape index: {}]
  %s1 = inlined_call_operand.vmem [shape: bf16[5,80,128], index: 1, kind: input, shape index: {}]
  %s2 = inlined_call_operand.vmem [shape: f32[1,128], index: 2, kind: input, shape index: {}]
  %s3 = inlined_call_operand.vmem [shape: bf16[2,256,128], index: 3, kind: output, shape index: {0}]
  %s4 = inlined_call_operand.vmem [shape: f32[2,1,128], index: 4, kind: output, shape index: {1}]
  %s5 = inlined_call_operand.vmem [shape: f32[2,1,128], index: 5, kind: output, shape index: {2}]
  %6 = xla_tuple %s3, %s4, %s5
  %s7 = sld [smem:[#allocation0]]
  $region61: #{_lambda_.8} parent=0
    _
  %s9 = ssub.s32 1, %s7
  %s10 = scalar_select 0, %s9, %s7
  loop: start=0, step=1, limit=4
  $region2: #{_lambda_.8} parent=0 // loop_pre_header
    _
  $region3: #{_lambda_.8} parent=0 // loop_header
    %s12 = sphi 0, %s16
    %p13 = scmp.ge.s32.totalorder %s12, 4
    %s22 = sphi 0, %s24
    %s25 = sphi 0, %s22
    %s26 = sphi 0, %s25
    %s42 = sphi 0, %s26
    %s46 = sphi 0, %s46
    %s48 = sphi 0, %s46
    %s49 = sphi 0, %s48
    %s63 = sphi 0, %s49
    %s67 = sphi 0, %s67
    %s69 = sphi 0, %s67
    %s70 = sphi 0, %s69
    %s84 = sphi 0, %s70
    %s90 = sphi 0, %s92
    %s93 = sphi 0, %s90
    %s94 = sphi 0, %s93
    %s110 = sphi 0, %s94
    %s116 = sphi 0, %s118
    %s119 = sphi 0, %s116
    %s120 = sphi 0, %s119
    %s136 = sphi 0, %s120
    %s142 = sphi 0, %s144
    %s145 = sphi 0, %s142
    %s146 = sphi 0, %s145
    %s162 = sphi 0, %s146
  $region4: #{_lambda_.8} parent=0 // loop_header_branch
    %15 = sbr.rel (%p13) target = $region8
  $region5: #{_lambda_.8} parent=0 // loop_body
    %s17 = ssub.s32 %s12, 1
    %s18 = ssub.s32 %s12, 2
    %s19 = sadd.s32 %s12, 1
    %s20 = ssub.s32 %s12, %s19
    %p21 = scmp.eq.s32.totalorder %s20, 0
    %s23 = sadd.s32 %s22, 1
    %s24 = scalar_select %p21, %s22, %s23
    %p27 = pneg %p21
    %p28 = scmp.eq.s32.totalorder %s12, 1
    %p29 = por %p27, %p28
    %p30 = scmp.ne.s32.totalorder %s22, %s25
    %p31 = scmp.eq.s32.totalorder %s12, 0
    %p32 = por %p30, %p31
    %p33 = scmp.ne.s32.totalorder %s22, %s25
    %p34 = scmp.eq.s32.totalorder %s17, 1
    %p35 = por %p33, %p34
    %p36 = scmp.ne.s32.totalorder %s25, %s26
    %p37 = scmp.eq.s32.totalorder %s17, 0
    %p38 = por %p36, %p37
    %p39 = scmp.ne.s32.totalorder %s25, %s26
    %p40 = scmp.eq.s32.totalorder %s18, 1
    %p41 = por %p39, %p40
    %p43 = scmp.ne.s32.totalorder %s26, %s42
    %p44 = scmp.eq.s32.totalorder %s18, 0
    %p45 = por %p43, %p44
    %s47 = sadd.s32 %s46, 1
    %p50 = scmp.eq.s32.totalorder %s12, 1
    %p51 = scmp.ne.s32.totalorder %s46, %s48
    %p52 = scmp.eq.s32.totalorder %s12, 0
    %p53 = por %p51, %p52
    %p54 = scmp.ne.s32.totalorder %s46, %s48
    %p55 = scmp.eq.s32.totalorder %s17, 1
    %p56 = por %p54, %p55
    %p57 = scmp.ne.s32.totalorder %s48, %s49
    %p58 = scmp.eq.s32.totalorder %s17, 0
    %p59 = por %p57, %p58
    %p60 = scmp.ne.s32.totalorder %s48, %s49
    %p61 = scmp.eq.s32.totalorder %s18, 1
    %p62 = por %p60, %p61
    %p64 = scmp.ne.s32.totalorder %s49, %s63
    %p65 = scmp.eq.s32.totalorder %s18, 0
    %p66 = por %p64, %p65
    %s68 = sadd.s32 %s67, 1
    %p71 = scmp.eq.s32.totalorder %s12, 1
    %p72 = scmp.ne.s32.totalorder %s67, %s69
    %p73 = scmp.eq.s32.totalorder %s12, 0
    %p74 = por %p72, %p73
    %p75 = scmp.ne.s32.totalorder %s67, %s69
    %p76 = scmp.eq.s32.totalorder %s17, 1
    %p77 = por %p75, %p76
    %p78 = scmp.ne.s32.totalorder %s69, %s70
    %p79 = scmp.eq.s32.totalorder %s17, 0
    %p80 = por %p78, %p79
    %p81 = scmp.ne.s32.totalorder %s69, %s70
    %p82 = scmp.eq.s32.totalorder %s18, 1
    %p83 = por %p81, %p82
    %p85 = scmp.ne.s32.totalorder %s70, %s84
    %p86 = scmp.eq.s32.totalorder %s18, 0
    %p87 = por %p85, %p86
    %s88 = ssub.s32 %s12, %s19
    %p89 = scmp.eq.s32.totalorder %s88, 0
    %s91 = sadd.s32 %s90, 1
    %s92 = scalar_select %p89, %s90, %s91
    %p95 = pneg %p89
    %p96 = scmp.eq.s32.totalorder %s12, 1
    %p97 = por %p95, %p96
    %p98 = scmp.ne.s32.totalorder %s90, %s93
    %p99 = scmp.eq.s32.totalorder %s12, 0
    %p100 = por %p98, %p99
    %p101 = scmp.ne.s32.totalorder %s90, %s93
    %p102 = scmp.eq.s32.totalorder %s17, 1
    %p103 = por %p101, %p102
    %p104 = scmp.ne.s32.totalorder %s93, %s94
    %p105 = scmp.eq.s32.totalorder %s17, 0
    %p106 = por %p104, %p105
    %p107 = scmp.ne.s32.totalorder %s93, %s94
    %p108 = scmp.eq.s32.totalorder %s18, 1
    %p109 = por %p107, %p108
    %p111 = scmp.ne.s32.totalorder %s94, %s110
    %p112 = scmp.eq.s32.totalorder %s18, 0
    %p113 = por %p111, %p112
    %s114 = ssub.s32 %s12, %s19
    %p115 = scmp.eq.s32.totalorder %s114, 0
    %s117 = sadd.s32 %s116, 1
    %s118 = scalar_select %p115, %s116, %s117
    %p121 = pneg %p115
    %p122 = scmp.eq.s32.totalorder %s12, 1
    %p123 = por %p121, %p122
    %p124 = scmp.ne.s32.totalorder %s116, %s119
    %p125 = scmp.eq.s32.totalorder %s12, 0
    %p126 = por %p124, %p125
    %p127 = scmp.ne.s32.totalorder %s116, %s119
    %p128 = scmp.eq.s32.totalorder %s17, 1
    %p129 = por %p127, %p128
    %p130 = scmp.ne.s32.totalorder %s119, %s120
    %p131 = scmp.eq.s32.totalorder %s17, 0
    %p132 = por %p130, %p131
    %p133 = scmp.ne.s32.totalorder %s119, %s120
    %p134 = scmp.eq.s32.totalorder %s18, 1
    %p135 = por %p133, %p134
    %p137 = scmp.ne.s32.totalorder %s120, %s136
    %p138 = scmp.eq.s32.totalorder %s18, 0
    %p139 = por %p137, %p138
    %s140 = ssub.s32 %s12, %s19
    %p141 = scmp.eq.s32.totalorder %s140, 0
    %s143 = sadd.s32 %s142, 1
    %s144 = scalar_select %p141, %s142, %s143
    %p147 = pneg %p141
    %p148 = scmp.eq.s32.totalorder %s12, 1
    %p149 = por %p147, %p148
    %p150 = scmp.ne.s32.totalorder %s142, %s145
    %p151 = scmp.eq.s32.totalorder %s12, 0
    %p152 = por %p150, %p151
    %p153 = scmp.ne.s32.totalorder %s142, %s145
    %p154 = scmp.eq.s32.totalorder %s17, 1
    %p155 = por %p153, %p154
    %p156 = scmp.ne.s32.totalorder %s145, %s146
    %p157 = scmp.eq.s32.totalorder %s17, 0
    %p158 = por %p156, %p157
    %p159 = scmp.ne.s32.totalorder %s145, %s146
    %p160 = scmp.eq.s32.totalorder %s18, 1
    %p161 = por %p159, %p160
    %p163 = scmp.ne.s32.totalorder %s146, %s162
    %p164 = scmp.eq.s32.totalorder %s18, 0
    %p165 = por %p163, %p164
    %p166 = scmp.le.s32.totalorder 1, %s12
    %p167 = scmp.lt.s32.totalorder %s12, 3
    %p168 = pnand %p166, %p167
    %p169 = pneg %p168
    // Predicated region
    $region9: #{_lambda_.8} parent=5 // pred_check
      _
    $region10: #{_lambda_.8} parent=5 // pred_check_branch
      %171 = sbr.rel (%p168) target = $region12
    $region11: #{_lambda_.8} parent=5 // pred_region
      %s172 = ssub.s32 %s12, 1
      // Predicated region
      $region13: #{_lambda_.8} parent=11 // pred_check
        %p173 = pneg %p59
      $region14: #{_lambda_.8} parent=11 // pred_check_branch
        %175 = sbr.rel (%p173) target = $region16
      $region15: #{_lambda_.8} parent=11 // pred_region
        _
      $region16: #{_lambda_.8} parent=11 // pred_fallthru
        _
      // Predicated region
      $region17: #{_lambda_.8} parent=11 // pred_check
        %p176 = pneg %p80
      $region18: #{_lambda_.8} parent=11 // pred_check_branch
        %178 = sbr.rel (%p176) target = $region20
      $region19: #{_lambda_.8} parent=11 // pred_region
        _
      $region20: #{_lambda_.8} parent=11 // pred_fallthru
        _
    $region12: #{_lambda_.8} parent=5 // pred_fallthru
      _
    %p179 = scmp.lt.s32.totalorder %s12, 2
    // Predicated region
    $region21: #{_lambda_.8} parent=5 // pred_check
      %p180 = pneg %p179
    $region22: #{_lambda_.8} parent=5 // pred_check_branch
      %182 = sbr.rel (%p180) target = $region24
    $region23: #{_lambda_.8} parent=5 // pred_region
      // Predicated region
      $region25: #{_lambda_.8} parent=23 // pred_check
        %p183 = pneg %p32
      $region26: #{_lambda_.8} parent=23 // pred_check_branch
        %185 = sbr.rel (%p183) target = $region28
      $region27: #{_lambda_.8} parent=23 // pred_region
        %p186 = scmp.lt.s32.totalorder %s12, 1
        %s187 = scalar_select %p186, %s12, 1
        %s188 = smul.addr %s187, 72
        %s189 = smul.addr %s188, 4
        %s190 = scalar_lea.vmem %s0, %s189
      $region28: #{_lambda_.8} parent=23 // pred_fallthru
        _
    $region24: #{_lambda_.8} parent=5 // pred_fallthru
      _
    %p191 = scmp.le.s32.totalorder 1, %s12
    %p192 = scmp.lt.s32.totalorder %s12, 3
    %p193 = pnand %p191, %p192
    %p194 = pneg %p193
    // Predicated region
    $region29: #{_lambda_.8} parent=5 // pred_check
      _
    $region30: #{_lambda_.8} parent=5 // pred_check_branch
      %196 = sbr.rel (%p193) target = $region32
    $region31: #{_lambda_.8} parent=5 // pred_region
      %s197 = ssub.s32 %s12, 1
      %p198 = scmp.lt.s32.totalorder %s17, 1
      %s199 = scalar_select %p198, %s17, 1
      %s200 = smul.addr %s199, 72
      %s201 = smul.addr %s200, 4
      %s202 = scalar_lea.vmem %s0, %s201
      %p203 = pneg %p38
      %p204 = pneg %p35
      %p205 = pneg %p59
      %p206 = pneg %p56
      %p207 = pneg %p80
      %p208 = pneg %p77
      %p209 = pneg %p106
      %p210 = pneg %p103
      %p211 = scmp.lt.s32.totalorder %s17, 1
      %s212 = scalar_select %p211, %s17, 1
      %s213 = smul.addr %s212, 32
      %s214 = smul.addr %s213, 4
      %s215 = scalar_lea.vmem %s3, %s214
      %p216 = pneg %p132
      %p217 = pneg %p129
      %p218 = scmp.lt.s32.totalorder %s17, 1
      %s219 = scalar_select %p218, %s17, 1
      %s220 = scalar_lea.vmem %s4, %s219
      %p221 = pneg %p158
      %p222 = pneg %p155
      %p223 = scmp.lt.s32.totalorder %s17, 1
      %s224 = scalar_select %p223, %s17, 1
      %s225 = scalar_lea.vmem %s5, %s224
      %p226 = scmp.lt.s32.totalorder %s17, 1
      %s227 = scalar_select %p226, %s17, 1
      %s228 = smul.addr %s227, 72
      %s229 = smul.addr %s228, 4
      %s230 = scalar_lea.vmem %s0, %s229
      %p231 = scmp.lt.s32.totalorder %s17, 1
      %s232 = scalar_select %p231, %s17, 1
      %s233 = smul.addr %s232, 32
      %s234 = smul.addr %s233, 4
      %s235 = scalar_lea.vmem %s3, %s234
      %p236 = scmp.lt.s32.totalorder %s17, 1
      %s237 = scalar_select %p236, %s17, 1
      %s238 = scalar_lea.vmem %s4, %s237
      %p239 = scmp.lt.s32.totalorder %s17, 1
      %s240 = scalar_select %p239, %s17, 1
      %s241 = scalar_lea.vmem %s5, %s240
      %v243 = vld [vmem:[%s230] sm:$0xf]
      %v244 = vld [vmem:[%s230 + $0x4] sm:$0xf]
      %v245 = vld [vmem:[%s230 + $0x8] sm:$0xf]
      %v246 = vld [vmem:[%s230 + $0xc] sm:$0xf]
      %v247 = vld [vmem:[%s230 + $0x10] sm:$0xf]
      %v248 = vld [vmem:[%s230 + $0x14] sm:$0xf]
      %v249 = vld [vmem:[%s230 + $0x18] sm:$0xf]
      %v250 = vld [vmem:[%s230 + $0x1c] sm:$0xf]
      %v251 = vld [vmem:[%s230 + $0x20] sm:$0xf]
      %v252 = vld [vmem:[%s230 + $0x24] sm:$0xf]
      %v253 = vld [vmem:[%s230 + $0x28] sm:$0xf]
      %v254 = vld [vmem:[%s230 + $0x2c] sm:$0xf]
      %v255 = vld [vmem:[%s230 + $0x30] sm:$0xf]
      %v256 = vld [vmem:[%s230 + $0x34] sm:$0xf]
      %v257 = vld [vmem:[%s230 + $0x38] sm:$0xf]
      %v258 = vld [vmem:[%s230 + $0x3c] sm:$0xf]
      %v259 = vld [vmem:[%s230 + $0x40] sm:$0xf]
      %v260 = vld [vmem:[%s230 + $0x44] sm:$0xf]
      %v261 = vld [vmem:[%s230 + $0x48] sm:$0xf]
      %v262 = vld [vmem:[%s230 + $0x4c] sm:$0xf]
      %v263 = vld [vmem:[%s230 + $0x50] sm:$0xf]
      %v264 = vld [vmem:[%s230 + $0x54] sm:$0xf]
      %v265 = vld [vmem:[%s230 + $0x58] sm:$0xf]
      %v266 = vld [vmem:[%s230 + $0x5c] sm:$0xf]
      %v267 = vld [vmem:[%s230 + $0x60] sm:$0xf]
      %v268 = vld [vmem:[%s230 + $0x64] sm:$0xf]
      %v269 = vld [vmem:[%s230 + $0x68] sm:$0xf]
      %v270 = vld [vmem:[%s230 + $0x6c] sm:$0xf]
      %v271 = vld [vmem:[%s230 + $0x70] sm:$0xf]
      %v272 = vld [vmem:[%s230 + $0x74] sm:$0xf]
      %v273 = vld [vmem:[%s230 + $0x78] sm:$0xf]
      %v274 = vld [vmem:[%s230 + $0x7c] sm:$0xf]
      %v275 = vld [vmem:[%s1] sm:$0xf]
      %v276 = vld [vmem:[%s1 + $0x4] sm:$0xf]
      %v277 = vld [vmem:[%s1 + $0x8] sm:$0xf]
      %v278 = vld [vmem:[%s1 + $0xc] sm:$0xf]
      %v279 = vld [vmem:[%s1 + $0x10] sm:$0xf]
      %v280 = vld [vmem:[%s1 + $0x14] sm:$0xf]
      %v281 = vld [vmem:[%s1 + $0x18] sm:$0xf]
      %v282 = vld [vmem:[%s1 + $0x1c] sm:$0xf]
      %v283 = vld [vmem:[%s1 + $0x20] sm:$0xf]
      %v284 = vld [vmem:[%s1 + $0x24] sm:$0xf]
      %s285 = scalar_lea.vmem %s230, 144
      %v286 = vld [vmem:[%s285] sm:$0xf]
      %v287 = vld [vmem:[%s285 + $0x4] sm:$0xf]
      %v288 = vld [vmem:[%s285 + $0x8] sm:$0xf]
      %v289 = vld [vmem:[%s285 + $0xc] sm:$0xf]
      %v290 = vld [vmem:[%s285 + $0x10] sm:$0xf]
      %v291 = vld [vmem:[%s285 + $0x14] sm:$0xf]
      %v292 = vld [vmem:[%s285 + $0x18] sm:$0xf]
      %v293 = vld [vmem:[%s285 + $0x1c] sm:$0xf]
      %v294 = vld [vmem:[%s285 + $0x20] sm:$0xf]
      %v295 = vld [vmem:[%s285 + $0x24] sm:$0xf]
      %v296 = vld [vmem:[%s285 + $0x28] sm:$0xf]
      %v297 = vld [vmem:[%s285 + $0x2c] sm:$0xf]
      %v298 = vld [vmem:[%s285 + $0x30] sm:$0xf]
      %v299 = vld [vmem:[%s285 + $0x34] sm:$0xf]
      %v300 = vld [vmem:[%s285 + $0x38] sm:$0xf]
      %v301 = vld [vmem:[%s285 + $0x3c] sm:$0xf]
      %v302 = vld [vmem:[%s285 + $0x40] sm:$0xf]
      %v303 = vld [vmem:[%s285 + $0x44] sm:$0xf]
      %v304 = vld [vmem:[%s285 + $0x48] sm:$0xf]
      %v305 = vld [vmem:[%s285 + $0x4c] sm:$0xf]
      %v306 = vld [vmem:[%s285 + $0x50] sm:$0xf]
      %v307 = vld [vmem:[%s285 + $0x54] sm:$0xf]
      %v308 = vld [vmem:[%s285 + $0x58] sm:$0xf]
      %v309 = vld [vmem:[%s285 + $0x5c] sm:$0xf]
      %v310 = vld [vmem:[%s285 + $0x60] sm:$0xf]
      %v311 = vld [vmem:[%s285 + $0x64] sm:$0xf]
      %v312 = vld [vmem:[%s285 + $0x68] sm:$0xf]
      %v313 = vld [vmem:[%s285 + $0x6c] sm:$0xf]
      %v314 = vld [vmem:[%s285 + $0x70] sm:$0xf]
      %v315 = vld [vmem:[%s285 + $0x74] sm:$0xf]
      %v316 = vld [vmem:[%s285 + $0x78] sm:$0xf]
      %v317 = vld [vmem:[%s285 + $0x7c] sm:$0xf]
      %s318 = scalar_lea.vmem %s1, 40
      %v319 = vld [vmem:[%s318] sm:$0xf]
      %v320 = vld [vmem:[%s318 + $0x4] sm:$0xf]
      %v321 = vld [vmem:[%s318 + $0x8] sm:$0xf]
      %v322 = vld [vmem:[%s318 + $0xc] sm:$0xf]
      %v323 = vld [vmem:[%s318 + $0x10] sm:$0xf]
      %v324 = vld [vmem:[%s318 + $0x14] sm:$0xf]
      %v325 = vld [vmem:[%s318 + $0x18] sm:$0xf]
      %v326 = vld [vmem:[%s318 + $0x1c] sm:$0xf]
      %v327 = vld [vmem:[%s318 + $0x20] sm:$0xf]
      %v328 = vld [vmem:[%s318 + $0x24] sm:$0xf]
      %v361 = vunpack.c.l.b16 %v286
      %v362 = vunpack.c.l.b16 %v287
      %v363 = vunpack.c.l.b16 %v288
      %v364 = vunpack.c.l.b16 %v289
      %v365 = vunpack.c.l.b16 %v290
      %v366 = vunpack.c.l.b16 %v291
      %v367 = vunpack.c.l.b16 %v292
      %v368 = vunpack.c.l.b16 %v293
      %v369 = vunpack.c.l.b16 %v294
      %v370 = vunpack.c.l.b16 %v295
      %v371 = vunpack.c.l.b16 %v296
      %v372 = vunpack.c.l.b16 %v297
      %v373 = vunpack.c.l.b16 %v298
      %v374 = vunpack.c.l.b16 %v299
      %v375 = vunpack.c.l.b16 %v300
      %v376 = vunpack.c.l.b16 %v301
      %v377 = vunpack.c.l.b16 %v302
      %v378 = vunpack.c.l.b16 %v303
      %v379 = vunpack.c.l.b16 %v304
      %v380 = vunpack.c.l.b16 %v305
      %v381 = vunpack.c.l.b16 %v306
      %v382 = vunpack.c.l.b16 %v307
      %v383 = vunpack.c.l.b16 %v308
      %v384 = vunpack.c.l.b16 %v309
      %v385 = vunpack.c.l.b16 %v310
      %v386 = vunpack.c.l.b16 %v311
      %v387 = vunpack.c.l.b16 %v312
      %v388 = vunpack.c.l.b16 %v313
      %v389 = vunpack.c.l.b16 %v314
      %v390 = vunpack.c.l.b16 %v315
      %v391 = vunpack.c.l.b16 %v316
      %v392 = vunpack.c.l.b16 %v317
      %v393 = vpack.c.b16 %v362, %v361
      %v394 = vpack.c.b16 %v364, %v363
      %v395 = vpack.c.b16 %v366, %v365
      %v396 = vpack.c.b16 %v368, %v367
      %v397 = vpack.c.b16 %v370, %v369
      %v398 = vpack.c.b16 %v372, %v371
      %v399 = vpack.c.b16 %v374, %v373
      %v400 = vpack.c.b16 %v376, %v375
      %v401 = vpack.c.b16 %v378, %v377
      %v402 = vpack.c.b16 %v380, %v379
      %v403 = vpack.c.b16 %v382, %v381
      %v404 = vpack.c.b16 %v384, %v383
      %v405 = vpack.c.b16 %v386, %v385
      %v406 = vpack.c.b16 %v388, %v387
      %v407 = vpack.c.b16 %v390, %v389
      %v408 = vpack.c.b16 %v392, %v391
      %v419 = vunpack.c.l.b16 %v319
      %v420 = vunpack.c.l.b16 %v320
      %v421 = vunpack.c.l.b16 %v321
      %v422 = vunpack.c.l.b16 %v322
      %v423 = vunpack.c.l.b16 %v323
      %v424 = vunpack.c.l.b16 %v324
      %v425 = vunpack.c.l.b16 %v325
      %v426 = vunpack.c.l.b16 %v326
      %v427 = vunpack.c.l.b16 %v327
      %v428 = vunpack.c.l.b16 %v328
      %v429 = vpack.c.b16 %v420, %v419
      %v430 = vpack.c.b16 %v422, %v421
      %v431 = vpack.c.b16 %v424, %v423
      %v432 = vpack.c.b16 %v426, %v425
      %v433 = vpack.c.b16 %v428, %v427
      %vm439 = vcmask 654336
      %v441 = vsel %vm439, %v393, 0
      %v444 = vsel %vm439, %v394, 0
      %v447 = vsel %vm439, %v395, 0
      %v450 = vsel %vm439, %v396, 0
      %v453 = vsel %vm439, %v397, 0
      %v456 = vsel %vm439, %v398, 0
      %v459 = vsel %vm439, %v399, 0
      %v462 = vsel %vm439, %v400, 0
      %v465 = vsel %vm439, %v401, 0
      %v468 = vsel %vm439, %v402, 0
      %v471 = vsel %vm439, %v403, 0
      %v474 = vsel %vm439, %v404, 0
      %v477 = vsel %vm439, %v405, 0
      %v480 = vsel %vm439, %v406, 0
      %v483 = vsel %vm439, %v407, 0
      %v486 = vsel %vm439, %v408, 0
      %488 = vmatpush.bf16.msra.mxu0 0
      %489 = vmatpush.bf16.msra.mxu0 0
      %490 = vmatpush.bf16.msra.mxu0 0
      %491 = vmatpush.bf16.msra.mxu0 %v433
      %492 = vmatpush.bf16.msra.mxu0 %v432
      %493 = vmatpush.bf16.msra.mxu0 %v431
      %494 = vmatpush.bf16.msra.mxu0 %v430
      %495 = vmatpush.bf16.msra.mxu0 %v429
      %496 = vmatmul.bf16.gmra.mxu0 %v441
      %v497 = vpop.f32.mrf.mxu0
      %v498 = vadd.f32 0.0, %v497
      %v499 = vpop.f32.mrf.mxu0
      %v500 = vadd.f32 0.0, %v499
      %501 = vmatmul.bf16.gmra.mxu0 %v444
      %v502 = vpop.f32.mrf.mxu0
      %v503 = vadd.f32 0.0, %v502
      %v504 = vpop.f32.mrf.mxu0
      %v505 = vadd.f32 0.0, %v504
      %506 = vmatmul.bf16.gmra.mxu0 %v447
      %v507 = vpop.f32.mrf.mxu0
      %v508 = vadd.f32 0.0, %v507
      %v509 = vpop.f32.mrf.mxu0
      %v510 = vadd.f32 0.0, %v509
      %511 = vmatmul.bf16.gmra.mxu0 %v450
      %v512 = vpop.f32.mrf.mxu0
      %v513 = vadd.f32 0.0, %v512
      %v514 = vpop.f32.mrf.mxu0
      %v515 = vadd.f32 0.0, %v514
      %516 = vmatmul.bf16.gmra.mxu0 %v453
      %v517 = vpop.f32.mrf.mxu0
      %v518 = vadd.f32 0.0, %v517
      %v519 = vpop.f32.mrf.mxu0
      %v520 = vadd.f32 0.0, %v519
      %521 = vmatmul.bf16.gmra.mxu0 %v456
      %v522 = vpop.f32.mrf.mxu0
      %v523 = vadd.f32 0.0, %v522
      %v524 = vpop.f32.mrf.mxu0
      %v525 = vadd.f32 0.0, %v524
      %526 = vmatmul.bf16.gmra.mxu0 %v459
      %v527 = vpop.f32.mrf.mxu0
      %v528 = vadd.f32 0.0, %v527
      %v529 = vpop.f32.mrf.mxu0
      %v530 = vadd.f32 0.0, %v529
      %531 = vmatmul.bf16.gmra.mxu0 %v462
      %v532 = vpop.f32.mrf.mxu0
      %v533 = vadd.f32 0.0, %v532
      %v534 = vpop.f32.mrf.mxu0
      %v535 = vadd.f32 0.0, %v534
      %536 = vmatmul.bf16.gmra.mxu0 %v465
      %v537 = vpop.f32.mrf.mxu0
      %v538 = vadd.f32 0.0, %v537
      %v539 = vpop.f32.mrf.mxu0
      %v540 = vadd.f32 0.0, %v539
      %541 = vmatmul.bf16.gmra.mxu0 %v468
      %v542 = vpop.f32.mrf.mxu0
      %v543 = vadd.f32 0.0, %v542
      %v544 = vpop.f32.mrf.mxu0
      %v545 = vadd.f32 0.0, %v544
      %546 = vmatmul.bf16.gmra.mxu0 %v471
      %v547 = vpop.f32.mrf.mxu0
      %v548 = vadd.f32 0.0, %v547
      %v549 = vpop.f32.mrf.mxu0
      %v550 = vadd.f32 0.0, %v549
      %551 = vmatmul.bf16.gmra.mxu0 %v474
      %v552 = vpop.f32.mrf.mxu0
      %v553 = vadd.f32 0.0, %v552
      %v554 = vpop.f32.mrf.mxu0
      %v555 = vadd.f32 0.0, %v554
      %556 = vmatmul.bf16.gmra.mxu0 %v477
      %v557 = vpop.f32.mrf.mxu0
      %v558 = vadd.f32 0.0, %v557
      %v559 = vpop.f32.mrf.mxu0
      %v560 = vadd.f32 0.0, %v559
      %561 = vmatmul.bf16.gmra.mxu0 %v480
      %v562 = vpop.f32.mrf.mxu0
      %v563 = vadd.f32 0.0, %v562
      %v564 = vpop.f32.mrf.mxu0
      %v565 = vadd.f32 0.0, %v564
      %566 = vmatmul.bf16.gmra.mxu0 %v483
      %v567 = vpop.f32.mrf.mxu0
      %v568 = vadd.f32 0.0, %v567
      %v569 = vpop.f32.mrf.mxu0
      %v570 = vadd.f32 0.0, %v569
      %571 = vmatmul.bf16.gmra.mxu0 %v486
      %v572 = vpop.f32.mrf.mxu0
      %v573 = vadd.f32 0.0, %v572
      %v574 = vpop.f32.mrf.mxu0
      %v575 = vadd.f32 0.0, %v574
      %576 = vdwg.mxu0
      %v609 = vunpack.c.l.b16 %v243
      %v610 = vunpack.c.l.b16 %v244
      %v611 = vunpack.c.l.b16 %v245
      %v612 = vunpack.c.l.b16 %v246
      %v613 = vunpack.c.l.b16 %v247
      %v614 = vunpack.c.l.b16 %v248
      %v615 = vunpack.c.l.b16 %v249
      %v616 = vunpack.c.l.b16 %v250
      %v617 = vunpack.c.l.b16 %v251
      %v618 = vunpack.c.l.b16 %v252
      %v619 = vunpack.c.l.b16 %v253
      %v620 = vunpack.c.l.b16 %v254
      %v621 = vunpack.c.l.b16 %v255
      %v622 = vunpack.c.l.b16 %v256
      %v623 = vunpack.c.l.b16 %v257
      %v624 = vunpack.c.l.b16 %v258
      %v625 = vunpack.c.l.b16 %v259
      %v626 = vunpack.c.l.b16 %v260
      %v627 = vunpack.c.l.b16 %v261
      %v628 = vunpack.c.l.b16 %v262
      %v629 = vunpack.c.l.b16 %v263
      %v630 = vunpack.c.l.b16 %v264
      %v631 = vunpack.c.l.b16 %v265
      %v632 = vunpack.c.l.b16 %v266
      %v633 = vunpack.c.l.b16 %v267
      %v634 = vunpack.c.l.b16 %v268
      %v635 = vunpack.c.l.b16 %v269
      %v636 = vunpack.c.l.b16 %v270
      %v637 = vunpack.c.l.b16 %v271
      %v638 = vunpack.c.l.b16 %v272
      %v639 = vunpack.c.l.b16 %v273
      %v640 = vunpack.c.l.b16 %v274
      %v641 = vpack.c.b16 %v610, %v609
      %v642 = vpack.c.b16 %v612, %v611
      %v643 = vpack.c.b16 %v614, %v613
      %v644 = vpack.c.b16 %v616, %v615
      %v645 = vpack.c.b16 %v618, %v617
      %v646 = vpack.c.b16 %v620, %v619
      %v647 = vpack.c.b16 %v622, %v621
      %v648 = vpack.c.b16 %v624, %v623
      %v649 = vpack.c.b16 %v626, %v625
      %v650 = vpack.c.b16 %v628, %v627
      %v651 = vpack.c.b16 %v630, %v629
      %v652 = vpack.c.b16 %v632, %v631
      %v653 = vpack.c.b16 %v634, %v633
      %v654 = vpack.c.b16 %v636, %v635
      %v655 = vpack.c.b16 %v638, %v637
      %v656 = vpack.c.b16 %v640, %v639
      %v667 = vunpack.c.l.b16 %v275
      %v668 = vunpack.c.l.b16 %v276
      %v669 = vunpack.c.l.b16 %v277
      %v670 = vunpack.c.l.b16 %v278
      %v671 = vunpack.c.l.b16 %v279
      %v672 = vunpack.c.l.b16 %v280
      %v673 = vunpack.c.l.b16 %v281
      %v674 = vunpack.c.l.b16 %v282
      %v675 = vunpack.c.l.b16 %v283
      %v676 = vunpack.c.l.b16 %v284
      %v677 = vpack.c.b16 %v668, %v667
      %v678 = vpack.c.b16 %v670, %v669
      %v679 = vpack.c.b16 %v672, %v671
      %v680 = vpack.c.b16 %v674, %v673
      %v681 = vpack.c.b16 %v676, %v675
      %v688 = vsel %vm439, %v641, 0
      %v691 = vsel %vm439, %v642, 0
      %v694 = vsel %vm439, %v643, 0
      %v697 = vsel %vm439, %v644, 0
      %v700 = vsel %vm439, %v645, 0
      %v703 = vsel %vm439, %v646, 0
      %v706 = vsel %vm439, %v647, 0
      %v709 = vsel %vm439, %v648, 0
      %v712 = vsel %vm439, %v649, 0
      %v715 = vsel %vm439, %v650, 0
      %v718 = vsel %vm439, %v651, 0
      %v721 = vsel %vm439, %v652, 0
      %v724 = vsel %vm439, %v653, 0
      %v727 = vsel %vm439, %v654, 0
      %v730 = vsel %vm439, %v655, 0
      %v733 = vsel %vm439, %v656, 0
      %735 = vmatpush.bf16.msra.mxu0 0
      %736 = vmatpush.bf16.msra.mxu0 0
      %737 = vmatpush.bf16.msra.mxu0 0
      %738 = vmatpush.bf16.msra.mxu0 %v681
      %739 = vmatpush.bf16.msra.mxu0 %v680
      %740 = vmatpush.bf16.msra.mxu0 %v679
      %741 = vmatpush.bf16.msra.mxu0 %v678
      %742 = vmatpush.bf16.msra.mxu0 %v677
      %743 = vmatmul.bf16.gmra.mxu0 %v688
      %v744 = vpop.f32.mrf.mxu0
      %v745 = vadd.f32 %v498, %v744
      %v746 = vpop.f32.mrf.mxu0
      %v747 = vadd.f32 %v500, %v746
      %748 = vmatmul.bf16.gmra.mxu0 %v691
      %v749 = vpop.f32.mrf.mxu0
      %v750 = vadd.f32 %v503, %v749
      %v751 = vpop.f32.mrf.mxu0
      %v752 = vadd.f32 %v505, %v751
      %753 = vmatmul.bf16.gmra.mxu0 %v694
      %v754 = vpop.f32.mrf.mxu0
      %v755 = vadd.f32 %v508, %v754
      %v756 = vpop.f32.mrf.mxu0
      %v757 = vadd.f32 %v510, %v756
      %758 = vmatmul.bf16.gmra.mxu0 %v697
      %v759 = vpop.f32.mrf.mxu0
      %v760 = vadd.f32 %v513, %v759
      %v761 = vpop.f32.mrf.mxu0
      %v762 = vadd.f32 %v515, %v761
      %763 = vmatmul.bf16.gmra.mxu0 %v700
      %v764 = vpop.f32.mrf.mxu0
      %v765 = vadd.f32 %v518, %v764
      %v766 = vpop.f32.mrf.mxu0
      %v767 = vadd.f32 %v520, %v766
      %768 = vmatmul.bf16.gmra.mxu0 %v703
      %v769 = vpop.f32.mrf.mxu0
      %v770 = vadd.f32 %v523, %v769
      %v771 = vpop.f32.mrf.mxu0
      %v772 = vadd.f32 %v525, %v771
      %773 = vmatmul.bf16.gmra.mxu0 %v706
      %v774 = vpop.f32.mrf.mxu0
      %v775 = vadd.f32 %v528, %v774
      %v776 = vpop.f32.mrf.mxu0
      %v777 = vadd.f32 %v530, %v776
      %778 = vmatmul.bf16.gmra.mxu0 %v709
      %v779 = vpop.f32.mrf.mxu0
      %v780 = vadd.f32 %v533, %v779
      %v781 = vpop.f32.mrf.mxu0
      %v782 = vadd.f32 %v535, %v781
      %783 = vmatmul.bf16.gmra.mxu0 %v712
      %v784 = vpop.f32.mrf.mxu0
      %v785 = vadd.f32 %v538, %v784
      %v786 = vpop.f32.mrf.mxu0
      %v787 = vadd.f32 %v540, %v786
      %788 = vmatmul.bf16.gmra.mxu0 %v715
      %v789 = vpop.f32.mrf.mxu0
      %v790 = vadd.f32 %v543, %v789
      %v791 = vpop.f32.mrf.mxu0
      %v792 = vadd.f32 %v545, %v791
      %793 = vmatmul.bf16.gmra.mxu0 %v718
      %v794 = vpop.f32.mrf.mxu0
      %v795 = vadd.f32 %v548, %v794
      %v796 = vpop.f32.mrf.mxu0
      %v797 = vadd.f32 %v550, %v796
      %798 = vmatmul.bf16.gmra.mxu0 %v721
      %v799 = vpop.f32.mrf.mxu0
      %v800 = vadd.f32 %v553, %v799
      %v801 = vpop.f32.mrf.mxu0
      %v802 = vadd.f32 %v555, %v801
      %803 = vmatmul.bf16.gmra.mxu0 %v724
      %v804 = vpop.f32.mrf.mxu0
      %v805 = vadd.f32 %v558, %v804
      %v806 = vpop.f32.mrf.mxu0
      %v807 = vadd.f32 %v560, %v806
      %808 = vmatmul.bf16.gmra.mxu0 %v727
      %v809 = vpop.f32.mrf.mxu0
      %v810 = vadd.f32 %v563, %v809
      %v811 = vpop.f32.mrf.mxu0
      %v812 = vadd.f32 %v565, %v811
      %813 = vmatmul.bf16.gmra.mxu0 %v730
      %v814 = vpop.f32.mrf.mxu0
      %v815 = vadd.f32 %v568, %v814
      %v816 = vpop.f32.mrf.mxu0
      %v817 = vadd.f32 %v570, %v816
      %818 = vmatmul.bf16.gmra.mxu0 %v733
      %v819 = vpop.f32.mrf.mxu0
      %v820 = vadd.f32 %v573, %v819
      %v821 = vpop.f32.mrf.mxu0
      %v822 = vadd.f32 %v575, %v821
      %823 = vdwg.mxu0
      %v824 = vld [vmem:[%s230 + $0x8] sm:$0xf]
      %v825 = vld [vmem:[%s230 + $0xc] sm:$0xf]
      %v826 = vld [vmem:[%s230 + $0x10] sm:$0xf]
      %v827 = vld [vmem:[%s230 + $0x14] sm:$0xf]
      %v828 = vld [vmem:[%s230 + $0x18] sm:$0xf]
      %v829 = vld [vmem:[%s230 + $0x1c] sm:$0xf]
      %v830 = vld [vmem:[%s230 + $0x20] sm:$0xf]
      %v831 = vld [vmem:[%s230 + $0x24] sm:$0xf]
      %v832 = vld [vmem:[%s230 + $0x28] sm:$0xf]
      %v833 = vld [vmem:[%s230 + $0x2c] sm:$0xf]
      %v834 = vld [vmem:[%s230 + $0x30] sm:$0xf]
      %v835 = vld [vmem:[%s230 + $0x34] sm:$0xf]
      %v836 = vld [vmem:[%s230 + $0x38] sm:$0xf]
      %v837 = vld [vmem:[%s230 + $0x3c] sm:$0xf]
      %v838 = vld [vmem:[%s230 + $0x40] sm:$0xf]
      %v839 = vld [vmem:[%s230 + $0x44] sm:$0xf]
      %v840 = vld [vmem:[%s230 + $0x48] sm:$0xf]
      %v841 = vld [vmem:[%s230 + $0x4c] sm:$0xf]
      %v842 = vld [vmem:[%s230 + $0x50] sm:$0xf]
      %v843 = vld [vmem:[%s230 + $0x54] sm:$0xf]
      %v844 = vld [vmem:[%s230 + $0x58] sm:$0xf]
      %v845 = vld [vmem:[%s230 + $0x5c] sm:$0xf]
      %v846 = vld [vmem:[%s230 + $0x60] sm:$0xf]
      %v847 = vld [vmem:[%s230 + $0x64] sm:$0xf]
      %v848 = vld [vmem:[%s230 + $0x68] sm:$0xf]
      %v849 = vld [vmem:[%s230 + $0x6c] sm:$0xf]
      %v850 = vld [vmem:[%s230 + $0x70] sm:$0xf]
      %v851 = vld [vmem:[%s230 + $0x74] sm:$0xf]
      %v852 = vld [vmem:[%s230 + $0x78] sm:$0xf]
      %v853 = vld [vmem:[%s230 + $0x7c] sm:$0xf]
      %v854 = vld [vmem:[%s230 + $0x80] sm:$0xf]
      %v855 = vld [vmem:[%s230 + $0x84] sm:$0xf]
      %s856 = scalar_lea.vmem %s1, 80
      %v857 = vld [vmem:[%s856] sm:$0xf]
      %v858 = vld [vmem:[%s856 + $0x4] sm:$0xf]
      %v859 = vld [vmem:[%s856 + $0x8] sm:$0xf]
      %v860 = vld [vmem:[%s856 + $0xc] sm:$0xf]
      %v861 = vld [vmem:[%s856 + $0x10] sm:$0xf]
      %v862 = vld [vmem:[%s856 + $0x14] sm:$0xf]
      %v863 = vld [vmem:[%s856 + $0x18] sm:$0xf]
      %v864 = vld [vmem:[%s856 + $0x1c] sm:$0xf]
      %v865 = vld [vmem:[%s856 + $0x20] sm:$0xf]
      %v866 = vld [vmem:[%s856 + $0x24] sm:$0xf]
      %v899 = vunpack.c.l.b16 %v824
      %v900 = vunpack.c.l.b16 %v825
      %v901 = vunpack.c.l.b16 %v826
      %v902 = vunpack.c.l.b16 %v827
      %v903 = vunpack.c.l.b16 %v828
      %v904 = vunpack.c.l.b16 %v829
      %v905 = vunpack.c.l.b16 %v830
      %v906 = vunpack.c.l.b16 %v831
      %v907 = vunpack.c.l.b16 %v832
      %v908 = vunpack.c.l.b16 %v833
      %v909 = vunpack.c.l.b16 %v834
      %v910 = vunpack.c.l.b16 %v835
      %v911 = vunpack.c.l.b16 %v836
      %v912 = vunpack.c.l.b16 %v837
      %v913 = vunpack.c.l.b16 %v838
      %v914 = vunpack.c.l.b16 %v839
      %v915 = vunpack.c.l.b16 %v840
      %v916 = vunpack.c.l.b16 %v841
      %v917 = vunpack.c.l.b16 %v842
      %v918 = vunpack.c.l.b16 %v843
      %v919 = vunpack.c.l.b16 %v844
      %v920 = vunpack.c.l.b16 %v845
      %v921 = vunpack.c.l.b16 %v846
      %v922 = vunpack.c.l.b16 %v847
      %v923 = vunpack.c.l.b16 %v848
      %v924 = vunpack.c.l.b16 %v849
      %v925 = vunpack.c.l.b16 %v850
      %v926 = vunpack.c.l.b16 %v851
      %v927 = vunpack.c.l.b16 %v852
      %v928 = vunpack.c.l.b16 %v853
      %v929 = vunpack.c.l.b16 %v854
      %v930 = vunpack.c.l.b16 %v855
      %v931 = vpack.c.b16 %v900, %v899
      %v932 = vpack.c.b16 %v902, %v901
      %v933 = vpack.c.b16 %v904, %v903
      %v934 = vpack.c.b16 %v906, %v905
      %v935 = vpack.c.b16 %v908, %v907
      %v936 = vpack.c.b16 %v910, %v909
      %v937 = vpack.c.b16 %v912, %v911
      %v938 = vpack.c.b16 %v914, %v913
      %v939 = vpack.c.b16 %v916, %v915
      %v940 = vpack.c.b16 %v918, %v917
      %v941 = vpack.c.b16 %v920, %v919
      %v942 = vpack.c.b16 %v922, %v921
      %v943 = vpack.c.b16 %v924, %v923
      %v944 = vpack.c.b16 %v926, %v925
      %v945 = vpack.c.b16 %v928, %v927
      %v946 = vpack.c.b16 %v930, %v929
      %v957 = vunpack.c.l.b16 %v857
      %v958 = vunpack.c.l.b16 %v858
      %v959 = vunpack.c.l.b16 %v859
      %v960 = vunpack.c.l.b16 %v860
      %v961 = vunpack.c.l.b16 %v861
      %v962 = vunpack.c.l.b16 %v862
      %v963 = vunpack.c.l.b16 %v863
      %v964 = vunpack.c.l.b16 %v864
      %v965 = vunpack.c.l.b16 %v865
      %v966 = vunpack.c.l.b16 %v866
      %v967 = vpack.c.b16 %v958, %v957
      %v968 = vpack.c.b16 %v960, %v959
      %v969 = vpack.c.b16 %v962, %v961
      %v970 = vpack.c.b16 %v964, %v963
      %v971 = vpack.c.b16 %v966, %v965
      %v978 = vsel %vm439, %v931, 0
      %v981 = vsel %vm439, %v932, 0
      %v984 = vsel %vm439, %v933, 0
      %v987 = vsel %vm439, %v934, 0
      %v990 = vsel %vm439, %v935, 0
      %v993 = vsel %vm439, %v936, 0
      %v996 = vsel %vm439, %v937, 0
      %v999 = vsel %vm439, %v938, 0
      %v1002 = vsel %vm439, %v939, 0
      %v1005 = vsel %vm439, %v940, 0
      %v1008 = vsel %vm439, %v941, 0
      %v1011 = vsel %vm439, %v942, 0
      %v1014 = vsel %vm439, %v943, 0
      %v1017 = vsel %vm439, %v944, 0
      %v1020 = vsel %vm439, %v945, 0
      %v1023 = vsel %vm439, %v946, 0
      %1025 = vmatpush.bf16.msra.mxu0 0
      %1026 = vmatpush.bf16.msra.mxu0 0
      %1027 = vmatpush.bf16.msra.mxu0 0
      %1028 = vmatpush.bf16.msra.mxu0 %v971
      %1029 = vmatpush.bf16.msra.mxu0 %v970
      %1030 = vmatpush.bf16.msra.mxu0 %v969
      %1031 = vmatpush.bf16.msra.mxu0 %v968
      %1032 = vmatpush.bf16.msra.mxu0 %v967
      %1033 = vmatmul.bf16.gmra.mxu0 %v978
      %v1034 = vpop.f32.mrf.mxu0
      %v1035 = vadd.f32 0.0, %v1034
      %v1036 = vpop.f32.mrf.mxu0
      %v1037 = vadd.f32 0.0, %v1036
      %1038 = vmatmul.bf16.gmra.mxu0 %v981
      %v1039 = vpop.f32.mrf.mxu0
      %v1040 = vadd.f32 0.0, %v1039
      %v1041 = vpop.f32.mrf.mxu0
      %v1042 = vadd.f32 0.0, %v1041
      %1043 = vmatmul.bf16.gmra.mxu0 %v984
      %v1044 = vpop.f32.mrf.mxu0
      %v1045 = vadd.f32 0.0, %v1044
      %v1046 = vpop.f32.mrf.mxu0
      %v1047 = vadd.f32 0.0, %v1046
      %1048 = vmatmul.bf16.gmra.mxu0 %v987
      %v1049 = vpop.f32.mrf.mxu0
      %v1050 = vadd.f32 0.0, %v1049
      %v1051 = vpop.f32.mrf.mxu0
      %v1052 = vadd.f32 0.0, %v1051
      %1053 = vmatmul.bf16.gmra.mxu0 %v990
      %v1054 = vpop.f32.mrf.mxu0
      %v1055 = vadd.f32 0.0, %v1054
      %v1056 = vpop.f32.mrf.mxu0
      %v1057 = vadd.f32 0.0, %v1056
      %1058 = vmatmul.bf16.gmra.mxu0 %v993
      %v1059 = vpop.f32.mrf.mxu0
      %v1060 = vadd.f32 0.0, %v1059
      %v1061 = vpop.f32.mrf.mxu0
      %v1062 = vadd.f32 0.0, %v1061
      %1063 = vmatmul.bf16.gmra.mxu0 %v996
      %v1064 = vpop.f32.mrf.mxu0
      %v1065 = vadd.f32 0.0, %v1064
      %v1066 = vpop.f32.mrf.mxu0
      %v1067 = vadd.f32 0.0, %v1066
      %1068 = vmatmul.bf16.gmra.mxu0 %v999
      %v1069 = vpop.f32.mrf.mxu0
      %v1070 = vadd.f32 0.0, %v1069
      %v1071 = vpop.f32.mrf.mxu0
      %v1072 = vadd.f32 0.0, %v1071
      %1073 = vmatmul.bf16.gmra.mxu0 %v1002
      %v1074 = vpop.f32.mrf.mxu0
      %v1075 = vadd.f32 0.0, %v1074
      %v1076 = vpop.f32.mrf.mxu0
      %v1077 = vadd.f32 0.0, %v1076
      %1078 = vmatmul.bf16.gmra.mxu0 %v1005
      %v1079 = vpop.f32.mrf.mxu0
      %v1080 = vadd.f32 0.0, %v1079
      %v1081 = vpop.f32.mrf.mxu0
      %v1082 = vadd.f32 0.0, %v1081
      %1083 = vmatmul.bf16.gmra.mxu0 %v1008
      %v1084 = vpop.f32.mrf.mxu0
      %v1085 = vadd.f32 0.0, %v1084
      %v1086 = vpop.f32.mrf.mxu0
      %v1087 = vadd.f32 0.0, %v1086
      %1088 = vmatmul.bf16.gmra.mxu0 %v1011
      %v1089 = vpop.f32.mrf.mxu0
      %v1090 = vadd.f32 0.0, %v1089
      %v1091 = vpop.f32.mrf.mxu0
      %v1092 = vadd.f32 0.0, %v1091
      %1093 = vmatmul.bf16.gmra.mxu0 %v1014
      %v1094 = vpop.f32.mrf.mxu0
      %v1095 = vadd.f32 0.0, %v1094
      %v1096 = vpop.f32.mrf.mxu0
      %v1097 = vadd.f32 0.0, %v1096
      %1098 = vmatmul.bf16.gmra.mxu0 %v1017
      %v1099 = vpop.f32.mrf.mxu0
      %v1100 = vadd.f32 0.0, %v1099
      %v1101 = vpop.f32.mrf.mxu0
      %v1102 = vadd.f32 0.0, %v1101
      %1103 = vmatmul.bf16.gmra.mxu0 %v1020
      %v1104 = vpop.f32.mrf.mxu0
      %v1105 = vadd.f32 0.0, %v1104
      %v1106 = vpop.f32.mrf.mxu0
      %v1107 = vadd.f32 0.0, %v1106
      %1108 = vmatmul.bf16.gmra.mxu0 %v1023
      %v1109 = vpop.f32.mrf.mxu0
      %v1110 = vadd.f32 0.0, %v1109
      %v1111 = vpop.f32.mrf.mxu0
      %v1112 = vadd.f32 0.0, %v1111
      %1113 = vdwg.mxu0
      %v1114 = vadd.f32 %v745, %v1035
      %v1115 = vadd.f32 %v747, %v1037
      %v1116 = vadd.f32 %v750, %v1040
      %v1117 = vadd.f32 %v752, %v1042
      %v1118 = vadd.f32 %v755, %v1045
      %v1119 = vadd.f32 %v757, %v1047
      %v1120 = vadd.f32 %v760, %v1050
      %v1121 = vadd.f32 %v762, %v1052
      %v1122 = vadd.f32 %v765, %v1055
      %v1123 = vadd.f32 %v767, %v1057
      %v1124 = vadd.f32 %v770, %v1060
      %v1125 = vadd.f32 %v772, %v1062
      %v1126 = vadd.f32 %v775, %v1065
      %v1127 = vadd.f32 %v777, %v1067
      %v1128 = vadd.f32 %v780, %v1070
      %v1129 = vadd.f32 %v782, %v1072
      %v1130 = vadd.f32 %v785, %v1075
      %v1131 = vadd.f32 %v787, %v1077
      %v1132 = vadd.f32 %v790, %v1080
      %v1133 = vadd.f32 %v792, %v1082
      %v1134 = vadd.f32 %v795, %v1085
      %v1135 = vadd.f32 %v797, %v1087
      %v1136 = vadd.f32 %v800, %v1090
      %v1137 = vadd.f32 %v802, %v1092
      %v1138 = vadd.f32 %v805, %v1095
      %v1139 = vadd.f32 %v807, %v1097
      %v1140 = vadd.f32 %v810, %v1100
      %v1141 = vadd.f32 %v812, %v1102
      %v1142 = vadd.f32 %v815, %v1105
      %v1143 = vadd.f32 %v817, %v1107
      %v1144 = vadd.f32 %v820, %v1110
      %v1145 = vadd.f32 %v822, %v1112
      %v1146 = vld [vmem:[%s285 + $0x8] sm:$0xf]
      %v1147 = vld [vmem:[%s285 + $0xc] sm:$0xf]
      %v1148 = vld [vmem:[%s285 + $0x10] sm:$0xf]
      %v1149 = vld [vmem:[%s285 + $0x14] sm:$0xf]
      %v1150 = vld [vmem:[%s285 + $0x18] sm:$0xf]
      %v1151 = vld [vmem:[%s285 + $0x1c] sm:$0xf]
      %v1152 = vld [vmem:[%s285 + $0x20] sm:$0xf]
      %v1153 = vld [vmem:[%s285 + $0x24] sm:$0xf]
      %v1154 = vld [vmem:[%s285 + $0x28] sm:$0xf]
      %v1155 = vld [vmem:[%s285 + $0x2c] sm:$0xf]
      %v1156 = vld [vmem:[%s285 + $0x30] sm:$0xf]
      %v1157 = vld [vmem:[%s285 + $0x34] sm:$0xf]
      %v1158 = vld [vmem:[%s285 + $0x38] sm:$0xf]
      %v1159 = vld [vmem:[%s285 + $0x3c] sm:$0xf]
      %v1160 = vld [vmem:[%s285 + $0x40] sm:$0xf]
      %v1161 = vld [vmem:[%s285 + $0x44] sm:$0xf]
      %v1162 = vld [vmem:[%s285 + $0x48] sm:$0xf]
      %v1163 = vld [vmem:[%s285 + $0x4c] sm:$0xf]
      %v1164 = vld [vmem:[%s285 + $0x50] sm:$0xf]
      %v1165 = vld [vmem:[%s285 + $0x54] sm:$0xf]
      %v1166 = vld [vmem:[%s285 + $0x58] sm:$0xf]
      %v1167 = vld [vmem:[%s285 + $0x5c] sm:$0xf]
      %v1168 = vld [vmem:[%s285 + $0x60] sm:$0xf]
      %v1169 = vld [vmem:[%s285 + $0x64] sm:$0xf]
      %v1170 = vld [vmem:[%s285 + $0x68] sm:$0xf]
      %v1171 = vld [vmem:[%s285 + $0x6c] sm:$0xf]
      %v1172 = vld [vmem:[%s285 + $0x70] sm:$0xf]
      %v1173 = vld [vmem:[%s285 + $0x74] sm:$0xf]
      %v1174 = vld [vmem:[%s285 + $0x78] sm:$0xf]
      %v1175 = vld [vmem:[%s285 + $0x7c] sm:$0xf]
      %v1176 = vld [vmem:[%s285 + $0x80] sm:$0xf]
      %v1177 = vld [vmem:[%s285 + $0x84] sm:$0xf]
      %s1178 = scalar_lea.vmem %s1, 120
      %v1179 = vld [vmem:[%s1178] sm:$0xf]
      %v1180 = vld [vmem:[%s1178 + $0x4] sm:$0xf]
      %v1181 = vld [vmem:[%s1178 + $0x8] sm:$0xf]
      %v1182 = vld [vmem:[%s1178 + $0xc] sm:$0xf]
      %v1183 = vld [vmem:[%s1178 + $0x10] sm:$0xf]
      %v1184 = vld [vmem:[%s1178 + $0x14] sm:$0xf]
      %v1185 = vld [vmem:[%s1178 + $0x18] sm:$0xf]
      %v1186 = vld [vmem:[%s1178 + $0x1c] sm:$0xf]
      %v1187 = vld [vmem:[%s1178 + $0x20] sm:$0xf]
      %v1188 = vld [vmem:[%s1178 + $0x24] sm:$0xf]
      %v1221 = vunpack.c.l.b16 %v1146
      %v1222 = vunpack.c.l.b16 %v1147
      %v1223 = vunpack.c.l.b16 %v1148
      %v1224 = vunpack.c.l.b16 %v1149
      %v1225 = vunpack.c.l.b16 %v1150
      %v1226 = vunpack.c.l.b16 %v1151
      %v1227 = vunpack.c.l.b16 %v1152
      %v1228 = vunpack.c.l.b16 %v1153
      %v1229 = vunpack.c.l.b16 %v1154
      %v1230 = vunpack.c.l.b16 %v1155
      %v1231 = vunpack.c.l.b16 %v1156
      %v1232 = vunpack.c.l.b16 %v1157
      %v1233 = vunpack.c.l.b16 %v1158
      %v1234 = vunpack.c.l.b16 %v1159
      %v1235 = vunpack.c.l.b16 %v1160
      %v1236 = vunpack.c.l.b16 %v1161
      %v1237 = vunpack.c.l.b16 %v1162
      %v1238 = vunpack.c.l.b16 %v1163
      %v1239 = vunpack.c.l.b16 %v1164
      %v1240 = vunpack.c.l.b16 %v1165
      %v1241 = vunpack.c.l.b16 %v1166
      %v1242 = vunpack.c.l.b16 %v1167
      %v1243 = vunpack.c.l.b16 %v1168
      %v1244 = vunpack.c.l.b16 %v1169
      %v1245 = vunpack.c.l.b16 %v1170
      %v1246 = vunpack.c.l.b16 %v1171
      %v1247 = vunpack.c.l.b16 %v1172
      %v1248 = vunpack.c.l.b16 %v1173
      %v1249 = vunpack.c.l.b16 %v1174
      %v1250 = vunpack.c.l.b16 %v1175
      %v1251 = vunpack.c.l.b16 %v1176
      %v1252 = vunpack.c.l.b16 %v1177
      %v1253 = vpack.c.b16 %v1222, %v1221
      %v1254 = vpack.c.b16 %v1224, %v1223
      %v1255 = vpack.c.b16 %v1226, %v1225
      %v1256 = vpack.c.b16 %v1228, %v1227
      %v1257 = vpack.c.b16 %v1230, %v1229
      %v1258 = vpack.c.b16 %v1232, %v1231
      %v1259 = vpack.c.b16 %v1234, %v1233
      %v1260 = vpack.c.b16 %v1236, %v1235
      %v1261 = vpack.c.b16 %v1238, %v1237
      %v1262 = vpack.c.b16 %v1240, %v1239
      %v1263 = vpack.c.b16 %v1242, %v1241
      %v1264 = vpack.c.b16 %v1244, %v1243
      %v1265 = vpack.c.b16 %v1246, %v1245
      %v1266 = vpack.c.b16 %v1248, %v1247
      %v1267 = vpack.c.b16 %v1250, %v1249
      %v1268 = vpack.c.b16 %v1252, %v1251
      %v1279 = vunpack.c.l.b16 %v1179
      %v1280 = vunpack.c.l.b16 %v1180
      %v1281 = vunpack.c.l.b16 %v1181
      %v1282 = vunpack.c.l.b16 %v1182
      %v1283 = vunpack.c.l.b16 %v1183
      %v1284 = vunpack.c.l.b16 %v1184
      %v1285 = vunpack.c.l.b16 %v1185
      %v1286 = vunpack.c.l.b16 %v1186
      %v1287 = vunpack.c.l.b16 %v1187
      %v1288 = vunpack.c.l.b16 %v1188
      %v1289 = vpack.c.b16 %v1280, %v1279
      %v1290 = vpack.c.b16 %v1282, %v1281
      %v1291 = vpack.c.b16 %v1284, %v1283
      %v1292 = vpack.c.b16 %v1286, %v1285
      %v1293 = vpack.c.b16 %v1288, %v1287
      %v1300 = vsel %vm439, %v1253, 0
      %v1303 = vsel %vm439, %v1254, 0
      %v1306 = vsel %vm439, %v1255, 0
      %v1309 = vsel %vm439, %v1256, 0
      %v1312 = vsel %vm439, %v1257, 0
      %v1315 = vsel %vm439, %v1258, 0
      %v1318 = vsel %vm439, %v1259, 0
      %v1321 = vsel %vm439, %v1260, 0
      %v1324 = vsel %vm439, %v1261, 0
      %v1327 = vsel %vm439, %v1262, 0
      %v1330 = vsel %vm439, %v1263, 0
      %v1333 = vsel %vm439, %v1264, 0
      %v1336 = vsel %vm439, %v1265, 0
      %v1339 = vsel %vm439, %v1266, 0
      %v1342 = vsel %vm439, %v1267, 0
      %v1345 = vsel %vm439, %v1268, 0
      %1347 = vmatpush.bf16.msra.mxu0 0
      %1348 = vmatpush.bf16.msra.mxu0 0
      %1349 = vmatpush.bf16.msra.mxu0 0
      %1350 = vmatpush.bf16.msra.mxu0 %v1293
      %1351 = vmatpush.bf16.msra.mxu0 %v1292
      %1352 = vmatpush.bf16.msra.mxu0 %v1291
      %1353 = vmatpush.bf16.msra.mxu0 %v1290
      %1354 = vmatpush.bf16.msra.mxu0 %v1289
      %1355 = vmatmul.bf16.gmra.mxu0 %v1300
      %v1356 = vpop.f32.mrf.mxu0
      %v1357 = vadd.f32 0.0, %v1356
      %v1358 = vpop.f32.mrf.mxu0
      %v1359 = vadd.f32 0.0, %v1358
      %1360 = vmatmul.bf16.gmra.mxu0 %v1303
      %v1361 = vpop.f32.mrf.mxu0
      %v1362 = vadd.f32 0.0, %v1361
      %v1363 = vpop.f32.mrf.mxu0
      %v1364 = vadd.f32 0.0, %v1363
      %1365 = vmatmul.bf16.gmra.mxu0 %v1306
      %v1366 = vpop.f32.mrf.mxu0
      %v1367 = vadd.f32 0.0, %v1366
      %v1368 = vpop.f32.mrf.mxu0
      %v1369 = vadd.f32 0.0, %v1368
      %1370 = vmatmul.bf16.gmra.mxu0 %v1309
      %v1371 = vpop.f32.mrf.mxu0
      %v1372 = vadd.f32 0.0, %v1371
      %v1373 = vpop.f32.mrf.mxu0
      %v1374 = vadd.f32 0.0, %v1373
      %1375 = vmatmul.bf16.gmra.mxu0 %v1312
      %v1376 = vpop.f32.mrf.mxu0
      %v1377 = vadd.f32 0.0, %v1376
      %v1378 = vpop.f32.mrf.mxu0
      %v1379 = vadd.f32 0.0, %v1378
      %1380 = vmatmul.bf16.gmra.mxu0 %v1315
      %v1381 = vpop.f32.mrf.mxu0
      %v1382 = vadd.f32 0.0, %v1381
      %v1383 = vpop.f32.mrf.mxu0
      %v1384 = vadd.f32 0.0, %v1383
      %1385 = vmatmul.bf16.gmra.mxu0 %v1318
      %v1386 = vpop.f32.mrf.mxu0
      %v1387 = vadd.f32 0.0, %v1386
      %v1388 = vpop.f32.mrf.mxu0
      %v1389 = vadd.f32 0.0, %v1388
      %1390 = vmatmul.bf16.gmra.mxu0 %v1321
      %v1391 = vpop.f32.mrf.mxu0
      %v1392 = vadd.f32 0.0, %v1391
      %v1393 = vpop.f32.mrf.mxu0
      %v1394 = vadd.f32 0.0, %v1393
      %1395 = vmatmul.bf16.gmra.mxu0 %v1324
      %v1396 = vpop.f32.mrf.mxu0
      %v1397 = vadd.f32 0.0, %v1396
      %v1398 = vpop.f32.mrf.mxu0
      %v1399 = vadd.f32 0.0, %v1398
      %1400 = vmatmul.bf16.gmra.mxu0 %v1327
      %v1401 = vpop.f32.mrf.mxu0
      %v1402 = vadd.f32 0.0, %v1401
      %v1403 = vpop.f32.mrf.mxu0
      %v1404 = vadd.f32 0.0, %v1403
      %1405 = vmatmul.bf16.gmra.mxu0 %v1330
      %v1406 = vpop.f32.mrf.mxu0
      %v1407 = vadd.f32 0.0, %v1406
      %v1408 = vpop.f32.mrf.mxu0
      %v1409 = vadd.f32 0.0, %v1408
      %1410 = vmatmul.bf16.gmra.mxu0 %v1333
      %v1411 = vpop.f32.mrf.mxu0
      %v1412 = vadd.f32 0.0, %v1411
      %v1413 = vpop.f32.mrf.mxu0
      %v1414 = vadd.f32 0.0, %v1413
      %1415 = vmatmul.bf16.gmra.mxu0 %v1336
      %v1416 = vpop.f32.mrf.mxu0
      %v1417 = vadd.f32 0.0, %v1416
      %v1418 = vpop.f32.mrf.mxu0
      %v1419 = vadd.f32 0.0, %v1418
      %1420 = vmatmul.bf16.gmra.mxu0 %v1339
      %v1421 = vpop.f32.mrf.mxu0
      %v1422 = vadd.f32 0.0, %v1421
      %v1423 = vpop.f32.mrf.mxu0
      %v1424 = vadd.f32 0.0, %v1423
      %1425 = vmatmul.bf16.gmra.mxu0 %v1342
      %v1426 = vpop.f32.mrf.mxu0
      %v1427 = vadd.f32 0.0, %v1426
      %v1428 = vpop.f32.mrf.mxu0
      %v1429 = vadd.f32 0.0, %v1428
      %1430 = vmatmul.bf16.gmra.mxu0 %v1345
      %v1431 = vpop.f32.mrf.mxu0
      %v1432 = vadd.f32 0.0, %v1431
      %v1433 = vpop.f32.mrf.mxu0
      %v1434 = vadd.f32 0.0, %v1433
      %1435 = vdwg.mxu0
      %v1436 = vadd.f32 %v1114, %v1357
      %v1437 = vadd.f32 %v1115, %v1359
      %v1438 = vadd.f32 %v1116, %v1362
      %v1439 = vadd.f32 %v1117, %v1364
      %v1440 = vadd.f32 %v1118, %v1367
      %v1441 = vadd.f32 %v1119, %v1369
      %v1442 = vadd.f32 %v1120, %v1372
      %v1443 = vadd.f32 %v1121, %v1374
      %v1444 = vadd.f32 %v1122, %v1377
      %v1445 = vadd.f32 %v1123, %v1379
      %v1446 = vadd.f32 %v1124, %v1382
      %v1447 = vadd.f32 %v1125, %v1384
      %v1448 = vadd.f32 %v1126, %v1387
      %v1449 = vadd.f32 %v1127, %v1389
      %v1450 = vadd.f32 %v1128, %v1392
      %v1451 = vadd.f32 %v1129, %v1394
      %v1452 = vadd.f32 %v1130, %v1397
      %v1453 = vadd.f32 %v1131, %v1399
      %v1454 = vadd.f32 %v1132, %v1402
      %v1455 = vadd.f32 %v1133, %v1404
      %v1456 = vadd.f32 %v1134, %v1407
      %v1457 = vadd.f32 %v1135, %v1409
      %v1458 = vadd.f32 %v1136, %v1412
      %v1459 = vadd.f32 %v1137, %v1414
      %v1460 = vadd.f32 %v1138, %v1417
      %v1461 = vadd.f32 %v1139, %v1419
      %v1462 = vadd.f32 %v1140, %v1422
      %v1463 = vadd.f32 %v1141, %v1424
      %v1464 = vadd.f32 %v1142, %v1427
      %v1465 = vadd.f32 %v1143, %v1429
      %v1466 = vadd.f32 %v1144, %v1432
      %v1467 = vadd.f32 %v1145, %v1434
      %v1468 = vld [vmem:[%s230 + $0x10] sm:$0xf]
      %v1469 = vld [vmem:[%s230 + $0x14] sm:$0xf]
      %v1470 = vld [vmem:[%s230 + $0x18] sm:$0xf]
      %v1471 = vld [vmem:[%s230 + $0x1c] sm:$0xf]
      %v1472 = vld [vmem:[%s230 + $0x20] sm:$0xf]
      %v1473 = vld [vmem:[%s230 + $0x24] sm:$0xf]
      %v1474 = vld [vmem:[%s230 + $0x28] sm:$0xf]
      %v1475 = vld [vmem:[%s230 + $0x2c] sm:$0xf]
      %v1476 = vld [vmem:[%s230 + $0x30] sm:$0xf]
      %v1477 = vld [vmem:[%s230 + $0x34] sm:$0xf]
      %v1478 = vld [vmem:[%s230 + $0x38] sm:$0xf]
      %v1479 = vld [vmem:[%s230 + $0x3c] sm:$0xf]
      %v1480 = vld [vmem:[%s230 + $0x40] sm:$0xf]
      %v1481 = vld [vmem:[%s230 + $0x44] sm:$0xf]
      %v1482 = vld [vmem:[%s230 + $0x48] sm:$0xf]
      %v1483 = vld [vmem:[%s230 + $0x4c] sm:$0xf]
      %v1484 = vld [vmem:[%s230 + $0x50] sm:$0xf]
      %v1485 = vld [vmem:[%s230 + $0x54] sm:$0xf]
      %v1486 = vld [vmem:[%s230 + $0x58] sm:$0xf]
      %v1487 = vld [vmem:[%s230 + $0x5c] sm:$0xf]
      %v1488 = vld [vmem:[%s230 + $0x60] sm:$0xf]
      %v1489 = vld [vmem:[%s230 + $0x64] sm:$0xf]
      %v1490 = vld [vmem:[%s230 + $0x68] sm:$0xf]
      %v1491 = vld [vmem:[%s230 + $0x6c] sm:$0xf]
      %v1492 = vld [vmem:[%s230 + $0x70] sm:$0xf]
      %v1493 = vld [vmem:[%s230 + $0x74] sm:$0xf]
      %v1494 = vld [vmem:[%s230 + $0x78] sm:$0xf]
      %v1495 = vld [vmem:[%s230 + $0x7c] sm:$0xf]
      %v1496 = vld [vmem:[%s230 + $0x80] sm:$0xf]
      %v1497 = vld [vmem:[%s230 + $0x84] sm:$0xf]
      %v1498 = vld [vmem:[%s230 + $0x88] sm:$0xf]
      %v1499 = vld [vmem:[%s230 + $0x8c] sm:$0xf]
      %s1500 = scalar_lea.vmem %s1, 160
      %v1501 = vld [vmem:[%s1500] sm:$0xf]
      %v1502 = vld [vmem:[%s1500 + $0x4] sm:$0xf]
      %v1503 = vld [vmem:[%s1500 + $0x8] sm:$0xf]
      %v1504 = vld [vmem:[%s1500 + $0xc] sm:$0xf]
      %v1505 = vld [vmem:[%s1500 + $0x10] sm:$0xf]
      %v1506 = vld [vmem:[%s1500 + $0x14] sm:$0xf]
      %v1507 = vld [vmem:[%s1500 + $0x18] sm:$0xf]
      %v1508 = vld [vmem:[%s1500 + $0x1c] sm:$0xf]
      %v1509 = vld [vmem:[%s1500 + $0x20] sm:$0xf]
      %v1510 = vld [vmem:[%s1500 + $0x24] sm:$0xf]
      %v1543 = vunpack.c.l.b16 %v1468
      %v1544 = vunpack.c.l.b16 %v1469
      %v1545 = vunpack.c.l.b16 %v1470
      %v1546 = vunpack.c.l.b16 %v1471
      %v1547 = vunpack.c.l.b16 %v1472
      %v1548 = vunpack.c.l.b16 %v1473
      %v1549 = vunpack.c.l.b16 %v1474
      %v1550 = vunpack.c.l.b16 %v1475
      %v1551 = vunpack.c.l.b16 %v1476
      %v1552 = vunpack.c.l.b16 %v1477
      %v1553 = vunpack.c.l.b16 %v1478
      %v1554 = vunpack.c.l.b16 %v1479
      %v1555 = vunpack.c.l.b16 %v1480
      %v1556 = vunpack.c.l.b16 %v1481
      %v1557 = vunpack.c.l.b16 %v1482
      %v1558 = vunpack.c.l.b16 %v1483
      %v1559 = vunpack.c.l.b16 %v1484
      %v1560 = vunpack.c.l.b16 %v1485
      %v1561 = vunpack.c.l.b16 %v1486
      %v1562 = vunpack.c.l.b16 %v1487
      %v1563 = vunpack.c.l.b16 %v1488
      %v1564 = vunpack.c.l.b16 %v1489
      %v1565 = vunpack.c.l.b16 %v1490
      %v1566 = vunpack.c.l.b16 %v1491
      %v1567 = vunpack.c.l.b16 %v1492
      %v1568 = vunpack.c.l.b16 %v1493
      %v1569 = vunpack.c.l.b16 %v1494
      %v1570 = vunpack.c.l.b16 %v1495
      %v1571 = vunpack.c.l.b16 %v1496
      %v1572 = vunpack.c.l.b16 %v1497
      %v1573 = vunpack.c.l.b16 %v1498
      %v1574 = vunpack.c.l.b16 %v1499
      %v1575 = vpack.c.b16 %v1544, %v1543
      %v1576 = vpack.c.b16 %v1546, %v1545
      %v1577 = vpack.c.b16 %v1548, %v1547
      %v1578 = vpack.c.b16 %v1550, %v1549
      %v1579 = vpack.c.b16 %v1552, %v1551
      %v1580 = vpack.c.b16 %v1554, %v1553
      %v1581 = vpack.c.b16 %v1556, %v1555
      %v1582 = vpack.c.b16 %v1558, %v1557
      %v1583 = vpack.c.b16 %v1560, %v1559
      %v1584 = vpack.c.b16 %v1562, %v1561
      %v1585 = vpack.c.b16 %v1564, %v1563
      %v1586 = vpack.c.b16 %v1566, %v1565
      %v1587 = vpack.c.b16 %v1568, %v1567
      %v1588 = vpack.c.b16 %v1570, %v1569
      %v1589 = vpack.c.b16 %v1572, %v1571
      %v1590 = vpack.c.b16 %v1574, %v1573
      %v1601 = vunpack.c.l.b16 %v1501
      %v1602 = vunpack.c.l.b16 %v1502
      %v1603 = vunpack.c.l.b16 %v1503
      %v1604 = vunpack.c.l.b16 %v1504
      %v1605 = vunpack.c.l.b16 %v1505
      %v1606 = vunpack.c.l.b16 %v1506
      %v1607 = vunpack.c.l.b16 %v1507
      %v1608 = vunpack.c.l.b16 %v1508
      %v1609 = vunpack.c.l.b16 %v1509
      %v1610 = vunpack.c.l.b16 %v1510
      %v1611 = vpack.c.b16 %v1602, %v1601
      %v1612 = vpack.c.b16 %v1604, %v1603
      %v1613 = vpack.c.b16 %v1606, %v1605
      %v1614 = vpack.c.b16 %v1608, %v1607
      %v1615 = vpack.c.b16 %v1610, %v1609
      %v1622 = vsel %vm439, %v1575, 0
      %v1625 = vsel %vm439, %v1576, 0
      %v1628 = vsel %vm439, %v1577, 0
      %v1631 = vsel %vm439, %v1578, 0
      %v1634 = vsel %vm439, %v1579, 0
      %v1637 = vsel %vm439, %v1580, 0
      %v1640 = vsel %vm439, %v1581, 0
      %v1643 = vsel %vm439, %v1582, 0
      %v1646 = vsel %vm439, %v1583, 0
      %v1649 = vsel %vm439, %v1584, 0
      %v1652 = vsel %vm439, %v1585, 0
      %v1655 = vsel %vm439, %v1586, 0
      %v1658 = vsel %vm439, %v1587, 0
      %v1661 = vsel %vm439, %v1588, 0
      %v1664 = vsel %vm439, %v1589, 0
      %v1667 = vsel %vm439, %v1590, 0
      %1669 = vmatpush.bf16.msra.mxu0 0
      %1670 = vmatpush.bf16.msra.mxu0 0
      %1671 = vmatpush.bf16.msra.mxu0 0
      %1672 = vmatpush.bf16.msra.mxu0 %v1615
      %1673 = vmatpush.bf16.msra.mxu0 %v1614
      %1674 = vmatpush.bf16.msra.mxu0 %v1613
      %1675 = vmatpush.bf16.msra.mxu0 %v1612
      %1676 = vmatpush.bf16.msra.mxu0 %v1611
      %1677 = vmatmul.bf16.gmra.mxu0 %v1622
      %v1678 = vpop.f32.mrf.mxu0
      %v1679 = vadd.f32 0.0, %v1678
      %v1680 = vpop.f32.mrf.mxu0
      %v1681 = vadd.f32 0.0, %v1680
      %1682 = vmatmul.bf16.gmra.mxu0 %v1625
      %v1683 = vpop.f32.mrf.mxu0
      %v1684 = vadd.f32 0.0, %v1683
      %v1685 = vpop.f32.mrf.mxu0
      %v1686 = vadd.f32 0.0, %v1685
      %1687 = vmatmul.bf16.gmra.mxu0 %v1628
      %v1688 = vpop.f32.mrf.mxu0
      %v1689 = vadd.f32 0.0, %v1688
      %v1690 = vpop.f32.mrf.mxu0
      %v1691 = vadd.f32 0.0, %v1690
      %1692 = vmatmul.bf16.gmra.mxu0 %v1631
      %v1693 = vpop.f32.mrf.mxu0
      %v1694 = vadd.f32 0.0, %v1693
      %v1695 = vpop.f32.mrf.mxu0
      %v1696 = vadd.f32 0.0, %v1695
      %1697 = vmatmul.bf16.gmra.mxu0 %v1634
      %v1698 = vpop.f32.mrf.mxu0
      %v1699 = vadd.f32 0.0, %v1698
      %v1700 = vpop.f32.mrf.mxu0
      %v1701 = vadd.f32 0.0, %v1700
      %1702 = vmatmul.bf16.gmra.mxu0 %v1637
      %v1703 = vpop.f32.mrf.mxu0
      %v1704 = vadd.f32 0.0, %v1703
      %v1705 = vpop.f32.mrf.mxu0
      %v1706 = vadd.f32 0.0, %v1705
      %1707 = vmatmul.bf16.gmra.mxu0 %v1640
      %v1708 = vpop.f32.mrf.mxu0
      %v1709 = vadd.f32 0.0, %v1708
      %v1710 = vpop.f32.mrf.mxu0
      %v1711 = vadd.f32 0.0, %v1710
      %1712 = vmatmul.bf16.gmra.mxu0 %v1643
      %v1713 = vpop.f32.mrf.mxu0
      %v1714 = vadd.f32 0.0, %v1713
      %v1715 = vpop.f32.mrf.mxu0
      %v1716 = vadd.f32 0.0, %v1715
      %1717 = vmatmul.bf16.gmra.mxu0 %v1646
      %v1718 = vpop.f32.mrf.mxu0
      %v1719 = vadd.f32 0.0, %v1718
      %v1720 = vpop.f32.mrf.mxu0
      %v1721 = vadd.f32 0.0, %v1720
      %1722 = vmatmul.bf16.gmra.mxu0 %v1649
      %v1723 = vpop.f32.mrf.mxu0
      %v1724 = vadd.f32 0.0, %v1723
      %v1725 = vpop.f32.mrf.mxu0
      %v1726 = vadd.f32 0.0, %v1725
      %1727 = vmatmul.bf16.gmra.mxu0 %v1652
      %v1728 = vpop.f32.mrf.mxu0
      %v1729 = vadd.f32 0.0, %v1728
      %v1730 = vpop.f32.mrf.mxu0
      %v1731 = vadd.f32 0.0, %v1730
      %1732 = vmatmul.bf16.gmra.mxu0 %v1655
      %v1733 = vpop.f32.mrf.mxu0
      %v1734 = vadd.f32 0.0, %v1733
      %v1735 = vpop.f32.mrf.mxu0
      %v1736 = vadd.f32 0.0, %v1735
      %1737 = vmatmul.bf16.gmra.mxu0 %v1658
      %v1738 = vpop.f32.mrf.mxu0
      %v1739 = vadd.f32 0.0, %v1738
      %v1740 = vpop.f32.mrf.mxu0
      %v1741 = vadd.f32 0.0, %v1740
      %1742 = vmatmul.bf16.gmra.mxu0 %v1661
      %v1743 = vpop.f32.mrf.mxu0
      %v1744 = vadd.f32 0.0, %v1743
      %v1745 = vpop.f32.mrf.mxu0
      %v1746 = vadd.f32 0.0, %v1745
      %1747 = vmatmul.bf16.gmra.mxu0 %v1664
      %v1748 = vpop.f32.mrf.mxu0
      %v1749 = vadd.f32 0.0, %v1748
      %v1750 = vpop.f32.mrf.mxu0
      %v1751 = vadd.f32 0.0, %v1750
      %1752 = vmatmul.bf16.gmra.mxu0 %v1667
      %v1753 = vpop.f32.mrf.mxu0
      %v1754 = vadd.f32 0.0, %v1753
      %v1755 = vpop.f32.mrf.mxu0
      %v1756 = vadd.f32 0.0, %v1755
      %1757 = vdwg.mxu0
      %v1758 = vadd.f32 %v1436, %v1679
      %v1759 = vadd.f32 %v1437, %v1681
      %v1760 = vadd.f32 %v1438, %v1684
      %v1761 = vadd.f32 %v1439, %v1686
      %v1762 = vadd.f32 %v1440, %v1689
      %v1763 = vadd.f32 %v1441, %v1691
      %v1764 = vadd.f32 %v1442, %v1694
      %v1765 = vadd.f32 %v1443, %v1696
      %v1766 = vadd.f32 %v1444, %v1699
      %v1767 = vadd.f32 %v1445, %v1701
      %v1768 = vadd.f32 %v1446, %v1704
      %v1769 = vadd.f32 %v1447, %v1706
      %v1770 = vadd.f32 %v1448, %v1709
      %v1771 = vadd.f32 %v1449, %v1711
      %v1772 = vadd.f32 %v1450, %v1714
      %v1773 = vadd.f32 %v1451, %v1716
      %v1774 = vadd.f32 %v1452, %v1719
      %v1775 = vadd.f32 %v1453, %v1721
      %v1776 = vadd.f32 %v1454, %v1724
      %v1777 = vadd.f32 %v1455, %v1726
      %v1778 = vadd.f32 %v1456, %v1729
      %v1779 = vadd.f32 %v1457, %v1731
      %v1780 = vadd.f32 %v1458, %v1734
      %v1781 = vadd.f32 %v1459, %v1736
      %v1782 = vadd.f32 %v1460, %v1739
      %v1783 = vadd.f32 %v1461, %v1741
      %v1784 = vadd.f32 %v1462, %v1744
      %v1785 = vadd.f32 %v1463, %v1746
      %v1786 = vadd.f32 %v1464, %v1749
      %v1787 = vadd.f32 %v1465, %v1751
      %v1788 = vadd.f32 %v1466, %v1754
      %v1789 = vadd.f32 %v1467, %v1756
      %v1790 = vld [vmem:[%s2] sm:$0x1]
      %v1792 = vperm.slane %v1790, 0
      %v1794 = vadd.f32 %v1758, %v1792
      %v1795 = vadd.f32 %v1759, %v1792
      %v1796 = vadd.f32 %v1760, %v1792
      %v1797 = vadd.f32 %v1761, %v1792
      %v1798 = vadd.f32 %v1762, %v1792
      %v1799 = vadd.f32 %v1763, %v1792
      %v1800 = vadd.f32 %v1764, %v1792
      %v1801 = vadd.f32 %v1765, %v1792
      %v1802 = vadd.f32 %v1766, %v1792
      %v1803 = vadd.f32 %v1767, %v1792
      %v1804 = vadd.f32 %v1768, %v1792
      %v1805 = vadd.f32 %v1769, %v1792
      %v1806 = vadd.f32 %v1770, %v1792
      %v1807 = vadd.f32 %v1771, %v1792
      %v1808 = vadd.f32 %v1772, %v1792
      %v1809 = vadd.f32 %v1773, %v1792
      %v1810 = vadd.f32 %v1774, %v1792
      %v1811 = vadd.f32 %v1775, %v1792
      %v1812 = vadd.f32 %v1776, %v1792
      %v1813 = vadd.f32 %v1777, %v1792
      %v1814 = vadd.f32 %v1778, %v1792
      %v1815 = vadd.f32 %v1779, %v1792
      %v1816 = vadd.f32 %v1780, %v1792
      %v1817 = vadd.f32 %v1781, %v1792
      %v1818 = vadd.f32 %v1782, %v1792
      %v1819 = vadd.f32 %v1783, %v1792
      %v1820 = vadd.f32 %v1784, %v1792
      %v1821 = vadd.f32 %v1785, %v1792
      %v1822 = vadd.f32 %v1786, %v1792
      %v1823 = vadd.f32 %v1787, %v1792
      %v1824 = vadd.f32 %v1788, %v1792
      %v1825 = vadd.f32 %v1789, %v1792
      %v1826 = vpack.c.bf16 %v1794, %v1794
      %v1827 = vpack.c.bf16 %v1795, %v1795
      %v1828 = vpack.c.bf16 %v1796, %v1796
      %v1829 = vpack.c.bf16 %v1797, %v1797
      %v1830 = vpack.c.bf16 %v1798, %v1798
      %v1831 = vpack.c.bf16 %v1799, %v1799
      %v1832 = vpack.c.bf16 %v1800, %v1800
      %v1833 = vpack.c.bf16 %v1801, %v1801
      %v1834 = vpack.c.bf16 %v1802, %v1802
      %v1835 = vpack.c.bf16 %v1803, %v1803
      %v1836 = vpack.c.bf16 %v1804, %v1804
      %v1837 = vpack.c.bf16 %v1805, %v1805
      %v1838 = vpack.c.bf16 %v1806, %v1806
      %v1839 = vpack.c.bf16 %v1807, %v1807
      %v1840 = vpack.c.bf16 %v1808, %v1808
      %v1841 = vpack.c.bf16 %v1809, %v1809
      %v1842 = vpack.c.bf16 %v1810, %v1810
      %v1843 = vpack.c.bf16 %v1811, %v1811
      %v1844 = vpack.c.bf16 %v1812, %v1812
      %v1845 = vpack.c.bf16 %v1813, %v1813
      %v1846 = vpack.c.bf16 %v1814, %v1814
      %v1847 = vpack.c.bf16 %v1815, %v1815
      %v1848 = vpack.c.bf16 %v1816, %v1816
      %v1849 = vpack.c.bf16 %v1817, %v1817
      %v1850 = vpack.c.bf16 %v1818, %v1818
      %v1851 = vpack.c.bf16 %v1819, %v1819
      %v1852 = vpack.c.bf16 %v1820, %v1820
      %v1853 = vpack.c.bf16 %v1821, %v1821
      %v1854 = vpack.c.bf16 %v1822, %v1822
      %v1855 = vpack.c.bf16 %v1823, %v1823
      %v1856 = vpack.c.bf16 %v1824, %v1824
      %v1857 = vpack.c.bf16 %v1825, %v1825
      %1858 = vst [vmem:[%s235] sm:$0xf] %v1826
      %1859 = vst [vmem:[%s235 + $0x4] sm:$0xf] %v1827
      %1860 = vst [vmem:[%s235 + $0x8] sm:$0xf] %v1828
      %1861 = vst [vmem:[%s235 + $0xc] sm:$0xf] %v1829
      %1862 = vst [vmem:[%s235 + $0x10] sm:$0xf] %v1830
      %1863 = vst [vmem:[%s235 + $0x14] sm:$0xf] %v1831
      %1864 = vst [vmem:[%s235 + $0x18] sm:$0xf] %v1832
      %1865 = vst [vmem:[%s235 + $0x1c] sm:$0xf] %v1833
      %1866 = vst [vmem:[%s235 + $0x20] sm:$0xf] %v1834
      %1867 = vst [vmem:[%s235 + $0x24] sm:$0xf] %v1835
      %1868 = vst [vmem:[%s235 + $0x28] sm:$0xf] %v1836
      %1869 = vst [vmem:[%s235 + $0x2c] sm:$0xf] %v1837
      %1870 = vst [vmem:[%s235 + $0x30] sm:$0xf] %v1838
      %1871 = vst [vmem:[%s235 + $0x34] sm:$0xf] %v1839
      %1872 = vst [vmem:[%s235 + $0x38] sm:$0xf] %v1840
      %1873 = vst [vmem:[%s235 + $0x3c] sm:$0xf] %v1841
      %1874 = vst [vmem:[%s235 + $0x40] sm:$0xf] %v1842
      %1875 = vst [vmem:[%s235 + $0x44] sm:$0xf] %v1843
      %1876 = vst [vmem:[%s235 + $0x48] sm:$0xf] %v1844
      %1877 = vst [vmem:[%s235 + $0x4c] sm:$0xf] %v1845
      %1878 = vst [vmem:[%s235 + $0x50] sm:$0xf] %v1846
      %1879 = vst [vmem:[%s235 + $0x54] sm:$0xf] %v1847
      %1880 = vst [vmem:[%s235 + $0x58] sm:$0xf] %v1848
      %1881 = vst [vmem:[%s235 + $0x5c] sm:$0xf] %v1849
      %1882 = vst [vmem:[%s235 + $0x60] sm:$0xf] %v1850
      %1883 = vst [vmem:[%s235 + $0x64] sm:$0xf] %v1851
      %1884 = vst [vmem:[%s235 + $0x68] sm:$0xf] %v1852
      %1885 = vst [vmem:[%s235 + $0x6c] sm:$0xf] %v1853
      %1886 = vst [vmem:[%s235 + $0x70] sm:$0xf] %v1854
      %1887 = vst [vmem:[%s235 + $0x74] sm:$0xf] %v1855
      %1888 = vst [vmem:[%s235 + $0x78] sm:$0xf] %v1856
      %1889 = vst [vmem:[%s235 + $0x7c] sm:$0xf] %v1857
      %v1890 = vadd.f32 %v1794, %v1795
      %v1891 = vadd.f32 %v1890, %v1796
      %v1892 = vadd.f32 %v1891, %v1797
      %v1893 = vadd.f32 %v1892, %v1798
      %v1894 = vadd.f32 %v1893, %v1799
      %v1895 = vadd.f32 %v1894, %v1800
      %v1896 = vadd.f32 %v1895, %v1801
      %v1897 = vadd.f32 %v1896, %v1802
      %v1898 = vadd.f32 %v1897, %v1803
      %v1899 = vadd.f32 %v1898, %v1804
      %v1900 = vadd.f32 %v1899, %v1805
      %v1901 = vadd.f32 %v1900, %v1806
      %v1902 = vadd.f32 %v1901, %v1807
      %v1903 = vadd.f32 %v1902, %v1808
      %v1904 = vadd.f32 %v1903, %v1809
      %v1905 = vadd.f32 %v1904, %v1810
      %v1906 = vadd.f32 %v1905, %v1811
      %v1907 = vadd.f32 %v1906, %v1812
      %v1908 = vadd.f32 %v1907, %v1813
      %v1909 = vadd.f32 %v1908, %v1814
      %v1910 = vadd.f32 %v1909, %v1815
      %v1911 = vadd.f32 %v1910, %v1816
      %v1912 = vadd.f32 %v1911, %v1817
      %v1913 = vadd.f32 %v1912, %v1818
      %v1914 = vadd.f32 %v1913, %v1819
      %v1915 = vadd.f32 %v1914, %v1820
      %v1916 = vadd.f32 %v1915, %v1821
      %v1917 = vadd.f32 %v1916, %v1822
      %v1918 = vadd.f32 %v1917, %v1823
      %v1919 = vadd.f32 %v1918, %v1824
      %v1920 = vadd.f32 %v1919, %v1825
      %v1921 = vrot.slane %v1920, 4
      %v1922 = vadd.f32 %v1920, %v1921
      %v1923 = vrot.slane %v1922, 2
      %v1924 = vadd.f32 %v1922, %v1923
      %v1925 = vrot.slane %v1924, 1
      %v1926 = vadd.f32 %v1924, %v1925
      %1927 = vst [vmem:[%s238] sm:$0x1] %v1926
      %v1928 = vmul.f32 %v1794, %v1794
      %v1929 = vmul.f32 %v1795, %v1795
      %v1930 = vmul.f32 %v1796, %v1796
      %v1931 = vmul.f32 %v1797, %v1797
      %v1932 = vmul.f32 %v1798, %v1798
      %v1933 = vmul.f32 %v1799, %v1799
      %v1934 = vmul.f32 %v1800, %v1800
      %v1935 = vmul.f32 %v1801, %v1801
      %v1936 = vmul.f32 %v1802, %v1802
      %v1937 = vmul.f32 %v1803, %v1803
      %v1938 = vmul.f32 %v1804, %v1804
      %v1939 = vmul.f32 %v1805, %v1805
      %v1940 = vmul.f32 %v1806, %v1806
      %v1941 = vmul.f32 %v1807, %v1807
      %v1942 = vmul.f32 %v1808, %v1808
      %v1943 = vmul.f32 %v1809, %v1809
      %v1944 = vmul.f32 %v1810, %v1810
      %v1945 = vmul.f32 %v1811, %v1811
      %v1946 = vmul.f32 %v1812, %v1812
      %v1947 = vmul.f32 %v1813, %v1813
      %v1948 = vmul.f32 %v1814, %v1814
      %v1949 = vmul.f32 %v1815, %v1815
      %v1950 = vmul.f32 %v1816, %v1816
      %v1951 = vmul.f32 %v1817, %v1817
      %v1952 = vmul.f32 %v1818, %v1818
      %v1953 = vmul.f32 %v1819, %v1819
      %v1954 = vmul.f32 %v1820, %v1820
      %v1955 = vmul.f32 %v1821, %v1821
      %v1956 = vmul.f32 %v1822, %v1822
      %v1957 = vmul.f32 %v1823, %v1823
      %v1958 = vmul.f32 %v1824, %v1824
      %v1959 = vmul.f32 %v1825, %v1825
      %v1960 = vadd.f32 %v1928, %v1929
      %v1961 = vadd.f32 %v1960, %v1930
      %v1962 = vadd.f32 %v1961, %v1931
      %v1963 = vadd.f32 %v1962, %v1932
      %v1964 = vadd.f32 %v1963, %v1933
      %v1965 = vadd.f32 %v1964, %v1934
      %v1966 = vadd.f32 %v1965, %v1935
      %v1967 = vadd.f32 %v1966, %v1936
      %v1968 = vadd.f32 %v1967, %v1937
      %v1969 = vadd.f32 %v1968, %v1938
      %v1970 = vadd.f32 %v1969, %v1939
      %v1971 = vadd.f32 %v1970, %v1940
      %v1972 = vadd.f32 %v1971, %v1941
      %v1973 = vadd.f32 %v1972, %v1942
      %v1974 = vadd.f32 %v1973, %v1943
      %v1975 = vadd.f32 %v1974, %v1944
      %v1976 = vadd.f32 %v1975, %v1945
      %v1977 = vadd.f32 %v1976, %v1946
      %v1978 = vadd.f32 %v1977, %v1947
      %v1979 = vadd.f32 %v1978, %v1948
      %v1980 = vadd.f32 %v1979, %v1949
      %v1981 = vadd.f32 %v1980, %v1950
      %v1982 = vadd.f32 %v1981, %v1951
      %v1983 = vadd.f32 %v1982, %v1952
      %v1984 = vadd.f32 %v1983, %v1953
      %v1985 = vadd.f32 %v1984, %v1954
      %v1986 = vadd.f32 %v1985, %v1955
      %v1987 = vadd.f32 %v1986, %v1956
      %v1988 = vadd.f32 %v1987, %v1957
      %v1989 = vadd.f32 %v1988, %v1958
      %v1990 = vadd.f32 %v1989, %v1959
      %v1991 = vrot.slane %v1990, 4
      %v1992 = vadd.f32 %v1990, %v1991
      %v1993 = vrot.slane %v1992, 2
      %v1994 = vadd.f32 %v1992, %v1993
      %v1995 = vrot.slane %v1994, 1
      %v1996 = vadd.f32 %v1994, %v1995
      %1997 = vst [vmem:[%s241] sm:$0x1] %v1996
      %p1998 = scmp.lt.s32.totalorder %s17, 1
      %s1999 = scalar_select %p1998, %s17, 1
      %s2000 = smul.addr %s1999, 32
      %s2001 = smul.addr %s2000, 4
      %s2002 = scalar_lea.vmem %s3, %s2001
      %p2003 = scmp.lt.s32.totalorder %s17, 1
      %s2004 = scalar_select %p2003, %s17, 1
      %s2005 = scalar_lea.vmem %s4, %s2004
      %p2006 = scmp.lt.s32.totalorder %s17, 1
      %s2007 = scalar_select %p2006, %s17, 1
      %s2008 = scalar_lea.vmem %s5, %s2007
      // Predicated region
      $region33: #{_lambda_.8} parent=31 // pred_check
        %p2009 = pneg %p103
      $region34: #{_lambda_.8} parent=31 // pred_check_branch
        %2011 = sbr.rel (%p2009) target = $region36
      $region35: #{_lambda_.8} parent=31 // pred_region
        _
      $region36: #{_lambda_.8} parent=31 // pred_fallthru
        _
      // Predicated region
      $region37: #{_lambda_.8} parent=31 // pred_check
        %p2012 = pneg %p129
      $region38: #{_lambda_.8} parent=31 // pred_check_branch
        %2014 = sbr.rel (%p2012) target = $region40
      $region39: #{_lambda_.8} parent=31 // pred_region
        _
      $region40: #{_lambda_.8} parent=31 // pred_fallthru
        _
      // Predicated region
      $region41: #{_lambda_.8} parent=31 // pred_check
        %p2015 = pneg %p155
      $region42: #{_lambda_.8} parent=31 // pred_check_branch
        %2017 = sbr.rel (%p2015) target = $region44
      $region43: #{_lambda_.8} parent=31 // pred_region
        _
      $region44: #{_lambda_.8} parent=31 // pred_fallthru
        _
    $region32: #{_lambda_.8} parent=5 // pred_fallthru
      _
    %p2018 = scmp.le.s32.totalorder 2, %s12
    // Predicated region
    $region45: #{_lambda_.8} parent=5 // pred_check
      %p2019 = pneg %p2018
    $region46: #{_lambda_.8} parent=5 // pred_check_branch
      %2021 = sbr.rel (%p2019) target = $region48
    $region47: #{_lambda_.8} parent=5 // pred_region
      %s2022 = ssub.s32 %s12, 2
      // Predicated region
      $region49: #{_lambda_.8} parent=47 // pred_check
        %p2023 = pneg %p109
      $region50: #{_lambda_.8} parent=47 // pred_check_branch
        %2025 = sbr.rel (%p2023) target = $region52
      $region51: #{_lambda_.8} parent=47 // pred_region
        %p2026 = scmp.lt.s32.totalorder %s18, 1
        %s2027 = scalar_select %p2026, %s18, 1
        %s2028 = smul.addr %s2027, 32
        %s2029 = smul.addr %s2028, 4
        %s2030 = scalar_lea.vmem %s3, %s2029
      $region52: #{_lambda_.8} parent=47 // pred_fallthru
        _
      // Predicated region
      $region53: #{_lambda_.8} parent=47 // pred_check
        %p2031 = pneg %p135
      $region54: #{_lambda_.8} parent=47 // pred_check_branch
        %2033 = sbr.rel (%p2031) target = $region56
      $region55: #{_lambda_.8} parent=47 // pred_region
        %p2034 = scmp.lt.s32.totalorder %s18, 1
        %s2035 = scalar_select %p2034, %s18, 1
        %s2036 = scalar_lea.vmem %s4, %s2035
      $region56: #{_lambda_.8} parent=47 // pred_fallthru
        _
      // Predicated region
      $region57: #{_lambda_.8} parent=47 // pred_check
        %p2037 = pneg %p161
      $region58: #{_lambda_.8} parent=47 // pred_check_branch
        %2039 = sbr.rel (%p2037) target = $region60
      $region59: #{_lambda_.8} parent=47 // pred_region
        %p2040 = scmp.lt.s32.totalorder %s18, 1
        %s2041 = scalar_select %p2040, %s18, 1
        %s2042 = scalar_lea.vmem %s5, %s2041
      $region60: #{_lambda_.8} parent=47 // pred_fallthru
        _
    $region48: #{_lambda_.8} parent=5 // pred_fallthru
      _
  $region6: #{_lambda_.8} parent=0 // loop_footer
    %s16 = sadd.s32 1, %s12
  $region7: #{_lambda_.8} parent=0 // loop_footer_branch
    %11 = sbr.rel target = $region3
  $region8: #{_lambda_.8} parent=0 // loop_exit
    _

// kernel: _lambda_.10
$region0: #{_lambda_.10}
  #allocation0 [shape = 'u32[]', space=smem, size = 0x4, offset = 0x4, fixed_abs, tag = 'smem constant byte address 0x4 - core index']
  #allocation1 [shape = 'u32[72,128]{1,0:T(1,128)}', space=vmem, size = 0x9000, scoped, tag = 'internal scratch']
  %s0 = inlined_call_operand.vmem [shape: bf16[2,2,80,160], index: 0, kind: input, shape index: {}]
  %s1 = inlined_call_operand.vmem [shape: bf16[5,160,128], index: 1, kind: input, shape index: {}]
  %s2 = inlined_call_operand.vmem [shape: f32[1,128], index: 2, kind: input, shape index: {}]
  %s3 = inlined_call_operand.vmem [shape: bf16[2,64,128], index: 3, kind: output, shape index: {0}]
  %s4 = inlined_call_operand.vmem [shape: f32[2,1,128], index: 4, kind: output, shape index: {1}]
  %s5 = inlined_call_operand.vmem [shape: f32[2,1,128], index: 5, kind: output, shape index: {2}]
  %6 = xla_tuple %s3, %s4, %s5
  %s7 = sld [smem:[#allocation0]]
  $region61: #{_lambda_.10} parent=0
    _
  %s9 = ssub.s32 1, %s7
  %s10 = scalar_select 0, %s9, %s7
  loop: start=0, step=1, limit=4
  $region2: #{_lambda_.10} parent=0 // loop_pre_header
    _
  $region3: #{_lambda_.10} parent=0 // loop_header
    %s12 = sphi 0, %s16
    %p13 = scmp.ge.s32.totalorder %s12, 4
    %s22 = sphi 0, %s24
    %s25 = sphi 0, %s22
    %s26 = sphi 0, %s25
    %s42 = sphi 0, %s26
    %s46 = sphi 0, %s46
    %s48 = sphi 0, %s46
    %s49 = sphi 0, %s48
    %s63 = sphi 0, %s49
    %s67 = sphi 0, %s67
    %s69 = sphi 0, %s67
    %s70 = sphi 0, %s69
    %s84 = sphi 0, %s70
    %s90 = sphi 0, %s92
    %s93 = sphi 0, %s90
    %s94 = sphi 0, %s93
    %s110 = sphi 0, %s94
    %s116 = sphi 0, %s118
    %s119 = sphi 0, %s116
    %s120 = sphi 0, %s119
    %s136 = sphi 0, %s120
    %s142 = sphi 0, %s144
    %s145 = sphi 0, %s142
    %s146 = sphi 0, %s145
    %s162 = sphi 0, %s146
  $region4: #{_lambda_.10} parent=0 // loop_header_branch
    %15 = sbr.rel (%p13) target = $region8
  $region5: #{_lambda_.10} parent=0 // loop_body
    %s17 = ssub.s32 %s12, 1
    %s18 = ssub.s32 %s12, 2
    %s19 = sadd.s32 %s12, 1
    %s20 = ssub.s32 %s12, %s19
    %p21 = scmp.eq.s32.totalorder %s20, 0
    %s23 = sadd.s32 %s22, 1
    %s24 = scalar_select %p21, %s22, %s23
    %p27 = pneg %p21
    %p28 = scmp.eq.s32.totalorder %s12, 1
    %p29 = por %p27, %p28
    %p30 = scmp.ne.s32.totalorder %s22, %s25
    %p31 = scmp.eq.s32.totalorder %s12, 0
    %p32 = por %p30, %p31
    %p33 = scmp.ne.s32.totalorder %s22, %s25
    %p34 = scmp.eq.s32.totalorder %s17, 1
    %p35 = por %p33, %p34
    %p36 = scmp.ne.s32.totalorder %s25, %s26
    %p37 = scmp.eq.s32.totalorder %s17, 0
    %p38 = por %p36, %p37
    %p39 = scmp.ne.s32.totalorder %s25, %s26
    %p40 = scmp.eq.s32.totalorder %s18, 1
    %p41 = por %p39, %p40
    %p43 = scmp.ne.s32.totalorder %s26, %s42
    %p44 = scmp.eq.s32.totalorder %s18, 0
    %p45 = por %p43, %p44
    %s47 = sadd.s32 %s46, 1
    %p50 = scmp.eq.s32.totalorder %s12, 1
    %p51 = scmp.ne.s32.totalorder %s46, %s48
    %p52 = scmp.eq.s32.totalorder %s12, 0
    %p53 = por %p51, %p52
    %p54 = scmp.ne.s32.totalorder %s46, %s48
    %p55 = scmp.eq.s32.totalorder %s17, 1
    %p56 = por %p54, %p55
    %p57 = scmp.ne.s32.totalorder %s48, %s49
    %p58 = scmp.eq.s32.totalorder %s17, 0
    %p59 = por %p57, %p58
    %p60 = scmp.ne.s32.totalorder %s48, %s49
    %p61 = scmp.eq.s32.totalorder %s18, 1
    %p62 = por %p60, %p61
    %p64 = scmp.ne.s32.totalorder %s49, %s63
    %p65 = scmp.eq.s32.totalorder %s18, 0
    %p66 = por %p64, %p65
    %s68 = sadd.s32 %s67, 1
    %p71 = scmp.eq.s32.totalorder %s12, 1
    %p72 = scmp.ne.s32.totalorder %s67, %s69
    %p73 = scmp.eq.s32.totalorder %s12, 0
    %p74 = por %p72, %p73
    %p75 = scmp.ne.s32.totalorder %s67, %s69
    %p76 = scmp.eq.s32.totalorder %s17, 1
    %p77 = por %p75, %p76
    %p78 = scmp.ne.s32.totalorder %s69, %s70
    %p79 = scmp.eq.s32.totalorder %s17, 0
    %p80 = por %p78, %p79
    %p81 = scmp.ne.s32.totalorder %s69, %s70
    %p82 = scmp.eq.s32.totalorder %s18, 1
    %p83 = por %p81, %p82
    %p85 = scmp.ne.s32.totalorder %s70, %s84
    %p86 = scmp.eq.s32.totalorder %s18, 0
    %p87 = por %p85, %p86
    %s88 = ssub.s32 %s12, %s19
    %p89 = scmp.eq.s32.totalorder %s88, 0
    %s91 = sadd.s32 %s90, 1
    %s92 = scalar_select %p89, %s90, %s91
    %p95 = pneg %p89
    %p96 = scmp.eq.s32.totalorder %s12, 1
    %p97 = por %p95, %p96
    %p98 = scmp.ne.s32.totalorder %s90, %s93
    %p99 = scmp.eq.s32.totalorder %s12, 0
    %p100 = por %p98, %p99
    %p101 = scmp.ne.s32.totalorder %s90, %s93
    %p102 = scmp.eq.s32.totalorder %s17, 1
    %p103 = por %p101, %p102
    %p104 = scmp.ne.s32.totalorder %s93, %s94
    %p105 = scmp.eq.s32.totalorder %s17, 0
    %p106 = por %p104, %p105
    %p107 = scmp.ne.s32.totalorder %s93, %s94
    %p108 = scmp.eq.s32.totalorder %s18, 1
    %p109 = por %p107, %p108
    %p111 = scmp.ne.s32.totalorder %s94, %s110
    %p112 = scmp.eq.s32.totalorder %s18, 0
    %p113 = por %p111, %p112
    %s114 = ssub.s32 %s12, %s19
    %p115 = scmp.eq.s32.totalorder %s114, 0
    %s117 = sadd.s32 %s116, 1
    %s118 = scalar_select %p115, %s116, %s117
    %p121 = pneg %p115
    %p122 = scmp.eq.s32.totalorder %s12, 1
    %p123 = por %p121, %p122
    %p124 = scmp.ne.s32.totalorder %s116, %s119
    %p125 = scmp.eq.s32.totalorder %s12, 0
    %p126 = por %p124, %p125
    %p127 = scmp.ne.s32.totalorder %s116, %s119
    %p128 = scmp.eq.s32.totalorder %s17, 1
    %p129 = por %p127, %p128
    %p130 = scmp.ne.s32.totalorder %s119, %s120
    %p131 = scmp.eq.s32.totalorder %s17, 0
    %p132 = por %p130, %p131
    %p133 = scmp.ne.s32.totalorder %s119, %s120
    %p134 = scmp.eq.s32.totalorder %s18, 1
    %p135 = por %p133, %p134
    %p137 = scmp.ne.s32.totalorder %s120, %s136
    %p138 = scmp.eq.s32.totalorder %s18, 0
    %p139 = por %p137, %p138
    %s140 = ssub.s32 %s12, %s19
    %p141 = scmp.eq.s32.totalorder %s140, 0
    %s143 = sadd.s32 %s142, 1
    %s144 = scalar_select %p141, %s142, %s143
    %p147 = pneg %p141
    %p148 = scmp.eq.s32.totalorder %s12, 1
    %p149 = por %p147, %p148
    %p150 = scmp.ne.s32.totalorder %s142, %s145
    %p151 = scmp.eq.s32.totalorder %s12, 0
    %p152 = por %p150, %p151
    %p153 = scmp.ne.s32.totalorder %s142, %s145
    %p154 = scmp.eq.s32.totalorder %s17, 1
    %p155 = por %p153, %p154
    %p156 = scmp.ne.s32.totalorder %s145, %s146
    %p157 = scmp.eq.s32.totalorder %s17, 0
    %p158 = por %p156, %p157
    %p159 = scmp.ne.s32.totalorder %s145, %s146
    %p160 = scmp.eq.s32.totalorder %s18, 1
    %p161 = por %p159, %p160
    %p163 = scmp.ne.s32.totalorder %s146, %s162
    %p164 = scmp.eq.s32.totalorder %s18, 0
    %p165 = por %p163, %p164
    %p166 = scmp.le.s32.totalorder 1, %s12
    %p167 = scmp.lt.s32.totalorder %s12, 3
    %p168 = pnand %p166, %p167
    %p169 = pneg %p168
    // Predicated region
    $region9: #{_lambda_.10} parent=5 // pred_check
      _
    $region10: #{_lambda_.10} parent=5 // pred_check_branch
      %171 = sbr.rel (%p168) target = $region12
    $region11: #{_lambda_.10} parent=5 // pred_region
      %s172 = ssub.s32 %s12, 1
      // Predicated region
      $region13: #{_lambda_.10} parent=11 // pred_check
        %p173 = pneg %p59
      $region14: #{_lambda_.10} parent=11 // pred_check_branch
        %175 = sbr.rel (%p173) target = $region16
      $region15: #{_lambda_.10} parent=11 // pred_region
        _
      $region16: #{_lambda_.10} parent=11 // pred_fallthru
        _
      // Predicated region
      $region17: #{_lambda_.10} parent=11 // pred_check
        %p176 = pneg %p80
      $region18: #{_lambda_.10} parent=11 // pred_check_branch
        %178 = sbr.rel (%p176) target = $region20
      $region19: #{_lambda_.10} parent=11 // pred_region
        _
      $region20: #{_lambda_.10} parent=11 // pred_fallthru
        _
    $region12: #{_lambda_.10} parent=5 // pred_fallthru
      _
    %p179 = scmp.lt.s32.totalorder %s12, 2
    // Predicated region
    $region21: #{_lambda_.10} parent=5 // pred_check
      %p180 = pneg %p179
    $region22: #{_lambda_.10} parent=5 // pred_check_branch
      %182 = sbr.rel (%p180) target = $region24
    $region23: #{_lambda_.10} parent=5 // pred_region
      // Predicated region
      $region25: #{_lambda_.10} parent=23 // pred_check
        %p183 = pneg %p32
      $region26: #{_lambda_.10} parent=23 // pred_check_branch
        %185 = sbr.rel (%p183) target = $region28
      $region27: #{_lambda_.10} parent=23 // pred_region
        %p186 = scmp.lt.s32.totalorder %s12, 1
        %s187 = scalar_select %p186, %s12, 1
        %s188 = smul.addr %s187, 40
        %s189 = smul.addr %s188, 4
        %s190 = scalar_lea.vmem %s0, %s189
      $region28: #{_lambda_.10} parent=23 // pred_fallthru
        _
    $region24: #{_lambda_.10} parent=5 // pred_fallthru
      _
    %p191 = scmp.le.s32.totalorder 1, %s12
    %p192 = scmp.lt.s32.totalorder %s12, 3
    %p193 = pnand %p191, %p192
    %p194 = pneg %p193
    // Predicated region
    $region29: #{_lambda_.10} parent=5 // pred_check
      _
    $region30: #{_lambda_.10} parent=5 // pred_check_branch
      %196 = sbr.rel (%p193) target = $region32
    $region31: #{_lambda_.10} parent=5 // pred_region
      %s197 = ssub.s32 %s12, 1
      %p198 = scmp.lt.s32.totalorder %s17, 1
      %s199 = scalar_select %p198, %s17, 1
      %s200 = smul.addr %s199, 40
      %s201 = smul.addr %s200, 4
      %s202 = scalar_lea.vmem %s0, %s201
      %p203 = pneg %p38
      %p204 = pneg %p35
      %p205 = pneg %p59
      %p206 = pneg %p56
      %p207 = pneg %p80
      %p208 = pneg %p77
      %p209 = pneg %p106
      %p210 = pneg %p103
      %p211 = scmp.lt.s32.totalorder %s17, 1
      %s212 = scalar_select %p211, %s17, 1
      %s213 = smul.addr %s212, 8
      %s214 = smul.addr %s213, 4
      %s215 = scalar_lea.vmem %s3, %s214
      %p216 = pneg %p132
      %p217 = pneg %p129
      %p218 = scmp.lt.s32.totalorder %s17, 1
      %s219 = scalar_select %p218, %s17, 1
      %s220 = scalar_lea.vmem %s4, %s219
      %p221 = pneg %p158
      %p222 = pneg %p155
      %p223 = scmp.lt.s32.totalorder %s17, 1
      %s224 = scalar_select %p223, %s17, 1
      %s225 = scalar_lea.vmem %s5, %s224
      %p226 = scmp.lt.s32.totalorder %s17, 1
      %s227 = scalar_select %p226, %s17, 1
      %s228 = smul.addr %s227, 40
      %s229 = smul.addr %s228, 4
      %s230 = scalar_lea.vmem %s0, %s229
      %p231 = scmp.lt.s32.totalorder %s17, 1
      %s232 = scalar_select %p231, %s17, 1
      %s233 = smul.addr %s232, 8
      %s234 = smul.addr %s233, 4
      %s235 = scalar_lea.vmem %s3, %s234
      %p236 = scmp.lt.s32.totalorder %s17, 1
      %s237 = scalar_select %p236, %s17, 1
      %s238 = scalar_lea.vmem %s4, %s237
      %p239 = scmp.lt.s32.totalorder %s17, 1
      %s240 = scalar_select %p239, %s17, 1
      %s241 = scalar_lea.vmem %s5, %s240
      %v243 = vld [vmem:[%s230] sm:$0xff]
      %v244 = vld [vmem:[%s230 + $0x8] sm:$0xff]
      %v245 = vld [vmem:[%s230 + $0x10] sm:$0xff]
      %v246 = vld [vmem:[%s230 + $0x18] sm:$0xff]
      %v247 = vld [vmem:[%s230 + $0x20] sm:$0xff]
      %v248 = vld [vmem:[%s230 + $0x28] sm:$0xff]
      %v249 = vld [vmem:[%s230 + $0x30] sm:$0xff]
      %v250 = vld [vmem:[%s230 + $0x38] sm:$0xff]
      %v251 = vld [vmem:[%s1] sm:$0xf]
      %v252 = vld [vmem:[%s1 + $0x4] sm:$0xf]
      %v253 = vld [vmem:[%s1 + $0x8] sm:$0xf]
      %v254 = vld [vmem:[%s1 + $0xc] sm:$0xf]
      %v255 = vld [vmem:[%s1 + $0x10] sm:$0xf]
      %v256 = vld [vmem:[%s1 + $0x14] sm:$0xf]
      %v257 = vld [vmem:[%s1 + $0x18] sm:$0xf]
      %v258 = vld [vmem:[%s1 + $0x1c] sm:$0xf]
      %v259 = vld [vmem:[%s1 + $0x20] sm:$0xf]
      %v260 = vld [vmem:[%s1 + $0x24] sm:$0xf]
      %v261 = vld [vmem:[%s1 + $0x28] sm:$0xf]
      %v262 = vld [vmem:[%s1 + $0x2c] sm:$0xf]
      %v263 = vld [vmem:[%s1 + $0x30] sm:$0xf]
      %v264 = vld [vmem:[%s1 + $0x34] sm:$0xf]
      %v265 = vld [vmem:[%s1 + $0x38] sm:$0xf]
      %v266 = vld [vmem:[%s1 + $0x3c] sm:$0xf]
      %v267 = vld [vmem:[%s1 + $0x40] sm:$0xf]
      %v268 = vld [vmem:[%s1 + $0x44] sm:$0xf]
      %v269 = vld [vmem:[%s1 + $0x48] sm:$0xf]
      %v270 = vld [vmem:[%s1 + $0x4c] sm:$0xf]
      %s271 = scalar_lea.vmem %s230, 80
      %v272 = vld [vmem:[%s271] sm:$0xff]
      %v273 = vld [vmem:[%s271 + $0x8] sm:$0xff]
      %v274 = vld [vmem:[%s271 + $0x10] sm:$0xff]
      %v275 = vld [vmem:[%s271 + $0x18] sm:$0xff]
      %v276 = vld [vmem:[%s271 + $0x20] sm:$0xff]
      %v277 = vld [vmem:[%s271 + $0x28] sm:$0xff]
      %v278 = vld [vmem:[%s271 + $0x30] sm:$0xff]
      %v279 = vld [vmem:[%s271 + $0x38] sm:$0xff]
      %s280 = scalar_lea.vmem %s1, 80
      %v281 = vld [vmem:[%s280] sm:$0xf]
      %v282 = vld [vmem:[%s280 + $0x4] sm:$0xf]
      %v283 = vld [vmem:[%s280 + $0x8] sm:$0xf]
      %v284 = vld [vmem:[%s280 + $0xc] sm:$0xf]
      %v285 = vld [vmem:[%s280 + $0x10] sm:$0xf]
      %v286 = vld [vmem:[%s280 + $0x14] sm:$0xf]
      %v287 = vld [vmem:[%s280 + $0x18] sm:$0xf]
      %v288 = vld [vmem:[%s280 + $0x1c] sm:$0xf]
      %v289 = vld [vmem:[%s280 + $0x20] sm:$0xf]
      %v290 = vld [vmem:[%s280 + $0x24] sm:$0xf]
      %v291 = vld [vmem:[%s280 + $0x28] sm:$0xf]
      %v292 = vld [vmem:[%s280 + $0x2c] sm:$0xf]
      %v293 = vld [vmem:[%s280 + $0x30] sm:$0xf]
      %v294 = vld [vmem:[%s280 + $0x34] sm:$0xf]
      %v295 = vld [vmem:[%s280 + $0x38] sm:$0xf]
      %v296 = vld [vmem:[%s280 + $0x3c] sm:$0xf]
      %v297 = vld [vmem:[%s280 + $0x40] sm:$0xf]
      %v298 = vld [vmem:[%s280 + $0x44] sm:$0xf]
      %v299 = vld [vmem:[%s280 + $0x48] sm:$0xf]
      %v300 = vld [vmem:[%s280 + $0x4c] sm:$0xf]
      %v309 = vunpack.c.l.b16 %v272
      %v310 = vunpack.c.h.b16 %v272
      %v311 = vunpack.c.l.b16 %v273
      %v312 = vunpack.c.h.b16 %v273
      %v313 = vunpack.c.l.b16 %v274
      %v314 = vunpack.c.h.b16 %v274
      %v315 = vunpack.c.l.b16 %v275
      %v316 = vunpack.c.h.b16 %v275
      %v317 = vunpack.c.l.b16 %v276
      %v318 = vunpack.c.h.b16 %v276
      %v319 = vunpack.c.l.b16 %v277
      %v320 = vunpack.c.h.b16 %v277
      %v321 = vunpack.c.l.b16 %v278
      %v322 = vunpack.c.h.b16 %v278
      %v323 = vunpack.c.l.b16 %v279
      %v324 = vunpack.c.h.b16 %v279
      %v325 = vpack.c.b16 %v311, %v309
      %v326 = vpack.c.b16 %v312, %v310
      %v327 = vpack.c.b16 %v315, %v313
      %v328 = vpack.c.b16 %v316, %v314
      %v329 = vpack.c.b16 %v319, %v317
      %v330 = vpack.c.b16 %v320, %v318
      %v331 = vpack.c.b16 %v323, %v321
      %v332 = vpack.c.b16 %v324, %v322
      %v357 = vunpack.c.l.b16 %v281
      %v358 = vunpack.c.l.b16 %v282
      %v359 = vunpack.c.l.b16 %v283
      %v360 = vunpack.c.l.b16 %v284
      %v361 = vunpack.c.l.b16 %v285
      %v362 = vunpack.c.l.b16 %v286
      %v363 = vunpack.c.l.b16 %v287
      %v364 = vunpack.c.l.b16 %v288
      %v365 = vunpack.c.l.b16 %v289
      %v366 = vunpack.c.l.b16 %v290
      %v367 = vunpack.c.l.b16 %v291
      %v368 = vunpack.c.l.b16 %v292
      %v369 = vunpack.c.l.b16 %v293
      %v370 = vunpack.c.l.b16 %v294
      %v371 = vunpack.c.l.b16 %v295
      %v372 = vunpack.c.l.b16 %v296
      %v373 = vunpack.c.l.b16 %v297
      %v374 = vunpack.c.l.b16 %v298
      %v375 = vunpack.c.l.b16 %v299
      %v376 = vunpack.c.l.b16 %v300
      %v377 = vpack.c.b16 %v358, %v357
      %v378 = vpack.c.b16 %v360, %v359
      %v379 = vpack.c.b16 %v362, %v361
      %v380 = vpack.c.b16 %v364, %v363
      %v381 = vpack.c.b16 %v366, %v365
      %v382 = vpack.c.b16 %v368, %v367
      %v383 = vpack.c.b16 %v370, %v369
      %v384 = vpack.c.b16 %v372, %v371
      %v385 = vpack.c.b16 %v374, %v373
      %v386 = vpack.c.b16 %v376, %v375
      %vm397 = vcmask 261120
      %v399 = vsel %vm397, %v326, 0
      %v402 = vsel %vm397, %v328, 0
      %v405 = vsel %vm397, %v330, 0
      %v408 = vsel %vm397, %v332, 0
      %410 = vmatpush.bf16.msra.mxu0 %v384
      %411 = vmatpush.bf16.msra.mxu0 %v383
      %412 = vmatpush.bf16.msra.mxu0 %v382
      %413 = vmatpush.bf16.msra.mxu0 %v381
      %414 = vmatpush.bf16.msra.mxu0 %v380
      %415 = vmatpush.bf16.msra.mxu0 %v379
      %416 = vmatpush.bf16.msra.mxu0 %v378
      %417 = vmatpush.bf16.msra.mxu0 %v377
      %418 = vmatmul.bf16.gmra.mxu0 %v325
      %v419 = vpop.f32.mrf.mxu0
      %v420 = vadd.f32 0.0, %v419
      %v421 = vpop.f32.mrf.mxu0
      %v422 = vadd.f32 0.0, %v421
      %423 = vmatmul.bf16.gmra.mxu0 %v327
      %v424 = vpop.f32.mrf.mxu0
      %v425 = vadd.f32 0.0, %v424
      %v426 = vpop.f32.mrf.mxu0
      %v427 = vadd.f32 0.0, %v426
      %428 = vmatmul.bf16.gmra.mxu0 %v329
      %v429 = vpop.f32.mrf.mxu0
      %v430 = vadd.f32 0.0, %v429
      %v431 = vpop.f32.mrf.mxu0
      %v432 = vadd.f32 0.0, %v431
      %433 = vmatmul.bf16.gmra.mxu0 %v331
      %v434 = vpop.f32.mrf.mxu0
      %v435 = vadd.f32 0.0, %v434
      %v436 = vpop.f32.mrf.mxu0
      %v437 = vadd.f32 0.0, %v436
      %438 = vdwg.mxu0
      %439 = vmatpush.bf16.msra.mxu0 0
      %440 = vmatpush.bf16.msra.mxu0 0
      %441 = vmatpush.bf16.msra.mxu0 0
      %442 = vmatpush.bf16.msra.mxu0 0
      %443 = vmatpush.bf16.msra.mxu0 0
      %444 = vmatpush.bf16.msra.mxu0 0
      %445 = vmatpush.bf16.msra.mxu0 %v386
      %446 = vmatpush.bf16.msra.mxu0 %v385
      %447 = vmatmul.bf16.gmra.mxu0 %v399
      %v448 = vpop.f32.mrf.mxu0
      %v449 = vadd.f32 %v420, %v448
      %v450 = vpop.f32.mrf.mxu0
      %v451 = vadd.f32 %v422, %v450
      %452 = vmatmul.bf16.gmra.mxu0 %v402
      %v453 = vpop.f32.mrf.mxu0
      %v454 = vadd.f32 %v425, %v453
      %v455 = vpop.f32.mrf.mxu0
      %v456 = vadd.f32 %v427, %v455
      %457 = vmatmul.bf16.gmra.mxu0 %v405
      %v458 = vpop.f32.mrf.mxu0
      %v459 = vadd.f32 %v430, %v458
      %v460 = vpop.f32.mrf.mxu0
      %v461 = vadd.f32 %v432, %v460
      %462 = vmatmul.bf16.gmra.mxu0 %v408
      %v463 = vpop.f32.mrf.mxu0
      %v464 = vadd.f32 %v435, %v463
      %v465 = vpop.f32.mrf.mxu0
      %v466 = vadd.f32 %v437, %v465
      %467 = vdwg.mxu0
      %v476 = vunpack.c.l.b16 %v243
      %v477 = vunpack.c.h.b16 %v243
      %v478 = vunpack.c.l.b16 %v244
      %v479 = vunpack.c.h.b16 %v244
      %v480 = vunpack.c.l.b16 %v245
      %v481 = vunpack.c.h.b16 %v245
      %v482 = vunpack.c.l.b16 %v246
      %v483 = vunpack.c.h.b16 %v246
      %v484 = vunpack.c.l.b16 %v247
      %v485 = vunpack.c.h.b16 %v247
      %v486 = vunpack.c.l.b16 %v248
      %v487 = vunpack.c.h.b16 %v248
      %v488 = vunpack.c.l.b16 %v249
      %v489 = vunpack.c.h.b16 %v249
      %v490 = vunpack.c.l.b16 %v250
      %v491 = vunpack.c.h.b16 %v250
      %v492 = vpack.c.b16 %v478, %v476
      %v493 = vpack.c.b16 %v479, %v477
      %v494 = vpack.c.b16 %v482, %v480
      %v495 = vpack.c.b16 %v483, %v481
      %v496 = vpack.c.b16 %v486, %v484
      %v497 = vpack.c.b16 %v487, %v485
      %v498 = vpack.c.b16 %v490, %v488
      %v499 = vpack.c.b16 %v491, %v489
      %v524 = vunpack.c.l.b16 %v251
      %v525 = vunpack.c.l.b16 %v252
      %v526 = vunpack.c.l.b16 %v253
      %v527 = vunpack.c.l.b16 %v254
      %v528 = vunpack.c.l.b16 %v255
      %v529 = vunpack.c.l.b16 %v256
      %v530 = vunpack.c.l.b16 %v257
      %v531 = vunpack.c.l.b16 %v258
      %v532 = vunpack.c.l.b16 %v259
      %v533 = vunpack.c.l.b16 %v260
      %v534 = vunpack.c.l.b16 %v261
      %v535 = vunpack.c.l.b16 %v262
      %v536 = vunpack.c.l.b16 %v263
      %v537 = vunpack.c.l.b16 %v264
      %v538 = vunpack.c.l.b16 %v265
      %v539 = vunpack.c.l.b16 %v266
      %v540 = vunpack.c.l.b16 %v267
      %v541 = vunpack.c.l.b16 %v268
      %v542 = vunpack.c.l.b16 %v269
      %v543 = vunpack.c.l.b16 %v270
      %v544 = vpack.c.b16 %v525, %v524
      %v545 = vpack.c.b16 %v527, %v526
      %v546 = vpack.c.b16 %v529, %v528
      %v547 = vpack.c.b16 %v531, %v530
      %v548 = vpack.c.b16 %v533, %v532
      %v549 = vpack.c.b16 %v535, %v534
      %v550 = vpack.c.b16 %v537, %v536
      %v551 = vpack.c.b16 %v539, %v538
      %v552 = vpack.c.b16 %v541, %v540
      %v553 = vpack.c.b16 %v543, %v542
      %v565 = vsel %vm397, %v493, 0
      %v568 = vsel %vm397, %v495, 0
      %v571 = vsel %vm397, %v497, 0
      %v574 = vsel %vm397, %v499, 0
      %576 = vmatpush.bf16.msra.mxu0 %v551
      %577 = vmatpush.bf16.msra.mxu0 %v550
      %578 = vmatpush.bf16.msra.mxu0 %v549
      %579 = vmatpush.bf16.msra.mxu0 %v548
      %580 = vmatpush.bf16.msra.mxu0 %v547
      %581 = vmatpush.bf16.msra.mxu0 %v546
      %582 = vmatpush.bf16.msra.mxu0 %v545
      %583 = vmatpush.bf16.msra.mxu0 %v544
      %584 = vmatmul.bf16.gmra.mxu0 %v492
      %v585 = vpop.f32.mrf.mxu0
      %v586 = vadd.f32 %v449, %v585
      %v587 = vpop.f32.mrf.mxu0
      %v588 = vadd.f32 %v451, %v587
      %589 = vmatmul.bf16.gmra.mxu0 %v494
      %v590 = vpop.f32.mrf.mxu0
      %v591 = vadd.f32 %v454, %v590
      %v592 = vpop.f32.mrf.mxu0
      %v593 = vadd.f32 %v456, %v592
      %594 = vmatmul.bf16.gmra.mxu0 %v496
      %v595 = vpop.f32.mrf.mxu0
      %v596 = vadd.f32 %v459, %v595
      %v597 = vpop.f32.mrf.mxu0
      %v598 = vadd.f32 %v461, %v597
      %599 = vmatmul.bf16.gmra.mxu0 %v498
      %v600 = vpop.f32.mrf.mxu0
      %v601 = vadd.f32 %v464, %v600
      %v602 = vpop.f32.mrf.mxu0
      %v603 = vadd.f32 %v466, %v602
      %604 = vdwg.mxu0
      %605 = vmatpush.bf16.msra.mxu0 0
      %606 = vmatpush.bf16.msra.mxu0 0
      %607 = vmatpush.bf16.msra.mxu0 0
      %608 = vmatpush.bf16.msra.mxu0 0
      %609 = vmatpush.bf16.msra.mxu0 0
      %610 = vmatpush.bf16.msra.mxu0 0
      %611 = vmatpush.bf16.msra.mxu0 %v553
      %612 = vmatpush.bf16.msra.mxu0 %v552
      %613 = vmatmul.bf16.gmra.mxu0 %v565
      %v614 = vpop.f32.mrf.mxu0
      %v615 = vadd.f32 %v586, %v614
      %v616 = vpop.f32.mrf.mxu0
      %v617 = vadd.f32 %v588, %v616
      %618 = vmatmul.bf16.gmra.mxu0 %v568
      %v619 = vpop.f32.mrf.mxu0
      %v620 = vadd.f32 %v591, %v619
      %v621 = vpop.f32.mrf.mxu0
      %v622 = vadd.f32 %v593, %v621
      %623 = vmatmul.bf16.gmra.mxu0 %v571
      %v624 = vpop.f32.mrf.mxu0
      %v625 = vadd.f32 %v596, %v624
      %v626 = vpop.f32.mrf.mxu0
      %v627 = vadd.f32 %v598, %v626
      %628 = vmatmul.bf16.gmra.mxu0 %v574
      %v629 = vpop.f32.mrf.mxu0
      %v630 = vadd.f32 %v601, %v629
      %v631 = vpop.f32.mrf.mxu0
      %v632 = vadd.f32 %v603, %v631
      %633 = vdwg.mxu0
      %v634 = vld [vmem:[%s230 + $0x8] sm:$0xff]
      %v635 = vld [vmem:[%s230 + $0x10] sm:$0xff]
      %v636 = vld [vmem:[%s230 + $0x18] sm:$0xff]
      %v637 = vld [vmem:[%s230 + $0x20] sm:$0xff]
      %v638 = vld [vmem:[%s230 + $0x28] sm:$0xff]
      %v639 = vld [vmem:[%s230 + $0x30] sm:$0xff]
      %v640 = vld [vmem:[%s230 + $0x38] sm:$0xff]
      %v641 = vld [vmem:[%s230 + $0x40] sm:$0xff]
      %s642 = scalar_lea.vmem %s1, 160
      %v643 = vld [vmem:[%s642] sm:$0xf]
      %v644 = vld [vmem:[%s642 + $0x4] sm:$0xf]
      %v645 = vld [vmem:[%s642 + $0x8] sm:$0xf]
      %v646 = vld [vmem:[%s642 + $0xc] sm:$0xf]
      %v647 = vld [vmem:[%s642 + $0x10] sm:$0xf]
      %v648 = vld [vmem:[%s642 + $0x14] sm:$0xf]
      %v649 = vld [vmem:[%s642 + $0x18] sm:$0xf]
      %v650 = vld [vmem:[%s642 + $0x1c] sm:$0xf]
      %v651 = vld [vmem:[%s642 + $0x20] sm:$0xf]
      %v652 = vld [vmem:[%s642 + $0x24] sm:$0xf]
      %v653 = vld [vmem:[%s642 + $0x28] sm:$0xf]
      %v654 = vld [vmem:[%s642 + $0x2c] sm:$0xf]
      %v655 = vld [vmem:[%s642 + $0x30] sm:$0xf]
      %v656 = vld [vmem:[%s642 + $0x34] sm:$0xf]
      %v657 = vld [vmem:[%s642 + $0x38] sm:$0xf]
      %v658 = vld [vmem:[%s642 + $0x3c] sm:$0xf]
      %v659 = vld [vmem:[%s642 + $0x40] sm:$0xf]
      %v660 = vld [vmem:[%s642 + $0x44] sm:$0xf]
      %v661 = vld [vmem:[%s642 + $0x48] sm:$0xf]
      %v662 = vld [vmem:[%s642 + $0x4c] sm:$0xf]
      %v671 = vunpack.c.l.b16 %v634
      %v672 = vunpack.c.h.b16 %v634
      %v673 = vunpack.c.l.b16 %v635
      %v674 = vunpack.c.h.b16 %v635
      %v675 = vunpack.c.l.b16 %v636
      %v676 = vunpack.c.h.b16 %v636
      %v677 = vunpack.c.l.b16 %v637
      %v678 = vunpack.c.h.b16 %v637
      %v679 = vunpack.c.l.b16 %v638
      %v680 = vunpack.c.h.b16 %v638
      %v681 = vunpack.c.l.b16 %v639
      %v682 = vunpack.c.h.b16 %v639
      %v683 = vunpack.c.l.b16 %v640
      %v684 = vunpack.c.h.b16 %v640
      %v685 = vunpack.c.l.b16 %v641
      %v686 = vunpack.c.h.b16 %v641
      %v687 = vpack.c.b16 %v673, %v671
      %v688 = vpack.c.b16 %v674, %v672
      %v689 = vpack.c.b16 %v677, %v675
      %v690 = vpack.c.b16 %v678, %v676
      %v691 = vpack.c.b16 %v681, %v679
      %v692 = vpack.c.b16 %v682, %v680
      %v693 = vpack.c.b16 %v685, %v683
      %v694 = vpack.c.b16 %v686, %v684
      %v719 = vunpack.c.l.b16 %v643
      %v720 = vunpack.c.l.b16 %v644
      %v721 = vunpack.c.l.b16 %v645
      %v722 = vunpack.c.l.b16 %v646
      %v723 = vunpack.c.l.b16 %v647
      %v724 = vunpack.c.l.b16 %v648
      %v725 = vunpack.c.l.b16 %v649
      %v726 = vunpack.c.l.b16 %v650
      %v727 = vunpack.c.l.b16 %v651
      %v728 = vunpack.c.l.b16 %v652
      %v729 = vunpack.c.l.b16 %v653
      %v730 = vunpack.c.l.b16 %v654
      %v731 = vunpack.c.l.b16 %v655
      %v732 = vunpack.c.l.b16 %v656
      %v733 = vunpack.c.l.b16 %v657
      %v734 = vunpack.c.l.b16 %v658
      %v735 = vunpack.c.l.b16 %v659
      %v736 = vunpack.c.l.b16 %v660
      %v737 = vunpack.c.l.b16 %v661
      %v738 = vunpack.c.l.b16 %v662
      %v739 = vpack.c.b16 %v720, %v719
      %v740 = vpack.c.b16 %v722, %v721
      %v741 = vpack.c.b16 %v724, %v723
      %v742 = vpack.c.b16 %v726, %v725
      %v743 = vpack.c.b16 %v728, %v727
      %v744 = vpack.c.b16 %v730, %v729
      %v745 = vpack.c.b16 %v732, %v731
      %v746 = vpack.c.b16 %v734, %v733
      %v747 = vpack.c.b16 %v736, %v735
      %v748 = vpack.c.b16 %v738, %v737
      %v760 = vsel %vm397, %v688, 0
      %v763 = vsel %vm397, %v690, 0
      %v766 = vsel %vm397, %v692, 0
      %v769 = vsel %vm397, %v694, 0
      %771 = vmatpush.bf16.msra.mxu0 %v746
      %772 = vmatpush.bf16.msra.mxu0 %v745
      %773 = vmatpush.bf16.msra.mxu0 %v744
      %774 = vmatpush.bf16.msra.mxu0 %v743
      %775 = vmatpush.bf16.msra.mxu0 %v742
      %776 = vmatpush.bf16.msra.mxu0 %v741
      %777 = vmatpush.bf16.msra.mxu0 %v740
      %778 = vmatpush.bf16.msra.mxu0 %v739
      %779 = vmatmul.bf16.gmra.mxu0 %v687
      %v780 = vpop.f32.mrf.mxu0
      %v781 = vadd.f32 0.0, %v780
      %v782 = vpop.f32.mrf.mxu0
      %v783 = vadd.f32 0.0, %v782
      %784 = vmatmul.bf16.gmra.mxu0 %v689
      %v785 = vpop.f32.mrf.mxu0
      %v786 = vadd.f32 0.0, %v785
      %v787 = vpop.f32.mrf.mxu0
      %v788 = vadd.f32 0.0, %v787
      %789 = vmatmul.bf16.gmra.mxu0 %v691
      %v790 = vpop.f32.mrf.mxu0
      %v791 = vadd.f32 0.0, %v790
      %v792 = vpop.f32.mrf.mxu0
      %v793 = vadd.f32 0.0, %v792
      %794 = vmatmul.bf16.gmra.mxu0 %v693
      %v795 = vpop.f32.mrf.mxu0
      %v796 = vadd.f32 0.0, %v795
      %v797 = vpop.f32.mrf.mxu0
      %v798 = vadd.f32 0.0, %v797
      %799 = vdwg.mxu0
      %800 = vmatpush.bf16.msra.mxu0 0
      %801 = vmatpush.bf16.msra.mxu0 0
      %802 = vmatpush.bf16.msra.mxu0 0
      %803 = vmatpush.bf16.msra.mxu0 0
      %804 = vmatpush.bf16.msra.mxu0 0
      %805 = vmatpush.bf16.msra.mxu0 0
      %806 = vmatpush.bf16.msra.mxu0 %v748
      %807 = vmatpush.bf16.msra.mxu0 %v747
      %808 = vmatmul.bf16.gmra.mxu0 %v760
      %v809 = vpop.f32.mrf.mxu0
      %v810 = vadd.f32 %v781, %v809
      %v811 = vpop.f32.mrf.mxu0
      %v812 = vadd.f32 %v783, %v811
      %813 = vmatmul.bf16.gmra.mxu0 %v763
      %v814 = vpop.f32.mrf.mxu0
      %v815 = vadd.f32 %v786, %v814
      %v816 = vpop.f32.mrf.mxu0
      %v817 = vadd.f32 %v788, %v816
      %818 = vmatmul.bf16.gmra.mxu0 %v766
      %v819 = vpop.f32.mrf.mxu0
      %v820 = vadd.f32 %v791, %v819
      %v821 = vpop.f32.mrf.mxu0
      %v822 = vadd.f32 %v793, %v821
      %823 = vmatmul.bf16.gmra.mxu0 %v769
      %v824 = vpop.f32.mrf.mxu0
      %v825 = vadd.f32 %v796, %v824
      %v826 = vpop.f32.mrf.mxu0
      %v827 = vadd.f32 %v798, %v826
      %828 = vdwg.mxu0
      %v829 = vadd.f32 %v615, %v810
      %v830 = vadd.f32 %v617, %v812
      %v831 = vadd.f32 %v620, %v815
      %v832 = vadd.f32 %v622, %v817
      %v833 = vadd.f32 %v625, %v820
      %v834 = vadd.f32 %v627, %v822
      %v835 = vadd.f32 %v630, %v825
      %v836 = vadd.f32 %v632, %v827
      %v837 = vld [vmem:[%s271 + $0x8] sm:$0xff]
      %v838 = vld [vmem:[%s271 + $0x10] sm:$0xff]
      %v839 = vld [vmem:[%s271 + $0x18] sm:$0xff]
      %v840 = vld [vmem:[%s271 + $0x20] sm:$0xff]
      %v841 = vld [vmem:[%s271 + $0x28] sm:$0xff]
      %v842 = vld [vmem:[%s271 + $0x30] sm:$0xff]
      %v843 = vld [vmem:[%s271 + $0x38] sm:$0xff]
      %v844 = vld [vmem:[%s271 + $0x40] sm:$0xff]
      %s845 = scalar_lea.vmem %s1, 240
      %v846 = vld [vmem:[%s845] sm:$0xf]
      %v847 = vld [vmem:[%s845 + $0x4] sm:$0xf]
      %v848 = vld [vmem:[%s845 + $0x8] sm:$0xf]
      %v849 = vld [vmem:[%s845 + $0xc] sm:$0xf]
      %v850 = vld [vmem:[%s845 + $0x10] sm:$0xf]
      %v851 = vld [vmem:[%s845 + $0x14] sm:$0xf]
      %v852 = vld [vmem:[%s845 + $0x18] sm:$0xf]
      %v853 = vld [vmem:[%s845 + $0x1c] sm:$0xf]
      %v854 = vld [vmem:[%s845 + $0x20] sm:$0xf]
      %v855 = vld [vmem:[%s845 + $0x24] sm:$0xf]
      %v856 = vld [vmem:[%s845 + $0x28] sm:$0xf]
      %v857 = vld [vmem:[%s845 + $0x2c] sm:$0xf]
      %v858 = vld [vmem:[%s845 + $0x30] sm:$0xf]
      %v859 = vld [vmem:[%s845 + $0x34] sm:$0xf]
      %v860 = vld [vmem:[%s845 + $0x38] sm:$0xf]
      %v861 = vld [vmem:[%s845 + $0x3c] sm:$0xf]
      %v862 = vld [vmem:[%s845 + $0x40] sm:$0xf]
      %v863 = vld [vmem:[%s845 + $0x44] sm:$0xf]
      %v864 = vld [vmem:[%s845 + $0x48] sm:$0xf]
      %v865 = vld [vmem:[%s845 + $0x4c] sm:$0xf]
      %v874 = vunpack.c.l.b16 %v837
      %v875 = vunpack.c.h.b16 %v837
      %v876 = vunpack.c.l.b16 %v838
      %v877 = vunpack.c.h.b16 %v838
      %v878 = vunpack.c.l.b16 %v839
      %v879 = vunpack.c.h.b16 %v839
      %v880 = vunpack.c.l.b16 %v840
      %v881 = vunpack.c.h.b16 %v840
      %v882 = vunpack.c.l.b16 %v841
      %v883 = vunpack.c.h.b16 %v841
      %v884 = vunpack.c.l.b16 %v842
      %v885 = vunpack.c.h.b16 %v842
      %v886 = vunpack.c.l.b16 %v843
      %v887 = vunpack.c.h.b16 %v843
      %v888 = vunpack.c.l.b16 %v844
      %v889 = vunpack.c.h.b16 %v844
      %v890 = vpack.c.b16 %v876, %v874
      %v891 = vpack.c.b16 %v877, %v875
      %v892 = vpack.c.b16 %v880, %v878
      %v893 = vpack.c.b16 %v881, %v879
      %v894 = vpack.c.b16 %v884, %v882
      %v895 = vpack.c.b16 %v885, %v883
      %v896 = vpack.c.b16 %v888, %v886
      %v897 = vpack.c.b16 %v889, %v887
      %v922 = vunpack.c.l.b16 %v846
      %v923 = vunpack.c.l.b16 %v847
      %v924 = vunpack.c.l.b16 %v848
      %v925 = vunpack.c.l.b16 %v849
      %v926 = vunpack.c.l.b16 %v850
      %v927 = vunpack.c.l.b16 %v851
      %v928 = vunpack.c.l.b16 %v852
      %v929 = vunpack.c.l.b16 %v853
      %v930 = vunpack.c.l.b16 %v854
      %v931 = vunpack.c.l.b16 %v855
      %v932 = vunpack.c.l.b16 %v856
      %v933 = vunpack.c.l.b16 %v857
      %v934 = vunpack.c.l.b16 %v858
      %v935 = vunpack.c.l.b16 %v859
      %v936 = vunpack.c.l.b16 %v860
      %v937 = vunpack.c.l.b16 %v861
      %v938 = vunpack.c.l.b16 %v862
      %v939 = vunpack.c.l.b16 %v863
      %v940 = vunpack.c.l.b16 %v864
      %v941 = vunpack.c.l.b16 %v865
      %v942 = vpack.c.b16 %v923, %v922
      %v943 = vpack.c.b16 %v925, %v924
      %v944 = vpack.c.b16 %v927, %v926
      %v945 = vpack.c.b16 %v929, %v928
      %v946 = vpack.c.b16 %v931, %v930
      %v947 = vpack.c.b16 %v933, %v932
      %v948 = vpack.c.b16 %v935, %v934
      %v949 = vpack.c.b16 %v937, %v936
      %v950 = vpack.c.b16 %v939, %v938
      %v951 = vpack.c.b16 %v941, %v940
      %v963 = vsel %vm397, %v891, 0
      %v966 = vsel %vm397, %v893, 0
      %v969 = vsel %vm397, %v895, 0
      %v972 = vsel %vm397, %v897, 0
      %974 = vmatpush.bf16.msra.mxu0 %v949
      %975 = vmatpush.bf16.msra.mxu0 %v948
      %976 = vmatpush.bf16.msra.mxu0 %v947
      %977 = vmatpush.bf16.msra.mxu0 %v946
      %978 = vmatpush.bf16.msra.mxu0 %v945
      %979 = vmatpush.bf16.msra.mxu0 %v944
      %980 = vmatpush.bf16.msra.mxu0 %v943
      %981 = vmatpush.bf16.msra.mxu0 %v942
      %982 = vmatmul.bf16.gmra.mxu0 %v890
      %v983 = vpop.f32.mrf.mxu0
      %v984 = vadd.f32 0.0, %v983
      %v985 = vpop.f32.mrf.mxu0
      %v986 = vadd.f32 0.0, %v985
      %987 = vmatmul.bf16.gmra.mxu0 %v892
      %v988 = vpop.f32.mrf.mxu0
      %v989 = vadd.f32 0.0, %v988
      %v990 = vpop.f32.mrf.mxu0
      %v991 = vadd.f32 0.0, %v990
      %992 = vmatmul.bf16.gmra.mxu0 %v894
      %v993 = vpop.f32.mrf.mxu0
      %v994 = vadd.f32 0.0, %v993
      %v995 = vpop.f32.mrf.mxu0
      %v996 = vadd.f32 0.0, %v995
      %997 = vmatmul.bf16.gmra.mxu0 %v896
      %v998 = vpop.f32.mrf.mxu0
      %v999 = vadd.f32 0.0, %v998
      %v1000 = vpop.f32.mrf.mxu0
      %v1001 = vadd.f32 0.0, %v1000
      %1002 = vdwg.mxu0
      %1003 = vmatpush.bf16.msra.mxu0 0
      %1004 = vmatpush.bf16.msra.mxu0 0
      %1005 = vmatpush.bf16.msra.mxu0 0
      %1006 = vmatpush.bf16.msra.mxu0 0
      %1007 = vmatpush.bf16.msra.mxu0 0
      %1008 = vmatpush.bf16.msra.mxu0 0
      %1009 = vmatpush.bf16.msra.mxu0 %v951
      %1010 = vmatpush.bf16.msra.mxu0 %v950
      %1011 = vmatmul.bf16.gmra.mxu0 %v963
      %v1012 = vpop.f32.mrf.mxu0
      %v1013 = vadd.f32 %v984, %v1012
      %v1014 = vpop.f32.mrf.mxu0
      %v1015 = vadd.f32 %v986, %v1014
      %1016 = vmatmul.bf16.gmra.mxu0 %v966
      %v1017 = vpop.f32.mrf.mxu0
      %v1018 = vadd.f32 %v989, %v1017
      %v1019 = vpop.f32.mrf.mxu0
      %v1020 = vadd.f32 %v991, %v1019
      %1021 = vmatmul.bf16.gmra.mxu0 %v969
      %v1022 = vpop.f32.mrf.mxu0
      %v1023 = vadd.f32 %v994, %v1022
      %v1024 = vpop.f32.mrf.mxu0
      %v1025 = vadd.f32 %v996, %v1024
      %1026 = vmatmul.bf16.gmra.mxu0 %v972
      %v1027 = vpop.f32.mrf.mxu0
      %v1028 = vadd.f32 %v999, %v1027
      %v1029 = vpop.f32.mrf.mxu0
      %v1030 = vadd.f32 %v1001, %v1029
      %1031 = vdwg.mxu0
      %v1032 = vadd.f32 %v829, %v1013
      %v1033 = vadd.f32 %v830, %v1015
      %v1034 = vadd.f32 %v831, %v1018
      %v1035 = vadd.f32 %v832, %v1020
      %v1036 = vadd.f32 %v833, %v1023
      %v1037 = vadd.f32 %v834, %v1025
      %v1038 = vadd.f32 %v835, %v1028
      %v1039 = vadd.f32 %v836, %v1030
      %v1040 = vld [vmem:[%s230 + $0x10] sm:$0xff]
      %v1041 = vld [vmem:[%s230 + $0x18] sm:$0xff]
      %v1042 = vld [vmem:[%s230 + $0x20] sm:$0xff]
      %v1043 = vld [vmem:[%s230 + $0x28] sm:$0xff]
      %v1044 = vld [vmem:[%s230 + $0x30] sm:$0xff]
      %v1045 = vld [vmem:[%s230 + $0x38] sm:$0xff]
      %v1046 = vld [vmem:[%s230 + $0x40] sm:$0xff]
      %v1047 = vld [vmem:[%s230 + $0x48] sm:$0xff]
      %s1048 = scalar_lea.vmem %s1, 320
      %v1049 = vld [vmem:[%s1048] sm:$0xf]
      %v1050 = vld [vmem:[%s1048 + $0x4] sm:$0xf]
      %v1051 = vld [vmem:[%s1048 + $0x8] sm:$0xf]
      %v1052 = vld [vmem:[%s1048 + $0xc] sm:$0xf]
      %v1053 = vld [vmem:[%s1048 + $0x10] sm:$0xf]
      %v1054 = vld [vmem:[%s1048 + $0x14] sm:$0xf]
      %v1055 = vld [vmem:[%s1048 + $0x18] sm:$0xf]
      %v1056 = vld [vmem:[%s1048 + $0x1c] sm:$0xf]
      %v1057 = vld [vmem:[%s1048 + $0x20] sm:$0xf]
      %v1058 = vld [vmem:[%s1048 + $0x24] sm:$0xf]
      %v1059 = vld [vmem:[%s1048 + $0x28] sm:$0xf]
      %v1060 = vld [vmem:[%s1048 + $0x2c] sm:$0xf]
      %v1061 = vld [vmem:[%s1048 + $0x30] sm:$0xf]
      %v1062 = vld [vmem:[%s1048 + $0x34] sm:$0xf]
      %v1063 = vld [vmem:[%s1048 + $0x38] sm:$0xf]
      %v1064 = vld [vmem:[%s1048 + $0x3c] sm:$0xf]
      %v1065 = vld [vmem:[%s1048 + $0x40] sm:$0xf]
      %v1066 = vld [vmem:[%s1048 + $0x44] sm:$0xf]
      %v1067 = vld [vmem:[%s1048 + $0x48] sm:$0xf]
      %v1068 = vld [vmem:[%s1048 + $0x4c] sm:$0xf]
      %v1077 = vunpack.c.l.b16 %v1040
      %v1078 = vunpack.c.h.b16 %v1040
      %v1079 = vunpack.c.l.b16 %v1041
      %v1080 = vunpack.c.h.b16 %v1041
      %v1081 = vunpack.c.l.b16 %v1042
      %v1082 = vunpack.c.h.b16 %v1042
      %v1083 = vunpack.c.l.b16 %v1043
      %v1084 = vunpack.c.h.b16 %v1043
      %v1085 = vunpack.c.l.b16 %v1044
      %v1086 = vunpack.c.h.b16 %v1044
      %v1087 = vunpack.c.l.b16 %v1045
      %v1088 = vunpack.c.h.b16 %v1045
      %v1089 = vunpack.c.l.b16 %v1046
      %v1090 = vunpack.c.h.b16 %v1046
      %v1091 = vunpack.c.l.b16 %v1047
      %v1092 = vunpack.c.h.b16 %v1047
      %v1093 = vpack.c.b16 %v1079, %v1077
      %v1094 = vpack.c.b16 %v1080, %v1078
      %v1095 = vpack.c.b16 %v1083, %v1081
      %v1096 = vpack.c.b16 %v1084, %v1082
      %v1097 = vpack.c.b16 %v1087, %v1085
      %v1098 = vpack.c.b16 %v1088, %v1086
      %v1099 = vpack.c.b16 %v1091, %v1089
      %v1100 = vpack.c.b16 %v1092, %v1090
      %v1125 = vunpack.c.l.b16 %v1049
      %v1126 = vunpack.c.l.b16 %v1050
      %v1127 = vunpack.c.l.b16 %v1051
      %v1128 = vunpack.c.l.b16 %v1052
      %v1129 = vunpack.c.l.b16 %v1053
      %v1130 = vunpack.c.l.b16 %v1054
      %v1131 = vunpack.c.l.b16 %v1055
      %v1132 = vunpack.c.l.b16 %v1056
      %v1133 = vunpack.c.l.b16 %v1057
      %v1134 = vunpack.c.l.b16 %v1058
      %v1135 = vunpack.c.l.b16 %v1059
      %v1136 = vunpack.c.l.b16 %v1060
      %v1137 = vunpack.c.l.b16 %v1061
      %v1138 = vunpack.c.l.b16 %v1062
      %v1139 = vunpack.c.l.b16 %v1063
      %v1140 = vunpack.c.l.b16 %v1064
      %v1141 = vunpack.c.l.b16 %v1065
      %v1142 = vunpack.c.l.b16 %v1066
      %v1143 = vunpack.c.l.b16 %v1067
      %v1144 = vunpack.c.l.b16 %v1068
      %v1145 = vpack.c.b16 %v1126, %v1125
      %v1146 = vpack.c.b16 %v1128, %v1127
      %v1147 = vpack.c.b16 %v1130, %v1129
      %v1148 = vpack.c.b16 %v1132, %v1131
      %v1149 = vpack.c.b16 %v1134, %v1133
      %v1150 = vpack.c.b16 %v1136, %v1135
      %v1151 = vpack.c.b16 %v1138, %v1137
      %v1152 = vpack.c.b16 %v1140, %v1139
      %v1153 = vpack.c.b16 %v1142, %v1141
      %v1154 = vpack.c.b16 %v1144, %v1143
      %v1166 = vsel %vm397, %v1094, 0
      %v1169 = vsel %vm397, %v1096, 0
      %v1172 = vsel %vm397, %v1098, 0
      %v1175 = vsel %vm397, %v1100, 0
      %1177 = vmatpush.bf16.msra.mxu0 %v1152
      %1178 = vmatpush.bf16.msra.mxu0 %v1151
      %1179 = vmatpush.bf16.msra.mxu0 %v1150
      %1180 = vmatpush.bf16.msra.mxu0 %v1149
      %1181 = vmatpush.bf16.msra.mxu0 %v1148
      %1182 = vmatpush.bf16.msra.mxu0 %v1147
      %1183 = vmatpush.bf16.msra.mxu0 %v1146
      %1184 = vmatpush.bf16.msra.mxu0 %v1145
      %1185 = vmatmul.bf16.gmra.mxu0 %v1093
      %v1186 = vpop.f32.mrf.mxu0
      %v1187 = vadd.f32 0.0, %v1186
      %v1188 = vpop.f32.mrf.mxu0
      %v1189 = vadd.f32 0.0, %v1188
      %1190 = vmatmul.bf16.gmra.mxu0 %v1095
      %v1191 = vpop.f32.mrf.mxu0
      %v1192 = vadd.f32 0.0, %v1191
      %v1193 = vpop.f32.mrf.mxu0
      %v1194 = vadd.f32 0.0, %v1193
      %1195 = vmatmul.bf16.gmra.mxu0 %v1097
      %v1196 = vpop.f32.mrf.mxu0
      %v1197 = vadd.f32 0.0, %v1196
      %v1198 = vpop.f32.mrf.mxu0
      %v1199 = vadd.f32 0.0, %v1198
      %1200 = vmatmul.bf16.gmra.mxu0 %v1099
      %v1201 = vpop.f32.mrf.mxu0
      %v1202 = vadd.f32 0.0, %v1201
      %v1203 = vpop.f32.mrf.mxu0
      %v1204 = vadd.f32 0.0, %v1203
      %1205 = vdwg.mxu0
      %1206 = vmatpush.bf16.msra.mxu0 0
      %1207 = vmatpush.bf16.msra.mxu0 0
      %1208 = vmatpush.bf16.msra.mxu0 0
      %1209 = vmatpush.bf16.msra.mxu0 0
      %1210 = vmatpush.bf16.msra.mxu0 0
      %1211 = vmatpush.bf16.msra.mxu0 0
      %1212 = vmatpush.bf16.msra.mxu0 %v1154
      %1213 = vmatpush.bf16.msra.mxu0 %v1153
      %1214 = vmatmul.bf16.gmra.mxu0 %v1166
      %v1215 = vpop.f32.mrf.mxu0
      %v1216 = vadd.f32 %v1187, %v1215
      %v1217 = vpop.f32.mrf.mxu0
      %v1218 = vadd.f32 %v1189, %v1217
      %1219 = vmatmul.bf16.gmra.mxu0 %v1169
      %v1220 = vpop.f32.mrf.mxu0
      %v1221 = vadd.f32 %v1192, %v1220
      %v1222 = vpop.f32.mrf.mxu0
      %v1223 = vadd.f32 %v1194, %v1222
      %1224 = vmatmul.bf16.gmra.mxu0 %v1172
      %v1225 = vpop.f32.mrf.mxu0
      %v1226 = vadd.f32 %v1197, %v1225
      %v1227 = vpop.f32.mrf.mxu0
      %v1228 = vadd.f32 %v1199, %v1227
      %1229 = vmatmul.bf16.gmra.mxu0 %v1175
      %v1230 = vpop.f32.mrf.mxu0
      %v1231 = vadd.f32 %v1202, %v1230
      %v1232 = vpop.f32.mrf.mxu0
      %v1233 = vadd.f32 %v1204, %v1232
      %1234 = vdwg.mxu0
      %v1235 = vadd.f32 %v1032, %v1216
      %v1236 = vadd.f32 %v1033, %v1218
      %v1237 = vadd.f32 %v1034, %v1221
      %v1238 = vadd.f32 %v1035, %v1223
      %v1239 = vadd.f32 %v1036, %v1226
      %v1240 = vadd.f32 %v1037, %v1228
      %v1241 = vadd.f32 %v1038, %v1231
      %v1242 = vadd.f32 %v1039, %v1233
      %v1243 = vld [vmem:[%s2] sm:$0x1]
      %v1245 = vperm.slane %v1243, 0
      %v1247 = vadd.f32 %v1235, %v1245
      %v1248 = vadd.f32 %v1236, %v1245
      %v1249 = vadd.f32 %v1237, %v1245
      %v1250 = vadd.f32 %v1238, %v1245
      %v1251 = vadd.f32 %v1239, %v1245
      %v1252 = vadd.f32 %v1240, %v1245
      %v1253 = vadd.f32 %v1241, %v1245
      %v1254 = vadd.f32 %v1242, %v1245
      %v1255 = vpack.c.bf16 %v1247, %v1247
      %v1256 = vpack.c.bf16 %v1248, %v1248
      %v1257 = vpack.c.bf16 %v1249, %v1249
      %v1258 = vpack.c.bf16 %v1250, %v1250
      %v1259 = vpack.c.bf16 %v1251, %v1251
      %v1260 = vpack.c.bf16 %v1252, %v1252
      %v1261 = vpack.c.bf16 %v1253, %v1253
      %v1262 = vpack.c.bf16 %v1254, %v1254
      %1263 = vst [vmem:[%s235] sm:$0xf] %v1255
      %1264 = vst [vmem:[%s235 + $0x4] sm:$0xf] %v1256
      %1265 = vst [vmem:[%s235 + $0x8] sm:$0xf] %v1257
      %1266 = vst [vmem:[%s235 + $0xc] sm:$0xf] %v1258
      %1267 = vst [vmem:[%s235 + $0x10] sm:$0xf] %v1259
      %1268 = vst [vmem:[%s235 + $0x14] sm:$0xf] %v1260
      %1269 = vst [vmem:[%s235 + $0x18] sm:$0xf] %v1261
      %1270 = vst [vmem:[%s235 + $0x1c] sm:$0xf] %v1262
      %v1271 = vadd.f32 %v1247, %v1248
      %v1272 = vadd.f32 %v1271, %v1249
      %v1273 = vadd.f32 %v1272, %v1250
      %v1274 = vadd.f32 %v1273, %v1251
      %v1275 = vadd.f32 %v1274, %v1252
      %v1276 = vadd.f32 %v1275, %v1253
      %v1277 = vadd.f32 %v1276, %v1254
      %v1278 = vrot.slane %v1277, 4
      %v1279 = vadd.f32 %v1277, %v1278
      %v1280 = vrot.slane %v1279, 2
      %v1281 = vadd.f32 %v1279, %v1280
      %v1282 = vrot.slane %v1281, 1
      %v1283 = vadd.f32 %v1281, %v1282
      %1284 = vst [vmem:[%s238] sm:$0x1] %v1283
      %v1285 = vmul.f32 %v1247, %v1247
      %v1286 = vmul.f32 %v1248, %v1248
      %v1287 = vmul.f32 %v1249, %v1249
      %v1288 = vmul.f32 %v1250, %v1250
      %v1289 = vmul.f32 %v1251, %v1251
      %v1290 = vmul.f32 %v1252, %v1252
      %v1291 = vmul.f32 %v1253, %v1253
      %v1292 = vmul.f32 %v1254, %v1254
      %v1293 = vadd.f32 %v1285, %v1286
      %v1294 = vadd.f32 %v1293, %v1287
      %v1295 = vadd.f32 %v1294, %v1288
      %v1296 = vadd.f32 %v1295, %v1289
      %v1297 = vadd.f32 %v1296, %v1290
      %v1298 = vadd.f32 %v1297, %v1291
      %v1299 = vadd.f32 %v1298, %v1292
      %v1300 = vrot.slane %v1299, 4
      %v1301 = vadd.f32 %v1299, %v1300
      %v1302 = vrot.slane %v1301, 2
      %v1303 = vadd.f32 %v1301, %v1302
      %v1304 = vrot.slane %v1303, 1
      %v1305 = vadd.f32 %v1303, %v1304
      %1306 = vst [vmem:[%s241] sm:$0x1] %v1305
      %p1307 = scmp.lt.s32.totalorder %s17, 1
      %s1308 = scalar_select %p1307, %s17, 1
      %s1309 = smul.addr %s1308, 8
      %s1310 = smul.addr %s1309, 4
      %s1311 = scalar_lea.vmem %s3, %s1310
      %p1312 = scmp.lt.s32.totalorder %s17, 1
      %s1313 = scalar_select %p1312, %s17, 1
      %s1314 = scalar_lea.vmem %s4, %s1313
      %p1315 = scmp.lt.s32.totalorder %s17, 1
      %s1316 = scalar_select %p1315, %s17, 1
      %s1317 = scalar_lea.vmem %s5, %s1316
      // Predicated region
      $region33: #{_lambda_.10} parent=31 // pred_check
        %p1318 = pneg %p103
      $region34: #{_lambda_.10} parent=31 // pred_check_branch
        %1320 = sbr.rel (%p1318) target = $region36
      $region35: #{_lambda_.10} parent=31 // pred_region
        _
      $region36: #{_lambda_.10} parent=31 // pred_fallthru
        _
      // Predicated region
      $region37: #{_lambda_.10} parent=31 // pred_check
        %p1321 = pneg %p129
      $region38: #{_lambda_.10} parent=31 // pred_check_branch
        %1323 = sbr.rel (%p1321) target = $region40
      $region39: #{_lambda_.10} parent=31 // pred_region
        _
      $region40: #{_lambda_.10} parent=31 // pred_fallthru
        _
      // Predicated region
      $region41: #{_lambda_.10} parent=31 // pred_check
        %p1324 = pneg %p155
      $region42: #{_lambda_.10} parent=31 // pred_check_branch
        %1326 = sbr.rel (%p1324) target = $region44
      $region43: #{_lambda_.10} parent=31 // pred_region
        _
      $region44: #{_lambda_.10} parent=31 // pred_fallthru
        _
    $region32: #{_lambda_.10} parent=5 // pred_fallthru
      _
    %p1327 = scmp.le.s32.totalorder 2, %s12
    // Predicated region
    $region45: #{_lambda_.10} parent=5 // pred_check
      %p1328 = pneg %p1327
    $region46: #{_lambda_.10} parent=5 // pred_check_branch
      %1330 = sbr.rel (%p1328) target = $region48
    $region47: #{_lambda_.10} parent=5 // pred_region
      %s1331 = ssub.s32 %s12, 2
      // Predicated region
      $region49: #{_lambda_.10} parent=47 // pred_check
        %p1332 = pneg %p109
      $region50: #{_lambda_.10} parent=47 // pred_check_branch
        %1334 = sbr.rel (%p1332) target = $region52
      $region51: #{_lambda_.10} parent=47 // pred_region
        %p1335 = scmp.lt.s32.totalorder %s18, 1
        %s1336 = scalar_select %p1335, %s18, 1
        %s1337 = smul.addr %s1336, 8
        %s1338 = smul.addr %s1337, 4
        %s1339 = scalar_lea.vmem %s3, %s1338
      $region52: #{_lambda_.10} parent=47 // pred_fallthru
        _
      // Predicated region
      $region53: #{_lambda_.10} parent=47 // pred_check
        %p1340 = pneg %p135
      $region54: #{_lambda_.10} parent=47 // pred_check_branch
        %1342 = sbr.rel (%p1340) target = $region56
      $region55: #{_lambda_.10} parent=47 // pred_region
        %p1343 = scmp.lt.s32.totalorder %s18, 1
        %s1344 = scalar_select %p1343, %s18, 1
        %s1345 = scalar_lea.vmem %s4, %s1344
      $region56: #{_lambda_.10} parent=47 // pred_fallthru
        _
      // Predicated region
      $region57: #{_lambda_.10} parent=47 // pred_check
        %p1346 = pneg %p161
      $region58: #{_lambda_.10} parent=47 // pred_check_branch
        %1348 = sbr.rel (%p1346) target = $region60
      $region59: #{_lambda_.10} parent=47 // pred_region
        %p1349 = scmp.lt.s32.totalorder %s18, 1
        %s1350 = scalar_select %p1349, %s18, 1
        %s1351 = scalar_lea.vmem %s5, %s1350
      $region60: #{_lambda_.10} parent=47 // pred_fallthru
        _
    $region48: #{_lambda_.10} parent=5 // pred_fallthru
      _
  $region6: #{_lambda_.10} parent=0 // loop_footer
    %s16 = sadd.s32 1, %s12
  $region7: #{_lambda_.10} parent=0 // loop_footer_branch
    %11 = sbr.rel target = $region3
  $region8: #{_lambda_.10} parent=0 // loop_exit
    _

// kernel: _lambda_.11
$region0: #{_lambda_.11}
  #allocation0 [shape = 'u32[]', space=smem, size = 0x4, offset = 0x4, fixed_abs, tag = 'smem constant byte address 0x4 - core index']
  #allocation1 [shape = 'u32[72,128]{1,0:T(1,128)}', space=vmem, size = 0x9000, scoped, tag = 'internal scratch']
  %s0 = inlined_call_operand.vmem [shape: bf16[128,128], index: 0, kind: input, shape index: {}]
  %s1 = inlined_call_operand.vmem [shape: f32[1,128], index: 1, kind: input, shape index: {}]
  %s2 = inlined_call_operand.vmem [shape: f32[1,128], index: 2, kind: input, shape index: {}]
  %s3 = inlined_call_operand.vmem [shape: bf16[128,128], index: 3, kind: output, shape index: {}]
  %s4 = sld [smem:[#allocation0]]
  $region45: #{_lambda_.11} parent=0
    _
  %s6 = ssub.s32 1, %s4
  %s7 = scalar_select 0, %s6, %s4
  loop: start=0, step=1, limit=4
  $region2: #{_lambda_.11} parent=0 // loop_pre_header
    _
  $region3: #{_lambda_.11} parent=0 // loop_header
    %s9 = sphi 0, %s13
    %p10 = scmp.ge.s32.totalorder %s9, 4
    %s19 = sphi 0, %s21
    %s22 = sphi 0, %s19
    %s23 = sphi 0, %s22
    %s39 = sphi 0, %s23
    %s43 = sphi 0, %s43
    %s45 = sphi 0, %s43
    %s46 = sphi 0, %s45
    %s60 = sphi 0, %s46
    %s64 = sphi 0, %s64
    %s66 = sphi 0, %s64
    %s67 = sphi 0, %s66
    %s81 = sphi 0, %s67
    %s87 = sphi 0, %s89
    %s90 = sphi 0, %s87
    %s91 = sphi 0, %s90
    %s107 = sphi 0, %s91
  $region4: #{_lambda_.11} parent=0 // loop_header_branch
    %12 = sbr.rel (%p10) target = $region8
  $region5: #{_lambda_.11} parent=0 // loop_body
    %s14 = ssub.s32 %s9, 1
    %s15 = ssub.s32 %s9, 2
    %s16 = sadd.s32 %s9, 1
    %s17 = ssub.s32 %s9, %s16
    %p18 = scmp.eq.s32.totalorder %s17, 0
    %s20 = sadd.s32 %s19, 1
    %s21 = scalar_select %p18, %s19, %s20
    %p24 = pneg %p18
    %p25 = scmp.eq.s32.totalorder %s9, 1
    %p26 = por %p24, %p25
    %p27 = scmp.ne.s32.totalorder %s19, %s22
    %p28 = scmp.eq.s32.totalorder %s9, 0
    %p29 = por %p27, %p28
    %p30 = scmp.ne.s32.totalorder %s19, %s22
    %p31 = scmp.eq.s32.totalorder %s14, 1
    %p32 = por %p30, %p31
    %p33 = scmp.ne.s32.totalorder %s22, %s23
    %p34 = scmp.eq.s32.totalorder %s14, 0
    %p35 = por %p33, %p34
    %p36 = scmp.ne.s32.totalorder %s22, %s23
    %p37 = scmp.eq.s32.totalorder %s15, 1
    %p38 = por %p36, %p37
    %p40 = scmp.ne.s32.totalorder %s23, %s39
    %p41 = scmp.eq.s32.totalorder %s15, 0
    %p42 = por %p40, %p41
    %s44 = sadd.s32 %s43, 1
    %p47 = scmp.eq.s32.totalorder %s9, 1
    %p48 = scmp.ne.s32.totalorder %s43, %s45
    %p49 = scmp.eq.s32.totalorder %s9, 0
    %p50 = por %p48, %p49
    %p51 = scmp.ne.s32.totalorder %s43, %s45
    %p52 = scmp.eq.s32.totalorder %s14, 1
    %p53 = por %p51, %p52
    %p54 = scmp.ne.s32.totalorder %s45, %s46
    %p55 = scmp.eq.s32.totalorder %s14, 0
    %p56 = por %p54, %p55
    %p57 = scmp.ne.s32.totalorder %s45, %s46
    %p58 = scmp.eq.s32.totalorder %s15, 1
    %p59 = por %p57, %p58
    %p61 = scmp.ne.s32.totalorder %s46, %s60
    %p62 = scmp.eq.s32.totalorder %s15, 0
    %p63 = por %p61, %p62
    %s65 = sadd.s32 %s64, 1
    %p68 = scmp.eq.s32.totalorder %s9, 1
    %p69 = scmp.ne.s32.totalorder %s64, %s66
    %p70 = scmp.eq.s32.totalorder %s9, 0
    %p71 = por %p69, %p70
    %p72 = scmp.ne.s32.totalorder %s64, %s66
    %p73 = scmp.eq.s32.totalorder %s14, 1
    %p74 = por %p72, %p73
    %p75 = scmp.ne.s32.totalorder %s66, %s67
    %p76 = scmp.eq.s32.totalorder %s14, 0
    %p77 = por %p75, %p76
    %p78 = scmp.ne.s32.totalorder %s66, %s67
    %p79 = scmp.eq.s32.totalorder %s15, 1
    %p80 = por %p78, %p79
    %p82 = scmp.ne.s32.totalorder %s67, %s81
    %p83 = scmp.eq.s32.totalorder %s15, 0
    %p84 = por %p82, %p83
    %s85 = ssub.s32 %s9, %s16
    %p86 = scmp.eq.s32.totalorder %s85, 0
    %s88 = sadd.s32 %s87, 1
    %s89 = scalar_select %p86, %s87, %s88
    %p92 = pneg %p86
    %p93 = scmp.eq.s32.totalorder %s9, 1
    %p94 = por %p92, %p93
    %p95 = scmp.ne.s32.totalorder %s87, %s90
    %p96 = scmp.eq.s32.totalorder %s9, 0
    %p97 = por %p95, %p96
    %p98 = scmp.ne.s32.totalorder %s87, %s90
    %p99 = scmp.eq.s32.totalorder %s14, 1
    %p100 = por %p98, %p99
    %p101 = scmp.ne.s32.totalorder %s90, %s91
    %p102 = scmp.eq.s32.totalorder %s14, 0
    %p103 = por %p101, %p102
    %p104 = scmp.ne.s32.totalorder %s90, %s91
    %p105 = scmp.eq.s32.totalorder %s15, 1
    %p106 = por %p104, %p105
    %p108 = scmp.ne.s32.totalorder %s91, %s107
    %p109 = scmp.eq.s32.totalorder %s15, 0
    %p110 = por %p108, %p109
    %p111 = scmp.le.s32.totalorder 1, %s9
    %p112 = scmp.lt.s32.totalorder %s9, 3
    %p113 = pnand %p111, %p112
    %p114 = pneg %p113
    // Predicated region
    $region9: #{_lambda_.11} parent=5 // pred_check
      _
    $region10: #{_lambda_.11} parent=5 // pred_check_branch
      %116 = sbr.rel (%p113) target = $region12
    $region11: #{_lambda_.11} parent=5 // pred_region
      %s117 = ssub.s32 %s9, 1
      // Predicated region
      $region13: #{_lambda_.11} parent=11 // pred_check
        %p118 = pneg %p56
      $region14: #{_lambda_.11} parent=11 // pred_check_branch
        %120 = sbr.rel (%p118) target = $region16
      $region15: #{_lambda_.11} parent=11 // pred_region
        _
      $region16: #{_lambda_.11} parent=11 // pred_fallthru
        _
      // Predicated region
      $region17: #{_lambda_.11} parent=11 // pred_check
        %p121 = pneg %p77
      $region18: #{_lambda_.11} parent=11 // pred_check_branch
        %123 = sbr.rel (%p121) target = $region20
      $region19: #{_lambda_.11} parent=11 // pred_region
        _
      $region20: #{_lambda_.11} parent=11 // pred_fallthru
        _
    $region12: #{_lambda_.11} parent=5 // pred_fallthru
      _
    %p124 = scmp.lt.s32.totalorder %s9, 2
    // Predicated region
    $region21: #{_lambda_.11} parent=5 // pred_check
      %p125 = pneg %p124
    $region22: #{_lambda_.11} parent=5 // pred_check_branch
      %127 = sbr.rel (%p125) target = $region24
    $region23: #{_lambda_.11} parent=5 // pred_region
      // Predicated region
      $region25: #{_lambda_.11} parent=23 // pred_check
        %p128 = pneg %p29
      $region26: #{_lambda_.11} parent=23 // pred_check_branch
        %130 = sbr.rel (%p128) target = $region28
      $region27: #{_lambda_.11} parent=23 // pred_region
        %s131 = smul.u32 8, %s9
        %p132 = scmp.lt.s32.totalorder %s131, 15
        %s133 = scalar_select %p132, %s131, 15
        %s134 = smul.addr %s133, 4
        %s135 = scalar_lea.vmem %s0, %s134
        %s136 = smul.u32 8, %s9
      $region28: #{_lambda_.11} parent=23 // pred_fallthru
        _
    $region24: #{_lambda_.11} parent=5 // pred_fallthru
      _
    %p137 = scmp.le.s32.totalorder 1, %s9
    %p138 = scmp.lt.s32.totalorder %s9, 3
    %p139 = pnand %p137, %p138
    %p140 = pneg %p139
    // Predicated region
    $region29: #{_lambda_.11} parent=5 // pred_check
      _
    $region30: #{_lambda_.11} parent=5 // pred_check_branch
      %142 = sbr.rel (%p139) target = $region32
    $region31: #{_lambda_.11} parent=5 // pred_region
      %s143 = ssub.s32 %s9, 1
      %s144 = smul.u32 8, %s14
      %p145 = scmp.lt.s32.totalorder %s144, 15
      %s146 = scalar_select %p145, %s144, 15
      %s147 = smul.addr %s146, 4
      %s148 = scalar_lea.vmem %s0, %s147
      %p149 = pneg %p35
      %p150 = pneg %p32
      %p151 = pneg %p56
      %p152 = pneg %p53
      %p153 = pneg %p77
      %p154 = pneg %p74
      %p155 = pneg %p103
      %p156 = pneg %p100
      %s157 = smul.u32 8, %s14
      %p158 = scmp.lt.s32.totalorder %s157, 15
      %s159 = scalar_select %p158, %s157, 15
      %s160 = smul.addr %s159, 4
      %s161 = scalar_lea.vmem %s3, %s160
      %s162 = smul.u32 8, %s14
      %p163 = scmp.lt.s32.totalorder %s162, 15
      %s164 = scalar_select %p163, %s162, 15
      %s165 = smul.addr %s164, 4
      %s166 = scalar_lea.vmem %s0, %s165
      %s167 = smul.u32 8, %s14
      %s168 = smul.u32 8, %s14
      %p169 = scmp.lt.s32.totalorder %s168, 15
      %s170 = scalar_select %p169, %s168, 15
      %s171 = smul.addr %s170, 4
      %s172 = scalar_lea.vmem %s3, %s171
      %s173 = smul.u32 8, %s14
      %v174 = vld [vmem:[%s166] sm:$0xf]
      %v175 = vld [vmem:[%s166 + $0x4] sm:$0xf]
      %v176 = vld [vmem:[%s166 + $0x8] sm:$0xf]
      %v177 = vld [vmem:[%s166 + $0xc] sm:$0xf]
      %v178 = vld [vmem:[%s166 + $0x10] sm:$0xf]
      %v179 = vld [vmem:[%s166 + $0x14] sm:$0xf]
      %v180 = vld [vmem:[%s166 + $0x18] sm:$0xf]
      %v181 = vld [vmem:[%s166 + $0x1c] sm:$0xf]
      %v182 = vunpack.c.l.bf16 %v174
      %v183 = vunpack.c.l.bf16 %v175
      %v184 = vunpack.c.l.bf16 %v176
      %v185 = vunpack.c.l.bf16 %v177
      %v186 = vunpack.c.l.bf16 %v178
      %v187 = vunpack.c.l.bf16 %v179
      %v188 = vunpack.c.l.bf16 %v180
      %v189 = vunpack.c.l.bf16 %v181
      %v190 = vld [vmem:[%s1] sm:$0x1]
      %v192 = vperm.slane %v190, 0
      %v194 = vmul.f32 %v182, %v192
      %v195 = vmul.f32 %v183, %v192
      %v196 = vmul.f32 %v184, %v192
      %v197 = vmul.f32 %v185, %v192
      %v198 = vmul.f32 %v186, %v192
      %v199 = vmul.f32 %v187, %v192
      %v200 = vmul.f32 %v188, %v192
      %v201 = vmul.f32 %v189, %v192
      %v202 = vld [vmem:[%s2] sm:$0x1]
      %v204 = vperm.slane %v202, 0
      %v206 = vadd.f32 %v194, %v204
      %v207 = vadd.f32 %v195, %v204
      %v208 = vadd.f32 %v196, %v204
      %v209 = vadd.f32 %v197, %v204
      %v210 = vadd.f32 %v198, %v204
      %v211 = vadd.f32 %v199, %v204
      %v212 = vadd.f32 %v200, %v204
      %v213 = vadd.f32 %v201, %v204
      %vm214 = vcmp.gt.f32.partialorder %v206, 0.0
      %vm215 = vcmp.gt.f32.partialorder %v207, 0.0
      %vm216 = vcmp.gt.f32.partialorder %v208, 0.0
      %vm217 = vcmp.gt.f32.partialorder %v209, 0.0
      %vm218 = vcmp.gt.f32.partialorder %v210, 0.0
      %vm219 = vcmp.gt.f32.partialorder %v211, 0.0
      %vm220 = vcmp.gt.f32.partialorder %v212, 0.0
      %vm221 = vcmp.gt.f32.partialorder %v213, 0.0
      %v222 = vmul.f32 %v206, 0.2
      %v223 = vmul.f32 %v207, 0.2
      %v224 = vmul.f32 %v208, 0.2
      %v225 = vmul.f32 %v209, 0.2
      %v226 = vmul.f32 %v210, 0.2
      %v227 = vmul.f32 %v211, 0.2
      %v228 = vmul.f32 %v212, 0.2
      %v229 = vmul.f32 %v213, 0.2
      %v230 = vsel %vm214, %v206, %v222
      %v231 = vsel %vm215, %v207, %v223
      %v232 = vsel %vm216, %v208, %v224
      %v233 = vsel %vm217, %v209, %v225
      %v234 = vsel %vm218, %v210, %v226
      %v235 = vsel %vm219, %v211, %v227
      %v236 = vsel %vm220, %v212, %v228
      %v237 = vsel %vm221, %v213, %v229
      %v238 = vpack.c.bf16 %v230, %v230
      %v239 = vpack.c.bf16 %v231, %v231
      %v240 = vpack.c.bf16 %v232, %v232
      %v241 = vpack.c.bf16 %v233, %v233
      %v242 = vpack.c.bf16 %v234, %v234
      %v243 = vpack.c.bf16 %v235, %v235
      %v244 = vpack.c.bf16 %v236, %v236
      %v245 = vpack.c.bf16 %v237, %v237
      %246 = vst [vmem:[%s172] sm:$0xf] %v238
      %247 = vst [vmem:[%s172 + $0x4] sm:$0xf] %v239
      %248 = vst [vmem:[%s172 + $0x8] sm:$0xf] %v240
      %249 = vst [vmem:[%s172 + $0xc] sm:$0xf] %v241
      %250 = vst [vmem:[%s172 + $0x10] sm:$0xf] %v242
      %251 = vst [vmem:[%s172 + $0x14] sm:$0xf] %v243
      %252 = vst [vmem:[%s172 + $0x18] sm:$0xf] %v244
      %253 = vst [vmem:[%s172 + $0x1c] sm:$0xf] %v245
      %s254 = smul.u32 8, %s14
      %p255 = scmp.lt.s32.totalorder %s254, 15
      %s256 = scalar_select %p255, %s254, 15
      %s257 = smul.addr %s256, 4
      %s258 = scalar_lea.vmem %s3, %s257
      // Predicated region
      $region33: #{_lambda_.11} parent=31 // pred_check
        %p259 = pneg %p100
      $region34: #{_lambda_.11} parent=31 // pred_check_branch
        %261 = sbr.rel (%p259) target = $region36
      $region35: #{_lambda_.11} parent=31 // pred_region
        %s262 = smul.u32 8, %s14
      $region36: #{_lambda_.11} parent=31 // pred_fallthru
        _
    $region32: #{_lambda_.11} parent=5 // pred_fallthru
      _
    %p263 = scmp.le.s32.totalorder 2, %s9
    // Predicated region
    $region37: #{_lambda_.11} parent=5 // pred_check
      %p264 = pneg %p263
    $region38: #{_lambda_.11} parent=5 // pred_check_branch
      %266 = sbr.rel (%p264) target = $region40
    $region39: #{_lambda_.11} parent=5 // pred_region
      %s267 = ssub.s32 %s9, 2
      // Predicated region
      $region41: #{_lambda_.11} parent=39 // pred_check
        %p268 = pneg %p106
      $region42: #{_lambda_.11} parent=39 // pred_check_branch
        %270 = sbr.rel (%p268) target = $region44
      $region43: #{_lambda_.11} parent=39 // pred_region
        %s271 = smul.u32 8, %s15
        %p272 = scmp.lt.s32.totalorder %s271, 15
        %s273 = scalar_select %p272, %s271, 15
        %s274 = smul.addr %s273, 4
        %s275 = scalar_lea.vmem %s3, %s274
      $region44: #{_lambda_.11} parent=39 // pred_fallthru
        _
    $region40: #{_lambda_.11} parent=5 // pred_fallthru
      _
  $region6: #{_lambda_.11} parent=0 // loop_footer
    %s13 = sadd.s32 1, %s9
  $region7: #{_lambda_.11} parent=0 // loop_footer_branch
    %8 = sbr.rel target = $region3
  $region8: #{_lambda_.11} parent=0 // loop_exit
    _

// kernel: _lambda_.13
$region0: #{_lambda_.13}
  #allocation0 [shape = 'u32[]', space=smem, size = 0x4, offset = 0x4, fixed_abs, tag = 'smem constant byte address 0x4 - core index']
  #allocation1 [shape = 'u32[72,128]{1,0:T(1,128)}', space=vmem, size = 0x9000, scoped, tag = 'internal scratch']
  #allocation2 [shape = 'f32[1]{0:T(128)S(6)}', space=smem, size = 0x200, scoped, tag = 'scoped memory for _lambda_.13']
  %s0 = inlined_call_operand.vmem [shape: bf16[2,16,128], index: 0, kind: input, shape index: {}]
  %s1 = inlined_call_operand.vmem [shape: f32[1,128], index: 1, kind: input, shape index: {}]
  %s2 = inlined_call_operand.vmem [shape: f32[1,128], index: 2, kind: input, shape index: {}]
  %s3 = inlined_call_operand.vmem [shape: f32[16,128], index: 3, kind: input, shape index: {}]
  %s4 = inlined_call_operand.<no memory space> [shape: f32[1], index: 4, kind: input, shape index: {}]
  %s5 = inlined_call_operand.vmem [shape: f32[2,1,128], index: 5, kind: output, shape index: {}]
  %s6 = sld [smem:[#allocation0]]
  $region53: #{_lambda_.13} parent=0
    _
  %s8 = ssub.s32 1, %s6
  %s9 = scalar_select 0, %s8, %s6
  %10 = sst [smem:[#allocation2]] %s4
  loop: start=0, step=1, limit=4
  $region2: #{_lambda_.13} parent=0 // loop_pre_header
    _
  $region3: #{_lambda_.13} parent=0 // loop_header
    %s12 = sphi 0, %s16
    %p13 = scmp.ge.s32.totalorder %s12, 4
    %s22 = sphi 0, %s24
    %s25 = sphi 0, %s22
    %s26 = sphi 0, %s25
    %s42 = sphi 0, %s26
    %s46 = sphi 0, %s46
    %s48 = sphi 0, %s46
    %s49 = sphi 0, %s48
    %s63 = sphi 0, %s49
    %s67 = sphi 0, %s67
    %s69 = sphi 0, %s67
    %s70 = sphi 0, %s69
    %s84 = sphi 0, %s70
    %s88 = sphi 0, %s88
    %s90 = sphi 0, %s88
    %s91 = sphi 0, %s90
    %s105 = sphi 0, %s91
    %s109 = sphi 0, %s109
    %s111 = sphi 0, %s109
    %s112 = sphi 0, %s111
    %s126 = sphi 0, %s112
    %s132 = sphi 0, %s134
    %s135 = sphi 0, %s132
    %s136 = sphi 0, %s135
    %s152 = sphi 0, %s136
  $region4: #{_lambda_.13} parent=0 // loop_header_branch
    %15 = sbr.rel (%p13) target = $region8
  $region5: #{_lambda_.13} parent=0 // loop_body
    %s17 = ssub.s32 %s12, 1
    %s18 = ssub.s32 %s12, 2
    %s19 = sadd.s32 %s12, 1
    %s20 = ssub.s32 %s12, %s19
    %p21 = scmp.eq.s32.totalorder %s20, 0
    %s23 = sadd.s32 %s22, 1
    %s24 = scalar_select %p21, %s22, %s23
    %p27 = pneg %p21
    %p28 = scmp.eq.s32.totalorder %s12, 1
    %p29 = por %p27, %p28
    %p30 = scmp.ne.s32.totalorder %s22, %s25
    %p31 = scmp.eq.s32.totalorder %s12, 0
    %p32 = por %p30, %p31
    %p33 = scmp.ne.s32.totalorder %s22, %s25
    %p34 = scmp.eq.s32.totalorder %s17, 1
    %p35 = por %p33, %p34
    %p36 = scmp.ne.s32.totalorder %s25, %s26
    %p37 = scmp.eq.s32.totalorder %s17, 0
    %p38 = por %p36, %p37
    %p39 = scmp.ne.s32.totalorder %s25, %s26
    %p40 = scmp.eq.s32.totalorder %s18, 1
    %p41 = por %p39, %p40
    %p43 = scmp.ne.s32.totalorder %s26, %s42
    %p44 = scmp.eq.s32.totalorder %s18, 0
    %p45 = por %p43, %p44
    %s47 = sadd.s32 %s46, 1
    %p50 = scmp.eq.s32.totalorder %s12, 1
    %p51 = scmp.ne.s32.totalorder %s46, %s48
    %p52 = scmp.eq.s32.totalorder %s12, 0
    %p53 = por %p51, %p52
    %p54 = scmp.ne.s32.totalorder %s46, %s48
    %p55 = scmp.eq.s32.totalorder %s17, 1
    %p56 = por %p54, %p55
    %p57 = scmp.ne.s32.totalorder %s48, %s49
    %p58 = scmp.eq.s32.totalorder %s17, 0
    %p59 = por %p57, %p58
    %p60 = scmp.ne.s32.totalorder %s48, %s49
    %p61 = scmp.eq.s32.totalorder %s18, 1
    %p62 = por %p60, %p61
    %p64 = scmp.ne.s32.totalorder %s49, %s63
    %p65 = scmp.eq.s32.totalorder %s18, 0
    %p66 = por %p64, %p65
    %s68 = sadd.s32 %s67, 1
    %p71 = scmp.eq.s32.totalorder %s12, 1
    %p72 = scmp.ne.s32.totalorder %s67, %s69
    %p73 = scmp.eq.s32.totalorder %s12, 0
    %p74 = por %p72, %p73
    %p75 = scmp.ne.s32.totalorder %s67, %s69
    %p76 = scmp.eq.s32.totalorder %s17, 1
    %p77 = por %p75, %p76
    %p78 = scmp.ne.s32.totalorder %s69, %s70
    %p79 = scmp.eq.s32.totalorder %s17, 0
    %p80 = por %p78, %p79
    %p81 = scmp.ne.s32.totalorder %s69, %s70
    %p82 = scmp.eq.s32.totalorder %s18, 1
    %p83 = por %p81, %p82
    %p85 = scmp.ne.s32.totalorder %s70, %s84
    %p86 = scmp.eq.s32.totalorder %s18, 0
    %p87 = por %p85, %p86
    %s89 = sadd.s32 %s88, 1
    %p92 = scmp.eq.s32.totalorder %s12, 1
    %p93 = scmp.ne.s32.totalorder %s88, %s90
    %p94 = scmp.eq.s32.totalorder %s12, 0
    %p95 = por %p93, %p94
    %p96 = scmp.ne.s32.totalorder %s88, %s90
    %p97 = scmp.eq.s32.totalorder %s17, 1
    %p98 = por %p96, %p97
    %p99 = scmp.ne.s32.totalorder %s90, %s91
    %p100 = scmp.eq.s32.totalorder %s17, 0
    %p101 = por %p99, %p100
    %p102 = scmp.ne.s32.totalorder %s90, %s91
    %p103 = scmp.eq.s32.totalorder %s18, 1
    %p104 = por %p102, %p103
    %p106 = scmp.ne.s32.totalorder %s91, %s105
    %p107 = scmp.eq.s32.totalorder %s18, 0
    %p108 = por %p106, %p107
    %s110 = sadd.s32 %s109, 1
    %p113 = scmp.eq.s32.totalorder %s12, 1
    %p114 = scmp.ne.s32.totalorder %s109, %s111
    %p115 = scmp.eq.s32.totalorder %s12, 0
    %p116 = por %p114, %p115
    %p117 = scmp.ne.s32.totalorder %s109, %s111
    %p118 = scmp.eq.s32.totalorder %s17, 1
    %p119 = por %p117, %p118
    %p120 = scmp.ne.s32.totalorder %s111, %s112
    %p121 = scmp.eq.s32.totalorder %s17, 0
    %p122 = por %p120, %p121
    %p123 = scmp.ne.s32.totalorder %s111, %s112
    %p124 = scmp.eq.s32.totalorder %s18, 1
    %p125 = por %p123, %p124
    %p127 = scmp.ne.s32.totalorder %s112, %s126
    %p128 = scmp.eq.s32.totalorder %s18, 0
    %p129 = por %p127, %p128
    %s130 = ssub.s32 %s12, %s19
    %p131 = scmp.eq.s32.totalorder %s130, 0
    %s133 = sadd.s32 %s132, 1
    %s134 = scalar_select %p131, %s132, %s133
    %p137 = pneg %p131
    %p138 = scmp.eq.s32.totalorder %s12, 1
    %p139 = por %p137, %p138
    %p140 = scmp.ne.s32.totalorder %s132, %s135
    %p141 = scmp.eq.s32.totalorder %s12, 0
    %p142 = por %p140, %p141
    %p143 = scmp.ne.s32.totalorder %s132, %s135
    %p144 = scmp.eq.s32.totalorder %s17, 1
    %p145 = por %p143, %p144
    %p146 = scmp.ne.s32.totalorder %s135, %s136
    %p147 = scmp.eq.s32.totalorder %s17, 0
    %p148 = por %p146, %p147
    %p149 = scmp.ne.s32.totalorder %s135, %s136
    %p150 = scmp.eq.s32.totalorder %s18, 1
    %p151 = por %p149, %p150
    %p153 = scmp.ne.s32.totalorder %s136, %s152
    %p154 = scmp.eq.s32.totalorder %s18, 0
    %p155 = por %p153, %p154
    %p156 = scmp.le.s32.totalorder 1, %s12
    %p157 = scmp.lt.s32.totalorder %s12, 3
    %p158 = pnand %p156, %p157
    %p159 = pneg %p158
    // Predicated region
    $region9: #{_lambda_.13} parent=5 // pred_check
      _
    $region10: #{_lambda_.13} parent=5 // pred_check_branch
      %161 = sbr.rel (%p158) target = $region12
    $region11: #{_lambda_.13} parent=5 // pred_region
      %s162 = ssub.s32 %s12, 1
      // Predicated region
      $region13: #{_lambda_.13} parent=11 // pred_check
        %p163 = pneg %p59
      $region14: #{_lambda_.13} parent=11 // pred_check_branch
        %165 = sbr.rel (%p163) target = $region16
      $region15: #{_lambda_.13} parent=11 // pred_region
        _
      $region16: #{_lambda_.13} parent=11 // pred_fallthru
        _
      // Predicated region
      $region17: #{_lambda_.13} parent=11 // pred_check
        %p166 = pneg %p80
      $region18: #{_lambda_.13} parent=11 // pred_check_branch
        %168 = sbr.rel (%p166) target = $region20
      $region19: #{_lambda_.13} parent=11 // pred_region
        _
      $region20: #{_lambda_.13} parent=11 // pred_fallthru
        _
      // Predicated region
      $region21: #{_lambda_.13} parent=11 // pred_check
        %p169 = pneg %p101
      $region22: #{_lambda_.13} parent=11 // pred_check_branch
        %171 = sbr.rel (%p169) target = $region24
      $region23: #{_lambda_.13} parent=11 // pred_region
        _
      $region24: #{_lambda_.13} parent=11 // pred_fallthru
        _
      // Predicated region
      $region25: #{_lambda_.13} parent=11 // pred_check
        %p172 = pneg %p122
      $region26: #{_lambda_.13} parent=11 // pred_check_branch
        %174 = sbr.rel (%p172) target = $region28
      $region27: #{_lambda_.13} parent=11 // pred_region
        _
      $region28: #{_lambda_.13} parent=11 // pred_fallthru
        _
    $region12: #{_lambda_.13} parent=5 // pred_fallthru
      _
    %p175 = scmp.lt.s32.totalorder %s12, 2
    // Predicated region
    $region29: #{_lambda_.13} parent=5 // pred_check
      %p176 = pneg %p175
    $region30: #{_lambda_.13} parent=5 // pred_check_branch
      %178 = sbr.rel (%p176) target = $region32
    $region31: #{_lambda_.13} parent=5 // pred_region
      // Predicated region
      $region33: #{_lambda_.13} parent=31 // pred_check
        %p179 = pneg %p32
      $region34: #{_lambda_.13} parent=31 // pred_check_branch
        %181 = sbr.rel (%p179) target = $region36
      $region35: #{_lambda_.13} parent=31 // pred_region
        %p182 = scmp.lt.s32.totalorder %s12, 1
        %s183 = scalar_select %p182, %s12, 1
        %s184 = smul.addr %s183, 2
        %s185 = smul.addr %s184, 4
        %s186 = scalar_lea.vmem %s0, %s185
      $region36: #{_lambda_.13} parent=31 // pred_fallthru
        _
    $region32: #{_lambda_.13} parent=5 // pred_fallthru
      _
    %p187 = scmp.le.s32.totalorder 1, %s12
    %p188 = scmp.lt.s32.totalorder %s12, 3
    %p189 = pnand %p187, %p188
    %p190 = pneg %p189
    // Predicated region
    $region37: #{_lambda_.13} parent=5 // pred_check
      _
    $region38: #{_lambda_.13} parent=5 // pred_check_branch
      %192 = sbr.rel (%p189) target = $region40
    $region39: #{_lambda_.13} parent=5 // pred_region
      %s193 = ssub.s32 %s12, 1
      %p194 = scmp.lt.s32.totalorder %s17, 1
      %s195 = scalar_select %p194, %s17, 1
      %s196 = smul.addr %s195, 2
      %s197 = smul.addr %s196, 4
      %s198 = scalar_lea.vmem %s0, %s197
      %p199 = pneg %p38
      %p200 = pneg %p35
      %p201 = pneg %p59
      %p202 = pneg %p56
      %p203 = pneg %p80
      %p204 = pneg %p77
      %p205 = pneg %p101
      %p206 = pneg %p98
      %p207 = pneg %p122
      %p208 = pneg %p119
      %p209 = pneg %p148
      %p210 = pneg %p145
      %p211 = scmp.lt.s32.totalorder %s17, 1
      %s212 = scalar_select %p211, %s17, 1
      %s213 = scalar_lea.vmem %s5, %s212
      %p214 = scmp.lt.s32.totalorder %s17, 1
      %s215 = scalar_select %p214, %s17, 1
      %s216 = smul.addr %s215, 2
      %s217 = smul.addr %s216, 4
      %s218 = scalar_lea.vmem %s0, %s217
      %p219 = scmp.lt.s32.totalorder %s17, 1
      %s220 = scalar_select %p219, %s17, 1
      %s221 = scalar_lea.vmem %s5, %s220
      %v222 = vld [vmem:[%s218] sm:$0xf]
      %v223 = vld [vmem:[%s218 + $0x4] sm:$0xf]
      %v224 = vunpack.c.l.bf16 %v222
      %v225 = vunpack.c.l.bf16 %v223
      %v226 = vld [vmem:[%s1] sm:$0x1]
      %v228 = vperm.slane %v226, 0
      %v230 = vmul.f32 %v224, %v228
      %v231 = vmul.f32 %v225, %v228
      %v232 = vld [vmem:[%s2] sm:$0x1]
      %v234 = vperm.slane %v232, 0
      %v236 = vadd.f32 %v230, %v234
      %v237 = vadd.f32 %v231, %v234
      %vm238 = vcmp.gt.f32.partialorder %v236, 0.0
      %vm239 = vcmp.gt.f32.partialorder %v237, 0.0
      %v240 = vmul.f32 %v236, 0.2
      %v241 = vmul.f32 %v237, 0.2
      %v242 = vsel %vm238, %v236, %v240
      %v243 = vsel %vm239, %v237, %v241
      %v244 = vld [vmem:[%s3] sm:$0xff]
      %v245 = vld [vmem:[%s3 + $0x8] sm:$0xff]
      %v246 = vmul.f32 %v242, %v244
      %v247 = vmul.f32 %v243, %v245
      %v248 = vadd.f32 %v246, %v247
      %v249 = vrot.slane %v248, 4
      %v250 = vadd.f32 %v248, %v249
      %v251 = vrot.slane %v250, 2
      %v252 = vadd.f32 %v250, %v251
      %v253 = vrot.slane %v252, 1
      %v254 = vadd.f32 %v252, %v253
      %255 = vadd.xlane.f32.xlu0 %v254
      %v256 = vpop.xlane.xlu0 %255
      %s257 = sld [smem:[#allocation2]]
      %v258 = vstv %s257
      %v259 = vadd.f32 %v256, %v258
      %v260 = vsub.f32 0.0, %v259
      %v261 = vmul.f32 %v260, 1.442695
      %v262 = vpow.pop %v261
      %v263 = vadd.f32 %v262, 1.0
      %v264 = vrcp.pop %v263
      %v265 = vmul.f32 %v263, %v264
      %v266 = vsub.f32 1.0, %v265
      %v267 = vmul.f32 %v264, %v266
      %v268 = vadd.f32 %v264, %v267
      %vm269 = vweird.f32 %v263
      %vm270 = vweird.f32 %v264
      %vm271 = vmor %vm269, %vm270
      %v272 = vsel %vm271, %v264, %v268
      %v273 = vand.u32 2147483647, %v263
      %vm274 = vcmp.eq.f32.partialorder %v273, 8.507059e+37
      %v275 = vand.u32 %v263, 2147483648
      %v276 = vor.u32 1.1754944e-38, %v275
      %v277 = vsel %vm274, %v276, %v272
      %v278 = vmul.f32 1.0, %v277
      %v279 = vadd.f32 %v278, 0.0
      %280 = vst [vmem:[%s221] sm:$0x1] %v279
      %p281 = scmp.lt.s32.totalorder %s17, 1
      %s282 = scalar_select %p281, %s17, 1
      %s283 = scalar_lea.vmem %s5, %s282
      // Predicated region
      $region41: #{_lambda_.13} parent=39 // pred_check
        %p284 = pneg %p145
      $region42: #{_lambda_.13} parent=39 // pred_check_branch
        %286 = sbr.rel (%p284) target = $region44
      $region43: #{_lambda_.13} parent=39 // pred_region
        _
      $region44: #{_lambda_.13} parent=39 // pred_fallthru
        _
    $region40: #{_lambda_.13} parent=5 // pred_fallthru
      _
    %p287 = scmp.le.s32.totalorder 2, %s12
    // Predicated region
    $region45: #{_lambda_.13} parent=5 // pred_check
      %p288 = pneg %p287
    $region46: #{_lambda_.13} parent=5 // pred_check_branch
      %290 = sbr.rel (%p288) target = $region48
    $region47: #{_lambda_.13} parent=5 // pred_region
      %s291 = ssub.s32 %s12, 2
      // Predicated region
      $region49: #{_lambda_.13} parent=47 // pred_check
        %p292 = pneg %p151
      $region50: #{_lambda_.13} parent=47 // pred_check_branch
        %294 = sbr.rel (%p292) target = $region52
      $region51: #{_lambda_.13} parent=47 // pred_region
        %p295 = scmp.lt.s32.totalorder %s18, 1
        %s296 = scalar_select %p295, %s18, 1
        %s297 = scalar_lea.vmem %s5, %s296
      $region52: #{_lambda_.13} parent=47 // pred_fallthru
        _
    $region48: #{_lambda_.13} parent=5 // pred_fallthru
      _
  $region6: #{_lambda_.13} parent=0 // loop_footer
    %s16 = sadd.s32 1, %s12
  $region7: #{_lambda_.13} parent=0 // loop_footer_branch
    %11 = sbr.rel target = $region3
  $region8: #{_lambda_.13} parent=0 // loop_exit
    _

// kernel: _lambda_.12
$region0: #{_lambda_.12}
  #allocation0 [shape = 'u32[]', space=smem, size = 0x4, offset = 0x4, fixed_abs, tag = 'smem constant byte address 0x4 - core index']
  #allocation1 [shape = 'u32[72,128]{1,0:T(1,128)}', space=vmem, size = 0x9000, scoped, tag = 'internal scratch']
  %s0 = inlined_call_operand.vmem [shape: bf16[2,2,24,320], index: 0, kind: input, shape index: {}]
  %s1 = inlined_call_operand.vmem [shape: bf16[5,320,128], index: 1, kind: input, shape index: {}]
  %s2 = inlined_call_operand.vmem [shape: f32[1,128], index: 2, kind: input, shape index: {}]
  %s3 = inlined_call_operand.vmem [shape: bf16[2,16,128], index: 3, kind: output, shape index: {0}]
  %s4 = inlined_call_operand.vmem [shape: f32[2,1,128], index: 4, kind: output, shape index: {1}]
  %s5 = inlined_call_operand.vmem [shape: f32[2,1,128], index: 5, kind: output, shape index: {2}]
  %6 = xla_tuple %s3, %s4, %s5
  %s7 = sld [smem:[#allocation0]]
  $region61: #{_lambda_.12} parent=0
    _
  %s9 = ssub.s32 1, %s7
  %s10 = scalar_select 0, %s9, %s7
  loop: start=0, step=1, limit=4
  $region2: #{_lambda_.12} parent=0 // loop_pre_header
    _
  $region3: #{_lambda_.12} parent=0 // loop_header
    %s12 = sphi 0, %s16
    %p13 = scmp.ge.s32.totalorder %s12, 4
    %s22 = sphi 0, %s24
    %s25 = sphi 0, %s22
    %s26 = sphi 0, %s25
    %s42 = sphi 0, %s26
    %s46 = sphi 0, %s46
    %s48 = sphi 0, %s46
    %s49 = sphi 0, %s48
    %s63 = sphi 0, %s49
    %s67 = sphi 0, %s67
    %s69 = sphi 0, %s67
    %s70 = sphi 0, %s69
    %s84 = sphi 0, %s70
    %s90 = sphi 0, %s92
    %s93 = sphi 0, %s90
    %s94 = sphi 0, %s93
    %s110 = sphi 0, %s94
    %s116 = sphi 0, %s118
    %s119 = sphi 0, %s116
    %s120 = sphi 0, %s119
    %s136 = sphi 0, %s120
    %s142 = sphi 0, %s144
    %s145 = sphi 0, %s142
    %s146 = sphi 0, %s145
    %s162 = sphi 0, %s146
  $region4: #{_lambda_.12} parent=0 // loop_header_branch
    %15 = sbr.rel (%p13) target = $region8
  $region5: #{_lambda_.12} parent=0 // loop_body
    %s17 = ssub.s32 %s12, 1
    %s18 = ssub.s32 %s12, 2
    %s19 = sadd.s32 %s12, 1
    %s20 = ssub.s32 %s12, %s19
    %p21 = scmp.eq.s32.totalorder %s20, 0
    %s23 = sadd.s32 %s22, 1
    %s24 = scalar_select %p21, %s22, %s23
    %p27 = pneg %p21
    %p28 = scmp.eq.s32.totalorder %s12, 1
    %p29 = por %p27, %p28
    %p30 = scmp.ne.s32.totalorder %s22, %s25
    %p31 = scmp.eq.s32.totalorder %s12, 0
    %p32 = por %p30, %p31
    %p33 = scmp.ne.s32.totalorder %s22, %s25
    %p34 = scmp.eq.s32.totalorder %s17, 1
    %p35 = por %p33, %p34
    %p36 = scmp.ne.s32.totalorder %s25, %s26
    %p37 = scmp.eq.s32.totalorder %s17, 0
    %p38 = por %p36, %p37
    %p39 = scmp.ne.s32.totalorder %s25, %s26
    %p40 = scmp.eq.s32.totalorder %s18, 1
    %p41 = por %p39, %p40
    %p43 = scmp.ne.s32.totalorder %s26, %s42
    %p44 = scmp.eq.s32.totalorder %s18, 0
    %p45 = por %p43, %p44
    %s47 = sadd.s32 %s46, 1
    %p50 = scmp.eq.s32.totalorder %s12, 1
    %p51 = scmp.ne.s32.totalorder %s46, %s48
    %p52 = scmp.eq.s32.totalorder %s12, 0
    %p53 = por %p51, %p52
    %p54 = scmp.ne.s32.totalorder %s46, %s48
    %p55 = scmp.eq.s32.totalorder %s17, 1
    %p56 = por %p54, %p55
    %p57 = scmp.ne.s32.totalorder %s48, %s49
    %p58 = scmp.eq.s32.totalorder %s17, 0
    %p59 = por %p57, %p58
    %p60 = scmp.ne.s32.totalorder %s48, %s49
    %p61 = scmp.eq.s32.totalorder %s18, 1
    %p62 = por %p60, %p61
    %p64 = scmp.ne.s32.totalorder %s49, %s63
    %p65 = scmp.eq.s32.totalorder %s18, 0
    %p66 = por %p64, %p65
    %s68 = sadd.s32 %s67, 1
    %p71 = scmp.eq.s32.totalorder %s12, 1
    %p72 = scmp.ne.s32.totalorder %s67, %s69
    %p73 = scmp.eq.s32.totalorder %s12, 0
    %p74 = por %p72, %p73
    %p75 = scmp.ne.s32.totalorder %s67, %s69
    %p76 = scmp.eq.s32.totalorder %s17, 1
    %p77 = por %p75, %p76
    %p78 = scmp.ne.s32.totalorder %s69, %s70
    %p79 = scmp.eq.s32.totalorder %s17, 0
    %p80 = por %p78, %p79
    %p81 = scmp.ne.s32.totalorder %s69, %s70
    %p82 = scmp.eq.s32.totalorder %s18, 1
    %p83 = por %p81, %p82
    %p85 = scmp.ne.s32.totalorder %s70, %s84
    %p86 = scmp.eq.s32.totalorder %s18, 0
    %p87 = por %p85, %p86
    %s88 = ssub.s32 %s12, %s19
    %p89 = scmp.eq.s32.totalorder %s88, 0
    %s91 = sadd.s32 %s90, 1
    %s92 = scalar_select %p89, %s90, %s91
    %p95 = pneg %p89
    %p96 = scmp.eq.s32.totalorder %s12, 1
    %p97 = por %p95, %p96
    %p98 = scmp.ne.s32.totalorder %s90, %s93
    %p99 = scmp.eq.s32.totalorder %s12, 0
    %p100 = por %p98, %p99
    %p101 = scmp.ne.s32.totalorder %s90, %s93
    %p102 = scmp.eq.s32.totalorder %s17, 1
    %p103 = por %p101, %p102
    %p104 = scmp.ne.s32.totalorder %s93, %s94
    %p105 = scmp.eq.s32.totalorder %s17, 0
    %p106 = por %p104, %p105
    %p107 = scmp.ne.s32.totalorder %s93, %s94
    %p108 = scmp.eq.s32.totalorder %s18, 1
    %p109 = por %p107, %p108
    %p111 = scmp.ne.s32.totalorder %s94, %s110
    %p112 = scmp.eq.s32.totalorder %s18, 0
    %p113 = por %p111, %p112
    %s114 = ssub.s32 %s12, %s19
    %p115 = scmp.eq.s32.totalorder %s114, 0
    %s117 = sadd.s32 %s116, 1
    %s118 = scalar_select %p115, %s116, %s117
    %p121 = pneg %p115
    %p122 = scmp.eq.s32.totalorder %s12, 1
    %p123 = por %p121, %p122
    %p124 = scmp.ne.s32.totalorder %s116, %s119
    %p125 = scmp.eq.s32.totalorder %s12, 0
    %p126 = por %p124, %p125
    %p127 = scmp.ne.s32.totalorder %s116, %s119
    %p128 = scmp.eq.s32.totalorder %s17, 1
    %p129 = por %p127, %p128
    %p130 = scmp.ne.s32.totalorder %s119, %s120
    %p131 = scmp.eq.s32.totalorder %s17, 0
    %p132 = por %p130, %p131
    %p133 = scmp.ne.s32.totalorder %s119, %s120
    %p134 = scmp.eq.s32.totalorder %s18, 1
    %p135 = por %p133, %p134
    %p137 = scmp.ne.s32.totalorder %s120, %s136
    %p138 = scmp.eq.s32.totalorder %s18, 0
    %p139 = por %p137, %p138
    %s140 = ssub.s32 %s12, %s19
    %p141 = scmp.eq.s32.totalorder %s140, 0
    %s143 = sadd.s32 %s142, 1
    %s144 = scalar_select %p141, %s142, %s143
    %p147 = pneg %p141
    %p148 = scmp.eq.s32.totalorder %s12, 1
    %p149 = por %p147, %p148
    %p150 = scmp.ne.s32.totalorder %s142, %s145
    %p151 = scmp.eq.s32.totalorder %s12, 0
    %p152 = por %p150, %p151
    %p153 = scmp.ne.s32.totalorder %s142, %s145
    %p154 = scmp.eq.s32.totalorder %s17, 1
    %p155 = por %p153, %p154
    %p156 = scmp.ne.s32.totalorder %s145, %s146
    %p157 = scmp.eq.s32.totalorder %s17, 0
    %p158 = por %p156, %p157
    %p159 = scmp.ne.s32.totalorder %s145, %s146
    %p160 = scmp.eq.s32.totalorder %s18, 1
    %p161 = por %p159, %p160
    %p163 = scmp.ne.s32.totalorder %s146, %s162
    %p164 = scmp.eq.s32.totalorder %s18, 0
    %p165 = por %p163, %p164
    %p166 = scmp.le.s32.totalorder 1, %s12
    %p167 = scmp.lt.s32.totalorder %s12, 3
    %p168 = pnand %p166, %p167
    %p169 = pneg %p168
    // Predicated region
    $region9: #{_lambda_.12} parent=5 // pred_check
      _
    $region10: #{_lambda_.12} parent=5 // pred_check_branch
      %171 = sbr.rel (%p168) target = $region12
    $region11: #{_lambda_.12} parent=5 // pred_region
      %s172 = ssub.s32 %s12, 1
      // Predicated region
      $region13: #{_lambda_.12} parent=11 // pred_check
        %p173 = pneg %p59
      $region14: #{_lambda_.12} parent=11 // pred_check_branch
        %175 = sbr.rel (%p173) target = $region16
      $region15: #{_lambda_.12} parent=11 // pred_region
        _
      $region16: #{_lambda_.12} parent=11 // pred_fallthru
        _
      // Predicated region
      $region17: #{_lambda_.12} parent=11 // pred_check
        %p176 = pneg %p80
      $region18: #{_lambda_.12} parent=11 // pred_check_branch
        %178 = sbr.rel (%p176) target = $region20
      $region19: #{_lambda_.12} parent=11 // pred_region
        _
      $region20: #{_lambda_.12} parent=11 // pred_fallthru
        _
    $region12: #{_lambda_.12} parent=5 // pred_fallthru
      _
    %p179 = scmp.lt.s32.totalorder %s12, 2
    // Predicated region
    $region21: #{_lambda_.12} parent=5 // pred_check
      %p180 = pneg %p179
    $region22: #{_lambda_.12} parent=5 // pred_check_branch
      %182 = sbr.rel (%p180) target = $region24
    $region23: #{_lambda_.12} parent=5 // pred_region
      // Predicated region
      $region25: #{_lambda_.12} parent=23 // pred_check
        %p183 = pneg %p32
      $region26: #{_lambda_.12} parent=23 // pred_check_branch
        %185 = sbr.rel (%p183) target = $region28
      $region27: #{_lambda_.12} parent=23 // pred_region
        %p186 = scmp.lt.s32.totalorder %s12, 1
        %s187 = scalar_select %p186, %s12, 1
        %s188 = smul.addr %s187, 18
        %s189 = smul.addr %s188, 4
        %s190 = scalar_lea.vmem %s0, %s189
      $region28: #{_lambda_.12} parent=23 // pred_fallthru
        _
    $region24: #{_lambda_.12} parent=5 // pred_fallthru
      _
    %p191 = scmp.le.s32.totalorder 1, %s12
    %p192 = scmp.lt.s32.totalorder %s12, 3
    %p193 = pnand %p191, %p192
    %p194 = pneg %p193
    // Predicated region
    $region29: #{_lambda_.12} parent=5 // pred_check
      _
    $region30: #{_lambda_.12} parent=5 // pred_check_branch
      %196 = sbr.rel (%p193) target = $region32
    $region31: #{_lambda_.12} parent=5 // pred_region
      %s197 = ssub.s32 %s12, 1
      %p198 = scmp.lt.s32.totalorder %s17, 1
      %s199 = scalar_select %p198, %s17, 1
      %s200 = smul.addr %s199, 18
      %s201 = smul.addr %s200, 4
      %s202 = scalar_lea.vmem %s0, %s201
      %p203 = pneg %p38
      %p204 = pneg %p35
      %p205 = pneg %p59
      %p206 = pneg %p56
      %p207 = pneg %p80
      %p208 = pneg %p77
      %p209 = pneg %p106
      %p210 = pneg %p103
      %p211 = scmp.lt.s32.totalorder %s17, 1
      %s212 = scalar_select %p211, %s17, 1
      %s213 = smul.addr %s212, 2
      %s214 = smul.addr %s213, 4
      %s215 = scalar_lea.vmem %s3, %s214
      %p216 = pneg %p132
      %p217 = pneg %p129
      %p218 = scmp.lt.s32.totalorder %s17, 1
      %s219 = scalar_select %p218, %s17, 1
      %s220 = scalar_lea.vmem %s4, %s219
      %p221 = pneg %p158
      %p222 = pneg %p155
      %p223 = scmp.lt.s32.totalorder %s17, 1
      %s224 = scalar_select %p223, %s17, 1
      %s225 = scalar_lea.vmem %s5, %s224
      %p226 = scmp.lt.s32.totalorder %s17, 1
      %s227 = scalar_select %p226, %s17, 1
      %s228 = smul.addr %s227, 18
      %s229 = smul.addr %s228, 4
      %s230 = scalar_lea.vmem %s0, %s229
      %p231 = scmp.lt.s32.totalorder %s17, 1
      %s232 = scalar_select %p231, %s17, 1
      %s233 = smul.addr %s232, 2
      %s234 = smul.addr %s233, 4
      %s235 = scalar_lea.vmem %s3, %s234
      %p236 = scmp.lt.s32.totalorder %s17, 1
      %s237 = scalar_select %p236, %s17, 1
      %s238 = scalar_lea.vmem %s4, %s237
      %p239 = scmp.lt.s32.totalorder %s17, 1
      %s240 = scalar_select %p239, %s17, 1
      %s241 = scalar_lea.vmem %s5, %s240
      %v243 = vld [vmem:[%s230] sm:$0xff]
      %v244 = vld [vmem:[%s230 + $0x8] sm:$0xf]
      %v245 = vld [vmem:[%s230 + $0xc] sm:$0xff]
      %v246 = vld [vmem:[%s230 + $0x14] sm:$0xf]
      %v247 = vld [vmem:[%s1] sm:$0xf]
      %v248 = vld [vmem:[%s1 + $0x4] sm:$0xf]
      %v249 = vld [vmem:[%s1 + $0x8] sm:$0xf]
      %v250 = vld [vmem:[%s1 + $0xc] sm:$0xf]
      %v251 = vld [vmem:[%s1 + $0x10] sm:$0xf]
      %v252 = vld [vmem:[%s1 + $0x14] sm:$0xf]
      %v253 = vld [vmem:[%s1 + $0x18] sm:$0xf]
      %v254 = vld [vmem:[%s1 + $0x1c] sm:$0xf]
      %v255 = vld [vmem:[%s1 + $0x20] sm:$0xf]
      %v256 = vld [vmem:[%s1 + $0x24] sm:$0xf]
      %v257 = vld [vmem:[%s1 + $0x28] sm:$0xf]
      %v258 = vld [vmem:[%s1 + $0x2c] sm:$0xf]
      %v259 = vld [vmem:[%s1 + $0x30] sm:$0xf]
      %v260 = vld [vmem:[%s1 + $0x34] sm:$0xf]
      %v261 = vld [vmem:[%s1 + $0x38] sm:$0xf]
      %v262 = vld [vmem:[%s1 + $0x3c] sm:$0xf]
      %v263 = vld [vmem:[%s1 + $0x40] sm:$0xf]
      %v264 = vld [vmem:[%s1 + $0x44] sm:$0xf]
      %v265 = vld [vmem:[%s1 + $0x48] sm:$0xf]
      %v266 = vld [vmem:[%s1 + $0x4c] sm:$0xf]
      %v267 = vld [vmem:[%s1 + $0x50] sm:$0xf]
      %v268 = vld [vmem:[%s1 + $0x54] sm:$0xf]
      %v269 = vld [vmem:[%s1 + $0x58] sm:$0xf]
      %v270 = vld [vmem:[%s1 + $0x5c] sm:$0xf]
      %v271 = vld [vmem:[%s1 + $0x60] sm:$0xf]
      %v272 = vld [vmem:[%s1 + $0x64] sm:$0xf]
      %v273 = vld [vmem:[%s1 + $0x68] sm:$0xf]
      %v274 = vld [vmem:[%s1 + $0x6c] sm:$0xf]
      %v275 = vld [vmem:[%s1 + $0x70] sm:$0xf]
      %v276 = vld [vmem:[%s1 + $0x74] sm:$0xf]
      %v277 = vld [vmem:[%s1 + $0x78] sm:$0xf]
      %v278 = vld [vmem:[%s1 + $0x7c] sm:$0xf]
      %v279 = vld [vmem:[%s1 + $0x80] sm:$0xf]
      %v280 = vld [vmem:[%s1 + $0x84] sm:$0xf]
      %v281 = vld [vmem:[%s1 + $0x88] sm:$0xf]
      %v282 = vld [vmem:[%s1 + $0x8c] sm:$0xf]
      %v283 = vld [vmem:[%s1 + $0x90] sm:$0xf]
      %v284 = vld [vmem:[%s1 + $0x94] sm:$0xf]
      %v285 = vld [vmem:[%s1 + $0x98] sm:$0xf]
      %v286 = vld [vmem:[%s1 + $0x9c] sm:$0xf]
      %s287 = scalar_lea.vmem %s230, 36
      %v288 = vld [vmem:[%s287] sm:$0xff]
      %v289 = vld [vmem:[%s287 + $0x8] sm:$0xf]
      %v290 = vld [vmem:[%s287 + $0xc] sm:$0xff]
      %v291 = vld [vmem:[%s287 + $0x14] sm:$0xf]
      %s292 = scalar_lea.vmem %s1, 160
      %v293 = vld [vmem:[%s292] sm:$0xf]
      %v294 = vld [vmem:[%s292 + $0x4] sm:$0xf]
      %v295 = vld [vmem:[%s292 + $0x8] sm:$0xf]
      %v296 = vld [vmem:[%s292 + $0xc] sm:$0xf]
      %v297 = vld [vmem:[%s292 + $0x10] sm:$0xf]
      %v298 = vld [vmem:[%s292 + $0x14] sm:$0xf]
      %v299 = vld [vmem:[%s292 + $0x18] sm:$0xf]
      %v300 = vld [vmem:[%s292 + $0x1c] sm:$0xf]
      %v301 = vld [vmem:[%s292 + $0x20] sm:$0xf]
      %v302 = vld [vmem:[%s292 + $0x24] sm:$0xf]
      %v303 = vld [vmem:[%s292 + $0x28] sm:$0xf]
      %v304 = vld [vmem:[%s292 + $0x2c] sm:$0xf]
      %v305 = vld [vmem:[%s292 + $0x30] sm:$0xf]
      %v306 = vld [vmem:[%s292 + $0x34] sm:$0xf]
      %v307 = vld [vmem:[%s292 + $0x38] sm:$0xf]
      %v308 = vld [vmem:[%s292 + $0x3c] sm:$0xf]
      %v309 = vld [vmem:[%s292 + $0x40] sm:$0xf]
      %v310 = vld [vmem:[%s292 + $0x44] sm:$0xf]
      %v311 = vld [vmem:[%s292 + $0x48] sm:$0xf]
      %v312 = vld [vmem:[%s292 + $0x4c] sm:$0xf]
      %v313 = vld [vmem:[%s292 + $0x50] sm:$0xf]
      %v314 = vld [vmem:[%s292 + $0x54] sm:$0xf]
      %v315 = vld [vmem:[%s292 + $0x58] sm:$0xf]
      %v316 = vld [vmem:[%s292 + $0x5c] sm:$0xf]
      %v317 = vld [vmem:[%s292 + $0x60] sm:$0xf]
      %v318 = vld [vmem:[%s292 + $0x64] sm:$0xf]
      %v319 = vld [vmem:[%s292 + $0x68] sm:$0xf]
      %v320 = vld [vmem:[%s292 + $0x6c] sm:$0xf]
      %v321 = vld [vmem:[%s292 + $0x70] sm:$0xf]
      %v322 = vld [vmem:[%s292 + $0x74] sm:$0xf]
      %v323 = vld [vmem:[%s292 + $0x78] sm:$0xf]
      %v324 = vld [vmem:[%s292 + $0x7c] sm:$0xf]
      %v325 = vld [vmem:[%s292 + $0x80] sm:$0xf]
      %v326 = vld [vmem:[%s292 + $0x84] sm:$0xf]
      %v327 = vld [vmem:[%s292 + $0x88] sm:$0xf]
      %v328 = vld [vmem:[%s292 + $0x8c] sm:$0xf]
      %v329 = vld [vmem:[%s292 + $0x90] sm:$0xf]
      %v330 = vld [vmem:[%s292 + $0x94] sm:$0xf]
      %v331 = vld [vmem:[%s292 + $0x98] sm:$0xf]
      %v332 = vld [vmem:[%s292 + $0x9c] sm:$0xf]
      %v337 = vunpack.c.l.b16 %v288
      %v338 = vunpack.c.h.b16 %v288
      %v339 = vunpack.c.l.b16 %v289
      %v340 = vunpack.c.l.b16 %v290
      %v341 = vunpack.c.h.b16 %v290
      %v342 = vunpack.c.l.b16 %v291
      %v343 = vpack.c.b16 %v340, %v337
      %v344 = vpack.c.b16 %v341, %v338
      %v345 = vpack.c.b16 %v342, %v339
      %v388 = vunpack.c.l.b16 %v293
      %v389 = vunpack.c.l.b16 %v294
      %v390 = vunpack.c.l.b16 %v295
      %v391 = vunpack.c.l.b16 %v296
      %v392 = vunpack.c.l.b16 %v297
      %v393 = vunpack.c.l.b16 %v298
      %v394 = vunpack.c.l.b16 %v299
      %v395 = vunpack.c.l.b16 %v300
      %v396 = vunpack.c.l.b16 %v301
      %v397 = vunpack.c.l.b16 %v302
      %v398 = vunpack.c.l.b16 %v303
      %v399 = vunpack.c.l.b16 %v304
      %v400 = vunpack.c.l.b16 %v305
      %v401 = vunpack.c.l.b16 %v306
      %v402 = vunpack.c.l.b16 %v307
      %v403 = vunpack.c.l.b16 %v308
      %v404 = vunpack.c.l.b16 %v309
      %v405 = vunpack.c.l.b16 %v310
      %v406 = vunpack.c.l.b16 %v311
      %v407 = vunpack.c.l.b16 %v312
      %v408 = vunpack.c.l.b16 %v313
      %v409 = vunpack.c.l.b16 %v314
      %v410 = vunpack.c.l.b16 %v315
      %v411 = vunpack.c.l.b16 %v316
      %v412 = vunpack.c.l.b16 %v317
      %v413 = vunpack.c.l.b16 %v318
      %v414 = vunpack.c.l.b16 %v319
      %v415 = vunpack.c.l.b16 %v320
      %v416 = vunpack.c.l.b16 %v321
      %v417 = vunpack.c.l.b16 %v322
      %v418 = vunpack.c.l.b16 %v323
      %v419 = vunpack.c.l.b16 %v324
      %v420 = vunpack.c.l.b16 %v325
      %v421 = vunpack.c.l.b16 %v326
      %v422 = vunpack.c.l.b16 %v327
      %v423 = vunpack.c.l.b16 %v328
      %v424 = vunpack.c.l.b16 %v329
      %v425 = vunpack.c.l.b16 %v330
      %v426 = vunpack.c.l.b16 %v331
      %v427 = vunpack.c.l.b16 %v332
      %v428 = vpack.c.b16 %v389, %v388
      %v429 = vpack.c.b16 %v391, %v390
      %v430 = vpack.c.b16 %v393, %v392
      %v431 = vpack.c.b16 %v395, %v394
      %v432 = vpack.c.b16 %v397, %v396
      %v433 = vpack.c.b16 %v399, %v398
      %v434 = vpack.c.b16 %v401, %v400
      %v435 = vpack.c.b16 %v403, %v402
      %v436 = vpack.c.b16 %v405, %v404
      %v437 = vpack.c.b16 %v407, %v406
      %v438 = vpack.c.b16 %v409, %v408
      %v439 = vpack.c.b16 %v411, %v410
      %v440 = vpack.c.b16 %v413, %v412
      %v441 = vpack.c.b16 %v415, %v414
      %v442 = vpack.c.b16 %v417, %v416
      %v443 = vpack.c.b16 %v419, %v418
      %v444 = vpack.c.b16 %v421, %v420
      %v445 = vpack.c.b16 %v423, %v422
      %v446 = vpack.c.b16 %v425, %v424
      %v447 = vpack.c.b16 %v427, %v426
      %vm468 = vcmask 523264
      %v470 = vsel %vm468, %v345, 0
      %472 = vmatpush.bf16.msra.mxu0 %v435
      %473 = vmatpush.bf16.msra.mxu0 %v434
      %474 = vmatpush.bf16.msra.mxu0 %v433
      %475 = vmatpush.bf16.msra.mxu0 %v432
      %476 = vmatpush.bf16.msra.mxu0 %v431
      %477 = vmatpush.bf16.msra.mxu0 %v430
      %478 = vmatpush.bf16.msra.mxu0 %v429
      %479 = vmatpush.bf16.msra.mxu0 %v428
      %480 = vmatmul.bf16.gmra.mxu0 %v343
      %v481 = vpop.f32.mrf.mxu0
      %v482 = vadd.f32 0.0, %v481
      %v483 = vpop.f32.mrf.mxu0
      %v484 = vadd.f32 0.0, %v483
      %485 = vdwg.mxu0
      %486 = vmatpush.bf16.msra.mxu0 %v443
      %487 = vmatpush.bf16.msra.mxu0 %v442
      %488 = vmatpush.bf16.msra.mxu0 %v441
      %489 = vmatpush.bf16.msra.mxu0 %v440
      %490 = vmatpush.bf16.msra.mxu0 %v439
      %491 = vmatpush.bf16.msra.mxu0 %v438
      %492 = vmatpush.bf16.msra.mxu0 %v437
      %493 = vmatpush.bf16.msra.mxu0 %v436
      %494 = vmatmul.bf16.gmra.mxu0 %v344
      %v495 = vpop.f32.mrf.mxu0
      %v496 = vadd.f32 %v482, %v495
      %v497 = vpop.f32.mrf.mxu0
      %v498 = vadd.f32 %v484, %v497
      %499 = vdwg.mxu0
      %500 = vmatpush.bf16.msra.mxu0 0
      %501 = vmatpush.bf16.msra.mxu0 0
      %502 = vmatpush.bf16.msra.mxu0 0
      %503 = vmatpush.bf16.msra.mxu0 0
      %504 = vmatpush.bf16.msra.mxu0 %v447
      %505 = vmatpush.bf16.msra.mxu0 %v446
      %506 = vmatpush.bf16.msra.mxu0 %v445
      %507 = vmatpush.bf16.msra.mxu0 %v444
      %508 = vmatmul.bf16.gmra.mxu0 %v470
      %v509 = vpop.f32.mrf.mxu0
      %v510 = vadd.f32 %v496, %v509
      %v511 = vpop.f32.mrf.mxu0
      %v512 = vadd.f32 %v498, %v511
      %513 = vdwg.mxu0
      %v518 = vunpack.c.l.b16 %v243
      %v519 = vunpack.c.h.b16 %v243
      %v520 = vunpack.c.l.b16 %v244
      %v521 = vunpack.c.l.b16 %v245
      %v522 = vunpack.c.h.b16 %v245
      %v523 = vunpack.c.l.b16 %v246
      %v524 = vpack.c.b16 %v521, %v518
      %v525 = vpack.c.b16 %v522, %v519
      %v526 = vpack.c.b16 %v523, %v520
      %v569 = vunpack.c.l.b16 %v247
      %v570 = vunpack.c.l.b16 %v248
      %v571 = vunpack.c.l.b16 %v249
      %v572 = vunpack.c.l.b16 %v250
      %v573 = vunpack.c.l.b16 %v251
      %v574 = vunpack.c.l.b16 %v252
      %v575 = vunpack.c.l.b16 %v253
      %v576 = vunpack.c.l.b16 %v254
      %v577 = vunpack.c.l.b16 %v255
      %v578 = vunpack.c.l.b16 %v256
      %v579 = vunpack.c.l.b16 %v257
      %v580 = vunpack.c.l.b16 %v258
      %v581 = vunpack.c.l.b16 %v259
      %v582 = vunpack.c.l.b16 %v260
      %v583 = vunpack.c.l.b16 %v261
      %v584 = vunpack.c.l.b16 %v262
      %v585 = vunpack.c.l.b16 %v263
      %v586 = vunpack.c.l.b16 %v264
      %v587 = vunpack.c.l.b16 %v265
      %v588 = vunpack.c.l.b16 %v266
      %v589 = vunpack.c.l.b16 %v267
      %v590 = vunpack.c.l.b16 %v268
      %v591 = vunpack.c.l.b16 %v269
      %v592 = vunpack.c.l.b16 %v270
      %v593 = vunpack.c.l.b16 %v271
      %v594 = vunpack.c.l.b16 %v272
      %v595 = vunpack.c.l.b16 %v273
      %v596 = vunpack.c.l.b16 %v274
      %v597 = vunpack.c.l.b16 %v275
      %v598 = vunpack.c.l.b16 %v276
      %v599 = vunpack.c.l.b16 %v277
      %v600 = vunpack.c.l.b16 %v278
      %v601 = vunpack.c.l.b16 %v279
      %v602 = vunpack.c.l.b16 %v280
      %v603 = vunpack.c.l.b16 %v281
      %v604 = vunpack.c.l.b16 %v282
      %v605 = vunpack.c.l.b16 %v283
      %v606 = vunpack.c.l.b16 %v284
      %v607 = vunpack.c.l.b16 %v285
      %v608 = vunpack.c.l.b16 %v286
      %v609 = vpack.c.b16 %v570, %v569
      %v610 = vpack.c.b16 %v572, %v571
      %v611 = vpack.c.b16 %v574, %v573
      %v612 = vpack.c.b16 %v576, %v575
      %v613 = vpack.c.b16 %v578, %v577
      %v614 = vpack.c.b16 %v580, %v579
      %v615 = vpack.c.b16 %v582, %v581
      %v616 = vpack.c.b16 %v584, %v583
      %v617 = vpack.c.b16 %v586, %v585
      %v618 = vpack.c.b16 %v588, %v587
      %v619 = vpack.c.b16 %v590, %v589
      %v620 = vpack.c.b16 %v592, %v591
      %v621 = vpack.c.b16 %v594, %v593
      %v622 = vpack.c.b16 %v596, %v595
      %v623 = vpack.c.b16 %v598, %v597
      %v624 = vpack.c.b16 %v600, %v599
      %v625 = vpack.c.b16 %v602, %v601
      %v626 = vpack.c.b16 %v604, %v603
      %v627 = vpack.c.b16 %v606, %v605
      %v628 = vpack.c.b16 %v608, %v607
      %v650 = vsel %vm468, %v526, 0
      %652 = vmatpush.bf16.msra.mxu0 %v616
      %653 = vmatpush.bf16.msra.mxu0 %v615
      %654 = vmatpush.bf16.msra.mxu0 %v614
      %655 = vmatpush.bf16.msra.mxu0 %v613
      %656 = vmatpush.bf16.msra.mxu0 %v612
      %657 = vmatpush.bf16.msra.mxu0 %v611
      %658 = vmatpush.bf16.msra.mxu0 %v610
      %659 = vmatpush.bf16.msra.mxu0 %v609
      %660 = vmatmul.bf16.gmra.mxu0 %v524
      %v661 = vpop.f32.mrf.mxu0
      %v662 = vadd.f32 %v510, %v661
      %v663 = vpop.f32.mrf.mxu0
      %v664 = vadd.f32 %v512, %v663
      %665 = vdwg.mxu0
      %666 = vmatpush.bf16.msra.mxu0 %v624
      %667 = vmatpush.bf16.msra.mxu0 %v623
      %668 = vmatpush.bf16.msra.mxu0 %v622
      %669 = vmatpush.bf16.msra.mxu0 %v621
      %670 = vmatpush.bf16.msra.mxu0 %v620
      %671 = vmatpush.bf16.msra.mxu0 %v619
      %672 = vmatpush.bf16.msra.mxu0 %v618
      %673 = vmatpush.bf16.msra.mxu0 %v617
      %674 = vmatmul.bf16.gmra.mxu0 %v525
      %v675 = vpop.f32.mrf.mxu0
      %v676 = vadd.f32 %v662, %v675
      %v677 = vpop.f32.mrf.mxu0
      %v678 = vadd.f32 %v664, %v677
      %679 = vdwg.mxu0
      %680 = vmatpush.bf16.msra.mxu0 0
      %681 = vmatpush.bf16.msra.mxu0 0
      %682 = vmatpush.bf16.msra.mxu0 0
      %683 = vmatpush.bf16.msra.mxu0 0
      %684 = vmatpush.bf16.msra.mxu0 %v628
      %685 = vmatpush.bf16.msra.mxu0 %v627
      %686 = vmatpush.bf16.msra.mxu0 %v626
      %687 = vmatpush.bf16.msra.mxu0 %v625
      %688 = vmatmul.bf16.gmra.mxu0 %v650
      %v689 = vpop.f32.mrf.mxu0
      %v690 = vadd.f32 %v676, %v689
      %v691 = vpop.f32.mrf.mxu0
      %v692 = vadd.f32 %v678, %v691
      %693 = vdwg.mxu0
      %v694 = vld [vmem:[%s230] sm:$0xcc]
      %v695 = vld [vmem:[%s230 + $0x8] sm:$0xc]
      %v696 = vld [vmem:[%s230 + $0xc] sm:$0xff]
      %v697 = vld [vmem:[%s230 + $0x14] sm:$0xf]
      %v698 = vld [vmem:[%s230 + $0x18] sm:$0x33]
      %v699 = vld [vmem:[%s230 + $0x20] sm:$0x3]
      %s700 = scalar_lea.vmem %s1, 320
      %v701 = vld [vmem:[%s700] sm:$0xf]
      %v702 = vld [vmem:[%s700 + $0x4] sm:$0xf]
      %v703 = vld [vmem:[%s700 + $0x8] sm:$0xf]
      %v704 = vld [vmem:[%s700 + $0xc] sm:$0xf]
      %v705 = vld [vmem:[%s700 + $0x10] sm:$0xf]
      %v706 = vld [vmem:[%s700 + $0x14] sm:$0xf]
      %v707 = vld [vmem:[%s700 + $0x18] sm:$0xf]
      %v708 = vld [vmem:[%s700 + $0x1c] sm:$0xf]
      %v709 = vld [vmem:[%s700 + $0x20] sm:$0xf]
      %v710 = vld [vmem:[%s700 + $0x24] sm:$0xf]
      %v711 = vld [vmem:[%s700 + $0x28] sm:$0xf]
      %v712 = vld [vmem:[%s700 + $0x2c] sm:$0xf]
      %v713 = vld [vmem:[%s700 + $0x30] sm:$0xf]
      %v714 = vld [vmem:[%s700 + $0x34] sm:$0xf]
      %v715 = vld [vmem:[%s700 + $0x38] sm:$0xf]
      %v716 = vld [vmem:[%s700 + $0x3c] sm:$0xf]
      %v717 = vld [vmem:[%s700 + $0x40] sm:$0xf]
      %v718 = vld [vmem:[%s700 + $0x44] sm:$0xf]
      %v719 = vld [vmem:[%s700 + $0x48] sm:$0xf]
      %v720 = vld [vmem:[%s700 + $0x4c] sm:$0xf]
      %v721 = vld [vmem:[%s700 + $0x50] sm:$0xf]
      %v722 = vld [vmem:[%s700 + $0x54] sm:$0xf]
      %v723 = vld [vmem:[%s700 + $0x58] sm:$0xf]
      %v724 = vld [vmem:[%s700 + $0x5c] sm:$0xf]
      %v725 = vld [vmem:[%s700 + $0x60] sm:$0xf]
      %v726 = vld [vmem:[%s700 + $0x64] sm:$0xf]
      %v727 = vld [vmem:[%s700 + $0x68] sm:$0xf]
      %v728 = vld [vmem:[%s700 + $0x6c] sm:$0xf]
      %v729 = vld [vmem:[%s700 + $0x70] sm:$0xf]
      %v730 = vld [vmem:[%s700 + $0x74] sm:$0xf]
      %v731 = vld [vmem:[%s700 + $0x78] sm:$0xf]
      %v732 = vld [vmem:[%s700 + $0x7c] sm:$0xf]
      %v733 = vld [vmem:[%s700 + $0x80] sm:$0xf]
      %v734 = vld [vmem:[%s700 + $0x84] sm:$0xf]
      %v735 = vld [vmem:[%s700 + $0x88] sm:$0xf]
      %v736 = vld [vmem:[%s700 + $0x8c] sm:$0xf]
      %v737 = vld [vmem:[%s700 + $0x90] sm:$0xf]
      %v738 = vld [vmem:[%s700 + $0x94] sm:$0xf]
      %v739 = vld [vmem:[%s700 + $0x98] sm:$0xf]
      %v740 = vld [vmem:[%s700 + $0x9c] sm:$0xf]
      %v747 = vunpack.c.l.b16 %v694
      %v748 = vunpack.c.h.b16 %v694
      %v749 = vunpack.c.l.b16 %v695
      %v750 = vunpack.c.l.b16 %v696
      %v751 = vunpack.c.h.b16 %v696
      %v752 = vunpack.c.l.b16 %v697
      %v753 = vunpack.c.l.b16 %v698
      %v754 = vunpack.c.h.b16 %v698
      %v755 = vunpack.c.l.b16 %v699
      %v756 = vpack.c.b16 %v750, %v747
      %v757 = vpack.c.b16 %v751, %v748
      %v758 = vpack.c.b16 %v752, %v749
      %v759 = vpack.c.b16 %v753, %v753
      %v760 = vpack.c.b16 %v754, %v754
      %v761 = vpack.c.b16 %v755, %v755
      %vm762 = vcmask 1045504
      %v763 = vrot.slane %v756, 2
      %v764 = vrot.slane %v759, 2
      %v765 = vsel %vm762, %v763, %v764
      %v766 = vrot.slane %v757, 2
      %v767 = vrot.slane %v760, 2
      %v768 = vsel %vm762, %v766, %v767
      %v769 = vrot.slane %v758, 2
      %v770 = vrot.slane %v761, 2
      %v771 = vsel %vm762, %v769, %v770
      %v814 = vunpack.c.l.b16 %v701
      %v815 = vunpack.c.l.b16 %v702
      %v816 = vunpack.c.l.b16 %v703
      %v817 = vunpack.c.l.b16 %v704
      %v818 = vunpack.c.l.b16 %v705
      %v819 = vunpack.c.l.b16 %v706
      %v820 = vunpack.c.l.b16 %v707
      %v821 = vunpack.c.l.b16 %v708
      %v822 = vunpack.c.l.b16 %v709
      %v823 = vunpack.c.l.b16 %v710
      %v824 = vunpack.c.l.b16 %v711
      %v825 = vunpack.c.l.b16 %v712
      %v826 = vunpack.c.l.b16 %v713
      %v827 = vunpack.c.l.b16 %v714
      %v828 = vunpack.c.l.b16 %v715
      %v829 = vunpack.c.l.b16 %v716
      %v830 = vunpack.c.l.b16 %v717
      %v831 = vunpack.c.l.b16 %v718
      %v832 = vunpack.c.l.b16 %v719
      %v833 = vunpack.c.l.b16 %v720
      %v834 = vunpack.c.l.b16 %v721
      %v835 = vunpack.c.l.b16 %v722
      %v836 = vunpack.c.l.b16 %v723
      %v837 = vunpack.c.l.b16 %v724
      %v838 = vunpack.c.l.b16 %v725
      %v839 = vunpack.c.l.b16 %v726
      %v840 = vunpack.c.l.b16 %v727
      %v841 = vunpack.c.l.b16 %v728
      %v842 = vunpack.c.l.b16 %v729
      %v843 = vunpack.c.l.b16 %v730
      %v844 = vunpack.c.l.b16 %v731
      %v845 = vunpack.c.l.b16 %v732
      %v846 = vunpack.c.l.b16 %v733
      %v847 = vunpack.c.l.b16 %v734
      %v848 = vunpack.c.l.b16 %v735
      %v849 = vunpack.c.l.b16 %v736
      %v850 = vunpack.c.l.b16 %v737
      %v851 = vunpack.c.l.b16 %v738
      %v852 = vunpack.c.l.b16 %v739
      %v853 = vunpack.c.l.b16 %v740
      %v854 = vpack.c.b16 %v815, %v814
      %v855 = vpack.c.b16 %v817, %v816
      %v856 = vpack.c.b16 %v819, %v818
      %v857 = vpack.c.b16 %v821, %v820
      %v858 = vpack.c.b16 %v823, %v822
      %v859 = vpack.c.b16 %v825, %v824
      %v860 = vpack.c.b16 %v827, %v826
      %v861 = vpack.c.b16 %v829, %v828
      %v862 = vpack.c.b16 %v831, %v830
      %v863 = vpack.c.b16 %v833, %v832
      %v864 = vpack.c.b16 %v835, %v834
      %v865 = vpack.c.b16 %v837, %v836
      %v866 = vpack.c.b16 %v839, %v838
      %v867 = vpack.c.b16 %v841, %v840
      %v868 = vpack.c.b16 %v843, %v842
      %v869 = vpack.c.b16 %v845, %v844
      %v870 = vpack.c.b16 %v847, %v846
      %v871 = vpack.c.b16 %v849, %v848
      %v872 = vpack.c.b16 %v851, %v850
      %v873 = vpack.c.b16 %v853, %v852
      %v895 = vsel %vm468, %v771, 0
      %897 = vmatpush.bf16.msra.mxu0 %v861
      %898 = vmatpush.bf16.msra.mxu0 %v860
      %899 = vmatpush.bf16.msra.mxu0 %v859
      %900 = vmatpush.bf16.msra.mxu0 %v858
      %901 = vmatpush.bf16.msra.mxu0 %v857
      %902 = vmatpush.bf16.msra.mxu0 %v856
      %903 = vmatpush.bf16.msra.mxu0 %v855
      %904 = vmatpush.bf16.msra.mxu0 %v854
      %905 = vmatmul.bf16.gmra.mxu0 %v765
      %v906 = vpop.f32.mrf.mxu0
      %v907 = vadd.f32 0.0, %v906
      %v908 = vpop.f32.mrf.mxu0
      %v909 = vadd.f32 0.0, %v908
      %910 = vdwg.mxu0
      %911 = vmatpush.bf16.msra.mxu0 %v869
      %912 = vmatpush.bf16.msra.mxu0 %v868
      %913 = vmatpush.bf16.msra.mxu0 %v867
      %914 = vmatpush.bf16.msra.mxu0 %v866
      %915 = vmatpush.bf16.msra.mxu0 %v865
      %916 = vmatpush.bf16.msra.mxu0 %v864
      %917 = vmatpush.bf16.msra.mxu0 %v863
      %918 = vmatpush.bf16.msra.mxu0 %v862
      %919 = vmatmul.bf16.gmra.mxu0 %v768
      %v920 = vpop.f32.mrf.mxu0
      %v921 = vadd.f32 %v907, %v920
      %v922 = vpop.f32.mrf.mxu0
      %v923 = vadd.f32 %v909, %v922
      %924 = vdwg.mxu0
      %925 = vmatpush.bf16.msra.mxu0 0
      %926 = vmatpush.bf16.msra.mxu0 0
      %927 = vmatpush.bf16.msra.mxu0 0
      %928 = vmatpush.bf16.msra.mxu0 0
      %929 = vmatpush.bf16.msra.mxu0 %v873
      %930 = vmatpush.bf16.msra.mxu0 %v872
      %931 = vmatpush.bf16.msra.mxu0 %v871
      %932 = vmatpush.bf16.msra.mxu0 %v870
      %933 = vmatmul.bf16.gmra.mxu0 %v895
      %v934 = vpop.f32.mrf.mxu0
      %v935 = vadd.f32 %v921, %v934
      %v936 = vpop.f32.mrf.mxu0
      %v937 = vadd.f32 %v923, %v936
      %938 = vdwg.mxu0
      %v939 = vadd.f32 %v690, %v935
      %v940 = vadd.f32 %v692, %v937
      %v941 = vld [vmem:[%s287] sm:$0xcc]
      %v942 = vld [vmem:[%s287 + $0x8] sm:$0xc]
      %v943 = vld [vmem:[%s287 + $0xc] sm:$0xff]
      %v944 = vld [vmem:[%s287 + $0x14] sm:$0xf]
      %v945 = vld [vmem:[%s287 + $0x18] sm:$0x33]
      %v946 = vld [vmem:[%s287 + $0x20] sm:$0x3]
      %s947 = scalar_lea.vmem %s1, 480
      %v948 = vld [vmem:[%s947] sm:$0xf]
      %v949 = vld [vmem:[%s947 + $0x4] sm:$0xf]
      %v950 = vld [vmem:[%s947 + $0x8] sm:$0xf]
      %v951 = vld [vmem:[%s947 + $0xc] sm:$0xf]
      %v952 = vld [vmem:[%s947 + $0x10] sm:$0xf]
      %v953 = vld [vmem:[%s947 + $0x14] sm:$0xf]
      %v954 = vld [vmem:[%s947 + $0x18] sm:$0xf]
      %v955 = vld [vmem:[%s947 + $0x1c] sm:$0xf]
      %v956 = vld [vmem:[%s947 + $0x20] sm:$0xf]
      %v957 = vld [vmem:[%s947 + $0x24] sm:$0xf]
      %v958 = vld [vmem:[%s947 + $0x28] sm:$0xf]
      %v959 = vld [vmem:[%s947 + $0x2c] sm:$0xf]
      %v960 = vld [vmem:[%s947 + $0x30] sm:$0xf]
      %v961 = vld [vmem:[%s947 + $0x34] sm:$0xf]
      %v962 = vld [vmem:[%s947 + $0x38] sm:$0xf]
      %v963 = vld [vmem:[%s947 + $0x3c] sm:$0xf]
      %v964 = vld [vmem:[%s947 + $0x40] sm:$0xf]
      %v965 = vld [vmem:[%s947 + $0x44] sm:$0xf]
      %v966 = vld [vmem:[%s947 + $0x48] sm:$0xf]
      %v967 = vld [vmem:[%s947 + $0x4c] sm:$0xf]
      %v968 = vld [vmem:[%s947 + $0x50] sm:$0xf]
      %v969 = vld [vmem:[%s947 + $0x54] sm:$0xf]
      %v970 = vld [vmem:[%s947 + $0x58] sm:$0xf]
      %v971 = vld [vmem:[%s947 + $0x5c] sm:$0xf]
      %v972 = vld [vmem:[%s947 + $0x60] sm:$0xf]
      %v973 = vld [vmem:[%s947 + $0x64] sm:$0xf]
      %v974 = vld [vmem:[%s947 + $0x68] sm:$0xf]
      %v975 = vld [vmem:[%s947 + $0x6c] sm:$0xf]
      %v976 = vld [vmem:[%s947 + $0x70] sm:$0xf]
      %v977 = vld [vmem:[%s947 + $0x74] sm:$0xf]
      %v978 = vld [vmem:[%s947 + $0x78] sm:$0xf]
      %v979 = vld [vmem:[%s947 + $0x7c] sm:$0xf]
      %v980 = vld [vmem:[%s947 + $0x80] sm:$0xf]
      %v981 = vld [vmem:[%s947 + $0x84] sm:$0xf]
      %v982 = vld [vmem:[%s947 + $0x88] sm:$0xf]
      %v983 = vld [vmem:[%s947 + $0x8c] sm:$0xf]
      %v984 = vld [vmem:[%s947 + $0x90] sm:$0xf]
      %v985 = vld [vmem:[%s947 + $0x94] sm:$0xf]
      %v986 = vld [vmem:[%s947 + $0x98] sm:$0xf]
      %v987 = vld [vmem:[%s947 + $0x9c] sm:$0xf]
      %v994 = vunpack.c.l.b16 %v941
      %v995 = vunpack.c.h.b16 %v941
      %v996 = vunpack.c.l.b16 %v942
      %v997 = vunpack.c.l.b16 %v943
      %v998 = vunpack.c.h.b16 %v943
      %v999 = vunpack.c.l.b16 %v944
      %v1000 = vunpack.c.l.b16 %v945
      %v1001 = vunpack.c.h.b16 %v945
      %v1002 = vunpack.c.l.b16 %v946
      %v1003 = vpack.c.b16 %v997, %v994
      %v1004 = vpack.c.b16 %v998, %v995
      %v1005 = vpack.c.b16 %v999, %v996
      %v1006 = vpack.c.b16 %v1000, %v1000
      %v1007 = vpack.c.b16 %v1001, %v1001
      %v1008 = vpack.c.b16 %v1002, %v1002
      %v1009 = vrot.slane %v1003, 2
      %v1010 = vrot.slane %v1006, 2
      %v1011 = vsel %vm762, %v1009, %v1010
      %v1012 = vrot.slane %v1004, 2
      %v1013 = vrot.slane %v1007, 2
      %v1014 = vsel %vm762, %v1012, %v1013
      %v1015 = vrot.slane %v1005, 2
      %v1016 = vrot.slane %v1008, 2
      %v1017 = vsel %vm762, %v1015, %v1016
      %v1060 = vunpack.c.l.b16 %v948
      %v1061 = vunpack.c.l.b16 %v949
      %v1062 = vunpack.c.l.b16 %v950
      %v1063 = vunpack.c.l.b16 %v951
      %v1064 = vunpack.c.l.b16 %v952
      %v1065 = vunpack.c.l.b16 %v953
      %v1066 = vunpack.c.l.b16 %v954
      %v1067 = vunpack.c.l.b16 %v955
      %v1068 = vunpack.c.l.b16 %v956
      %v1069 = vunpack.c.l.b16 %v957
      %v1070 = vunpack.c.l.b16 %v958
      %v1071 = vunpack.c.l.b16 %v959
      %v1072 = vunpack.c.l.b16 %v960
      %v1073 = vunpack.c.l.b16 %v961
      %v1074 = vunpack.c.l.b16 %v962
      %v1075 = vunpack.c.l.b16 %v963
      %v1076 = vunpack.c.l.b16 %v964
      %v1077 = vunpack.c.l.b16 %v965
      %v1078 = vunpack.c.l.b16 %v966
      %v1079 = vunpack.c.l.b16 %v967
      %v1080 = vunpack.c.l.b16 %v968
      %v1081 = vunpack.c.l.b16 %v969
      %v1082 = vunpack.c.l.b16 %v970
      %v1083 = vunpack.c.l.b16 %v971
      %v1084 = vunpack.c.l.b16 %v972
      %v1085 = vunpack.c.l.b16 %v973
      %v1086 = vunpack.c.l.b16 %v974
      %v1087 = vunpack.c.l.b16 %v975
      %v1088 = vunpack.c.l.b16 %v976
      %v1089 = vunpack.c.l.b16 %v977
      %v1090 = vunpack.c.l.b16 %v978
      %v1091 = vunpack.c.l.b16 %v979
      %v1092 = vunpack.c.l.b16 %v980
      %v1093 = vunpack.c.l.b16 %v981
      %v1094 = vunpack.c.l.b16 %v982
      %v1095 = vunpack.c.l.b16 %v983
      %v1096 = vunpack.c.l.b16 %v984
      %v1097 = vunpack.c.l.b16 %v985
      %v1098 = vunpack.c.l.b16 %v986
      %v1099 = vunpack.c.l.b16 %v987
      %v1100 = vpack.c.b16 %v1061, %v1060
      %v1101 = vpack.c.b16 %v1063, %v1062
      %v1102 = vpack.c.b16 %v1065, %v1064
      %v1103 = vpack.c.b16 %v1067, %v1066
      %v1104 = vpack.c.b16 %v1069, %v1068
      %v1105 = vpack.c.b16 %v1071, %v1070
      %v1106 = vpack.c.b16 %v1073, %v1072
      %v1107 = vpack.c.b16 %v1075, %v1074
      %v1108 = vpack.c.b16 %v1077, %v1076
      %v1109 = vpack.c.b16 %v1079, %v1078
      %v1110 = vpack.c.b16 %v1081, %v1080
      %v1111 = vpack.c.b16 %v1083, %v1082
      %v1112 = vpack.c.b16 %v1085, %v1084
      %v1113 = vpack.c.b16 %v1087, %v1086
      %v1114 = vpack.c.b16 %v1089, %v1088
      %v1115 = vpack.c.b16 %v1091, %v1090
      %v1116 = vpack.c.b16 %v1093, %v1092
      %v1117 = vpack.c.b16 %v1095, %v1094
      %v1118 = vpack.c.b16 %v1097, %v1096
      %v1119 = vpack.c.b16 %v1099, %v1098
      %v1141 = vsel %vm468, %v1017, 0
      %1143 = vmatpush.bf16.msra.mxu0 %v1107
      %1144 = vmatpush.bf16.msra.mxu0 %v1106
      %1145 = vmatpush.bf16.msra.mxu0 %v1105
      %1146 = vmatpush.bf16.msra.mxu0 %v1104
      %1147 = vmatpush.bf16.msra.mxu0 %v1103
      %1148 = vmatpush.bf16.msra.mxu0 %v1102
      %1149 = vmatpush.bf16.msra.mxu0 %v1101
      %1150 = vmatpush.bf16.msra.mxu0 %v1100
      %1151 = vmatmul.bf16.gmra.mxu0 %v1011
      %v1152 = vpop.f32.mrf.mxu0
      %v1153 = vadd.f32 0.0, %v1152
      %v1154 = vpop.f32.mrf.mxu0
      %v1155 = vadd.f32 0.0, %v1154
      %1156 = vdwg.mxu0
      %1157 = vmatpush.bf16.msra.mxu0 %v1115
      %1158 = vmatpush.bf16.msra.mxu0 %v1114
      %1159 = vmatpush.bf16.msra.mxu0 %v1113
      %1160 = vmatpush.bf16.msra.mxu0 %v1112
      %1161 = vmatpush.bf16.msra.mxu0 %v1111
      %1162 = vmatpush.bf16.msra.mxu0 %v1110
      %1163 = vmatpush.bf16.msra.mxu0 %v1109
      %1164 = vmatpush.bf16.msra.mxu0 %v1108
      %1165 = vmatmul.bf16.gmra.mxu0 %v1014
      %v1166 = vpop.f32.mrf.mxu0
      %v1167 = vadd.f32 %v1153, %v1166
      %v1168 = vpop.f32.mrf.mxu0
      %v1169 = vadd.f32 %v1155, %v1168
      %1170 = vdwg.mxu0
      %1171 = vmatpush.bf16.msra.mxu0 0
      %1172 = vmatpush.bf16.msra.mxu0 0
      %1173 = vmatpush.bf16.msra.mxu0 0
      %1174 = vmatpush.bf16.msra.mxu0 0
      %1175 = vmatpush.bf16.msra.mxu0 %v1119
      %1176 = vmatpush.bf16.msra.mxu0 %v1118
      %1177 = vmatpush.bf16.msra.mxu0 %v1117
      %1178 = vmatpush.bf16.msra.mxu0 %v1116
      %1179 = vmatmul.bf16.gmra.mxu0 %v1141
      %v1180 = vpop.f32.mrf.mxu0
      %v1181 = vadd.f32 %v1167, %v1180
      %v1182 = vpop.f32.mrf.mxu0
      %v1183 = vadd.f32 %v1169, %v1182
      %1184 = vdwg.mxu0
      %v1185 = vadd.f32 %v939, %v1181
      %v1186 = vadd.f32 %v940, %v1183
      %v1187 = vld [vmem:[%s230 + $0x18] sm:$0xff]
      %v1188 = vld [vmem:[%s230 + $0x20] sm:$0xf]
      %s1189 = scalar_lea.vmem %s1, 640
      %v1190 = vld [vmem:[%s1189] sm:$0xf]
      %v1191 = vld [vmem:[%s1189 + $0x4] sm:$0xf]
      %v1192 = vld [vmem:[%s1189 + $0x8] sm:$0xf]
      %v1193 = vld [vmem:[%s1189 + $0xc] sm:$0xf]
      %v1194 = vld [vmem:[%s1189 + $0x10] sm:$0xf]
      %v1195 = vld [vmem:[%s1189 + $0x14] sm:$0xf]
      %v1196 = vld [vmem:[%s1189 + $0x18] sm:$0xf]
      %v1197 = vld [vmem:[%s1189 + $0x1c] sm:$0xf]
      %v1198 = vld [vmem:[%s1189 + $0x20] sm:$0xf]
      %v1199 = vld [vmem:[%s1189 + $0x24] sm:$0xf]
      %v1200 = vld [vmem:[%s1189 + $0x28] sm:$0xf]
      %v1201 = vld [vmem:[%s1189 + $0x2c] sm:$0xf]
      %v1202 = vld [vmem:[%s1189 + $0x30] sm:$0xf]
      %v1203 = vld [vmem:[%s1189 + $0x34] sm:$0xf]
      %v1204 = vld [vmem:[%s1189 + $0x38] sm:$0xf]
      %v1205 = vld [vmem:[%s1189 + $0x3c] sm:$0xf]
      %v1206 = vld [vmem:[%s1189 + $0x40] sm:$0xf]
      %v1207 = vld [vmem:[%s1189 + $0x44] sm:$0xf]
      %v1208 = vld [vmem:[%s1189 + $0x48] sm:$0xf]
      %v1209 = vld [vmem:[%s1189 + $0x4c] sm:$0xf]
      %v1210 = vld [vmem:[%s1189 + $0x50] sm:$0xf]
      %v1211 = vld [vmem:[%s1189 + $0x54] sm:$0xf]
      %v1212 = vld [vmem:[%s1189 + $0x58] sm:$0xf]
      %v1213 = vld [vmem:[%s1189 + $0x5c] sm:$0xf]
      %v1214 = vld [vmem:[%s1189 + $0x60] sm:$0xf]
      %v1215 = vld [vmem:[%s1189 + $0x64] sm:$0xf]
      %v1216 = vld [vmem:[%s1189 + $0x68] sm:$0xf]
      %v1217 = vld [vmem:[%s1189 + $0x6c] sm:$0xf]
      %v1218 = vld [vmem:[%s1189 + $0x70] sm:$0xf]
      %v1219 = vld [vmem:[%s1189 + $0x74] sm:$0xf]
      %v1220 = vld [vmem:[%s1189 + $0x78] sm:$0xf]
      %v1221 = vld [vmem:[%s1189 + $0x7c] sm:$0xf]
      %v1222 = vld [vmem:[%s1189 + $0x80] sm:$0xf]
      %v1223 = vld [vmem:[%s1189 + $0x84] sm:$0xf]
      %v1224 = vld [vmem:[%s1189 + $0x88] sm:$0xf]
      %v1225 = vld [vmem:[%s1189 + $0x8c] sm:$0xf]
      %v1226 = vld [vmem:[%s1189 + $0x90] sm:$0xf]
      %v1227 = vld [vmem:[%s1189 + $0x94] sm:$0xf]
      %v1228 = vld [vmem:[%s1189 + $0x98] sm:$0xf]
      %v1229 = vld [vmem:[%s1189 + $0x9c] sm:$0xf]
      %v1232 = vunpack.c.l.b16 %v1187
      %v1233 = vunpack.c.h.b16 %v1187
      %v1234 = vunpack.c.l.b16 %v1188
      %v1235 = vpack.c.b16 %v1232, %v750
      %v1236 = vpack.c.b16 %v1233, %v751
      %v1237 = vpack.c.b16 %v1234, %v752
      %v1280 = vunpack.c.l.b16 %v1190
      %v1281 = vunpack.c.l.b16 %v1191
      %v1282 = vunpack.c.l.b16 %v1192
      %v1283 = vunpack.c.l.b16 %v1193
      %v1284 = vunpack.c.l.b16 %v1194
      %v1285 = vunpack.c.l.b16 %v1195
      %v1286 = vunpack.c.l.b16 %v1196
      %v1287 = vunpack.c.l.b16 %v1197
      %v1288 = vunpack.c.l.b16 %v1198
      %v1289 = vunpack.c.l.b16 %v1199
      %v1290 = vunpack.c.l.b16 %v1200
      %v1291 = vunpack.c.l.b16 %v1201
      %v1292 = vunpack.c.l.b16 %v1202
      %v1293 = vunpack.c.l.b16 %v1203
      %v1294 = vunpack.c.l.b16 %v1204
      %v1295 = vunpack.c.l.b16 %v1205
      %v1296 = vunpack.c.l.b16 %v1206
      %v1297 = vunpack.c.l.b16 %v1207
      %v1298 = vunpack.c.l.b16 %v1208
      %v1299 = vunpack.c.l.b16 %v1209
      %v1300 = vunpack.c.l.b16 %v1210
      %v1301 = vunpack.c.l.b16 %v1211
      %v1302 = vunpack.c.l.b16 %v1212
      %v1303 = vunpack.c.l.b16 %v1213
      %v1304 = vunpack.c.l.b16 %v1214
      %v1305 = vunpack.c.l.b16 %v1215
      %v1306 = vunpack.c.l.b16 %v1216
      %v1307 = vunpack.c.l.b16 %v1217
      %v1308 = vunpack.c.l.b16 %v1218
      %v1309 = vunpack.c.l.b16 %v1219
      %v1310 = vunpack.c.l.b16 %v1220
      %v1311 = vunpack.c.l.b16 %v1221
      %v1312 = vunpack.c.l.b16 %v1222
      %v1313 = vunpack.c.l.b16 %v1223
      %v1314 = vunpack.c.l.b16 %v1224
      %v1315 = vunpack.c.l.b16 %v1225
      %v1316 = vunpack.c.l.b16 %v1226
      %v1317 = vunpack.c.l.b16 %v1227
      %v1318 = vunpack.c.l.b16 %v1228
      %v1319 = vunpack.c.l.b16 %v1229
      %v1320 = vpack.c.b16 %v1281, %v1280
      %v1321 = vpack.c.b16 %v1283, %v1282
      %v1322 = vpack.c.b16 %v1285, %v1284
      %v1323 = vpack.c.b16 %v1287, %v1286
      %v1324 = vpack.c.b16 %v1289, %v1288
      %v1325 = vpack.c.b16 %v1291, %v1290
      %v1326 = vpack.c.b16 %v1293, %v1292
      %v1327 = vpack.c.b16 %v1295, %v1294
      %v1328 = vpack.c.b16 %v1297, %v1296
      %v1329 = vpack.c.b16 %v1299, %v1298
      %v1330 = vpack.c.b16 %v1301, %v1300
      %v1331 = vpack.c.b16 %v1303, %v1302
      %v1332 = vpack.c.b16 %v1305, %v1304
      %v1333 = vpack.c.b16 %v1307, %v1306
      %v1334 = vpack.c.b16 %v1309, %v1308
      %v1335 = vpack.c.b16 %v1311, %v1310
      %v1336 = vpack.c.b16 %v1313, %v1312
      %v1337 = vpack.c.b16 %v1315, %v1314
      %v1338 = vpack.c.b16 %v1317, %v1316
      %v1339 = vpack.c.b16 %v1319, %v1318
      %v1361 = vsel %vm468, %v1237, 0
      %1363 = vmatpush.bf16.msra.mxu0 %v1327
      %1364 = vmatpush.bf16.msra.mxu0 %v1326
      %1365 = vmatpush.bf16.msra.mxu0 %v1325
      %1366 = vmatpush.bf16.msra.mxu0 %v1324
      %1367 = vmatpush.bf16.msra.mxu0 %v1323
      %1368 = vmatpush.bf16.msra.mxu0 %v1322
      %1369 = vmatpush.bf16.msra.mxu0 %v1321
      %1370 = vmatpush.bf16.msra.mxu0 %v1320
      %1371 = vmatmul.bf16.gmra.mxu0 %v1235
      %v1372 = vpop.f32.mrf.mxu0
      %v1373 = vadd.f32 0.0, %v1372
      %v1374 = vpop.f32.mrf.mxu0
      %v1375 = vadd.f32 0.0, %v1374
      %1376 = vdwg.mxu0
      %1377 = vmatpush.bf16.msra.mxu0 %v1335
      %1378 = vmatpush.bf16.msra.mxu0 %v1334
      %1379 = vmatpush.bf16.msra.mxu0 %v1333
      %1380 = vmatpush.bf16.msra.mxu0 %v1332
      %1381 = vmatpush.bf16.msra.mxu0 %v1331
      %1382 = vmatpush.bf16.msra.mxu0 %v1330
      %1383 = vmatpush.bf16.msra.mxu0 %v1329
      %1384 = vmatpush.bf16.msra.mxu0 %v1328
      %1385 = vmatmul.bf16.gmra.mxu0 %v1236
      %v1386 = vpop.f32.mrf.mxu0
      %v1387 = vadd.f32 %v1373, %v1386
      %v1388 = vpop.f32.mrf.mxu0
      %v1389 = vadd.f32 %v1375, %v1388
      %1390 = vdwg.mxu0
      %1391 = vmatpush.bf16.msra.mxu0 0
      %1392 = vmatpush.bf16.msra.mxu0 0
      %1393 = vmatpush.bf16.msra.mxu0 0
      %1394 = vmatpush.bf16.msra.mxu0 0
      %1395 = vmatpush.bf16.msra.mxu0 %v1339
      %1396 = vmatpush.bf16.msra.mxu0 %v1338
      %1397 = vmatpush.bf16.msra.mxu0 %v1337
      %1398 = vmatpush.bf16.msra.mxu0 %v1336
      %1399 = vmatmul.bf16.gmra.mxu0 %v1361
      %v1400 = vpop.f32.mrf.mxu0
      %v1401 = vadd.f32 %v1387, %v1400
      %v1402 = vpop.f32.mrf.mxu0
      %v1403 = vadd.f32 %v1389, %v1402
      %1404 = vdwg.mxu0
      %v1405 = vadd.f32 %v1185, %v1401
      %v1406 = vadd.f32 %v1186, %v1403
      %v1407 = vld [vmem:[%s2] sm:$0x1]
      %v1409 = vperm.slane %v1407, 0
      %v1411 = vadd.f32 %v1405, %v1409
      %v1412 = vadd.f32 %v1406, %v1409
      %v1413 = vpack.c.bf16 %v1411, %v1411
      %v1414 = vpack.c.bf16 %v1412, %v1412
      %1415 = vst [vmem:[%s235] sm:$0xf] %v1413
      %1416 = vst [vmem:[%s235 + $0x4] sm:$0xf] %v1414
      %v1417 = vadd.f32 %v1411, %v1412
      %v1418 = vrot.slane %v1417, 4
      %v1419 = vadd.f32 %v1417, %v1418
      %v1420 = vrot.slane %v1419, 2
      %v1421 = vadd.f32 %v1419, %v1420
      %v1422 = vrot.slane %v1421, 1
      %v1423 = vadd.f32 %v1421, %v1422
      %1424 = vst [vmem:[%s238] sm:$0x1] %v1423
      %v1425 = vmul.f32 %v1411, %v1411
      %v1426 = vmul.f32 %v1412, %v1412
      %v1427 = vadd.f32 %v1425, %v1426
      %v1428 = vrot.slane %v1427, 4
      %v1429 = vadd.f32 %v1427, %v1428
      %v1430 = vrot.slane %v1429, 2
      %v1431 = vadd.f32 %v1429, %v1430
      %v1432 = vrot.slane %v1431, 1
      %v1433 = vadd.f32 %v1431, %v1432
      %1434 = vst [vmem:[%s241] sm:$0x1] %v1433
      %p1435 = scmp.lt.s32.totalorder %s17, 1
      %s1436 = scalar_select %p1435, %s17, 1
      %s1437 = smul.addr %s1436, 2
      %s1438 = smul.addr %s1437, 4
      %s1439 = scalar_lea.vmem %s3, %s1438
      %p1440 = scmp.lt.s32.totalorder %s17, 1
      %s1441 = scalar_select %p1440, %s17, 1
      %s1442 = scalar_lea.vmem %s4, %s1441
      %p1443 = scmp.lt.s32.totalorder %s17, 1
      %s1444 = scalar_select %p1443, %s17, 1
      %s1445 = scalar_lea.vmem %s5, %s1444
      // Predicated region
      $region33: #{_lambda_.12} parent=31 // pred_check
        %p1446 = pneg %p103
      $region34: #{_lambda_.12} parent=31 // pred_check_branch
        %1448 = sbr.rel (%p1446) target = $region36
      $region35: #{_lambda_.12} parent=31 // pred_region
        _
      $region36: #{_lambda_.12} parent=31 // pred_fallthru
        _
      // Predicated region
      $region37: #{_lambda_.12} parent=31 // pred_check
        %p1449 = pneg %p129
      $region38: #{_lambda_.12} parent=31 // pred_check_branch
        %1451 = sbr.rel (%p1449) target = $region40
      $region39: #{_lambda_.12} parent=31 // pred_region
        _
      $region40: #{_lambda_.12} parent=31 // pred_fallthru
        _
      // Predicated region
      $region41: #{_lambda_.12} parent=31 // pred_check
        %p1452 = pneg %p155
      $region42: #{_lambda_.12} parent=31 // pred_check_branch
        %1454 = sbr.rel (%p1452) target = $region44
      $region43: #{_lambda_.12} parent=31 // pred_region
        _
      $region44: #{_lambda_.12} parent=31 // pred_fallthru
        _
    $region32: #{_lambda_.12} parent=5 // pred_fallthru
      _
    %p1455 = scmp.le.s32.totalorder 2, %s12
    // Predicated region
    $region45: #{_lambda_.12} parent=5 // pred_check
      %p1456 = pneg %p1455
    $region46: #{_lambda_.12} parent=5 // pred_check_branch
      %1458 = sbr.rel (%p1456) target = $region48
    $region47: #{_lambda_.12} parent=5 // pred_region
      %s1459 = ssub.s32 %s12, 2
      // Predicated region
      $region49: #{_lambda_.12} parent=47 // pred_check
        %p1460 = pneg %p109
      $region50: #{_lambda_.12} parent=47 // pred_check_branch
        %1462 = sbr.rel (%p1460) target = $region52
      $region51: #{_lambda_.12} parent=47 // pred_region
        %p1463 = scmp.lt.s32.totalorder %s18, 1
        %s1464 = scalar_select %p1463, %s18, 1
        %s1465 = smul.addr %s1464, 2
        %s1466 = smul.addr %s1465, 4
        %s1467 = scalar_lea.vmem %s3, %s1466
      $region52: #{_lambda_.12} parent=47 // pred_fallthru
        _
      // Predicated region
      $region53: #{_lambda_.12} parent=47 // pred_check
        %p1468 = pneg %p135
      $region54: #{_lambda_.12} parent=47 // pred_check_branch
        %1470 = sbr.rel (%p1468) target = $region56
      $region55: #{_lambda_.12} parent=47 // pred_region
        %p1471 = scmp.lt.s32.totalorder %s18, 1
        %s1472 = scalar_select %p1471, %s18, 1
        %s1473 = scalar_lea.vmem %s4, %s1472
      $region56: #{_lambda_.12} parent=47 // pred_fallthru
        _
      // Predicated region
      $region57: #{_lambda_.12} parent=47 // pred_check
        %p1474 = pneg %p161
      $region58: #{_lambda_.12} parent=47 // pred_check_branch
        %1476 = sbr.rel (%p1474) target = $region60
      $region59: #{_lambda_.12} parent=47 // pred_region
        %p1477 = scmp.lt.s32.totalorder %s18, 1
        %s1478 = scalar_select %p1477, %s18, 1
        %s1479 = scalar_lea.vmem %s5, %s1478
      $region60: #{_lambda_.12} parent=47 // pred_fallthru
        _
    $region48: #{_lambda_.12} parent=5 // pred_fallthru
      _
  $region6: #{_lambda_.12} parent=0 // loop_footer
    %s16 = sadd.s32 1, %s12
  $region7: #{_lambda_.12} parent=0 // loop_footer_branch
    %11 = sbr.rel target = $region3
  $region8: #{_lambda_.12} parent=0 // loop_exit
    _

</llo_original>
